<compile_context>
chip_gen: v6e
topology: v6e:2x2x1
jax: 0.10.0
libtpu: 0.0.40
codegen_flags: <defaults>
</compile_context>

<pallas_src>
import jax
import jax.numpy as jnp
from jax import lax
from jax.experimental import pallas as pl
from jax.experimental.pallas import tpu as pltpu


# Set to jnp.bfloat16 for production channel widths (v5e/v6e/v7x MXU peak);
# accumulation stays f32 either way.  Kept f32 here so the 1e-4 reference
# check stays tight at these tiny test channels (block is memory-bound there).
MXU_DTYPE = jnp.float32

_VMEM_LIMIT = 32 * 1024 * 1024   # safe scoped-VMEM budget on v5e/v6e/v7x


def _pick_tile(m, target=256):
    """Largest tile <= target that divides m and is a multiple of 8."""
    if m <= target:
        return m
    for tm in range(target, 7, -8):
        if m % tm == 0:
            return tm
    return m


# ----------------------------- Pallas kernels ------------------------------

def _make_fused_1x1_kernel(n_in):
    """silu( sum_i dot(x_i, w_i) + bias ) over a (TM, Cout) tile.

    refs = (x_0..x_{n-1}, w_0..w_{n-1}, bias, out).  With n_in > 1 this fuses
    a channel-concat followed by a 1x1 conv (split-K partial matmuls).
    """

    def kernel(*refs):
        x_refs = refs[:n_in]
        w_refs = refs[n_in:2 * n_in]
        b_ref = refs[2 * n_in]
        o_ref = refs[2 * n_in + 1]

        acc = jnp.dot(x_refs[0][...].astype(MXU_DTYPE),
                      w_refs[0][...].astype(MXU_DTYPE),
                      preferred_element_type=jnp.float32)
        for i in range(1, n_in):
            acc = acc + jnp.dot(x_refs[i][...].astype(MXU_DTYPE),
                                w_refs[i][...].astype(MXU_DTYPE),
                                preferred_element_type=jnp.float32)
        y = acc + b_ref[...]               # folded-BN bias (scale is in w)
        y = y * jax.nn.sigmoid(y)          # SiLU
        o_ref[...] = y.astype(o_ref.dtype)

    return kernel


def _conv3x3_bn_silu_kernel(x_ref, w_ref, b_ref, o_ref, xp_ref):
    # x_ref : (1, H, W, Cin)   unpadded input image tile
    # w_ref : (9, Cin, Cout)   taps in row-major (dy, dx) order, BN-scaled
    # b_ref : (1, Cout)
    # o_ref : (1, H*W, Cout)   lane-dense 2-D output block
    # xp_ref: VMEM scratch (H+2, W+16, Cin); interior stored at sublane
    #         offset 8 so the store is 8-aligned, borders stay zero (halo).
    _, H, W, Cin = x_ref.shape
    Cout = o_ref.shape[-1]

    xp_ref[...] = jnp.zeros_like(xp_ref)
    xp_ref[1:H + 1, 8:8 + W, :] = x_ref[0].astype(xp_ref.dtype)

    acc = jnp.zeros((H * W, Cout), jnp.float32)
    for t in range(9):                     # static unroll over the 9 taps
        dy, dx = t // 3, t % 3
        patch = xp_ref[dy:dy + H, 7 + dx:7 + dx + W, :]
        patch = patch.reshape(H * W, Cin).astype(MXU_DTYPE)
        acc = acc + jnp.dot(patch, w_ref[t].astype(MXU_DTYPE),
                            preferred_element_type=jnp.float32)
    y = acc + b_ref[...]
    y = y * jax.nn.sigmoid(y)
    o_ref[0] = y.astype(o_ref.dtype)


# ------------------------------ JAX wrappers --------------------------------

def fused_1x1_bn_silu(xs, ws, bias, *, tile_m=256):
    """silu( concat(xs, axis=-1) @ concat(ws, axis=0) + bias ) without
    materializing the concat.  xs: list of (N,H,W,Ci); ws: list of (Ci,Cout)."""
    N, H, W = xs[0].shape[:3]
    M = N * H * W
    Cout = ws[0].shape[1]
    xs2 = [x.reshape(M, x.shape[-1]) for x in xs]

    tm = _pick_tile(M, tile_m)
    grid = (M // tm,)

    in_specs = []
    for x2 in xs2:
        ci = x2.shape[1]
        in_specs.append(pl.BlockSpec((tm, ci), lambda i: (i, 0)))
    for w in ws:
        ci = w.shape[0]
        # Weights / bias: same block for every grid step -> stay VMEM-resident.
        in_specs.append(pl.BlockSpec((ci, Cout), lambda i: (0, 0)))
    in_specs.append(pl.BlockSpec((1, Cout), lambda i: (0, 0)))

    out = pl.pallas_call(
        _make_fused_1x1_kernel(len(xs2)),
        out_shape=jax.ShapeDtypeStruct((M, Cout), xs[0].dtype),
        grid=grid,
        in_specs=in_specs,
        out_specs=pl.BlockSpec((tm, Cout), lambda i: (i, 0)),
        compiler_params=pltpu.CompilerParams(
            dimension_semantics=("parallel",),
            vmem_limit_bytes=_VMEM_LIMIT),
    )(*xs2, *ws, bias.reshape(1, Cout))
    return out.reshape(N, H, W, Cout)


def conv3x3_bn_silu(x_nhwc, w9, bias):
    """3x3 stride-1 SAME conv + folded BN + SiLU, halo built in VMEM."""
    N, H, W, Cin = x_nhwc.shape
    Cout = w9.shape[-1]
    # TODO(synk): for large resolutions (e.g. 640x640) tile H with an
    # overlapping-halo index_map instead of one image per grid step.
    out = pl.pallas_call(
        _conv3x3_bn_silu_kernel,
        out_shape=jax.ShapeDtypeStruct((N, H * W, Cout), x_nhwc.dtype),
        grid=(N,),
        in_specs=[
            pl.BlockSpec((1, H, W, Cin), lambda n: (n, 0, 0, 0)),
            pl.BlockSpec((9, Cin, Cout), lambda n: (0, 0, 0)),
            pl.BlockSpec((1, Cout), lambda n: (0, 0)),
        ],
        out_specs=pl.BlockSpec((1, H * W, Cout), lambda n: (n, 0, 0)),
        scratch_shapes=[pltpu.VMEM((H + 2, W + 16, Cin), jnp.float32)],
        compiler_params=pltpu.CompilerParams(
            dimension_semantics=("parallel",),
            vmem_limit_bytes=_VMEM_LIMIT),
    )(x_nhwc, w9, bias.reshape(1, Cout))
    return out.reshape(N, H, W, Cout)


# ------------------------- parameter construction ---------------------------

def make_conv_params(key, cin, cout, k):
    """Conv(k x k, bias=False) + BatchNorm2d(eps=1e-3) in eval mode.

    BN scale is folded into the conv weights (per output channel); only the
    bias remains for the kernels' epilogue.
    """
    kw, kg, kb, km, kv = jax.random.split(key, 5)
    w = jax.random.normal(kw, (k, k, cin, cout), jnp.float32) * 0.1   # HWIO
    gamma = 1.0 + 0.1 * jax.random.normal(kg, (cout,), jnp.float32)
    beta = 0.1 * jax.random.normal(kb, (cout,), jnp.float32)
    mean = 0.1 * jax.random.normal(km, (cout,), jnp.float32)
    var = jnp.abs(jax.random.normal(kv, (cout,), jnp.float32)) + 0.5

    scale = gamma * lax.rsqrt(var + 1e-3)     # module uses eps=0.001
    bias = beta - mean * scale
    w = w * scale                             # fold BN scale into weights

    if k == 1:
        w = w.reshape(cin, cout)
    else:
        w = w.reshape(k * k, cin, cout)       # tap-major (dy, dx) order
    return {"w": w, "bias": bias}


def init_multi_concat_block(key, c1, c2, c3, n=4, e=1, ids=None):
    if ids is None:
        ids = [0]
    c_ = int(c2 * e)
    keys = jax.random.split(key, 3 + n)
    params = {
        "cv1": make_conv_params(keys[0], c1, c_, 1),
        "cv2": make_conv_params(keys[1], c1, c_, 1),
        "cv3": [make_conv_params(keys[3 + i], c_ if i == 0 else c2, c2, 3)
                for i in range(n)],
        "cv4": make_conv_params(keys[2], c_ * 2 + c2 * (len(ids) - 2), c3, 1),
        "ids": list(ids),
    }
    return params


# ------------------------------ forward pass ---------------------------------

def multi_concat_block_forward(params, x_nchw):
    """Matches MultiConcatBlock.forward.  Input/output NCHW like PyTorch."""
    x = jnp.transpose(x_nchw, (0, 2, 3, 1))          # NCHW -> NHWC
    c_ = params["cv1"]["w"].shape[1]

    # cv1 + cv2 fused: one HBM read of x, lane-dense 2*c_ output; split is a view.
    w12 = jnp.concatenate([params["cv1"]["w"], params["cv2"]["w"]], axis=1)
    b12 = jnp.concatenate([params["cv1"]["bias"], params["cv2"]["bias"]])
    y12 = fused_1x1_bn_silu([x], [w12], b12)
    x_1, x_2 = y12[..., :c_], y12[..., c_:]

    x_all = [x_1, x_2]
    for p3 in params["cv3"]:
        x_2 = conv3x3_bn_silu(x_2, p3["w"], p3["bias"])
        x_all.append(x_2)

    # concat + cv4 fused: split cv4's weight rows per selected input and
    # accumulate split-K partial matmuls; `cat` never touches HBM.
    sel = [x_all[i] for i in params["ids"]]
    w4, b4 = params["cv4"]["w"], params["cv4"]["bias"]
    w_splits, off = [], 0
    for t in sel:
        c = t.shape[-1]
        w_splits.append(w4[off:off + c, :])
        off += c
    out = fused_1x1_bn_silu(sel, w_splits, b4)
    return jnp.transpose(out, (0, 3, 1, 2))          # NHWC -> NCHW


# --------------------------- pure-JAX reference ------------------------------

def _ref_conv_bn_silu(x_nhwc, w_hwio, bias):
    y = lax.conv_general_dilated(
        x_nhwc, w_hwio, window_strides=(1, 1), padding="SAME",
        dimension_numbers=("NHWC", "HWIO", "NHWC"))
    y = y + bias
    return y * jax.nn.sigmoid(y)


def multi_concat_block_reference(params, x_nchw):
    x = jnp.transpose(x_nchw, (0, 2, 3, 1))

    def run(p, x, k):
        if k == 1:
            cin, cout = p["w"].shape
            w = p["w"].reshape(1, 1, cin, cout)
        else:
            _, cin, cout = p["w"].shape
            w = p["w"].reshape(3, 3, cin, cout)
        return _ref_conv_bn_silu(x, w, p["bias"])

    x_1 = run(params["cv1"], x, 1)
    x_2 = run(params["cv2"], x, 1)
    x_all = [x_1, x_2]
    for p3 in params["cv3"]:
        x_2 = run(p3, x_2, 3)
        x_all.append(x_2)
    cat = jnp.concatenate([x_all[i] for i in params["ids"]], axis=-1)
    out = run(params["cv4"], cat, 1)
    return jnp.transpose(out, (0, 3, 1, 2))


# ----------------------------------- main ------------------------------------

if __name__ == "__main__":
    # Small shapes consistent with the module; standard YOLOv7 ELAN ids.
    N, C1, H, W = 2, 4, 16, 16
    C2, C3, n, e = 8, 16, 4, 1
    ids = [-1, -3, -5, -6]

    key = jax.random.PRNGKey(0)
    k_param, k_x = jax.random.split(key)
    params = init_multi_concat_block(k_param, C1, C2, C3, n=n, e=e, ids=ids)
    x = jax.random.normal(k_x, (N, C1, H, W), jnp.float32)

    fwd = jax.jit(lambda inp: multi_concat_block_forward(params, inp))
    out = jax.block_until_ready(fwd(x))

    ref = jax.block_until_ready(multi_concat_block_reference(params, x))
    assert out.shape == (N, C3, H, W), out.shape
    max_err = float(jnp.max(jnp.abs(out - ref)))
    assert jnp.allclose(out, ref, atol=1e-4, rtol=1e-4), max_err

    print("KERNEL_OK")
</pallas_src>

<mosaic_0001>
module attributes {stable_mosaic.version = 11 : i64} {
  func.func @kernel(%arg0: i32, %arg1: memref<256x4xf32, #tpu.memory_space<vmem>>, %arg2: memref<4x16xf32, #tpu.memory_space<vmem>>, %arg3: memref<1x16xf32, #tpu.memory_space<vmem>>, %arg4: memref<256x16xf32, #tpu.memory_space<vmem>>) attributes {dimension_semantics = [#tpu.dimension_semantics<parallel>], iteration_bounds = array<i64: 2>, scalar_prefetch = 0 : i64, scratch_operands = 0 : i64, tpu.core_type = #tpu.core_type<tc>, window_params = [{transform_indices = @transform_0, window_bounds = array<i64: 256, 4>}, {pipeline_mode = #tpu.pipeline_mode<synchronous>, transform_indices = @transform_1, window_bounds = array<i64: 4, 16>}, {pipeline_mode = #tpu.pipeline_mode<synchronous>, transform_indices = @transform_2, window_bounds = array<i64: 1, 16>}, {transform_indices = @transform_3, window_bounds = array<i64: 256, 16>}]} {
    %c0 = arith.constant 0 : index
    %c0_0 = arith.constant 0 : index
    %0 = vector.load %arg1[%c0, %c0_0] : memref<256x4xf32, #tpu.memory_space<vmem>>, vector<256x4xf32>
    %c0_1 = arith.constant 0 : index
    %c0_2 = arith.constant 0 : index
    %1 = vector.load %arg2[%c0_1, %c0_2] : memref<4x16xf32, #tpu.memory_space<vmem>>, vector<4x16xf32>
    %cst = arith.constant dense<0.000000e+00> : vector<256x16xf32>
    %2 = tpu.matmul %0, %1, %cst {dimension_numbers = #tpu.dot_dimension_numbers<[1], [0], [0], [1], [0, 0, 1, 1], [], []>} : vector<256x4xf32>, vector<4x16xf32>, vector<256x16xf32> -> vector<256x16xf32>
    %c0_3 = arith.constant 0 : index
    %c0_4 = arith.constant 0 : index
    %3 = vector.load %arg3[%c0_3, %c0_4] : memref<1x16xf32, #tpu.memory_space<vmem>>, vector<1x16xf32>
    %4 = vector.broadcast %3 : vector<1x16xf32> to vector<256x16xf32>
    %5 = arith.addf %2, %4 : vector<256x16xf32>
    %6 = arith.negf %5 : vector<256x16xf32>
    %7 = math.exp %6 : vector<256x16xf32>
    %cst_5 = arith.constant 1.000000e+00 : f32
    %8 = vector.broadcast %cst_5 : f32 to vector<256x16xf32>
    %9 = arith.addf %8, %7 : vector<256x16xf32>
    %10 = arith.divf %8, %9 : vector<256x16xf32>
    %11 = arith.mulf %5, %10 : vector<256x16xf32>
    %c0_6 = arith.constant 0 : index
    %c0_7 = arith.constant 0 : index
    %12 = vector.load %arg4[%c0_6, %c0_7] : memref<256x16xf32, #tpu.memory_space<vmem>>, vector<256x16xf32>
    tpu.vector_store %arg4[%c0_6, %c0_7], %11 {strides = array<i32>} : memref<256x16xf32, #tpu.memory_space<vmem>>, vector<256x16xf32>,
    return
  }
  func.func @transform_0(%arg0: i32) -> (i32, i32) {
    %c0_i32 = arith.constant 0 : i32
    %c0_i32_0 = arith.constant 0 : i32
    return %arg0, %c0_i32 : i32, i32
  }
  func.func @transform_1(%arg0: i32) -> (i32, i32) {
    %c0_i32 = arith.constant 0 : i32
    %c0_i32_0 = arith.constant 0 : i32
    %c0_i32_1 = arith.constant 0 : i32
    return %c0_i32, %c0_i32_0 : i32, i32
  }
  func.func @transform_2(%arg0: i32) -> (i32, i32) {
    %c0_i32 = arith.constant 0 : i32
    %c0_i32_0 = arith.constant 0 : i32
    %c0_i32_1 = arith.constant 0 : i32
    return %c0_i32, %c0_i32_0 : i32, i32
  }
  func.func @transform_3(%arg0: i32) -> (i32, i32) {
    %c0_i32 = arith.constant 0 : i32
    %c0_i32_0 = arith.constant 0 : i32
    return %arg0, %c0_i32 : i32, i32
  }
}

module attributes {stable_mosaic.version = 11 : i64} {
  func.func @_conv3x3_bn_silu_kernel(%arg0: i32, %arg1: memref<1x16x16x8xf32, #tpu.memory_space<vmem>>, %arg2: memref<9x8x8xf32, #tpu.memory_space<vmem>>, %arg3: memref<1x8xf32, #tpu.memory_space<vmem>>, %arg4: memref<1x256x8xf32, #tpu.memory_space<vmem>>, %arg5: memref<18x32x8xf32, #tpu.memory_space<vmem>>) attributes {dimension_semantics = [#tpu.dimension_semantics<parallel>], iteration_bounds = array<i64: 2>, scalar_prefetch = 0 : i64, scratch_operands = 1 : i64, tpu.core_type = #tpu.core_type<tc>, window_params = [{transform_indices = @transform_0, window_bounds = array<i64: 1, 16, 16, 8>}, {pipeline_mode = #tpu.pipeline_mode<synchronous>, transform_indices = @transform_1, window_bounds = array<i64: 9, 8, 8>}, {pipeline_mode = #tpu.pipeline_mode<synchronous>, transform_indices = @transform_2, window_bounds = array<i64: 1, 8>}, {transform_indices = @transform_3, window_bounds = array<i64: 1, 256, 8>}]} {
    %cst = arith.constant 0.000000e+00 : f32
    %0 = vector.broadcast %cst : f32 to vector<18x32x8xf32>
    %c0 = arith.constant 0 : index
    %c0_0 = arith.constant 0 : index
    %c0_1 = arith.constant 0 : index
    %1 = vector.load %arg5[%c0, %c0_0, %c0_1] : memref<18x32x8xf32, #tpu.memory_space<vmem>>, vector<18x32x8xf32>
    tpu.vector_store %arg5[%c0, %c0_0, %c0_1], %0 {strides = array<i32>} : memref<18x32x8xf32, #tpu.memory_space<vmem>>, vector<18x32x8xf32>,
    %c0_2 = arith.constant 0 : index
    %c0_3 = arith.constant 0 : index
    %c0_4 = arith.constant 0 : index
    %c0_5 = arith.constant 0 : index
    %2 = vector.load %arg1[%c0_2, %c0_3, %c0_4, %c0_5] : memref<1x16x16x8xf32, #tpu.memory_space<vmem>>, vector<1x16x16x8xf32>
    %3 = vector.shape_cast %2 : vector<1x16x16x8xf32> to vector<16x16x8xf32>
    %c1 = arith.constant 1 : index
    %c8 = arith.constant 8 : index
    %c0_6 = arith.constant 0 : index
    %4 = vector.load %arg5[%c1, %c8, %c0_6] : memref<18x32x8xf32, #tpu.memory_space<vmem>>, vector<16x16x8xf32>
    tpu.vector_store %arg5[%c1, %c8, %c0_6], %3 {strides = array<i32>} : memref<18x32x8xf32, #tpu.memory_space<vmem>>, vector<16x16x8xf32>,
    %cst_7 = arith.constant 0.000000e+00 : f32
    %5 = vector.broadcast %cst_7 : f32 to vector<256x8xf32>
    %c0_8 = arith.constant 0 : index
    %c7 = arith.constant 7 : index
    %c0_9 = arith.constant 0 : index
    %6 = vector.load %arg5[%c0_8, %c7, %c0_9] : memref<18x32x8xf32, #tpu.memory_space<vmem>>, vector<16x16x8xf32>
    %7 = vector.shape_cast %6 : vector<16x16x8xf32> to vector<256x8xf32>
    %c0_10 = arith.constant 0 : index
    %c0_11 = arith.constant 0 : index
    %c0_12 = arith.constant 0 : index
    %8 = vector.load %arg2[%c0_10, %c0_11, %c0_12] : memref<9x8x8xf32, #tpu.memory_space<vmem>>, vector<1x8x8xf32>
    %9 = vector.shape_cast %8 : vector<1x8x8xf32> to vector<8x8xf32>
    %cst_13 = arith.constant dense<0.000000e+00> : vector<256x8xf32>
    %10 = tpu.matmul %7, %9, %cst_13 {dimension_numbers = #tpu.dot_dimension_numbers<[1], [0], [0], [1], [0, 0, 1, 1], [], []>} : vector<256x8xf32>, vector<8x8xf32>, vector<256x8xf32> -> vector<256x8xf32>
    %11 = arith.addf %5, %10 : vector<256x8xf32>
    %c0_14 = arith.constant 0 : index
    %c8_15 = arith.constant 8 : index
    %c0_16 = arith.constant 0 : index
    %12 = vector.load %arg5[%c0_14, %c8_15, %c0_16] : memref<18x32x8xf32, #tpu.memory_space<vmem>>, vector<16x16x8xf32>
    %13 = vector.shape_cast %12 : vector<16x16x8xf32> to vector<256x8xf32>
    %c1_17 = arith.constant 1 : index
    %c0_18 = arith.constant 0 : index
    %c0_19 = arith.constant 0 : index
    %14 = vector.load %arg2[%c1_17, %c0_18, %c0_19] : memref<9x8x8xf32, #tpu.memory_space<vmem>>, vector<1x8x8xf32>
    %15 = vector.shape_cast %14 : vector<1x8x8xf32> to vector<8x8xf32>
    %cst_20 = arith.constant dense<0.000000e+00> : vector<256x8xf32>
    %16 = tpu.matmul %13, %15, %cst_20 {dimension_numbers = #tpu.dot_dimension_numbers<[1], [0], [0], [1], [0, 0, 1, 1], [], []>} : vector<256x8xf32>, vector<8x8xf32>, vector<256x8xf32> -> vector<256x8xf32>
    %17 = arith.addf %11, %16 : vector<256x8xf32>
    %c0_21 = arith.constant 0 : index
    %c9 = arith.constant 9 : index
    %c0_22 = arith.constant 0 : index
    %18 = vector.load %arg5[%c0_21, %c9, %c0_22] : memref<18x32x8xf32, #tpu.memory_space<vmem>>, vector<16x16x8xf32>
    %19 = vector.shape_cast %18 : vector<16x16x8xf32> to vector<256x8xf32>
    %c2 = arith.constant 2 : index
    %c0_23 = arith.constant 0 : index
    %c0_24 = arith.constant 0 : index
    %20 = vector.load %arg2[%c2, %c0_23, %c0_24] : memref<9x8x8xf32, #tpu.memory_space<vmem>>, vector<1x8x8xf32>
    %21 = vector.shape_cast %20 : vector<1x8x8xf32> to vector<8x8xf32>
    %cst_25 = arith.constant dense<0.000000e+00> : vector<256x8xf32>
    %22 = tpu.matmul %19, %21, %cst_25 {dimension_numbers = #tpu.dot_dimension_numbers<[1], [0], [0], [1], [0, 0, 1, 1], [], []>} : vector<256x8xf32>, vector<8x8xf32>, vector<256x8xf32> -> vector<256x8xf32>
    %23 = arith.addf %17, %22 : vector<256x8xf32>
    %c1_26 = arith.constant 1 : index
    %c7_27 = arith.constant 7 : index
    %c0_28 = arith.constant 0 : index
    %24 = vector.load %arg5[%c1_26, %c7_27, %c0_28] : memref<18x32x8xf32, #tpu.memory_space<vmem>>, vector<16x16x8xf32>
    %25 = vector.shape_cast %24 : vector<16x16x8xf32> to vector<256x8xf32>
    %c3 = arith.constant 3 : index
    %c0_29 = arith.constant 0 : index
    %c0_30 = arith.constant 0 : index
    %26 = vector.load %arg2[%c3, %c0_29, %c0_30] : memref<9x8x8xf32, #tpu.memory_space<vmem>>, vector<1x8x8xf32>
    %27 = vector.shape_cast %26 : vector<1x8x8xf32> to vector<8x8xf32>
    %cst_31 = arith.constant dense<0.000000e+00> : vector<256x8xf32>
    %28 = tpu.matmul %25, %27, %cst_31 {dimension_numbers = #tpu.dot_dimension_numbers<[1], [0], [0], [1], [0, 0, 1, 1], [], []>} : vector<256x8xf32>, vector<8x8xf32>, vector<256x8xf32> -> vector<256x8xf32>
    %29 = arith.addf %23, %28 : vector<256x8xf32>
    %c1_32 = arith.constant 1 : index
    %c8_33 = arith.constant 8 : index
    %c0_34 = arith.constant 0 : index
    %30 = vector.load %arg5[%c1_32, %c8_33, %c0_34] : memref<18x32x8xf32, #tpu.memory_space<vmem>>, vector<16x16x8xf32>
    %31 = vector.shape_cast %30 : vector<16x16x8xf32> to vector<256x8xf32>
    %c4 = arith.constant 4 : index
    %c0_35 = arith.constant 0 : index
    %c0_36 = arith.constant 0 : index
    %32 = vector.load %arg2[%c4, %c0_35, %c0_36] : memref<9x8x8xf32, #tpu.memory_space<vmem>>, vector<1x8x8xf32>
    %33 = vector.shape_cast %32 : vector<1x8x8xf32> to vector<8x8xf32>
    %cst_37 = arith.constant dense<0.000000e+00> : vector<256x8xf32>
    %34 = tpu.matmul %31, %33, %cst_37 {dimension_numbers = #tpu.dot_dimension_numbers<[1], [0], [0], [1], [0, 0, 1, 1], [], []>} : vector<256x8xf32>, vector<8x8xf32>, vector<256x8xf32> -> vector<256x8xf32>
    %35 = arith.addf %29, %34 : vector<256x8xf32>
    %c1_38 = arith.constant 1 : index
    %c9_39 = arith.constant 9 : index
    %c0_40 = arith.constant 0 : index
    %36 = vector.load %arg5[%c1_38, %c9_39, %c0_40] : memref<18x32x8xf32, #tpu.memory_space<vmem>>, vector<16x16x8xf32>
    %37 = vector.shape_cast %36 : vector<16x16x8xf32> to vector<256x8xf32>
    %c5 = arith.constant 5 : index
    %c0_41 = arith.constant 0 : index
    %c0_42 = arith.constant 0 : index
    %38 = vector.load %arg2[%c5, %c0_41, %c0_42] : memref<9x8x8xf32, #tpu.memory_space<vmem>>, vector<1x8x8xf32>
    %39 = vector.shape_cast %38 : vector<1x8x8xf32> to vector<8x8xf32>
    %cst_43 = arith.constant dense<0.000000e+00> : vector<256x8xf32>
    %40 = tpu.matmul %37, %39, %cst_43 {dimension_numbers = #tpu.dot_dimension_numbers<[1], [0], [0], [1], [0, 0, 1, 1], [], []>} : vector<256x8xf32>, vector<8x8xf32>, vector<256x8xf32> -> vector<256x8xf32>
    %41 = arith.addf %35, %40 : vector<256x8xf32>
    %c2_44 = arith.constant 2 : index
    %c7_45 = arith.constant 7 : index
    %c0_46 = arith.constant 0 : index
    %42 = vector.load %arg5[%c2_44, %c7_45, %c0_46] : memref<18x32x8xf32, #tpu.memory_space<vmem>>, vector<16x16x8xf32>
    %43 = vector.shape_cast %42 : vector<16x16x8xf32> to vector<256x8xf32>
    %c6 = arith.constant 6 : index
    %c0_47 = arith.constant 0 : index
    %c0_48 = arith.constant 0 : index
    %44 = vector.load %arg2[%c6, %c0_47, %c0_48] : memref<9x8x8xf32, #tpu.memory_space<vmem>>, vector<1x8x8xf32>
    %45 = vector.shape_cast %44 : vector<1x8x8xf32> to vector<8x8xf32>
    %cst_49 = arith.constant dense<0.000000e+00> : vector<256x8xf32>
    %46 = tpu.matmul %43, %45, %cst_49 {dimension_numbers = #tpu.dot_dimension_numbers<[1], [0], [0], [1], [0, 0, 1, 1], [], []>} : vector<256x8xf32>, vector<8x8xf32>, vector<256x8xf32> -> vector<256x8xf32>
    %47 = arith.addf %41, %46 : vector<256x8xf32>
    %c2_50 = arith.constant 2 : index
    %c8_51 = arith.constant 8 : index
    %c0_52 = arith.constant 0 : index
    %48 = vector.load %arg5[%c2_50, %c8_51, %c0_52] : memref<18x32x8xf32, #tpu.memory_space<vmem>>, vector<16x16x8xf32>
    %49 = vector.shape_cast %48 : vector<16x16x8xf32> to vector<256x8xf32>
    %c7_53 = arith.constant 7 : index
    %c0_54 = arith.constant 0 : index
    %c0_55 = arith.constant 0 : index
    %50 = vector.load %arg2[%c7_53, %c0_54, %c0_55] : memref<9x8x8xf32, #tpu.memory_space<vmem>>, vector<1x8x8xf32>
    %51 = vector.shape_cast %50 : vector<1x8x8xf32> to vector<8x8xf32>
    %cst_56 = arith.constant dense<0.000000e+00> : vector<256x8xf32>
    %52 = tpu.matmul %49, %51, %cst_56 {dimension_numbers = #tpu.dot_dimension_numbers<[1], [0], [0], [1], [0, 0, 1, 1], [], []>} : vector<256x8xf32>, vector<8x8xf32>, vector<256x8xf32> -> vector<256x8xf32>
    %53 = arith.addf %47, %52 : vector<256x8xf32>
    %c2_57 = arith.constant 2 : index
    %c9_58 = arith.constant 9 : index
    %c0_59 = arith.constant 0 : index
    %54 = vector.load %arg5[%c2_57, %c9_58, %c0_59] : memref<18x32x8xf32, #tpu.memory_space<vmem>>, vector<16x16x8xf32>
    %55 = vector.shape_cast %54 : vector<16x16x8xf32> to vector<256x8xf32>
    %c8_60 = arith.constant 8 : index
    %c0_61 = arith.constant 0 : index
    %c0_62 = arith.constant 0 : index
    %56 = vector.load %arg2[%c8_60, %c0_61, %c0_62] : memref<9x8x8xf32, #tpu.memory_space<vmem>>, vector<1x8x8xf32>
    %57 = vector.shape_cast %56 : vector<1x8x8xf32> to vector<8x8xf32>
    %cst_63 = arith.constant dense<0.000000e+00> : vector<256x8xf32>
    %58 = tpu.matmul %55, %57, %cst_63 {dimension_numbers = #tpu.dot_dimension_numbers<[1], [0], [0], [1], [0, 0, 1, 1], [], []>} : vector<256x8xf32>, vector<8x8xf32>, vector<256x8xf32> -> vector<256x8xf32>
    %59 = arith.addf %53, %58 : vector<256x8xf32>
    %c0_64 = arith.constant 0 : index
    %c0_65 = arith.constant 0 : index
    %60 = vector.load %arg3[%c0_64, %c0_65] : memref<1x8xf32, #tpu.memory_space<vmem>>, vector<1x8xf32>
    %61 = vector.broadcast %60 : vector<1x8xf32> to vector<256x8xf32>
    %62 = arith.addf %59, %61 : vector<256x8xf32>
    %63 = arith.negf %62 : vector<256x8xf32>
    %64 = math.exp %63 : vector<256x8xf32>
    %cst_66 = arith.constant 1.000000e+00 : f32
    %65 = vector.broadcast %cst_66 : f32 to vector<256x8xf32>
    %66 = arith.addf %65, %64 : vector<256x8xf32>
    %67 = arith.divf %65, %66 : vector<256x8xf32>
    %68 = arith.mulf %62, %67 : vector<256x8xf32>
    %c0_67 = arith.constant 0 : index
    %c0_68 = arith.constant 0 : index
    %c0_69 = arith.constant 0 : index
    %69 = vector.load %arg4[%c0_67, %c0_68, %c0_69] : memref<1x256x8xf32, #tpu.memory_space<vmem>>, vector<1x256x8xf32>
    %70 = vector.shape_cast %69 : vector<1x256x8xf32> to vector<256x8xf32>
    %71 = vector.shape_cast %68 : vector<256x8xf32> to vector<1x256x8xf32>
    tpu.vector_store %arg4[%c0_67, %c0_68, %c0_69], %71 {strides = array<i32>} : memref<1x256x8xf32, #tpu.memory_space<vmem>>, vector<1x256x8xf32>,
    return
  }
  func.func @transform_0(%arg0: i32) -> (i32, i32, i32, i32) {
    %c0_i32 = arith.constant 0 : i32
    %c0_i32_0 = arith.constant 0 : i32
    %c0_i32_1 = arith.constant 0 : i32
    %c0_i32_2 = arith.constant 0 : i32
    return %arg0, %c0_i32, %c0_i32_0, %c0_i32_1 : i32, i32, i32, i32
  }
  func.func @transform_1(%arg0: i32) -> (i32, i32, i32) {
    %c0_i32 = arith.constant 0 : i32
    %c0_i32_0 = arith.constant 0 : i32
    %c0_i32_1 = arith.constant 0 : i32
    %c0_i32_2 = arith.constant 0 : i32
    return %c0_i32, %c0_i32_0, %c0_i32_1 : i32, i32, i32
  }
  func.func @transform_2(%arg0: i32) -> (i32, i32) {
    %c0_i32 = arith.constant 0 : i32
    %c0_i32_0 = arith.constant 0 : i32
    %c0_i32_1 = arith.constant 0 : i32
    return %c0_i32, %c0_i32_0 : i32, i32
  }
  func.func @transform_3(%arg0: i32) -> (i32, i32, i32) {
    %c0_i32 = arith.constant 0 : i32
    %c0_i32_0 = arith.constant 0 : i32
    %c0_i32_1 = arith.constant 0 : i32
    return %arg0, %c0_i32, %c0_i32_0 : i32, i32, i32
  }
}

module attributes {stable_mosaic.version = 11 : i64} {
  func.func @kernel(%arg0: i32, %arg1: memref<256x8xf32, #tpu.memory_space<vmem>>, %arg2: memref<256x8xf32, #tpu.memory_space<vmem>>, %arg3: memref<256x8xf32, #tpu.memory_space<vmem>>, %arg4: memref<256x8xf32, #tpu.memory_space<vmem>>, %arg5: memref<8x16xf32, #tpu.memory_space<vmem>>, %arg6: memref<8x16xf32, #tpu.memory_space<vmem>>, %arg7: memref<8x16xf32, #tpu.memory_space<vmem>>, %arg8: memref<8x16xf32, #tpu.memory_space<vmem>>, %arg9: memref<1x16xf32, #tpu.memory_space<vmem>>, %arg10: memref<256x16xf32, #tpu.memory_space<vmem>>) attributes {dimension_semantics = [#tpu.dimension_semantics<parallel>], iteration_bounds = array<i64: 2>, scalar_prefetch = 0 : i64, scratch_operands = 0 : i64, tpu.core_type = #tpu.core_type<tc>, window_params = [{transform_indices = @transform_0, window_bounds = array<i64: 256, 8>}, {transform_indices = @transform_1, window_bounds = array<i64: 256, 8>}, {transform_indices = @transform_2, window_bounds = array<i64: 256, 8>}, {transform_indices = @transform_3, window_bounds = array<i64: 256, 8>}, {pipeline_mode = #tpu.pipeline_mode<synchronous>, transform_indices = @transform_4, window_bounds = array<i64: 8, 16>}, {pipeline_mode = #tpu.pipeline_mode<synchronous>, transform_indices = @transform_5, window_bounds = array<i64: 8, 16>}, {pipeline_mode = #tpu.pipeline_mode<synchronous>, transform_indices = @transform_6, window_bounds = array<i64: 8, 16>}, {pipeline_mode = #tpu.pipeline_mode<synchronous>, transform_indices = @transform_7, window_bounds = array<i64: 8, 16>}, {pipeline_mode = #tpu.pipeline_mode<synchronous>, transform_indices = @transform_8, window_bounds = array<i64: 1, 16>}, {transform_indices = @transform_9, window_bounds = array<i64: 256, 16>}]} {
    %c0 = arith.constant 0 : index
    %c0_0 = arith.constant 0 : index
    %0 = vector.load %arg1[%c0, %c0_0] : memref<256x8xf32, #tpu.memory_space<vmem>>, vector<256x8xf32>
    %c0_1 = arith.constant 0 : index
    %c0_2 = arith.constant 0 : index
    %1 = vector.load %arg5[%c0_1, %c0_2] : memref<8x16xf32, #tpu.memory_space<vmem>>, vector<8x16xf32>
    %cst = arith.constant dense<0.000000e+00> : vector<256x16xf32>
    %2 = tpu.matmul %0, %1, %cst {dimension_numbers = #tpu.dot_dimension_numbers<[1], [0], [0], [1], [0, 0, 1, 1], [], []>} : vector<256x8xf32>, vector<8x16xf32>, vector<256x16xf32> -> vector<256x16xf32>
    %c0_3 = arith.constant 0 : index
    %c0_4 = arith.constant 0 : index
    %3 = vector.load %arg2[%c0_3, %c0_4] : memref<256x8xf32, #tpu.memory_space<vmem>>, vector<256x8xf32>
    %c0_5 = arith.constant 0 : index
    %c0_6 = arith.constant 0 : index
    %4 = vector.load %arg6[%c0_5, %c0_6] : memref<8x16xf32, #tpu.memory_space<vmem>>, vector<8x16xf32>
    %cst_7 = arith.constant dense<0.000000e+00> : vector<256x16xf32>
    %5 = tpu.matmul %3, %4, %cst_7 {dimension_numbers = #tpu.dot_dimension_numbers<[1], [0], [0], [1], [0, 0, 1, 1], [], []>} : vector<256x8xf32>, vector<8x16xf32>, vector<256x16xf32> -> vector<256x16xf32>
    %6 = arith.addf %2, %5 : vector<256x16xf32>
    %c0_8 = arith.constant 0 : index
    %c0_9 = arith.constant 0 : index
    %7 = vector.load %arg3[%c0_8, %c0_9] : memref<256x8xf32, #tpu.memory_space<vmem>>, vector<256x8xf32>
    %c0_10 = arith.constant 0 : index
    %c0_11 = arith.constant 0 : index
    %8 = vector.load %arg7[%c0_10, %c0_11] : memref<8x16xf32, #tpu.memory_space<vmem>>, vector<8x16xf32>
    %cst_12 = arith.constant dense<0.000000e+00> : vector<256x16xf32>
    %9 = tpu.matmul %7, %8, %cst_12 {dimension_numbers = #tpu.dot_dimension_numbers<[1], [0], [0], [1], [0, 0, 1, 1], [], []>} : vector<256x8xf32>, vector<8x16xf32>, vector<256x16xf32> -> vector<256x16xf32>
    %10 = arith.addf %6, %9 : vector<256x16xf32>
    %c0_13 = arith.constant 0 : index
    %c0_14 = arith.constant 0 : index
    %11 = vector.load %arg4[%c0_13, %c0_14] : memref<256x8xf32, #tpu.memory_space<vmem>>, vector<256x8xf32>
    %c0_15 = arith.constant 0 : index
    %c0_16 = arith.constant 0 : index
    %12 = vector.load %arg8[%c0_15, %c0_16] : memref<8x16xf32, #tpu.memory_space<vmem>>, vector<8x16xf32>
    %cst_17 = arith.constant dense<0.000000e+00> : vector<256x16xf32>
    %13 = tpu.matmul %11, %12, %cst_17 {dimension_numbers = #tpu.dot_dimension_numbers<[1], [0], [0], [1], [0, 0, 1, 1], [], []>} : vector<256x8xf32>, vector<8x16xf32>, vector<256x16xf32> -> vector<256x16xf32>
    %14 = arith.addf %10, %13 : vector<256x16xf32>
    %c0_18 = arith.constant 0 : index
    %c0_19 = arith.constant 0 : index
    %15 = vector.load %arg9[%c0_18, %c0_19] : memref<1x16xf32, #tpu.memory_space<vmem>>, vector<1x16xf32>
    %16 = vector.broadcast %15 : vector<1x16xf32> to vector<256x16xf32>
    %17 = arith.addf %14, %16 : vector<256x16xf32>
    %18 = arith.negf %17 : vector<256x16xf32>
    %19 = math.exp %18 : vector<256x16xf32>
    %cst_20 = arith.constant 1.000000e+00 : f32
    %20 = vector.broadcast %cst_20 : f32 to vector<256x16xf32>
    %21 = arith.addf %20, %19 : vector<256x16xf32>
    %22 = arith.divf %20, %21 : vector<256x16xf32>
    %23 = arith.mulf %17, %22 : vector<256x16xf32>
    %c0_21 = arith.constant 0 : index
    %c0_22 = arith.constant 0 : index
    %24 = vector.load %arg10[%c0_21, %c0_22] : memref<256x16xf32, #tpu.memory_space<vmem>>, vector<256x16xf32>
    tpu.vector_store %arg10[%c0_21, %c0_22], %23 {strides = array<i32>} : memref<256x16xf32, #tpu.memory_space<vmem>>, vector<256x16xf32>,
    return
  }
  func.func @transform_0(%arg0: i32) -> (i32, i32) {
    %c0_i32 = arith.constant 0 : i32
    %c0_i32_0 = arith.constant 0 : i32
    return %arg0, %c0_i32 : i32, i32
  }
  func.func @transform_1(%arg0: i32) -> (i32, i32) {
    %c0_i32 = arith.constant 0 : i32
    %c0_i32_0 = arith.constant 0 : i32
    return %arg0, %c0_i32 : i32, i32
  }
  func.func @transform_2(%arg0: i32) -> (i32, i32) {
    %c0_i32 = arith.constant 0 : i32
    %c0_i32_0 = arith.constant 0 : i32
    return %arg0, %c0_i32 : i32, i32
  }
  func.func @transform_3(%arg0: i32) -> (i32, i32) {
    %c0_i32 = arith.constant 0 : i32
    %c0_i32_0 = arith.constant 0 : i32
    return %arg0, %c0_i32 : i32, i32
  }
  func.func @transform_4(%arg0: i32) -> (i32, i32) {
    %c0_i32 = arith.constant 0 : i32
    %c0_i32_0 = arith.constant 0 : i32
    %c0_i32_1 = arith.constant 0 : i32
    return %c0_i32, %c0_i32_0 : i32, i32
  }
  func.func @transform_5(%arg0: i32) -> (i32, i32) {
    %c0_i32 = arith.constant 0 : i32
    %c0_i32_0 = arith.constant 0 : i32
    %c0_i32_1 = arith.constant 0 : i32
    return %c0_i32, %c0_i32_0 : i32, i32
  }
  func.func @transform_6(%arg0: i32) -> (i32, i32) {
    %c0_i32 = arith.constant 0 : i32
    %c0_i32_0 = arith.constant 0 : i32
    %c0_i32_1 = arith.constant 0 : i32
    return %c0_i32, %c0_i32_0 : i32, i32
  }
  func.func @transform_7(%arg0: i32) -> (i32, i32) {
    %c0_i32 = arith.constant 0 : i32
    %c0_i32_0 = arith.constant 0 : i32
    %c0_i32_1 = arith.constant 0 : i32
    return %c0_i32, %c0_i32_0 : i32, i32
  }
  func.func @transform_8(%arg0: i32) -> (i32, i32) {
    %c0_i32 = arith.constant 0 : i32
    %c0_i32_0 = arith.constant 0 : i32
    %c0_i32_1 = arith.constant 0 : i32
    return %c0_i32, %c0_i32_0 : i32, i32
  }
  func.func @transform_9(%arg0: i32) -> (i32, i32) {
    %c0_i32 = arith.constant 0 : i32
    %c0_i32_0 = arith.constant 0 : i32
    return %arg0, %c0_i32 : i32, i32
  }
}

</mosaic_0001>

<llo_original>
// kernel: _lambda_.6
$region0: #{_lambda_.6}
  #allocation0 [shape = 'u32[]', space=smem, size = 0x4, offset = 0x4, fixed_abs, tag = 'smem constant byte address 0x4 - core index']
  #allocation1 [shape = 'u32[144,128]{1,0:T(1,128)}', space=vmem, size = 0x12000, scoped, tag = 'internal scratch']
  %s0 = inlined_call_operand.vmem [shape: f32[512,4], index: 0, kind: input, shape index: {}]
  %s1 = inlined_call_operand.vmem [shape: f32[4,16], index: 1, kind: input, shape index: {}]
  %s2 = inlined_call_operand.vmem [shape: f32[1,16], index: 2, kind: input, shape index: {}]
  %s3 = inlined_call_operand.vmem [shape: f32[512,16], index: 3, kind: output, shape index: {}]
  %s4 = sld [smem:[#allocation0]]
  $region45: #{_lambda_.6} parent=0
    _
  %s6 = ssub.s32 1, %s4
  %s7 = scalar_select 0, %s6, %s4
  loop: start=0, step=1, limit=4
  $region2: #{_lambda_.6} parent=0 // loop_pre_header
    _
  $region3: #{_lambda_.6} parent=0 // loop_header
    %s9 = sphi 0, %s13
    %p10 = scmp.ge.s32.totalorder %s9, 4
    %s19 = sphi 0, %s21
    %s22 = sphi 0, %s19
    %s23 = sphi 0, %s22
    %s39 = sphi 0, %s23
    %s43 = sphi 0, %s43
    %s45 = sphi 0, %s43
    %s46 = sphi 0, %s45
    %s60 = sphi 0, %s46
    %s64 = sphi 0, %s64
    %s66 = sphi 0, %s64
    %s67 = sphi 0, %s66
    %s81 = sphi 0, %s67
    %s87 = sphi 0, %s89
    %s90 = sphi 0, %s87
    %s91 = sphi 0, %s90
    %s107 = sphi 0, %s91
  $region4: #{_lambda_.6} parent=0 // loop_header_branch
    %12 = sbr.rel (%p10) target = $region8
  $region5: #{_lambda_.6} parent=0 // loop_body
    %s14 = ssub.s32 %s9, 1
    %s15 = ssub.s32 %s9, 2
    %s16 = sadd.s32 %s9, 1
    %s17 = ssub.s32 %s9, %s16
    %p18 = scmp.eq.s32.totalorder %s17, 0
    %s20 = sadd.s32 %s19, 1
    %s21 = scalar_select %p18, %s19, %s20
    %p24 = pneg %p18
    %p25 = scmp.eq.s32.totalorder %s9, 1
    %p26 = por %p24, %p25
    %p27 = scmp.ne.s32.totalorder %s19, %s22
    %p28 = scmp.eq.s32.totalorder %s9, 0
    %p29 = por %p27, %p28
    %p30 = scmp.ne.s32.totalorder %s19, %s22
    %p31 = scmp.eq.s32.totalorder %s14, 1
    %p32 = por %p30, %p31
    %p33 = scmp.ne.s32.totalorder %s22, %s23
    %p34 = scmp.eq.s32.totalorder %s14, 0
    %p35 = por %p33, %p34
    %p36 = scmp.ne.s32.totalorder %s22, %s23
    %p37 = scmp.eq.s32.totalorder %s15, 1
    %p38 = por %p36, %p37
    %p40 = scmp.ne.s32.totalorder %s23, %s39
    %p41 = scmp.eq.s32.totalorder %s15, 0
    %p42 = por %p40, %p41
    %s44 = sadd.s32 %s43, 1
    %p47 = scmp.eq.s32.totalorder %s9, 1
    %p48 = scmp.ne.s32.totalorder %s43, %s45
    %p49 = scmp.eq.s32.totalorder %s9, 0
    %p50 = por %p48, %p49
    %p51 = scmp.ne.s32.totalorder %s43, %s45
    %p52 = scmp.eq.s32.totalorder %s14, 1
    %p53 = por %p51, %p52
    %p54 = scmp.ne.s32.totalorder %s45, %s46
    %p55 = scmp.eq.s32.totalorder %s14, 0
    %p56 = por %p54, %p55
    %p57 = scmp.ne.s32.totalorder %s45, %s46
    %p58 = scmp.eq.s32.totalorder %s15, 1
    %p59 = por %p57, %p58
    %p61 = scmp.ne.s32.totalorder %s46, %s60
    %p62 = scmp.eq.s32.totalorder %s15, 0
    %p63 = por %p61, %p62
    %s65 = sadd.s32 %s64, 1
    %p68 = scmp.eq.s32.totalorder %s9, 1
    %p69 = scmp.ne.s32.totalorder %s64, %s66
    %p70 = scmp.eq.s32.totalorder %s9, 0
    %p71 = por %p69, %p70
    %p72 = scmp.ne.s32.totalorder %s64, %s66
    %p73 = scmp.eq.s32.totalorder %s14, 1
    %p74 = por %p72, %p73
    %p75 = scmp.ne.s32.totalorder %s66, %s67
    %p76 = scmp.eq.s32.totalorder %s14, 0
    %p77 = por %p75, %p76
    %p78 = scmp.ne.s32.totalorder %s66, %s67
    %p79 = scmp.eq.s32.totalorder %s15, 1
    %p80 = por %p78, %p79
    %p82 = scmp.ne.s32.totalorder %s67, %s81
    %p83 = scmp.eq.s32.totalorder %s15, 0
    %p84 = por %p82, %p83
    %s85 = ssub.s32 %s9, %s16
    %p86 = scmp.eq.s32.totalorder %s85, 0
    %s88 = sadd.s32 %s87, 1
    %s89 = scalar_select %p86, %s87, %s88
    %p92 = pneg %p86
    %p93 = scmp.eq.s32.totalorder %s9, 1
    %p94 = por %p92, %p93
    %p95 = scmp.ne.s32.totalorder %s87, %s90
    %p96 = scmp.eq.s32.totalorder %s9, 0
    %p97 = por %p95, %p96
    %p98 = scmp.ne.s32.totalorder %s87, %s90
    %p99 = scmp.eq.s32.totalorder %s14, 1
    %p100 = por %p98, %p99
    %p101 = scmp.ne.s32.totalorder %s90, %s91
    %p102 = scmp.eq.s32.totalorder %s14, 0
    %p103 = por %p101, %p102
    %p104 = scmp.ne.s32.totalorder %s90, %s91
    %p105 = scmp.eq.s32.totalorder %s15, 1
    %p106 = por %p104, %p105
    %p108 = scmp.ne.s32.totalorder %s91, %s107
    %p109 = scmp.eq.s32.totalorder %s15, 0
    %p110 = por %p108, %p109
    %p111 = scmp.le.s32.totalorder 1, %s9
    %p112 = scmp.lt.s32.totalorder %s9, 3
    %p113 = pnand %p111, %p112
    %p114 = pneg %p113
    // Predicated region
    $region9: #{_lambda_.6} parent=5 // pred_check
      _
    $region10: #{_lambda_.6} parent=5 // pred_check_branch
      %116 = sbr.rel (%p113) target = $region12
    $region11: #{_lambda_.6} parent=5 // pred_region
      %s117 = ssub.s32 %s9, 1
      // Predicated region
      $region13: #{_lambda_.6} parent=11 // pred_check
        %p118 = pneg %p56
      $region14: #{_lambda_.6} parent=11 // pred_check_branch
        %120 = sbr.rel (%p118) target = $region16
      $region15: #{_lambda_.6} parent=11 // pred_region
        _
      $region16: #{_lambda_.6} parent=11 // pred_fallthru
        _
      // Predicated region
      $region17: #{_lambda_.6} parent=11 // pred_check
        %p121 = pneg %p77
      $region18: #{_lambda_.6} parent=11 // pred_check_branch
        %123 = sbr.rel (%p121) target = $region20
      $region19: #{_lambda_.6} parent=11 // pred_region
        _
      $region20: #{_lambda_.6} parent=11 // pred_fallthru
        _
    $region12: #{_lambda_.6} parent=5 // pred_fallthru
      _
    %p124 = scmp.lt.s32.totalorder %s9, 2
    // Predicated region
    $region21: #{_lambda_.6} parent=5 // pred_check
      %p125 = pneg %p124
    $region22: #{_lambda_.6} parent=5 // pred_check_branch
      %127 = sbr.rel (%p125) target = $region24
    $region23: #{_lambda_.6} parent=5 // pred_region
      // Predicated region
      $region25: #{_lambda_.6} parent=23 // pred_check
        %p128 = pneg %p29
      $region26: #{_lambda_.6} parent=23 // pred_check_branch
        %130 = sbr.rel (%p128) target = $region28
      $region27: #{_lambda_.6} parent=23 // pred_region
        %s131 = smul.u32 32, %s9
        %p132 = scmp.lt.s32.totalorder %s131, 63
        %s133 = scalar_select %p132, %s131, 63
        %s134 = smul.addr %s133, 8
        %s135 = scalar_lea.vmem %s0, %s134
        %s136 = smul.u32 32, %s9
      $region28: #{_lambda_.6} parent=23 // pred_fallthru
        _
    $region24: #{_lambda_.6} parent=5 // pred_fallthru
      _
    %p137 = scmp.le.s32.totalorder 1, %s9
    %p138 = scmp.lt.s32.totalorder %s9, 3
    %p139 = pnand %p137, %p138
    %p140 = pneg %p139
    // Predicated region
    $region29: #{_lambda_.6} parent=5 // pred_check
      _
    $region30: #{_lambda_.6} parent=5 // pred_check_branch
      %142 = sbr.rel (%p139) target = $region32
    $region31: #{_lambda_.6} parent=5 // pred_region
      %s143 = ssub.s32 %s9, 1
      %s144 = smul.u32 32, %s14
      %p145 = scmp.lt.s32.totalorder %s144, 63
      %s146 = scalar_select %p145, %s144, 63
      %s147 = smul.addr %s146, 8
      %s148 = scalar_lea.vmem %s0, %s147
      %p149 = pneg %p35
      %p150 = pneg %p32
      %p151 = pneg %p56
      %p152 = pneg %p53
      %p153 = pneg %p77
      %p154 = pneg %p74
      %p155 = pneg %p103
      %p156 = pneg %p100
      %s157 = smul.u32 32, %s14
      %p158 = scmp.lt.s32.totalorder %s157, 63
      %s159 = scalar_select %p158, %s157, 63
      %s160 = smul.addr %s159, 8
      %s161 = scalar_lea.vmem %s3, %s160
      %s162 = smul.u32 32, %s14
      %p163 = scmp.lt.s32.totalorder %s162, 63
      %s164 = scalar_select %p163, %s162, 63
      %s165 = smul.addr %s164, 8
      %s166 = scalar_lea.vmem %s0, %s165
      %s167 = smul.u32 32, %s14
      %s168 = smul.u32 32, %s14
      %p169 = scmp.lt.s32.totalorder %s168, 63
      %s170 = scalar_select %p169, %s168, 63
      %s171 = smul.addr %s170, 8
      %s172 = scalar_lea.vmem %s3, %s171
      %s173 = smul.u32 32, %s14
      %v174 = vld [vmem:[%s166] sm:$0xff]
      %v175 = vld [vmem:[%s166 + $0x8] sm:$0xff]
      %v176 = vld [vmem:[%s166 + $0x10] sm:$0xff]
      %v177 = vld [vmem:[%s166 + $0x18] sm:$0xff]
      %v178 = vld [vmem:[%s166 + $0x20] sm:$0xff]
      %v179 = vld [vmem:[%s166 + $0x28] sm:$0xff]
      %v180 = vld [vmem:[%s166 + $0x30] sm:$0xff]
      %v181 = vld [vmem:[%s166 + $0x38] sm:$0xff]
      %v182 = vld [vmem:[%s166 + $0x40] sm:$0xff]
      %v183 = vld [vmem:[%s166 + $0x48] sm:$0xff]
      %v184 = vld [vmem:[%s166 + $0x50] sm:$0xff]
      %v185 = vld [vmem:[%s166 + $0x58] sm:$0xff]
      %v186 = vld [vmem:[%s166 + $0x60] sm:$0xff]
      %v187 = vld [vmem:[%s166 + $0x68] sm:$0xff]
      %v188 = vld [vmem:[%s166 + $0x70] sm:$0xff]
      %v189 = vld [vmem:[%s166 + $0x78] sm:$0xff]
      %v190 = vld [vmem:[%s166 + $0x80] sm:$0xff]
      %v191 = vld [vmem:[%s166 + $0x88] sm:$0xff]
      %v192 = vld [vmem:[%s166 + $0x90] sm:$0xff]
      %v193 = vld [vmem:[%s166 + $0x98] sm:$0xff]
      %v194 = vld [vmem:[%s166 + $0xa0] sm:$0xff]
      %v195 = vld [vmem:[%s166 + $0xa8] sm:$0xff]
      %v196 = vld [vmem:[%s166 + $0xb0] sm:$0xff]
      %v197 = vld [vmem:[%s166 + $0xb8] sm:$0xff]
      %v198 = vld [vmem:[%s166 + $0xc0] sm:$0xff]
      %v199 = vld [vmem:[%s166 + $0xc8] sm:$0xff]
      %v200 = vld [vmem:[%s166 + $0xd0] sm:$0xff]
      %v201 = vld [vmem:[%s166 + $0xd8] sm:$0xff]
      %v202 = vld [vmem:[%s166 + $0xe0] sm:$0xff]
      %v203 = vld [vmem:[%s166 + $0xe8] sm:$0xff]
      %v204 = vld [vmem:[%s166 + $0xf0] sm:$0xff]
      %v205 = vld [vmem:[%s166 + $0xf8] sm:$0xff]
      %v206 = vld [vmem:[%s1] sm:$0xf]
      %v207 = vld [vmem:[%s2] sm:$0x1]
      %v209 = vlaneseq
      %v210 = vshrl.u32 %v209, 7
      %v211 = vsub.s32 0, %v210
      %v212 = vrot.slane %v207, %v211
      %vm214 = vcmask 31744
      %v216 = vsel %vm214, %v174, 0
      %v219 = vsel %vm214, %v175, 0
      %v222 = vsel %vm214, %v176, 0
      %v225 = vsel %vm214, %v177, 0
      %v228 = vsel %vm214, %v178, 0
      %v231 = vsel %vm214, %v179, 0
      %v234 = vsel %vm214, %v180, 0
      %v237 = vsel %vm214, %v181, 0
      %v240 = vsel %vm214, %v182, 0
      %v243 = vsel %vm214, %v183, 0
      %v246 = vsel %vm214, %v184, 0
      %v249 = vsel %vm214, %v185, 0
      %v252 = vsel %vm214, %v186, 0
      %v255 = vsel %vm214, %v187, 0
      %v258 = vsel %vm214, %v188, 0
      %v261 = vsel %vm214, %v189, 0
      %v264 = vsel %vm214, %v190, 0
      %v267 = vsel %vm214, %v191, 0
      %v270 = vsel %vm214, %v192, 0
      %v273 = vsel %vm214, %v193, 0
      %v276 = vsel %vm214, %v194, 0
      %v279 = vsel %vm214, %v195, 0
      %v282 = vsel %vm214, %v196, 0
      %v285 = vsel %vm214, %v197, 0
      %v288 = vsel %vm214, %v198, 0
      %v291 = vsel %vm214, %v199, 0
      %v294 = vsel %vm214, %v200, 0
      %v297 = vsel %vm214, %v201, 0
      %v300 = vsel %vm214, %v202, 0
      %v303 = vsel %vm214, %v203, 0
      %v306 = vsel %vm214, %v204, 0
      %v309 = vsel %vm214, %v205, 0
      %vm311 = vcmask 1043456
      %v313 = vsel %vm311, %v206, 0
      %315 = vmatprep.subr.mxu0 0.0
      %316 = vmatpush1.msra.mxu0 0.0
      %317 = vmatprep.subr.mxu0 0.0
      %318 = vmatpush1.msra.mxu0 0.0
      %319 = vmatprep.subr.mxu0 0.0
      %320 = vmatpush1.msra.mxu0 0.0
      %321 = vmatprep.subr.mxu0 0.0
      %322 = vmatpush1.msra.mxu0 0.0
      %323 = vmatprep.subr.mxu0 0.0
      %324 = vmatpush1.msra.mxu0 0.0
      %325 = vmatprep.subr.mxu0 0.0
      %326 = vmatpush1.msra.mxu0 0.0
      %327 = vmatprep.subr.mxu0 0.0
      %328 = vmatpush1.msra.mxu0 0.0
      %329 = vmatprep.subr.mxu0 0.0
      %330 = vmatpush1.msra.mxu0 0.0
      %331 = vmatprep.subr.mxu0 0.0
      %332 = vmatpush1.msra.mxu0 0.0
      %333 = vmatprep.subr.mxu0 0.0
      %334 = vmatpush1.msra.mxu0 0.0
      %335 = vmatprep.subr.mxu0 0.0
      %336 = vmatpush1.msra.mxu0 0.0
      %337 = vmatprep.subr.mxu0 0.0
      %338 = vmatpush1.msra.mxu0 0.0
      %339 = vmatprep.subr.mxu0 0.0
      %340 = vmatpush1.msra.mxu0 0.0
      %341 = vmatprep.subr.mxu0 0.0
      %342 = vmatpush1.msra.mxu0 0.0
      %343 = vmatprep.subr.mxu0 0.0
      %344 = vmatpush1.msra.mxu0 0.0
      %345 = vmatprep.subr.mxu0 0.0
      %346 = vmatpush1.msra.mxu0 %v313
      %347 = vmatprep.subr.mxu0 0.0
      %348 = vmatpush2.msra.mxu0 0.0
      %349 = vmatprep.subr.mxu0 0.0
      %350 = vmatpush2.msra.mxu0 0.0
      %351 = vmatprep.subr.mxu0 0.0
      %352 = vmatpush2.msra.mxu0 0.0
      %353 = vmatprep.subr.mxu0 0.0
      %354 = vmatpush2.msra.mxu0 0.0
      %355 = vmatprep.subr.mxu0 0.0
      %356 = vmatpush2.msra.mxu0 0.0
      %357 = vmatprep.subr.mxu0 0.0
      %358 = vmatpush2.msra.mxu0 0.0
      %359 = vmatprep.subr.mxu0 0.0
      %360 = vmatpush2.msra.mxu0 0.0
      %361 = vmatprep.subr.mxu0 0.0
      %362 = vmatpush2.msra.mxu0 0.0
      %363 = vmatprep.subr.mxu0 0.0
      %364 = vmatpush2.msra.mxu0 0.0
      %365 = vmatprep.subr.mxu0 0.0
      %366 = vmatpush2.msra.mxu0 0.0
      %367 = vmatprep.subr.mxu0 0.0
      %368 = vmatpush2.msra.mxu0 0.0
      %369 = vmatprep.subr.mxu0 0.0
      %370 = vmatpush2.msra.mxu0 0.0
      %371 = vmatprep.subr.mxu0 0.0
      %372 = vmatpush2.msra.mxu0 0.0
      %373 = vmatprep.subr.mxu0 0.0
      %374 = vmatpush2.msra.mxu0 0.0
      %375 = vmatprep.subr.mxu0 0.0
      %376 = vmatpush2.msra.mxu0 0.0
      %377 = vmatprep.subr.mxu0 0.0
      %378 = vmatpush2.msra.mxu0 0.0
      %379 = vmatprep.mubr.f32.mxu0 0.0
      %380 = vmatmul.mubr.f32.gmra.mxu0 %v216
      %v381 = vpop.f32.mrf.mxu0
      %v382 = vadd.f32 %v212, %v381
      %v383 = vpop.f32.mrf.mxu0
      %384 = vmatprep.mubr.f32.mxu0 0.0
      %385 = vmatmul.mubr.f32.gmra.mxu0 %v219
      %v386 = vpop.f32.mrf.mxu0
      %v387 = vadd.f32 %v212, %v386
      %v388 = vpop.f32.mrf.mxu0
      %389 = vmatprep.mubr.f32.mxu0 0.0
      %390 = vmatmul.mubr.f32.gmra.mxu0 %v222
      %v391 = vpop.f32.mrf.mxu0
      %v392 = vadd.f32 %v212, %v391
      %v393 = vpop.f32.mrf.mxu0
      %394 = vmatprep.mubr.f32.mxu0 0.0
      %395 = vmatmul.mubr.f32.gmra.mxu0 %v225
      %v396 = vpop.f32.mrf.mxu0
      %v397 = vadd.f32 %v212, %v396
      %v398 = vpop.f32.mrf.mxu0
      %399 = vmatprep.mubr.f32.mxu0 0.0
      %400 = vmatmul.mubr.f32.gmra.mxu0 %v228
      %v401 = vpop.f32.mrf.mxu0
      %v402 = vadd.f32 %v212, %v401
      %v403 = vpop.f32.mrf.mxu0
      %404 = vmatprep.mubr.f32.mxu0 0.0
      %405 = vmatmul.mubr.f32.gmra.mxu0 %v231
      %v406 = vpop.f32.mrf.mxu0
      %v407 = vadd.f32 %v212, %v406
      %v408 = vpop.f32.mrf.mxu0
      %409 = vmatprep.mubr.f32.mxu0 0.0
      %410 = vmatmul.mubr.f32.gmra.mxu0 %v234
      %v411 = vpop.f32.mrf.mxu0
      %v412 = vadd.f32 %v212, %v411
      %v413 = vpop.f32.mrf.mxu0
      %414 = vmatprep.mubr.f32.mxu0 0.0
      %415 = vmatmul.mubr.f32.gmra.mxu0 %v237
      %v416 = vpop.f32.mrf.mxu0
      %v417 = vadd.f32 %v212, %v416
      %v418 = vpop.f32.mrf.mxu0
      %419 = vmatprep.mubr.f32.mxu0 0.0
      %420 = vmatmul.mubr.f32.gmra.mxu0 %v240
      %v421 = vpop.f32.mrf.mxu0
      %v422 = vadd.f32 %v212, %v421
      %v423 = vpop.f32.mrf.mxu0
      %424 = vmatprep.mubr.f32.mxu0 0.0
      %425 = vmatmul.mubr.f32.gmra.mxu0 %v243
      %v426 = vpop.f32.mrf.mxu0
      %v427 = vadd.f32 %v212, %v426
      %v428 = vpop.f32.mrf.mxu0
      %429 = vmatprep.mubr.f32.mxu0 0.0
      %430 = vmatmul.mubr.f32.gmra.mxu0 %v246
      %v431 = vpop.f32.mrf.mxu0
      %v432 = vadd.f32 %v212, %v431
      %v433 = vpop.f32.mrf.mxu0
      %434 = vmatprep.mubr.f32.mxu0 0.0
      %435 = vmatmul.mubr.f32.gmra.mxu0 %v249
      %v436 = vpop.f32.mrf.mxu0
      %v437 = vadd.f32 %v212, %v436
      %v438 = vpop.f32.mrf.mxu0
      %439 = vmatprep.mubr.f32.mxu0 0.0
      %440 = vmatmul.mubr.f32.gmra.mxu0 %v252
      %v441 = vpop.f32.mrf.mxu0
      %v442 = vadd.f32 %v212, %v441
      %v443 = vpop.f32.mrf.mxu0
      %444 = vmatprep.mubr.f32.mxu0 0.0
      %445 = vmatmul.mubr.f32.gmra.mxu0 %v255
      %v446 = vpop.f32.mrf.mxu0
      %v447 = vadd.f32 %v212, %v446
      %v448 = vpop.f32.mrf.mxu0
      %449 = vmatprep.mubr.f32.mxu0 0.0
      %450 = vmatmul.mubr.f32.gmra.mxu0 %v258
      %v451 = vpop.f32.mrf.mxu0
      %v452 = vadd.f32 %v212, %v451
      %v453 = vpop.f32.mrf.mxu0
      %454 = vmatprep.mubr.f32.mxu0 0.0
      %455 = vmatmul.mubr.f32.gmra.mxu0 %v261
      %v456 = vpop.f32.mrf.mxu0
      %v457 = vadd.f32 %v212, %v456
      %v458 = vpop.f32.mrf.mxu0
      %459 = vmatprep.mubr.f32.mxu0 0.0
      %460 = vmatmul.mubr.f32.gmra.mxu0 %v264
      %v461 = vpop.f32.mrf.mxu0
      %v462 = vadd.f32 %v212, %v461
      %v463 = vpop.f32.mrf.mxu0
      %464 = vmatprep.mubr.f32.mxu0 0.0
      %465 = vmatmul.mubr.f32.gmra.mxu0 %v267
      %v466 = vpop.f32.mrf.mxu0
      %v467 = vadd.f32 %v212, %v466
      %v468 = vpop.f32.mrf.mxu0
      %469 = vmatprep.mubr.f32.mxu0 0.0
      %470 = vmatmul.mubr.f32.gmra.mxu0 %v270
      %v471 = vpop.f32.mrf.mxu0
      %v472 = vadd.f32 %v212, %v471
      %v473 = vpop.f32.mrf.mxu0
      %474 = vmatprep.mubr.f32.mxu0 0.0
      %475 = vmatmul.mubr.f32.gmra.mxu0 %v273
      %v476 = vpop.f32.mrf.mxu0
      %v477 = vadd.f32 %v212, %v476
      %v478 = vpop.f32.mrf.mxu0
      %479 = vmatprep.mubr.f32.mxu0 0.0
      %480 = vmatmul.mubr.f32.gmra.mxu0 %v276
      %v481 = vpop.f32.mrf.mxu0
      %v482 = vadd.f32 %v212, %v481
      %v483 = vpop.f32.mrf.mxu0
      %484 = vmatprep.mubr.f32.mxu0 0.0
      %485 = vmatmul.mubr.f32.gmra.mxu0 %v279
      %v486 = vpop.f32.mrf.mxu0
      %v487 = vadd.f32 %v212, %v486
      %v488 = vpop.f32.mrf.mxu0
      %489 = vmatprep.mubr.f32.mxu0 0.0
      %490 = vmatmul.mubr.f32.gmra.mxu0 %v282
      %v491 = vpop.f32.mrf.mxu0
      %v492 = vadd.f32 %v212, %v491
      %v493 = vpop.f32.mrf.mxu0
      %494 = vmatprep.mubr.f32.mxu0 0.0
      %495 = vmatmul.mubr.f32.gmra.mxu0 %v285
      %v496 = vpop.f32.mrf.mxu0
      %v497 = vadd.f32 %v212, %v496
      %v498 = vpop.f32.mrf.mxu0
      %499 = vmatprep.mubr.f32.mxu0 0.0
      %500 = vmatmul.mubr.f32.gmra.mxu0 %v288
      %v501 = vpop.f32.mrf.mxu0
      %v502 = vadd.f32 %v212, %v501
      %v503 = vpop.f32.mrf.mxu0
      %504 = vmatprep.mubr.f32.mxu0 0.0
      %505 = vmatmul.mubr.f32.gmra.mxu0 %v291
      %v506 = vpop.f32.mrf.mxu0
      %v507 = vadd.f32 %v212, %v506
      %v508 = vpop.f32.mrf.mxu0
      %509 = vmatprep.mubr.f32.mxu0 0.0
      %510 = vmatmul.mubr.f32.gmra.mxu0 %v294
      %v511 = vpop.f32.mrf.mxu0
      %v512 = vadd.f32 %v212, %v511
      %v513 = vpop.f32.mrf.mxu0
      %514 = vmatprep.mubr.f32.mxu0 0.0
      %515 = vmatmul.mubr.f32.gmra.mxu0 %v297
      %v516 = vpop.f32.mrf.mxu0
      %v517 = vadd.f32 %v212, %v516
      %v518 = vpop.f32.mrf.mxu0
      %519 = vmatprep.mubr.f32.mxu0 0.0
      %520 = vmatmul.mubr.f32.gmra.mxu0 %v300
      %v521 = vpop.f32.mrf.mxu0
      %v522 = vadd.f32 %v212, %v521
      %v523 = vpop.f32.mrf.mxu0
      %524 = vmatprep.mubr.f32.mxu0 0.0
      %525 = vmatmul.mubr.f32.gmra.mxu0 %v303
      %v526 = vpop.f32.mrf.mxu0
      %v527 = vadd.f32 %v212, %v526
      %v528 = vpop.f32.mrf.mxu0
      %529 = vmatprep.mubr.f32.mxu0 0.0
      %530 = vmatmul.mubr.f32.gmra.mxu0 %v306
      %v531 = vpop.f32.mrf.mxu0
      %v532 = vadd.f32 %v212, %v531
      %v533 = vpop.f32.mrf.mxu0
      %534 = vmatprep.mubr.f32.mxu0 0.0
      %535 = vmatmul.mubr.f32.gmra.mxu0 %v309
      %v536 = vpop.f32.mrf.mxu0
      %v537 = vadd.f32 %v212, %v536
      %v538 = vpop.f32.mrf.mxu0
      %539 = vdwg.mxu0
      %v540 = vxor.u32 %v382, 2147483648
      %v541 = vxor.u32 %v387, 2147483648
      %v542 = vxor.u32 %v392, 2147483648
      %v543 = vxor.u32 %v397, 2147483648
      %v544 = vxor.u32 %v402, 2147483648
      %v545 = vxor.u32 %v407, 2147483648
      %v546 = vxor.u32 %v412, 2147483648
      %v547 = vxor.u32 %v417, 2147483648
      %v548 = vxor.u32 %v422, 2147483648
      %v549 = vxor.u32 %v427, 2147483648
      %v550 = vxor.u32 %v432, 2147483648
      %v551 = vxor.u32 %v437, 2147483648
      %v552 = vxor.u32 %v442, 2147483648
      %v553 = vxor.u32 %v447, 2147483648
      %v554 = vxor.u32 %v452, 2147483648
      %v555 = vxor.u32 %v457, 2147483648
      %v556 = vxor.u32 %v462, 2147483648
      %v557 = vxor.u32 %v467, 2147483648
      %v558 = vxor.u32 %v472, 2147483648
      %v559 = vxor.u32 %v477, 2147483648
      %v560 = vxor.u32 %v482, 2147483648
      %v561 = vxor.u32 %v487, 2147483648
      %v562 = vxor.u32 %v492, 2147483648
      %v563 = vxor.u32 %v497, 2147483648
      %v564 = vxor.u32 %v502, 2147483648
      %v565 = vxor.u32 %v507, 2147483648
      %v566 = vxor.u32 %v512, 2147483648
      %v567 = vxor.u32 %v517, 2147483648
      %v568 = vxor.u32 %v522, 2147483648
      %v569 = vxor.u32 %v527, 2147483648
      %v570 = vxor.u32 %v532, 2147483648
      %v571 = vxor.u32 %v537, 2147483648
      %v572 = vmul.f32 %v540, 1.442695
      %v573 = vpow.pop %v572
      %v574 = vmul.f32 %v541, 1.442695
      %v575 = vpow.pop %v574
      %v576 = vmul.f32 %v542, 1.442695
      %v577 = vpow.pop %v576
      %v578 = vmul.f32 %v543, 1.442695
      %v579 = vpow.pop %v578
      %v580 = vmul.f32 %v544, 1.442695
      %v581 = vpow.pop %v580
      %v582 = vmul.f32 %v545, 1.442695
      %v583 = vpow.pop %v582
      %v584 = vmul.f32 %v546, 1.442695
      %v585 = vpow.pop %v584
      %v586 = vmul.f32 %v547, 1.442695
      %v587 = vpow.pop %v586
      %v588 = vmul.f32 %v548, 1.442695
      %v589 = vpow.pop %v588
      %v590 = vmul.f32 %v549, 1.442695
      %v591 = vpow.pop %v590
      %v592 = vmul.f32 %v550, 1.442695
      %v593 = vpow.pop %v592
      %v594 = vmul.f32 %v551, 1.442695
      %v595 = vpow.pop %v594
      %v596 = vmul.f32 %v552, 1.442695
      %v597 = vpow.pop %v596
      %v598 = vmul.f32 %v553, 1.442695
      %v599 = vpow.pop %v598
      %v600 = vmul.f32 %v554, 1.442695
      %v601 = vpow.pop %v600
      %v602 = vmul.f32 %v555, 1.442695
      %v603 = vpow.pop %v602
      %v604 = vmul.f32 %v556, 1.442695
      %v605 = vpow.pop %v604
      %v606 = vmul.f32 %v557, 1.442695
      %v607 = vpow.pop %v606
      %v608 = vmul.f32 %v558, 1.442695
      %v609 = vpow.pop %v608
      %v610 = vmul.f32 %v559, 1.442695
      %v611 = vpow.pop %v610
      %v612 = vmul.f32 %v560, 1.442695
      %v613 = vpow.pop %v612
      %v614 = vmul.f32 %v561, 1.442695
      %v615 = vpow.pop %v614
      %v616 = vmul.f32 %v562, 1.442695
      %v617 = vpow.pop %v616
      %v618 = vmul.f32 %v563, 1.442695
      %v619 = vpow.pop %v618
      %v620 = vmul.f32 %v564, 1.442695
      %v621 = vpow.pop %v620
      %v622 = vmul.f32 %v565, 1.442695
      %v623 = vpow.pop %v622
      %v624 = vmul.f32 %v566, 1.442695
      %v625 = vpow.pop %v624
      %v626 = vmul.f32 %v567, 1.442695
      %v627 = vpow.pop %v626
      %v628 = vmul.f32 %v568, 1.442695
      %v629 = vpow.pop %v628
      %v630 = vmul.f32 %v569, 1.442695
      %v631 = vpow.pop %v630
      %v632 = vmul.f32 %v570, 1.442695
      %v633 = vpow.pop %v632
      %v634 = vmul.f32 %v571, 1.442695
      %v635 = vpow.pop %v634
      %v636 = vadd.f32 %v573, 1.0
      %v637 = vadd.f32 %v575, 1.0
      %v638 = vadd.f32 %v577, 1.0
      %v639 = vadd.f32 %v579, 1.0
      %v640 = vadd.f32 %v581, 1.0
      %v641 = vadd.f32 %v583, 1.0
      %v642 = vadd.f32 %v585, 1.0
      %v643 = vadd.f32 %v587, 1.0
      %v644 = vadd.f32 %v589, 1.0
      %v645 = vadd.f32 %v591, 1.0
      %v646 = vadd.f32 %v593, 1.0
      %v647 = vadd.f32 %v595, 1.0
      %v648 = vadd.f32 %v597, 1.0
      %v649 = vadd.f32 %v599, 1.0
      %v650 = vadd.f32 %v601, 1.0
      %v651 = vadd.f32 %v603, 1.0
      %v652 = vadd.f32 %v605, 1.0
      %v653 = vadd.f32 %v607, 1.0
      %v654 = vadd.f32 %v609, 1.0
      %v655 = vadd.f32 %v611, 1.0
      %v656 = vadd.f32 %v613, 1.0
      %v657 = vadd.f32 %v615, 1.0
      %v658 = vadd.f32 %v617, 1.0
      %v659 = vadd.f32 %v619, 1.0
      %v660 = vadd.f32 %v621, 1.0
      %v661 = vadd.f32 %v623, 1.0
      %v662 = vadd.f32 %v625, 1.0
      %v663 = vadd.f32 %v627, 1.0
      %v664 = vadd.f32 %v629, 1.0
      %v665 = vadd.f32 %v631, 1.0
      %v666 = vadd.f32 %v633, 1.0
      %v667 = vadd.f32 %v635, 1.0
      %v668 = vrcp.pop %v636
      %v669 = vmul.f32 1.0, %v668
      %v670 = vrcp.pop %v637
      %v671 = vmul.f32 1.0, %v670
      %v672 = vrcp.pop %v638
      %v673 = vmul.f32 1.0, %v672
      %v674 = vrcp.pop %v639
      %v675 = vmul.f32 1.0, %v674
      %v676 = vrcp.pop %v640
      %v677 = vmul.f32 1.0, %v676
      %v678 = vrcp.pop %v641
      %v679 = vmul.f32 1.0, %v678
      %v680 = vrcp.pop %v642
      %v681 = vmul.f32 1.0, %v680
      %v682 = vrcp.pop %v643
      %v683 = vmul.f32 1.0, %v682
      %v684 = vrcp.pop %v644
      %v685 = vmul.f32 1.0, %v684
      %v686 = vrcp.pop %v645
      %v687 = vmul.f32 1.0, %v686
      %v688 = vrcp.pop %v646
      %v689 = vmul.f32 1.0, %v688
      %v690 = vrcp.pop %v647
      %v691 = vmul.f32 1.0, %v690
      %v692 = vrcp.pop %v648
      %v693 = vmul.f32 1.0, %v692
      %v694 = vrcp.pop %v649
      %v695 = vmul.f32 1.0, %v694
      %v696 = vrcp.pop %v650
      %v697 = vmul.f32 1.0, %v696
      %v698 = vrcp.pop %v651
      %v699 = vmul.f32 1.0, %v698
      %v700 = vrcp.pop %v652
      %v701 = vmul.f32 1.0, %v700
      %v702 = vrcp.pop %v653
      %v703 = vmul.f32 1.0, %v702
      %v704 = vrcp.pop %v654
      %v705 = vmul.f32 1.0, %v704
      %v706 = vrcp.pop %v655
      %v707 = vmul.f32 1.0, %v706
      %v708 = vrcp.pop %v656
      %v709 = vmul.f32 1.0, %v708
      %v710 = vrcp.pop %v657
      %v711 = vmul.f32 1.0, %v710
      %v712 = vrcp.pop %v658
      %v713 = vmul.f32 1.0, %v712
      %v714 = vrcp.pop %v659
      %v715 = vmul.f32 1.0, %v714
      %v716 = vrcp.pop %v660
      %v717 = vmul.f32 1.0, %v716
      %v718 = vrcp.pop %v661
      %v719 = vmul.f32 1.0, %v718
      %v720 = vrcp.pop %v662
      %v721 = vmul.f32 1.0, %v720
      %v722 = vrcp.pop %v663
      %v723 = vmul.f32 1.0, %v722
      %v724 = vrcp.pop %v664
      %v725 = vmul.f32 1.0, %v724
      %v726 = vrcp.pop %v665
      %v727 = vmul.f32 1.0, %v726
      %v728 = vrcp.pop %v666
      %v729 = vmul.f32 1.0, %v728
      %v730 = vrcp.pop %v667
      %v731 = vmul.f32 1.0, %v730
      %v732 = vmul.f32 %v382, %v669
      %v733 = vmul.f32 %v387, %v671
      %v734 = vmul.f32 %v392, %v673
      %v735 = vmul.f32 %v397, %v675
      %v736 = vmul.f32 %v402, %v677
      %v737 = vmul.f32 %v407, %v679
      %v738 = vmul.f32 %v412, %v681
      %v739 = vmul.f32 %v417, %v683
      %v740 = vmul.f32 %v422, %v685
      %v741 = vmul.f32 %v427, %v687
      %v742 = vmul.f32 %v432, %v689
      %v743 = vmul.f32 %v437, %v691
      %v744 = vmul.f32 %v442, %v693
      %v745 = vmul.f32 %v447, %v695
      %v746 = vmul.f32 %v452, %v697
      %v747 = vmul.f32 %v457, %v699
      %v748 = vmul.f32 %v462, %v701
      %v749 = vmul.f32 %v467, %v703
      %v750 = vmul.f32 %v472, %v705
      %v751 = vmul.f32 %v477, %v707
      %v752 = vmul.f32 %v482, %v709
      %v753 = vmul.f32 %v487, %v711
      %v754 = vmul.f32 %v492, %v713
      %v755 = vmul.f32 %v497, %v715
      %v756 = vmul.f32 %v502, %v717
      %v757 = vmul.f32 %v507, %v719
      %v758 = vmul.f32 %v512, %v721
      %v759 = vmul.f32 %v517, %v723
      %v760 = vmul.f32 %v522, %v725
      %v761 = vmul.f32 %v527, %v727
      %v762 = vmul.f32 %v532, %v729
      %v763 = vmul.f32 %v537, %v731
      %vm764 = vcmask 130048
      %765 = vst.msk [vmem:[%s172] sm:$0xff] %vm764, %v732
      %766 = vst.msk [vmem:[%s172 + $0x8] sm:$0xff] %vm764, %v733
      %767 = vst.msk [vmem:[%s172 + $0x10] sm:$0xff] %vm764, %v734
      %768 = vst.msk [vmem:[%s172 + $0x18] sm:$0xff] %vm764, %v735
      %769 = vst.msk [vmem:[%s172 + $0x20] sm:$0xff] %vm764, %v736
      %770 = vst.msk [vmem:[%s172 + $0x28] sm:$0xff] %vm764, %v737
      %771 = vst.msk [vmem:[%s172 + $0x30] sm:$0xff] %vm764, %v738
      %772 = vst.msk [vmem:[%s172 + $0x38] sm:$0xff] %vm764, %v739
      %773 = vst.msk [vmem:[%s172 + $0x40] sm:$0xff] %vm764, %v740
      %774 = vst.msk [vmem:[%s172 + $0x48] sm:$0xff] %vm764, %v741
      %775 = vst.msk [vmem:[%s172 + $0x50] sm:$0xff] %vm764, %v742
      %776 = vst.msk [vmem:[%s172 + $0x58] sm:$0xff] %vm764, %v743
      %777 = vst.msk [vmem:[%s172 + $0x60] sm:$0xff] %vm764, %v744
      %778 = vst.msk [vmem:[%s172 + $0x68] sm:$0xff] %vm764, %v745
      %779 = vst.msk [vmem:[%s172 + $0x70] sm:$0xff] %vm764, %v746
      %780 = vst.msk [vmem:[%s172 + $0x78] sm:$0xff] %vm764, %v747
      %781 = vst.msk [vmem:[%s172 + $0x80] sm:$0xff] %vm764, %v748
      %782 = vst.msk [vmem:[%s172 + $0x88] sm:$0xff] %vm764, %v749
      %783 = vst.msk [vmem:[%s172 + $0x90] sm:$0xff] %vm764, %v750
      %784 = vst.msk [vmem:[%s172 + $0x98] sm:$0xff] %vm764, %v751
      %785 = vst.msk [vmem:[%s172 + $0xa0] sm:$0xff] %vm764, %v752
      %786 = vst.msk [vmem:[%s172 + $0xa8] sm:$0xff] %vm764, %v753
      %787 = vst.msk [vmem:[%s172 + $0xb0] sm:$0xff] %vm764, %v754
      %788 = vst.msk [vmem:[%s172 + $0xb8] sm:$0xff] %vm764, %v755
      %789 = vst.msk [vmem:[%s172 + $0xc0] sm:$0xff] %vm764, %v756
      %790 = vst.msk [vmem:[%s172 + $0xc8] sm:$0xff] %vm764, %v757
      %791 = vst.msk [vmem:[%s172 + $0xd0] sm:$0xff] %vm764, %v758
      %792 = vst.msk [vmem:[%s172 + $0xd8] sm:$0xff] %vm764, %v759
      %793 = vst.msk [vmem:[%s172 + $0xe0] sm:$0xff] %vm764, %v760
      %794 = vst.msk [vmem:[%s172 + $0xe8] sm:$0xff] %vm764, %v761
      %795 = vst.msk [vmem:[%s172 + $0xf0] sm:$0xff] %vm764, %v762
      %796 = vst.msk [vmem:[%s172 + $0xf8] sm:$0xff] %vm764, %v763
      %s797 = smul.u32 32, %s14
      %p798 = scmp.lt.s32.totalorder %s797, 63
      %s799 = scalar_select %p798, %s797, 63
      %s800 = smul.addr %s799, 8
      %s801 = scalar_lea.vmem %s3, %s800
      // Predicated region
      $region33: #{_lambda_.6} parent=31 // pred_check
        %p802 = pneg %p100
      $region34: #{_lambda_.6} parent=31 // pred_check_branch
        %804 = sbr.rel (%p802) target = $region36
      $region35: #{_lambda_.6} parent=31 // pred_region
        %s805 = smul.u32 32, %s14
      $region36: #{_lambda_.6} parent=31 // pred_fallthru
        _
    $region32: #{_lambda_.6} parent=5 // pred_fallthru
      _
    %p806 = scmp.le.s32.totalorder 2, %s9
    // Predicated region
    $region37: #{_lambda_.6} parent=5 // pred_check
      %p807 = pneg %p806
    $region38: #{_lambda_.6} parent=5 // pred_check_branch
      %809 = sbr.rel (%p807) target = $region40
    $region39: #{_lambda_.6} parent=5 // pred_region
      %s810 = ssub.s32 %s9, 2
      // Predicated region
      $region41: #{_lambda_.6} parent=39 // pred_check
        %p811 = pneg %p106
      $region42: #{_lambda_.6} parent=39 // pred_check_branch
        %813 = sbr.rel (%p811) target = $region44
      $region43: #{_lambda_.6} parent=39 // pred_region
        %s814 = smul.u32 32, %s15
        %p815 = scmp.lt.s32.totalorder %s814, 63
        %s816 = scalar_select %p815, %s814, 63
        %s817 = smul.addr %s816, 8
        %s818 = scalar_lea.vmem %s3, %s817
      $region44: #{_lambda_.6} parent=39 // pred_fallthru
        _
    $region40: #{_lambda_.6} parent=5 // pred_fallthru
      _
  $region6: #{_lambda_.6} parent=0 // loop_footer
    %s13 = sadd.s32 1, %s9
  $region7: #{_lambda_.6} parent=0 // loop_footer_branch
    %8 = sbr.rel target = $region3
  $region8: #{_lambda_.6} parent=0 // loop_exit
    _

// kernel: _lambda_.11
$region0: #{_lambda_.11}
  #allocation0 [shape = 'u32[]', space=smem, size = 0x4, offset = 0x4, fixed_abs, tag = 'smem constant byte address 0x4 - core index']
  #allocation1 [shape = 'u32[144,128]{1,0:T(1,128)}', space=vmem, size = 0x12000, scoped, tag = 'internal scratch']
  %s0 = inlined_call_operand.vmem [shape: f32[512,8], index: 0, kind: input, shape index: {}]
  %s1 = inlined_call_operand.vmem [shape: f32[512,8], index: 1, kind: input, shape index: {}]
  %s2 = inlined_call_operand.vmem [shape: f32[512,8], index: 2, kind: input, shape index: {}]
  %s3 = inlined_call_operand.vmem [shape: f32[512,8], index: 3, kind: input, shape index: {}]
  %s4 = inlined_call_operand.vmem [shape: f32[8,16], index: 4, kind: input, shape index: {}]
  %s5 = inlined_call_operand.vmem [shape: f32[8,16], index: 5, kind: input, shape index: {}]
  %s6 = inlined_call_operand.vmem [shape: f32[8,16], index: 6, kind: input, shape index: {}]
  %s7 = inlined_call_operand.vmem [shape: f32[8,16], index: 7, kind: input, shape index: {}]
  %s8 = inlined_call_operand.vmem [shape: f32[1,16], index: 8, kind: input, shape index: {}]
  %s9 = inlined_call_operand.vmem [shape: f32[512,16], index: 9, kind: output, shape index: {}]
  %s10 = sld [smem:[#allocation0]]
  $region69: #{_lambda_.11} parent=0
    _
  %s12 = ssub.s32 1, %s10
  %s13 = scalar_select 0, %s12, %s10
  loop: start=0, step=1, limit=4
  $region2: #{_lambda_.11} parent=0 // loop_pre_header
    _
  $region3: #{_lambda_.11} parent=0 // loop_header
    %s15 = sphi 0, %s19
    %p16 = scmp.ge.s32.totalorder %s15, 4
    %s25 = sphi 0, %s27
    %s28 = sphi 0, %s25
    %s29 = sphi 0, %s28
    %s45 = sphi 0, %s29
    %s51 = sphi 0, %s53
    %s54 = sphi 0, %s51
    %s55 = sphi 0, %s54
    %s71 = sphi 0, %s55
    %s77 = sphi 0, %s79
    %s80 = sphi 0, %s77
    %s81 = sphi 0, %s80
    %s97 = sphi 0, %s81
    %s103 = sphi 0, %s105
    %s106 = sphi 0, %s103
    %s107 = sphi 0, %s106
    %s123 = sphi 0, %s107
    %s127 = sphi 0, %s127
    %s129 = sphi 0, %s127
    %s130 = sphi 0, %s129
    %s144 = sphi 0, %s130
    %s148 = sphi 0, %s148
    %s150 = sphi 0, %s148
    %s151 = sphi 0, %s150
    %s165 = sphi 0, %s151
    %s169 = sphi 0, %s169
    %s171 = sphi 0, %s169
    %s172 = sphi 0, %s171
    %s186 = sphi 0, %s172
    %s190 = sphi 0, %s190
    %s192 = sphi 0, %s190
    %s193 = sphi 0, %s192
    %s207 = sphi 0, %s193
    %s211 = sphi 0, %s211
    %s213 = sphi 0, %s211
    %s214 = sphi 0, %s213
    %s228 = sphi 0, %s214
    %s234 = sphi 0, %s236
    %s237 = sphi 0, %s234
    %s238 = sphi 0, %s237
    %s254 = sphi 0, %s238
  $region4: #{_lambda_.11} parent=0 // loop_header_branch
    %18 = sbr.rel (%p16) target = $region8
  $region5: #{_lambda_.11} parent=0 // loop_body
    %s20 = ssub.s32 %s15, 1
    %s21 = ssub.s32 %s15, 2
    %s22 = sadd.s32 %s15, 1
    %s23 = ssub.s32 %s15, %s22
    %p24 = scmp.eq.s32.totalorder %s23, 0
    %s26 = sadd.s32 %s25, 1
    %s27 = scalar_select %p24, %s25, %s26
    %p30 = pneg %p24
    %p31 = scmp.eq.s32.totalorder %s15, 1
    %p32 = por %p30, %p31
    %p33 = scmp.ne.s32.totalorder %s25, %s28
    %p34 = scmp.eq.s32.totalorder %s15, 0
    %p35 = por %p33, %p34
    %p36 = scmp.ne.s32.totalorder %s25, %s28
    %p37 = scmp.eq.s32.totalorder %s20, 1
    %p38 = por %p36, %p37
    %p39 = scmp.ne.s32.totalorder %s28, %s29
    %p40 = scmp.eq.s32.totalorder %s20, 0
    %p41 = por %p39, %p40
    %p42 = scmp.ne.s32.totalorder %s28, %s29
    %p43 = scmp.eq.s32.totalorder %s21, 1
    %p44 = por %p42, %p43
    %p46 = scmp.ne.s32.totalorder %s29, %s45
    %p47 = scmp.eq.s32.totalorder %s21, 0
    %p48 = por %p46, %p47
    %s49 = ssub.s32 %s15, %s22
    %p50 = scmp.eq.s32.totalorder %s49, 0
    %s52 = sadd.s32 %s51, 1
    %s53 = scalar_select %p50, %s51, %s52
    %p56 = pneg %p50
    %p57 = scmp.eq.s32.totalorder %s15, 1
    %p58 = por %p56, %p57
    %p59 = scmp.ne.s32.totalorder %s51, %s54
    %p60 = scmp.eq.s32.totalorder %s15, 0
    %p61 = por %p59, %p60
    %p62 = scmp.ne.s32.totalorder %s51, %s54
    %p63 = scmp.eq.s32.totalorder %s20, 1
    %p64 = por %p62, %p63
    %p65 = scmp.ne.s32.totalorder %s54, %s55
    %p66 = scmp.eq.s32.totalorder %s20, 0
    %p67 = por %p65, %p66
    %p68 = scmp.ne.s32.totalorder %s54, %s55
    %p69 = scmp.eq.s32.totalorder %s21, 1
    %p70 = por %p68, %p69
    %p72 = scmp.ne.s32.totalorder %s55, %s71
    %p73 = scmp.eq.s32.totalorder %s21, 0
    %p74 = por %p72, %p73
    %s75 = ssub.s32 %s15, %s22
    %p76 = scmp.eq.s32.totalorder %s75, 0
    %s78 = sadd.s32 %s77, 1
    %s79 = scalar_select %p76, %s77, %s78
    %p82 = pneg %p76
    %p83 = scmp.eq.s32.totalorder %s15, 1
    %p84 = por %p82, %p83
    %p85 = scmp.ne.s32.totalorder %s77, %s80
    %p86 = scmp.eq.s32.totalorder %s15, 0
    %p87 = por %p85, %p86
    %p88 = scmp.ne.s32.totalorder %s77, %s80
    %p89 = scmp.eq.s32.totalorder %s20, 1
    %p90 = por %p88, %p89
    %p91 = scmp.ne.s32.totalorder %s80, %s81
    %p92 = scmp.eq.s32.totalorder %s20, 0
    %p93 = por %p91, %p92
    %p94 = scmp.ne.s32.totalorder %s80, %s81
    %p95 = scmp.eq.s32.totalorder %s21, 1
    %p96 = por %p94, %p95
    %p98 = scmp.ne.s32.totalorder %s81, %s97
    %p99 = scmp.eq.s32.totalorder %s21, 0
    %p100 = por %p98, %p99
    %s101 = ssub.s32 %s15, %s22
    %p102 = scmp.eq.s32.totalorder %s101, 0
    %s104 = sadd.s32 %s103, 1
    %s105 = scalar_select %p102, %s103, %s104
    %p108 = pneg %p102
    %p109 = scmp.eq.s32.totalorder %s15, 1
    %p110 = por %p108, %p109
    %p111 = scmp.ne.s32.totalorder %s103, %s106
    %p112 = scmp.eq.s32.totalorder %s15, 0
    %p113 = por %p111, %p112
    %p114 = scmp.ne.s32.totalorder %s103, %s106
    %p115 = scmp.eq.s32.totalorder %s20, 1
    %p116 = por %p114, %p115
    %p117 = scmp.ne.s32.totalorder %s106, %s107
    %p118 = scmp.eq.s32.totalorder %s20, 0
    %p119 = por %p117, %p118
    %p120 = scmp.ne.s32.totalorder %s106, %s107
    %p121 = scmp.eq.s32.totalorder %s21, 1
    %p122 = por %p120, %p121
    %p124 = scmp.ne.s32.totalorder %s107, %s123
    %p125 = scmp.eq.s32.totalorder %s21, 0
    %p126 = por %p124, %p125
    %s128 = sadd.s32 %s127, 1
    %p131 = scmp.eq.s32.totalorder %s15, 1
    %p132 = scmp.ne.s32.totalorder %s127, %s129
    %p133 = scmp.eq.s32.totalorder %s15, 0
    %p134 = por %p132, %p133
    %p135 = scmp.ne.s32.totalorder %s127, %s129
    %p136 = scmp.eq.s32.totalorder %s20, 1
    %p137 = por %p135, %p136
    %p138 = scmp.ne.s32.totalorder %s129, %s130
    %p139 = scmp.eq.s32.totalorder %s20, 0
    %p140 = por %p138, %p139
    %p141 = scmp.ne.s32.totalorder %s129, %s130
    %p142 = scmp.eq.s32.totalorder %s21, 1
    %p143 = por %p141, %p142
    %p145 = scmp.ne.s32.totalorder %s130, %s144
    %p146 = scmp.eq.s32.totalorder %s21, 0
    %p147 = por %p145, %p146
    %s149 = sadd.s32 %s148, 1
    %p152 = scmp.eq.s32.totalorder %s15, 1
    %p153 = scmp.ne.s32.totalorder %s148, %s150
    %p154 = scmp.eq.s32.totalorder %s15, 0
    %p155 = por %p153, %p154
    %p156 = scmp.ne.s32.totalorder %s148, %s150
    %p157 = scmp.eq.s32.totalorder %s20, 1
    %p158 = por %p156, %p157
    %p159 = scmp.ne.s32.totalorder %s150, %s151
    %p160 = scmp.eq.s32.totalorder %s20, 0
    %p161 = por %p159, %p160
    %p162 = scmp.ne.s32.totalorder %s150, %s151
    %p163 = scmp.eq.s32.totalorder %s21, 1
    %p164 = por %p162, %p163
    %p166 = scmp.ne.s32.totalorder %s151, %s165
    %p167 = scmp.eq.s32.totalorder %s21, 0
    %p168 = por %p166, %p167
    %s170 = sadd.s32 %s169, 1
    %p173 = scmp.eq.s32.totalorder %s15, 1
    %p174 = scmp.ne.s32.totalorder %s169, %s171
    %p175 = scmp.eq.s32.totalorder %s15, 0
    %p176 = por %p174, %p175
    %p177 = scmp.ne.s32.totalorder %s169, %s171
    %p178 = scmp.eq.s32.totalorder %s20, 1
    %p179 = por %p177, %p178
    %p180 = scmp.ne.s32.totalorder %s171, %s172
    %p181 = scmp.eq.s32.totalorder %s20, 0
    %p182 = por %p180, %p181
    %p183 = scmp.ne.s32.totalorder %s171, %s172
    %p184 = scmp.eq.s32.totalorder %s21, 1
    %p185 = por %p183, %p184
    %p187 = scmp.ne.s32.totalorder %s172, %s186
    %p188 = scmp.eq.s32.totalorder %s21, 0
    %p189 = por %p187, %p188
    %s191 = sadd.s32 %s190, 1
    %p194 = scmp.eq.s32.totalorder %s15, 1
    %p195 = scmp.ne.s32.totalorder %s190, %s192
    %p196 = scmp.eq.s32.totalorder %s15, 0
    %p197 = por %p195, %p196
    %p198 = scmp.ne.s32.totalorder %s190, %s192
    %p199 = scmp.eq.s32.totalorder %s20, 1
    %p200 = por %p198, %p199
    %p201 = scmp.ne.s32.totalorder %s192, %s193
    %p202 = scmp.eq.s32.totalorder %s20, 0
    %p203 = por %p201, %p202
    %p204 = scmp.ne.s32.totalorder %s192, %s193
    %p205 = scmp.eq.s32.totalorder %s21, 1
    %p206 = por %p204, %p205
    %p208 = scmp.ne.s32.totalorder %s193, %s207
    %p209 = scmp.eq.s32.totalorder %s21, 0
    %p210 = por %p208, %p209
    %s212 = sadd.s32 %s211, 1
    %p215 = scmp.eq.s32.totalorder %s15, 1
    %p216 = scmp.ne.s32.totalorder %s211, %s213
    %p217 = scmp.eq.s32.totalorder %s15, 0
    %p218 = por %p216, %p217
    %p219 = scmp.ne.s32.totalorder %s211, %s213
    %p220 = scmp.eq.s32.totalorder %s20, 1
    %p221 = por %p219, %p220
    %p222 = scmp.ne.s32.totalorder %s213, %s214
    %p223 = scmp.eq.s32.totalorder %s20, 0
    %p224 = por %p222, %p223
    %p225 = scmp.ne.s32.totalorder %s213, %s214
    %p226 = scmp.eq.s32.totalorder %s21, 1
    %p227 = por %p225, %p226
    %p229 = scmp.ne.s32.totalorder %s214, %s228
    %p230 = scmp.eq.s32.totalorder %s21, 0
    %p231 = por %p229, %p230
    %s232 = ssub.s32 %s15, %s22
    %p233 = scmp.eq.s32.totalorder %s232, 0
    %s235 = sadd.s32 %s234, 1
    %s236 = scalar_select %p233, %s234, %s235
    %p239 = pneg %p233
    %p240 = scmp.eq.s32.totalorder %s15, 1
    %p241 = por %p239, %p240
    %p242 = scmp.ne.s32.totalorder %s234, %s237
    %p243 = scmp.eq.s32.totalorder %s15, 0
    %p244 = por %p242, %p243
    %p245 = scmp.ne.s32.totalorder %s234, %s237
    %p246 = scmp.eq.s32.totalorder %s20, 1
    %p247 = por %p245, %p246
    %p248 = scmp.ne.s32.totalorder %s237, %s238
    %p249 = scmp.eq.s32.totalorder %s20, 0
    %p250 = por %p248, %p249
    %p251 = scmp.ne.s32.totalorder %s237, %s238
    %p252 = scmp.eq.s32.totalorder %s21, 1
    %p253 = por %p251, %p252
    %p255 = scmp.ne.s32.totalorder %s238, %s254
    %p256 = scmp.eq.s32.totalorder %s21, 0
    %p257 = por %p255, %p256
    %p258 = scmp.le.s32.totalorder 1, %s15
    %p259 = scmp.lt.s32.totalorder %s15, 3
    %p260 = pnand %p258, %p259
    %p261 = pneg %p260
    // Predicated region
    $region9: #{_lambda_.11} parent=5 // pred_check
      _
    $region10: #{_lambda_.11} parent=5 // pred_check_branch
      %263 = sbr.rel (%p260) target = $region12
    $region11: #{_lambda_.11} parent=5 // pred_region
      %s264 = ssub.s32 %s15, 1
      // Predicated region
      $region13: #{_lambda_.11} parent=11 // pred_check
        %p265 = pneg %p140
      $region14: #{_lambda_.11} parent=11 // pred_check_branch
        %267 = sbr.rel (%p265) target = $region16
      $region15: #{_lambda_.11} parent=11 // pred_region
        _
      $region16: #{_lambda_.11} parent=11 // pred_fallthru
        _
      // Predicated region
      $region17: #{_lambda_.11} parent=11 // pred_check
        %p268 = pneg %p161
      $region18: #{_lambda_.11} parent=11 // pred_check_branch
        %270 = sbr.rel (%p268) target = $region20
      $region19: #{_lambda_.11} parent=11 // pred_region
        _
      $region20: #{_lambda_.11} parent=11 // pred_fallthru
        _
      // Predicated region
      $region21: #{_lambda_.11} parent=11 // pred_check
        %p271 = pneg %p182
      $region22: #{_lambda_.11} parent=11 // pred_check_branch
        %273 = sbr.rel (%p271) target = $region24
      $region23: #{_lambda_.11} parent=11 // pred_region
        _
      $region24: #{_lambda_.11} parent=11 // pred_fallthru
        _
      // Predicated region
      $region25: #{_lambda_.11} parent=11 // pred_check
        %p274 = pneg %p203
      $region26: #{_lambda_.11} parent=11 // pred_check_branch
        %276 = sbr.rel (%p274) target = $region28
      $region27: #{_lambda_.11} parent=11 // pred_region
        _
      $region28: #{_lambda_.11} parent=11 // pred_fallthru
        _
      // Predicated region
      $region29: #{_lambda_.11} parent=11 // pred_check
        %p277 = pneg %p224
      $region30: #{_lambda_.11} parent=11 // pred_check_branch
        %279 = sbr.rel (%p277) target = $region32
      $region31: #{_lambda_.11} parent=11 // pred_region
        _
      $region32: #{_lambda_.11} parent=11 // pred_fallthru
        _
    $region12: #{_lambda_.11} parent=5 // pred_fallthru
      _
    %p280 = scmp.lt.s32.totalorder %s15, 2
    // Predicated region
    $region33: #{_lambda_.11} parent=5 // pred_check
      %p281 = pneg %p280
    $region34: #{_lambda_.11} parent=5 // pred_check_branch
      %283 = sbr.rel (%p281) target = $region36
    $region35: #{_lambda_.11} parent=5 // pred_region
      // Predicated region
      $region37: #{_lambda_.11} parent=35 // pred_check
        %p284 = pneg %p35
      $region38: #{_lambda_.11} parent=35 // pred_check_branch
        %286 = sbr.rel (%p284) target = $region40
      $region39: #{_lambda_.11} parent=35 // pred_region
        %s287 = smul.u32 32, %s15
        %p288 = scmp.lt.s32.totalorder %s287, 63
        %s289 = scalar_select %p288, %s287, 63
        %s290 = smul.addr %s289, 8
        %s291 = scalar_lea.vmem %s0, %s290
        %s292 = smul.u32 32, %s15
      $region40: #{_lambda_.11} parent=35 // pred_fallthru
        _
      // Predicated region
      $region41: #{_lambda_.11} parent=35 // pred_check
        %p293 = pneg %p61
      $region42: #{_lambda_.11} parent=35 // pred_check_branch
        %295 = sbr.rel (%p293) target = $region44
      $region43: #{_lambda_.11} parent=35 // pred_region
        %s296 = smul.u32 32, %s15
        %p297 = scmp.lt.s32.totalorder %s296, 63
        %s298 = scalar_select %p297, %s296, 63
        %s299 = smul.addr %s298, 8
        %s300 = scalar_lea.vmem %s1, %s299
        %s301 = smul.u32 32, %s15
      $region44: #{_lambda_.11} parent=35 // pred_fallthru
        _
      // Predicated region
      $region45: #{_lambda_.11} parent=35 // pred_check
        %p302 = pneg %p87
      $region46: #{_lambda_.11} parent=35 // pred_check_branch
        %304 = sbr.rel (%p302) target = $region48
      $region47: #{_lambda_.11} parent=35 // pred_region
        %s305 = smul.u32 32, %s15
        %p306 = scmp.lt.s32.totalorder %s305, 63
        %s307 = scalar_select %p306, %s305, 63
        %s308 = smul.addr %s307, 8
        %s309 = scalar_lea.vmem %s2, %s308
        %s310 = smul.u32 32, %s15
      $region48: #{_lambda_.11} parent=35 // pred_fallthru
        _
      // Predicated region
      $region49: #{_lambda_.11} parent=35 // pred_check
        %p311 = pneg %p113
      $region50: #{_lambda_.11} parent=35 // pred_check_branch
        %313 = sbr.rel (%p311) target = $region52
      $region51: #{_lambda_.11} parent=35 // pred_region
        %s314 = smul.u32 32, %s15
        %p315 = scmp.lt.s32.totalorder %s314, 63
        %s316 = scalar_select %p315, %s314, 63
        %s317 = smul.addr %s316, 8
        %s318 = scalar_lea.vmem %s3, %s317
        %s319 = smul.u32 32, %s15
      $region52: #{_lambda_.11} parent=35 // pred_fallthru
        _
    $region36: #{_lambda_.11} parent=5 // pred_fallthru
      _
    %p320 = scmp.le.s32.totalorder 1, %s15
    %p321 = scmp.lt.s32.totalorder %s15, 3
    %p322 = pnand %p320, %p321
    %p323 = pneg %p322
    // Predicated region
    $region53: #{_lambda_.11} parent=5 // pred_check
      _
    $region54: #{_lambda_.11} parent=5 // pred_check_branch
      %325 = sbr.rel (%p322) target = $region56
    $region55: #{_lambda_.11} parent=5 // pred_region
      %s326 = ssub.s32 %s15, 1
      %s327 = smul.u32 32, %s20
      %p328 = scmp.lt.s32.totalorder %s327, 63
      %s329 = scalar_select %p328, %s327, 63
      %s330 = smul.addr %s329, 8
      %s331 = scalar_lea.vmem %s0, %s330
      %p332 = pneg %p41
      %p333 = pneg %p38
      %s334 = smul.u32 32, %s20
      %p335 = scmp.lt.s32.totalorder %s334, 63
      %s336 = scalar_select %p335, %s334, 63
      %s337 = smul.addr %s336, 8
      %s338 = scalar_lea.vmem %s1, %s337
      %p339 = pneg %p67
      %p340 = pneg %p64
      %s341 = smul.u32 32, %s20
      %p342 = scmp.lt.s32.totalorder %s341, 63
      %s343 = scalar_select %p342, %s341, 63
      %s344 = smul.addr %s343, 8
      %s345 = scalar_lea.vmem %s2, %s344
      %p346 = pneg %p93
      %p347 = pneg %p90
      %s348 = smul.u32 32, %s20
      %p349 = scmp.lt.s32.totalorder %s348, 63
      %s350 = scalar_select %p349, %s348, 63
      %s351 = smul.addr %s350, 8
      %s352 = scalar_lea.vmem %s3, %s351
      %p353 = pneg %p119
      %p354 = pneg %p116
      %p355 = pneg %p140
      %p356 = pneg %p137
      %p357 = pneg %p161
      %p358 = pneg %p158
      %p359 = pneg %p182
      %p360 = pneg %p179
      %p361 = pneg %p203
      %p362 = pneg %p200
      %p363 = pneg %p224
      %p364 = pneg %p221
      %p365 = pneg %p250
      %p366 = pneg %p247
      %s367 = smul.u32 32, %s20
      %p368 = scmp.lt.s32.totalorder %s367, 63
      %s369 = scalar_select %p368, %s367, 63
      %s370 = smul.addr %s369, 8
      %s371 = scalar_lea.vmem %s9, %s370
      %s372 = smul.u32 32, %s20
      %p373 = scmp.lt.s32.totalorder %s372, 63
      %s374 = scalar_select %p373, %s372, 63
      %s375 = smul.addr %s374, 8
      %s376 = scalar_lea.vmem %s0, %s375
      %s377 = smul.u32 32, %s20
      %s378 = smul.u32 32, %s20
      %p379 = scmp.lt.s32.totalorder %s378, 63
      %s380 = scalar_select %p379, %s378, 63
      %s381 = smul.addr %s380, 8
      %s382 = scalar_lea.vmem %s1, %s381
      %s383 = smul.u32 32, %s20
      %s384 = smul.u32 32, %s20
      %p385 = scmp.lt.s32.totalorder %s384, 63
      %s386 = scalar_select %p385, %s384, 63
      %s387 = smul.addr %s386, 8
      %s388 = scalar_lea.vmem %s2, %s387
      %s389 = smul.u32 32, %s20
      %s390 = smul.u32 32, %s20
      %p391 = scmp.lt.s32.totalorder %s390, 63
      %s392 = scalar_select %p391, %s390, 63
      %s393 = smul.addr %s392, 8
      %s394 = scalar_lea.vmem %s3, %s393
      %s395 = smul.u32 32, %s20
      %s396 = smul.u32 32, %s20
      %p397 = scmp.lt.s32.totalorder %s396, 63
      %s398 = scalar_select %p397, %s396, 63
      %s399 = smul.addr %s398, 8
      %s400 = scalar_lea.vmem %s9, %s399
      %s401 = smul.u32 32, %s20
      %v402 = vld [vmem:[%s376] sm:$0xff]
      %v403 = vld [vmem:[%s376 + $0x8] sm:$0xff]
      %v404 = vld [vmem:[%s376 + $0x10] sm:$0xff]
      %v405 = vld [vmem:[%s376 + $0x18] sm:$0xff]
      %v406 = vld [vmem:[%s376 + $0x20] sm:$0xff]
      %v407 = vld [vmem:[%s376 + $0x28] sm:$0xff]
      %v408 = vld [vmem:[%s376 + $0x30] sm:$0xff]
      %v409 = vld [vmem:[%s376 + $0x38] sm:$0xff]
      %v410 = vld [vmem:[%s376 + $0x40] sm:$0xff]
      %v411 = vld [vmem:[%s376 + $0x48] sm:$0xff]
      %v412 = vld [vmem:[%s376 + $0x50] sm:$0xff]
      %v413 = vld [vmem:[%s376 + $0x58] sm:$0xff]
      %v414 = vld [vmem:[%s376 + $0x60] sm:$0xff]
      %v415 = vld [vmem:[%s376 + $0x68] sm:$0xff]
      %v416 = vld [vmem:[%s376 + $0x70] sm:$0xff]
      %v417 = vld [vmem:[%s376 + $0x78] sm:$0xff]
      %v418 = vld [vmem:[%s376 + $0x80] sm:$0xff]
      %v419 = vld [vmem:[%s376 + $0x88] sm:$0xff]
      %v420 = vld [vmem:[%s376 + $0x90] sm:$0xff]
      %v421 = vld [vmem:[%s376 + $0x98] sm:$0xff]
      %v422 = vld [vmem:[%s376 + $0xa0] sm:$0xff]
      %v423 = vld [vmem:[%s376 + $0xa8] sm:$0xff]
      %v424 = vld [vmem:[%s376 + $0xb0] sm:$0xff]
      %v425 = vld [vmem:[%s376 + $0xb8] sm:$0xff]
      %v426 = vld [vmem:[%s376 + $0xc0] sm:$0xff]
      %v427 = vld [vmem:[%s376 + $0xc8] sm:$0xff]
      %v428 = vld [vmem:[%s376 + $0xd0] sm:$0xff]
      %v429 = vld [vmem:[%s376 + $0xd8] sm:$0xff]
      %v430 = vld [vmem:[%s376 + $0xe0] sm:$0xff]
      %v431 = vld [vmem:[%s376 + $0xe8] sm:$0xff]
      %v432 = vld [vmem:[%s376 + $0xf0] sm:$0xff]
      %v433 = vld [vmem:[%s376 + $0xf8] sm:$0xff]
      %v434 = vld [vmem:[%s4] sm:$0xff]
      %v435 = vld [vmem:[%s382] sm:$0xff]
      %v436 = vld [vmem:[%s382 + $0x8] sm:$0xff]
      %v437 = vld [vmem:[%s382 + $0x10] sm:$0xff]
      %v438 = vld [vmem:[%s382 + $0x18] sm:$0xff]
      %v439 = vld [vmem:[%s382 + $0x20] sm:$0xff]
      %v440 = vld [vmem:[%s382 + $0x28] sm:$0xff]
      %v441 = vld [vmem:[%s382 + $0x30] sm:$0xff]
      %v442 = vld [vmem:[%s382 + $0x38] sm:$0xff]
      %v443 = vld [vmem:[%s382 + $0x40] sm:$0xff]
      %v444 = vld [vmem:[%s382 + $0x48] sm:$0xff]
      %v445 = vld [vmem:[%s382 + $0x50] sm:$0xff]
      %v446 = vld [vmem:[%s382 + $0x58] sm:$0xff]
      %v447 = vld [vmem:[%s382 + $0x60] sm:$0xff]
      %v448 = vld [vmem:[%s382 + $0x68] sm:$0xff]
      %v449 = vld [vmem:[%s382 + $0x70] sm:$0xff]
      %v450 = vld [vmem:[%s382 + $0x78] sm:$0xff]
      %v451 = vld [vmem:[%s382 + $0x80] sm:$0xff]
      %v452 = vld [vmem:[%s382 + $0x88] sm:$0xff]
      %v453 = vld [vmem:[%s382 + $0x90] sm:$0xff]
      %v454 = vld [vmem:[%s382 + $0x98] sm:$0xff]
      %v455 = vld [vmem:[%s382 + $0xa0] sm:$0xff]
      %v456 = vld [vmem:[%s382 + $0xa8] sm:$0xff]
      %v457 = vld [vmem:[%s382 + $0xb0] sm:$0xff]
      %v458 = vld [vmem:[%s382 + $0xb8] sm:$0xff]
      %v459 = vld [vmem:[%s382 + $0xc0] sm:$0xff]
      %v460 = vld [vmem:[%s382 + $0xc8] sm:$0xff]
      %v461 = vld [vmem:[%s382 + $0xd0] sm:$0xff]
      %v462 = vld [vmem:[%s382 + $0xd8] sm:$0xff]
      %v463 = vld [vmem:[%s382 + $0xe0] sm:$0xff]
      %v464 = vld [vmem:[%s382 + $0xe8] sm:$0xff]
      %v465 = vld [vmem:[%s382 + $0xf0] sm:$0xff]
      %v466 = vld [vmem:[%s382 + $0xf8] sm:$0xff]
      %v467 = vld [vmem:[%s5] sm:$0xff]
      %vm468 = vcmask 64512
      %v470 = vsel %vm468, %v435, 0
      %v473 = vsel %vm468, %v436, 0
      %v476 = vsel %vm468, %v437, 0
      %v479 = vsel %vm468, %v438, 0
      %v482 = vsel %vm468, %v439, 0
      %v485 = vsel %vm468, %v440, 0
      %v488 = vsel %vm468, %v441, 0
      %v491 = vsel %vm468, %v442, 0
      %v494 = vsel %vm468, %v443, 0
      %v497 = vsel %vm468, %v444, 0
      %v500 = vsel %vm468, %v445, 0
      %v503 = vsel %vm468, %v446, 0
      %v506 = vsel %vm468, %v447, 0
      %v509 = vsel %vm468, %v448, 0
      %v512 = vsel %vm468, %v449, 0
      %v515 = vsel %vm468, %v450, 0
      %v518 = vsel %vm468, %v451, 0
      %v521 = vsel %vm468, %v452, 0
      %v524 = vsel %vm468, %v453, 0
      %v527 = vsel %vm468, %v454, 0
      %v530 = vsel %vm468, %v455, 0
      %v533 = vsel %vm468, %v456, 0
      %v536 = vsel %vm468, %v457, 0
      %v539 = vsel %vm468, %v458, 0
      %v542 = vsel %vm468, %v459, 0
      %v545 = vsel %vm468, %v460, 0
      %v548 = vsel %vm468, %v461, 0
      %v551 = vsel %vm468, %v462, 0
      %v554 = vsel %vm468, %v463, 0
      %v557 = vsel %vm468, %v464, 0
      %v560 = vsel %vm468, %v465, 0
      %v563 = vsel %vm468, %v466, 0
      %565 = vmatprep.subr.mxu0 0.0
      %566 = vmatpush1.msra.mxu0 0.0
      %567 = vmatprep.subr.mxu0 0.0
      %568 = vmatpush1.msra.mxu0 0.0
      %569 = vmatprep.subr.mxu0 0.0
      %570 = vmatpush1.msra.mxu0 0.0
      %571 = vmatprep.subr.mxu0 0.0
      %572 = vmatpush1.msra.mxu0 0.0
      %573 = vmatprep.subr.mxu0 0.0
      %574 = vmatpush1.msra.mxu0 0.0
      %575 = vmatprep.subr.mxu0 0.0
      %576 = vmatpush1.msra.mxu0 0.0
      %577 = vmatprep.subr.mxu0 0.0
      %578 = vmatpush1.msra.mxu0 0.0
      %579 = vmatprep.subr.mxu0 0.0
      %580 = vmatpush1.msra.mxu0 0.0
      %581 = vmatprep.subr.mxu0 0.0
      %582 = vmatpush1.msra.mxu0 0.0
      %583 = vmatprep.subr.mxu0 0.0
      %584 = vmatpush1.msra.mxu0 0.0
      %585 = vmatprep.subr.mxu0 0.0
      %586 = vmatpush1.msra.mxu0 0.0
      %587 = vmatprep.subr.mxu0 0.0
      %588 = vmatpush1.msra.mxu0 0.0
      %589 = vmatprep.subr.mxu0 0.0
      %590 = vmatpush1.msra.mxu0 0.0
      %591 = vmatprep.subr.mxu0 0.0
      %592 = vmatpush1.msra.mxu0 0.0
      %593 = vmatprep.subr.mxu0 0.0
      %594 = vmatpush1.msra.mxu0 0.0
      %595 = vmatprep.subr.mxu0 0.0
      %596 = vmatpush1.msra.mxu0 %v467
      %597 = vmatprep.subr.mxu0 0.0
      %598 = vmatpush2.msra.mxu0 0.0
      %599 = vmatprep.subr.mxu0 0.0
      %600 = vmatpush2.msra.mxu0 0.0
      %601 = vmatprep.subr.mxu0 0.0
      %602 = vmatpush2.msra.mxu0 0.0
      %603 = vmatprep.subr.mxu0 0.0
      %604 = vmatpush2.msra.mxu0 0.0
      %605 = vmatprep.subr.mxu0 0.0
      %606 = vmatpush2.msra.mxu0 0.0
      %607 = vmatprep.subr.mxu0 0.0
      %608 = vmatpush2.msra.mxu0 0.0
      %609 = vmatprep.subr.mxu0 0.0
      %610 = vmatpush2.msra.mxu0 0.0
      %611 = vmatprep.subr.mxu0 0.0
      %612 = vmatpush2.msra.mxu0 0.0
      %613 = vmatprep.subr.mxu0 0.0
      %614 = vmatpush2.msra.mxu0 0.0
      %615 = vmatprep.subr.mxu0 0.0
      %616 = vmatpush2.msra.mxu0 0.0
      %617 = vmatprep.subr.mxu0 0.0
      %618 = vmatpush2.msra.mxu0 0.0
      %619 = vmatprep.subr.mxu0 0.0
      %620 = vmatpush2.msra.mxu0 0.0
      %621 = vmatprep.subr.mxu0 0.0
      %622 = vmatpush2.msra.mxu0 0.0
      %623 = vmatprep.subr.mxu0 0.0
      %624 = vmatpush2.msra.mxu0 0.0
      %625 = vmatprep.subr.mxu0 0.0
      %626 = vmatpush2.msra.mxu0 0.0
      %627 = vmatprep.subr.mxu0 0.0
      %628 = vmatpush2.msra.mxu0 0.0
      %629 = vmatprep.mubr.f32.mxu0 0.0
      %630 = vmatmul.mubr.f32.gmra.mxu0 %v470
      %v631 = vpop.f32.mrf.mxu0
      %v632 = vadd.f32 0.0, %v631
      %v633 = vpop.f32.mrf.mxu0
      %634 = vmatprep.mubr.f32.mxu0 0.0
      %635 = vmatmul.mubr.f32.gmra.mxu0 %v473
      %v636 = vpop.f32.mrf.mxu0
      %v637 = vadd.f32 0.0, %v636
      %v638 = vpop.f32.mrf.mxu0
      %639 = vmatprep.mubr.f32.mxu0 0.0
      %640 = vmatmul.mubr.f32.gmra.mxu0 %v476
      %v641 = vpop.f32.mrf.mxu0
      %v642 = vadd.f32 0.0, %v641
      %v643 = vpop.f32.mrf.mxu0
      %644 = vmatprep.mubr.f32.mxu0 0.0
      %645 = vmatmul.mubr.f32.gmra.mxu0 %v479
      %v646 = vpop.f32.mrf.mxu0
      %v647 = vadd.f32 0.0, %v646
      %v648 = vpop.f32.mrf.mxu0
      %649 = vmatprep.mubr.f32.mxu0 0.0
      %650 = vmatmul.mubr.f32.gmra.mxu0 %v482
      %v651 = vpop.f32.mrf.mxu0
      %v652 = vadd.f32 0.0, %v651
      %v653 = vpop.f32.mrf.mxu0
      %654 = vmatprep.mubr.f32.mxu0 0.0
      %655 = vmatmul.mubr.f32.gmra.mxu0 %v485
      %v656 = vpop.f32.mrf.mxu0
      %v657 = vadd.f32 0.0, %v656
      %v658 = vpop.f32.mrf.mxu0
      %659 = vmatprep.mubr.f32.mxu0 0.0
      %660 = vmatmul.mubr.f32.gmra.mxu0 %v488
      %v661 = vpop.f32.mrf.mxu0
      %v662 = vadd.f32 0.0, %v661
      %v663 = vpop.f32.mrf.mxu0
      %664 = vmatprep.mubr.f32.mxu0 0.0
      %665 = vmatmul.mubr.f32.gmra.mxu0 %v491
      %v666 = vpop.f32.mrf.mxu0
      %v667 = vadd.f32 0.0, %v666
      %v668 = vpop.f32.mrf.mxu0
      %669 = vmatprep.mubr.f32.mxu0 0.0
      %670 = vmatmul.mubr.f32.gmra.mxu0 %v494
      %v671 = vpop.f32.mrf.mxu0
      %v672 = vadd.f32 0.0, %v671
      %v673 = vpop.f32.mrf.mxu0
      %674 = vmatprep.mubr.f32.mxu0 0.0
      %675 = vmatmul.mubr.f32.gmra.mxu0 %v497
      %v676 = vpop.f32.mrf.mxu0
      %v677 = vadd.f32 0.0, %v676
      %v678 = vpop.f32.mrf.mxu0
      %679 = vmatprep.mubr.f32.mxu0 0.0
      %680 = vmatmul.mubr.f32.gmra.mxu0 %v500
      %v681 = vpop.f32.mrf.mxu0
      %v682 = vadd.f32 0.0, %v681
      %v683 = vpop.f32.mrf.mxu0
      %684 = vmatprep.mubr.f32.mxu0 0.0
      %685 = vmatmul.mubr.f32.gmra.mxu0 %v503
      %v686 = vpop.f32.mrf.mxu0
      %v687 = vadd.f32 0.0, %v686
      %v688 = vpop.f32.mrf.mxu0
      %689 = vmatprep.mubr.f32.mxu0 0.0
      %690 = vmatmul.mubr.f32.gmra.mxu0 %v506
      %v691 = vpop.f32.mrf.mxu0
      %v692 = vadd.f32 0.0, %v691
      %v693 = vpop.f32.mrf.mxu0
      %694 = vmatprep.mubr.f32.mxu0 0.0
      %695 = vmatmul.mubr.f32.gmra.mxu0 %v509
      %v696 = vpop.f32.mrf.mxu0
      %v697 = vadd.f32 0.0, %v696
      %v698 = vpop.f32.mrf.mxu0
      %699 = vmatprep.mubr.f32.mxu0 0.0
      %700 = vmatmul.mubr.f32.gmra.mxu0 %v512
      %v701 = vpop.f32.mrf.mxu0
      %v702 = vadd.f32 0.0, %v701
      %v703 = vpop.f32.mrf.mxu0
      %704 = vmatprep.mubr.f32.mxu0 0.0
      %705 = vmatmul.mubr.f32.gmra.mxu0 %v515
      %v706 = vpop.f32.mrf.mxu0
      %v707 = vadd.f32 0.0, %v706
      %v708 = vpop.f32.mrf.mxu0
      %709 = vmatprep.mubr.f32.mxu0 0.0
      %710 = vmatmul.mubr.f32.gmra.mxu0 %v518
      %v711 = vpop.f32.mrf.mxu0
      %v712 = vadd.f32 0.0, %v711
      %v713 = vpop.f32.mrf.mxu0
      %714 = vmatprep.mubr.f32.mxu0 0.0
      %715 = vmatmul.mubr.f32.gmra.mxu0 %v521
      %v716 = vpop.f32.mrf.mxu0
      %v717 = vadd.f32 0.0, %v716
      %v718 = vpop.f32.mrf.mxu0
      %719 = vmatprep.mubr.f32.mxu0 0.0
      %720 = vmatmul.mubr.f32.gmra.mxu0 %v524
      %v721 = vpop.f32.mrf.mxu0
      %v722 = vadd.f32 0.0, %v721
      %v723 = vpop.f32.mrf.mxu0
      %724 = vmatprep.mubr.f32.mxu0 0.0
      %725 = vmatmul.mubr.f32.gmra.mxu0 %v527
      %v726 = vpop.f32.mrf.mxu0
      %v727 = vadd.f32 0.0, %v726
      %v728 = vpop.f32.mrf.mxu0
      %729 = vmatprep.mubr.f32.mxu0 0.0
      %730 = vmatmul.mubr.f32.gmra.mxu0 %v530
      %v731 = vpop.f32.mrf.mxu0
      %v732 = vadd.f32 0.0, %v731
      %v733 = vpop.f32.mrf.mxu0
      %734 = vmatprep.mubr.f32.mxu0 0.0
      %735 = vmatmul.mubr.f32.gmra.mxu0 %v533
      %v736 = vpop.f32.mrf.mxu0
      %v737 = vadd.f32 0.0, %v736
      %v738 = vpop.f32.mrf.mxu0
      %739 = vmatprep.mubr.f32.mxu0 0.0
      %740 = vmatmul.mubr.f32.gmra.mxu0 %v536
      %v741 = vpop.f32.mrf.mxu0
      %v742 = vadd.f32 0.0, %v741
      %v743 = vpop.f32.mrf.mxu0
      %744 = vmatprep.mubr.f32.mxu0 0.0
      %745 = vmatmul.mubr.f32.gmra.mxu0 %v539
      %v746 = vpop.f32.mrf.mxu0
      %v747 = vadd.f32 0.0, %v746
      %v748 = vpop.f32.mrf.mxu0
      %749 = vmatprep.mubr.f32.mxu0 0.0
      %750 = vmatmul.mubr.f32.gmra.mxu0 %v542
      %v751 = vpop.f32.mrf.mxu0
      %v752 = vadd.f32 0.0, %v751
      %v753 = vpop.f32.mrf.mxu0
      %754 = vmatprep.mubr.f32.mxu0 0.0
      %755 = vmatmul.mubr.f32.gmra.mxu0 %v545
      %v756 = vpop.f32.mrf.mxu0
      %v757 = vadd.f32 0.0, %v756
      %v758 = vpop.f32.mrf.mxu0
      %759 = vmatprep.mubr.f32.mxu0 0.0
      %760 = vmatmul.mubr.f32.gmra.mxu0 %v548
      %v761 = vpop.f32.mrf.mxu0
      %v762 = vadd.f32 0.0, %v761
      %v763 = vpop.f32.mrf.mxu0
      %764 = vmatprep.mubr.f32.mxu0 0.0
      %765 = vmatmul.mubr.f32.gmra.mxu0 %v551
      %v766 = vpop.f32.mrf.mxu0
      %v767 = vadd.f32 0.0, %v766
      %v768 = vpop.f32.mrf.mxu0
      %769 = vmatprep.mubr.f32.mxu0 0.0
      %770 = vmatmul.mubr.f32.gmra.mxu0 %v554
      %v771 = vpop.f32.mrf.mxu0
      %v772 = vadd.f32 0.0, %v771
      %v773 = vpop.f32.mrf.mxu0
      %774 = vmatprep.mubr.f32.mxu0 0.0
      %775 = vmatmul.mubr.f32.gmra.mxu0 %v557
      %v776 = vpop.f32.mrf.mxu0
      %v777 = vadd.f32 0.0, %v776
      %v778 = vpop.f32.mrf.mxu0
      %779 = vmatprep.mubr.f32.mxu0 0.0
      %780 = vmatmul.mubr.f32.gmra.mxu0 %v560
      %v781 = vpop.f32.mrf.mxu0
      %v782 = vadd.f32 0.0, %v781
      %v783 = vpop.f32.mrf.mxu0
      %784 = vmatprep.mubr.f32.mxu0 0.0
      %785 = vmatmul.mubr.f32.gmra.mxu0 %v563
      %v786 = vpop.f32.mrf.mxu0
      %v787 = vadd.f32 0.0, %v786
      %v788 = vpop.f32.mrf.mxu0
      %789 = vdwg.mxu0
      %v791 = vsel %vm468, %v402, 0
      %v794 = vsel %vm468, %v403, 0
      %v797 = vsel %vm468, %v404, 0
      %v800 = vsel %vm468, %v405, 0
      %v803 = vsel %vm468, %v406, 0
      %v806 = vsel %vm468, %v407, 0
      %v809 = vsel %vm468, %v408, 0
      %v812 = vsel %vm468, %v409, 0
      %v815 = vsel %vm468, %v410, 0
      %v818 = vsel %vm468, %v411, 0
      %v821 = vsel %vm468, %v412, 0
      %v824 = vsel %vm468, %v413, 0
      %v827 = vsel %vm468, %v414, 0
      %v830 = vsel %vm468, %v415, 0
      %v833 = vsel %vm468, %v416, 0
      %v836 = vsel %vm468, %v417, 0
      %v839 = vsel %vm468, %v418, 0
      %v842 = vsel %vm468, %v419, 0
      %v845 = vsel %vm468, %v420, 0
      %v848 = vsel %vm468, %v421, 0
      %v851 = vsel %vm468, %v422, 0
      %v854 = vsel %vm468, %v423, 0
      %v857 = vsel %vm468, %v424, 0
      %v860 = vsel %vm468, %v425, 0
      %v863 = vsel %vm468, %v426, 0
      %v866 = vsel %vm468, %v427, 0
      %v869 = vsel %vm468, %v428, 0
      %v872 = vsel %vm468, %v429, 0
      %v875 = vsel %vm468, %v430, 0
      %v878 = vsel %vm468, %v431, 0
      %v881 = vsel %vm468, %v432, 0
      %v884 = vsel %vm468, %v433, 0
      %886 = vmatprep.subr.mxu0 0.0
      %887 = vmatpush1.msra.mxu0 0.0
      %888 = vmatprep.subr.mxu0 0.0
      %889 = vmatpush1.msra.mxu0 0.0
      %890 = vmatprep.subr.mxu0 0.0
      %891 = vmatpush1.msra.mxu0 0.0
      %892 = vmatprep.subr.mxu0 0.0
      %893 = vmatpush1.msra.mxu0 0.0
      %894 = vmatprep.subr.mxu0 0.0
      %895 = vmatpush1.msra.mxu0 0.0
      %896 = vmatprep.subr.mxu0 0.0
      %897 = vmatpush1.msra.mxu0 0.0
      %898 = vmatprep.subr.mxu0 0.0
      %899 = vmatpush1.msra.mxu0 0.0
      %900 = vmatprep.subr.mxu0 0.0
      %901 = vmatpush1.msra.mxu0 0.0
      %902 = vmatprep.subr.mxu0 0.0
      %903 = vmatpush1.msra.mxu0 0.0
      %904 = vmatprep.subr.mxu0 0.0
      %905 = vmatpush1.msra.mxu0 0.0
      %906 = vmatprep.subr.mxu0 0.0
      %907 = vmatpush1.msra.mxu0 0.0
      %908 = vmatprep.subr.mxu0 0.0
      %909 = vmatpush1.msra.mxu0 0.0
      %910 = vmatprep.subr.mxu0 0.0
      %911 = vmatpush1.msra.mxu0 0.0
      %912 = vmatprep.subr.mxu0 0.0
      %913 = vmatpush1.msra.mxu0 0.0
      %914 = vmatprep.subr.mxu0 0.0
      %915 = vmatpush1.msra.mxu0 0.0
      %916 = vmatprep.subr.mxu0 0.0
      %917 = vmatpush1.msra.mxu0 %v434
      %918 = vmatprep.subr.mxu0 0.0
      %919 = vmatpush2.msra.mxu0 0.0
      %920 = vmatprep.subr.mxu0 0.0
      %921 = vmatpush2.msra.mxu0 0.0
      %922 = vmatprep.subr.mxu0 0.0
      %923 = vmatpush2.msra.mxu0 0.0
      %924 = vmatprep.subr.mxu0 0.0
      %925 = vmatpush2.msra.mxu0 0.0
      %926 = vmatprep.subr.mxu0 0.0
      %927 = vmatpush2.msra.mxu0 0.0
      %928 = vmatprep.subr.mxu0 0.0
      %929 = vmatpush2.msra.mxu0 0.0
      %930 = vmatprep.subr.mxu0 0.0
      %931 = vmatpush2.msra.mxu0 0.0
      %932 = vmatprep.subr.mxu0 0.0
      %933 = vmatpush2.msra.mxu0 0.0
      %934 = vmatprep.subr.mxu0 0.0
      %935 = vmatpush2.msra.mxu0 0.0
      %936 = vmatprep.subr.mxu0 0.0
      %937 = vmatpush2.msra.mxu0 0.0
      %938 = vmatprep.subr.mxu0 0.0
      %939 = vmatpush2.msra.mxu0 0.0
      %940 = vmatprep.subr.mxu0 0.0
      %941 = vmatpush2.msra.mxu0 0.0
      %942 = vmatprep.subr.mxu0 0.0
      %943 = vmatpush2.msra.mxu0 0.0
      %944 = vmatprep.subr.mxu0 0.0
      %945 = vmatpush2.msra.mxu0 0.0
      %946 = vmatprep.subr.mxu0 0.0
      %947 = vmatpush2.msra.mxu0 0.0
      %948 = vmatprep.subr.mxu0 0.0
      %949 = vmatpush2.msra.mxu0 0.0
      %950 = vmatprep.mubr.f32.mxu0 0.0
      %951 = vmatmul.mubr.f32.gmra.mxu0 %v791
      %v952 = vpop.f32.mrf.mxu0
      %v953 = vadd.f32 %v632, %v952
      %v954 = vpop.f32.mrf.mxu0
      %955 = vmatprep.mubr.f32.mxu0 0.0
      %956 = vmatmul.mubr.f32.gmra.mxu0 %v794
      %v957 = vpop.f32.mrf.mxu0
      %v958 = vadd.f32 %v637, %v957
      %v959 = vpop.f32.mrf.mxu0
      %960 = vmatprep.mubr.f32.mxu0 0.0
      %961 = vmatmul.mubr.f32.gmra.mxu0 %v797
      %v962 = vpop.f32.mrf.mxu0
      %v963 = vadd.f32 %v642, %v962
      %v964 = vpop.f32.mrf.mxu0
      %965 = vmatprep.mubr.f32.mxu0 0.0
      %966 = vmatmul.mubr.f32.gmra.mxu0 %v800
      %v967 = vpop.f32.mrf.mxu0
      %v968 = vadd.f32 %v647, %v967
      %v969 = vpop.f32.mrf.mxu0
      %970 = vmatprep.mubr.f32.mxu0 0.0
      %971 = vmatmul.mubr.f32.gmra.mxu0 %v803
      %v972 = vpop.f32.mrf.mxu0
      %v973 = vadd.f32 %v652, %v972
      %v974 = vpop.f32.mrf.mxu0
      %975 = vmatprep.mubr.f32.mxu0 0.0
      %976 = vmatmul.mubr.f32.gmra.mxu0 %v806
      %v977 = vpop.f32.mrf.mxu0
      %v978 = vadd.f32 %v657, %v977
      %v979 = vpop.f32.mrf.mxu0
      %980 = vmatprep.mubr.f32.mxu0 0.0
      %981 = vmatmul.mubr.f32.gmra.mxu0 %v809
      %v982 = vpop.f32.mrf.mxu0
      %v983 = vadd.f32 %v662, %v982
      %v984 = vpop.f32.mrf.mxu0
      %985 = vmatprep.mubr.f32.mxu0 0.0
      %986 = vmatmul.mubr.f32.gmra.mxu0 %v812
      %v987 = vpop.f32.mrf.mxu0
      %v988 = vadd.f32 %v667, %v987
      %v989 = vpop.f32.mrf.mxu0
      %990 = vmatprep.mubr.f32.mxu0 0.0
      %991 = vmatmul.mubr.f32.gmra.mxu0 %v815
      %v992 = vpop.f32.mrf.mxu0
      %v993 = vadd.f32 %v672, %v992
      %v994 = vpop.f32.mrf.mxu0
      %995 = vmatprep.mubr.f32.mxu0 0.0
      %996 = vmatmul.mubr.f32.gmra.mxu0 %v818
      %v997 = vpop.f32.mrf.mxu0
      %v998 = vadd.f32 %v677, %v997
      %v999 = vpop.f32.mrf.mxu0
      %1000 = vmatprep.mubr.f32.mxu0 0.0
      %1001 = vmatmul.mubr.f32.gmra.mxu0 %v821
      %v1002 = vpop.f32.mrf.mxu0
      %v1003 = vadd.f32 %v682, %v1002
      %v1004 = vpop.f32.mrf.mxu0
      %1005 = vmatprep.mubr.f32.mxu0 0.0
      %1006 = vmatmul.mubr.f32.gmra.mxu0 %v824
      %v1007 = vpop.f32.mrf.mxu0
      %v1008 = vadd.f32 %v687, %v1007
      %v1009 = vpop.f32.mrf.mxu0
      %1010 = vmatprep.mubr.f32.mxu0 0.0
      %1011 = vmatmul.mubr.f32.gmra.mxu0 %v827
      %v1012 = vpop.f32.mrf.mxu0
      %v1013 = vadd.f32 %v692, %v1012
      %v1014 = vpop.f32.mrf.mxu0
      %1015 = vmatprep.mubr.f32.mxu0 0.0
      %1016 = vmatmul.mubr.f32.gmra.mxu0 %v830
      %v1017 = vpop.f32.mrf.mxu0
      %v1018 = vadd.f32 %v697, %v1017
      %v1019 = vpop.f32.mrf.mxu0
      %1020 = vmatprep.mubr.f32.mxu0 0.0
      %1021 = vmatmul.mubr.f32.gmra.mxu0 %v833
      %v1022 = vpop.f32.mrf.mxu0
      %v1023 = vadd.f32 %v702, %v1022
      %v1024 = vpop.f32.mrf.mxu0
      %1025 = vmatprep.mubr.f32.mxu0 0.0
      %1026 = vmatmul.mubr.f32.gmra.mxu0 %v836
      %v1027 = vpop.f32.mrf.mxu0
      %v1028 = vadd.f32 %v707, %v1027
      %v1029 = vpop.f32.mrf.mxu0
      %1030 = vmatprep.mubr.f32.mxu0 0.0
      %1031 = vmatmul.mubr.f32.gmra.mxu0 %v839
      %v1032 = vpop.f32.mrf.mxu0
      %v1033 = vadd.f32 %v712, %v1032
      %v1034 = vpop.f32.mrf.mxu0
      %1035 = vmatprep.mubr.f32.mxu0 0.0
      %1036 = vmatmul.mubr.f32.gmra.mxu0 %v842
      %v1037 = vpop.f32.mrf.mxu0
      %v1038 = vadd.f32 %v717, %v1037
      %v1039 = vpop.f32.mrf.mxu0
      %1040 = vmatprep.mubr.f32.mxu0 0.0
      %1041 = vmatmul.mubr.f32.gmra.mxu0 %v845
      %v1042 = vpop.f32.mrf.mxu0
      %v1043 = vadd.f32 %v722, %v1042
      %v1044 = vpop.f32.mrf.mxu0
      %1045 = vmatprep.mubr.f32.mxu0 0.0
      %1046 = vmatmul.mubr.f32.gmra.mxu0 %v848
      %v1047 = vpop.f32.mrf.mxu0
      %v1048 = vadd.f32 %v727, %v1047
      %v1049 = vpop.f32.mrf.mxu0
      %1050 = vmatprep.mubr.f32.mxu0 0.0
      %1051 = vmatmul.mubr.f32.gmra.mxu0 %v851
      %v1052 = vpop.f32.mrf.mxu0
      %v1053 = vadd.f32 %v732, %v1052
      %v1054 = vpop.f32.mrf.mxu0
      %1055 = vmatprep.mubr.f32.mxu0 0.0
      %1056 = vmatmul.mubr.f32.gmra.mxu0 %v854
      %v1057 = vpop.f32.mrf.mxu0
      %v1058 = vadd.f32 %v737, %v1057
      %v1059 = vpop.f32.mrf.mxu0
      %1060 = vmatprep.mubr.f32.mxu0 0.0
      %1061 = vmatmul.mubr.f32.gmra.mxu0 %v857
      %v1062 = vpop.f32.mrf.mxu0
      %v1063 = vadd.f32 %v742, %v1062
      %v1064 = vpop.f32.mrf.mxu0
      %1065 = vmatprep.mubr.f32.mxu0 0.0
      %1066 = vmatmul.mubr.f32.gmra.mxu0 %v860
      %v1067 = vpop.f32.mrf.mxu0
      %v1068 = vadd.f32 %v747, %v1067
      %v1069 = vpop.f32.mrf.mxu0
      %1070 = vmatprep.mubr.f32.mxu0 0.0
      %1071 = vmatmul.mubr.f32.gmra.mxu0 %v863
      %v1072 = vpop.f32.mrf.mxu0
      %v1073 = vadd.f32 %v752, %v1072
      %v1074 = vpop.f32.mrf.mxu0
      %1075 = vmatprep.mubr.f32.mxu0 0.0
      %1076 = vmatmul.mubr.f32.gmra.mxu0 %v866
      %v1077 = vpop.f32.mrf.mxu0
      %v1078 = vadd.f32 %v757, %v1077
      %v1079 = vpop.f32.mrf.mxu0
      %1080 = vmatprep.mubr.f32.mxu0 0.0
      %1081 = vmatmul.mubr.f32.gmra.mxu0 %v869
      %v1082 = vpop.f32.mrf.mxu0
      %v1083 = vadd.f32 %v762, %v1082
      %v1084 = vpop.f32.mrf.mxu0
      %1085 = vmatprep.mubr.f32.mxu0 0.0
      %1086 = vmatmul.mubr.f32.gmra.mxu0 %v872
      %v1087 = vpop.f32.mrf.mxu0
      %v1088 = vadd.f32 %v767, %v1087
      %v1089 = vpop.f32.mrf.mxu0
      %1090 = vmatprep.mubr.f32.mxu0 0.0
      %1091 = vmatmul.mubr.f32.gmra.mxu0 %v875
      %v1092 = vpop.f32.mrf.mxu0
      %v1093 = vadd.f32 %v772, %v1092
      %v1094 = vpop.f32.mrf.mxu0
      %1095 = vmatprep.mubr.f32.mxu0 0.0
      %1096 = vmatmul.mubr.f32.gmra.mxu0 %v878
      %v1097 = vpop.f32.mrf.mxu0
      %v1098 = vadd.f32 %v777, %v1097
      %v1099 = vpop.f32.mrf.mxu0
      %1100 = vmatprep.mubr.f32.mxu0 0.0
      %1101 = vmatmul.mubr.f32.gmra.mxu0 %v881
      %v1102 = vpop.f32.mrf.mxu0
      %v1103 = vadd.f32 %v782, %v1102
      %v1104 = vpop.f32.mrf.mxu0
      %1105 = vmatprep.mubr.f32.mxu0 0.0
      %1106 = vmatmul.mubr.f32.gmra.mxu0 %v884
      %v1107 = vpop.f32.mrf.mxu0
      %v1108 = vadd.f32 %v787, %v1107
      %v1109 = vpop.f32.mrf.mxu0
      %1110 = vdwg.mxu0
      %v1111 = vld [vmem:[%s388] sm:$0xff]
      %v1112 = vld [vmem:[%s388 + $0x8] sm:$0xff]
      %v1113 = vld [vmem:[%s388 + $0x10] sm:$0xff]
      %v1114 = vld [vmem:[%s388 + $0x18] sm:$0xff]
      %v1115 = vld [vmem:[%s388 + $0x20] sm:$0xff]
      %v1116 = vld [vmem:[%s388 + $0x28] sm:$0xff]
      %v1117 = vld [vmem:[%s388 + $0x30] sm:$0xff]
      %v1118 = vld [vmem:[%s388 + $0x38] sm:$0xff]
      %v1119 = vld [vmem:[%s388 + $0x40] sm:$0xff]
      %v1120 = vld [vmem:[%s388 + $0x48] sm:$0xff]
      %v1121 = vld [vmem:[%s388 + $0x50] sm:$0xff]
      %v1122 = vld [vmem:[%s388 + $0x58] sm:$0xff]
      %v1123 = vld [vmem:[%s388 + $0x60] sm:$0xff]
      %v1124 = vld [vmem:[%s388 + $0x68] sm:$0xff]
      %v1125 = vld [vmem:[%s388 + $0x70] sm:$0xff]
      %v1126 = vld [vmem:[%s388 + $0x78] sm:$0xff]
      %v1127 = vld [vmem:[%s388 + $0x80] sm:$0xff]
      %v1128 = vld [vmem:[%s388 + $0x88] sm:$0xff]
      %v1129 = vld [vmem:[%s388 + $0x90] sm:$0xff]
      %v1130 = vld [vmem:[%s388 + $0x98] sm:$0xff]
      %v1131 = vld [vmem:[%s388 + $0xa0] sm:$0xff]
      %v1132 = vld [vmem:[%s388 + $0xa8] sm:$0xff]
      %v1133 = vld [vmem:[%s388 + $0xb0] sm:$0xff]
      %v1134 = vld [vmem:[%s388 + $0xb8] sm:$0xff]
      %v1135 = vld [vmem:[%s388 + $0xc0] sm:$0xff]
      %v1136 = vld [vmem:[%s388 + $0xc8] sm:$0xff]
      %v1137 = vld [vmem:[%s388 + $0xd0] sm:$0xff]
      %v1138 = vld [vmem:[%s388 + $0xd8] sm:$0xff]
      %v1139 = vld [vmem:[%s388 + $0xe0] sm:$0xff]
      %v1140 = vld [vmem:[%s388 + $0xe8] sm:$0xff]
      %v1141 = vld [vmem:[%s388 + $0xf0] sm:$0xff]
      %v1142 = vld [vmem:[%s388 + $0xf8] sm:$0xff]
      %v1143 = vld [vmem:[%s6] sm:$0xff]
      %v1145 = vsel %vm468, %v1111, 0
      %v1148 = vsel %vm468, %v1112, 0
      %v1151 = vsel %vm468, %v1113, 0
      %v1154 = vsel %vm468, %v1114, 0
      %v1157 = vsel %vm468, %v1115, 0
      %v1160 = vsel %vm468, %v1116, 0
      %v1163 = vsel %vm468, %v1117, 0
      %v1166 = vsel %vm468, %v1118, 0
      %v1169 = vsel %vm468, %v1119, 0
      %v1172 = vsel %vm468, %v1120, 0
      %v1175 = vsel %vm468, %v1121, 0
      %v1178 = vsel %vm468, %v1122, 0
      %v1181 = vsel %vm468, %v1123, 0
      %v1184 = vsel %vm468, %v1124, 0
      %v1187 = vsel %vm468, %v1125, 0
      %v1190 = vsel %vm468, %v1126, 0
      %v1193 = vsel %vm468, %v1127, 0
      %v1196 = vsel %vm468, %v1128, 0
      %v1199 = vsel %vm468, %v1129, 0
      %v1202 = vsel %vm468, %v1130, 0
      %v1205 = vsel %vm468, %v1131, 0
      %v1208 = vsel %vm468, %v1132, 0
      %v1211 = vsel %vm468, %v1133, 0
      %v1214 = vsel %vm468, %v1134, 0
      %v1217 = vsel %vm468, %v1135, 0
      %v1220 = vsel %vm468, %v1136, 0
      %v1223 = vsel %vm468, %v1137, 0
      %v1226 = vsel %vm468, %v1138, 0
      %v1229 = vsel %vm468, %v1139, 0
      %v1232 = vsel %vm468, %v1140, 0
      %v1235 = vsel %vm468, %v1141, 0
      %v1238 = vsel %vm468, %v1142, 0
      %1240 = vmatprep.subr.mxu0 0.0
      %1241 = vmatpush1.msra.mxu0 0.0
      %1242 = vmatprep.subr.mxu0 0.0
      %1243 = vmatpush1.msra.mxu0 0.0
      %1244 = vmatprep.subr.mxu0 0.0
      %1245 = vmatpush1.msra.mxu0 0.0
      %1246 = vmatprep.subr.mxu0 0.0
      %1247 = vmatpush1.msra.mxu0 0.0
      %1248 = vmatprep.subr.mxu0 0.0
      %1249 = vmatpush1.msra.mxu0 0.0
      %1250 = vmatprep.subr.mxu0 0.0
      %1251 = vmatpush1.msra.mxu0 0.0
      %1252 = vmatprep.subr.mxu0 0.0
      %1253 = vmatpush1.msra.mxu0 0.0
      %1254 = vmatprep.subr.mxu0 0.0
      %1255 = vmatpush1.msra.mxu0 0.0
      %1256 = vmatprep.subr.mxu0 0.0
      %1257 = vmatpush1.msra.mxu0 0.0
      %1258 = vmatprep.subr.mxu0 0.0
      %1259 = vmatpush1.msra.mxu0 0.0
      %1260 = vmatprep.subr.mxu0 0.0
      %1261 = vmatpush1.msra.mxu0 0.0
      %1262 = vmatprep.subr.mxu0 0.0
      %1263 = vmatpush1.msra.mxu0 0.0
      %1264 = vmatprep.subr.mxu0 0.0
      %1265 = vmatpush1.msra.mxu0 0.0
      %1266 = vmatprep.subr.mxu0 0.0
      %1267 = vmatpush1.msra.mxu0 0.0
      %1268 = vmatprep.subr.mxu0 0.0
      %1269 = vmatpush1.msra.mxu0 0.0
      %1270 = vmatprep.subr.mxu0 0.0
      %1271 = vmatpush1.msra.mxu0 %v1143
      %1272 = vmatprep.subr.mxu0 0.0
      %1273 = vmatpush2.msra.mxu0 0.0
      %1274 = vmatprep.subr.mxu0 0.0
      %1275 = vmatpush2.msra.mxu0 0.0
      %1276 = vmatprep.subr.mxu0 0.0
      %1277 = vmatpush2.msra.mxu0 0.0
      %1278 = vmatprep.subr.mxu0 0.0
      %1279 = vmatpush2.msra.mxu0 0.0
      %1280 = vmatprep.subr.mxu0 0.0
      %1281 = vmatpush2.msra.mxu0 0.0
      %1282 = vmatprep.subr.mxu0 0.0
      %1283 = vmatpush2.msra.mxu0 0.0
      %1284 = vmatprep.subr.mxu0 0.0
      %1285 = vmatpush2.msra.mxu0 0.0
      %1286 = vmatprep.subr.mxu0 0.0
      %1287 = vmatpush2.msra.mxu0 0.0
      %1288 = vmatprep.subr.mxu0 0.0
      %1289 = vmatpush2.msra.mxu0 0.0
      %1290 = vmatprep.subr.mxu0 0.0
      %1291 = vmatpush2.msra.mxu0 0.0
      %1292 = vmatprep.subr.mxu0 0.0
      %1293 = vmatpush2.msra.mxu0 0.0
      %1294 = vmatprep.subr.mxu0 0.0
      %1295 = vmatpush2.msra.mxu0 0.0
      %1296 = vmatprep.subr.mxu0 0.0
      %1297 = vmatpush2.msra.mxu0 0.0
      %1298 = vmatprep.subr.mxu0 0.0
      %1299 = vmatpush2.msra.mxu0 0.0
      %1300 = vmatprep.subr.mxu0 0.0
      %1301 = vmatpush2.msra.mxu0 0.0
      %1302 = vmatprep.subr.mxu0 0.0
      %1303 = vmatpush2.msra.mxu0 0.0
      %1304 = vmatprep.mubr.f32.mxu0 0.0
      %1305 = vmatmul.mubr.f32.gmra.mxu0 %v1145
      %v1306 = vpop.f32.mrf.mxu0
      %v1307 = vadd.f32 0.0, %v1306
      %v1308 = vpop.f32.mrf.mxu0
      %1309 = vmatprep.mubr.f32.mxu0 0.0
      %1310 = vmatmul.mubr.f32.gmra.mxu0 %v1148
      %v1311 = vpop.f32.mrf.mxu0
      %v1312 = vadd.f32 0.0, %v1311
      %v1313 = vpop.f32.mrf.mxu0
      %1314 = vmatprep.mubr.f32.mxu0 0.0
      %1315 = vmatmul.mubr.f32.gmra.mxu0 %v1151
      %v1316 = vpop.f32.mrf.mxu0
      %v1317 = vadd.f32 0.0, %v1316
      %v1318 = vpop.f32.mrf.mxu0
      %1319 = vmatprep.mubr.f32.mxu0 0.0
      %1320 = vmatmul.mubr.f32.gmra.mxu0 %v1154
      %v1321 = vpop.f32.mrf.mxu0
      %v1322 = vadd.f32 0.0, %v1321
      %v1323 = vpop.f32.mrf.mxu0
      %1324 = vmatprep.mubr.f32.mxu0 0.0
      %1325 = vmatmul.mubr.f32.gmra.mxu0 %v1157
      %v1326 = vpop.f32.mrf.mxu0
      %v1327 = vadd.f32 0.0, %v1326
      %v1328 = vpop.f32.mrf.mxu0
      %1329 = vmatprep.mubr.f32.mxu0 0.0
      %1330 = vmatmul.mubr.f32.gmra.mxu0 %v1160
      %v1331 = vpop.f32.mrf.mxu0
      %v1332 = vadd.f32 0.0, %v1331
      %v1333 = vpop.f32.mrf.mxu0
      %1334 = vmatprep.mubr.f32.mxu0 0.0
      %1335 = vmatmul.mubr.f32.gmra.mxu0 %v1163
      %v1336 = vpop.f32.mrf.mxu0
      %v1337 = vadd.f32 0.0, %v1336
      %v1338 = vpop.f32.mrf.mxu0
      %1339 = vmatprep.mubr.f32.mxu0 0.0
      %1340 = vmatmul.mubr.f32.gmra.mxu0 %v1166
      %v1341 = vpop.f32.mrf.mxu0
      %v1342 = vadd.f32 0.0, %v1341
      %v1343 = vpop.f32.mrf.mxu0
      %1344 = vmatprep.mubr.f32.mxu0 0.0
      %1345 = vmatmul.mubr.f32.gmra.mxu0 %v1169
      %v1346 = vpop.f32.mrf.mxu0
      %v1347 = vadd.f32 0.0, %v1346
      %v1348 = vpop.f32.mrf.mxu0
      %1349 = vmatprep.mubr.f32.mxu0 0.0
      %1350 = vmatmul.mubr.f32.gmra.mxu0 %v1172
      %v1351 = vpop.f32.mrf.mxu0
      %v1352 = vadd.f32 0.0, %v1351
      %v1353 = vpop.f32.mrf.mxu0
      %1354 = vmatprep.mubr.f32.mxu0 0.0
      %1355 = vmatmul.mubr.f32.gmra.mxu0 %v1175
      %v1356 = vpop.f32.mrf.mxu0
      %v1357 = vadd.f32 0.0, %v1356
      %v1358 = vpop.f32.mrf.mxu0
      %1359 = vmatprep.mubr.f32.mxu0 0.0
      %1360 = vmatmul.mubr.f32.gmra.mxu0 %v1178
      %v1361 = vpop.f32.mrf.mxu0
      %v1362 = vadd.f32 0.0, %v1361
      %v1363 = vpop.f32.mrf.mxu0
      %1364 = vmatprep.mubr.f32.mxu0 0.0
      %1365 = vmatmul.mubr.f32.gmra.mxu0 %v1181
      %v1366 = vpop.f32.mrf.mxu0
      %v1367 = vadd.f32 0.0, %v1366
      %v1368 = vpop.f32.mrf.mxu0
      %1369 = vmatprep.mubr.f32.mxu0 0.0
      %1370 = vmatmul.mubr.f32.gmra.mxu0 %v1184
      %v1371 = vpop.f32.mrf.mxu0
      %v1372 = vadd.f32 0.0, %v1371
      %v1373 = vpop.f32.mrf.mxu0
      %1374 = vmatprep.mubr.f32.mxu0 0.0
      %1375 = vmatmul.mubr.f32.gmra.mxu0 %v1187
      %v1376 = vpop.f32.mrf.mxu0
      %v1377 = vadd.f32 0.0, %v1376
      %v1378 = vpop.f32.mrf.mxu0
      %1379 = vmatprep.mubr.f32.mxu0 0.0
      %1380 = vmatmul.mubr.f32.gmra.mxu0 %v1190
      %v1381 = vpop.f32.mrf.mxu0
      %v1382 = vadd.f32 0.0, %v1381
      %v1383 = vpop.f32.mrf.mxu0
      %1384 = vmatprep.mubr.f32.mxu0 0.0
      %1385 = vmatmul.mubr.f32.gmra.mxu0 %v1193
      %v1386 = vpop.f32.mrf.mxu0
      %v1387 = vadd.f32 0.0, %v1386
      %v1388 = vpop.f32.mrf.mxu0
      %1389 = vmatprep.mubr.f32.mxu0 0.0
      %1390 = vmatmul.mubr.f32.gmra.mxu0 %v1196
      %v1391 = vpop.f32.mrf.mxu0
      %v1392 = vadd.f32 0.0, %v1391
      %v1393 = vpop.f32.mrf.mxu0
      %1394 = vmatprep.mubr.f32.mxu0 0.0
      %1395 = vmatmul.mubr.f32.gmra.mxu0 %v1199
      %v1396 = vpop.f32.mrf.mxu0
      %v1397 = vadd.f32 0.0, %v1396
      %v1398 = vpop.f32.mrf.mxu0
      %1399 = vmatprep.mubr.f32.mxu0 0.0
      %1400 = vmatmul.mubr.f32.gmra.mxu0 %v1202
      %v1401 = vpop.f32.mrf.mxu0
      %v1402 = vadd.f32 0.0, %v1401
      %v1403 = vpop.f32.mrf.mxu0
      %1404 = vmatprep.mubr.f32.mxu0 0.0
      %1405 = vmatmul.mubr.f32.gmra.mxu0 %v1205
      %v1406 = vpop.f32.mrf.mxu0
      %v1407 = vadd.f32 0.0, %v1406
      %v1408 = vpop.f32.mrf.mxu0
      %1409 = vmatprep.mubr.f32.mxu0 0.0
      %1410 = vmatmul.mubr.f32.gmra.mxu0 %v1208
      %v1411 = vpop.f32.mrf.mxu0
      %v1412 = vadd.f32 0.0, %v1411
      %v1413 = vpop.f32.mrf.mxu0
      %1414 = vmatprep.mubr.f32.mxu0 0.0
      %1415 = vmatmul.mubr.f32.gmra.mxu0 %v1211
      %v1416 = vpop.f32.mrf.mxu0
      %v1417 = vadd.f32 0.0, %v1416
      %v1418 = vpop.f32.mrf.mxu0
      %1419 = vmatprep.mubr.f32.mxu0 0.0
      %1420 = vmatmul.mubr.f32.gmra.mxu0 %v1214
      %v1421 = vpop.f32.mrf.mxu0
      %v1422 = vadd.f32 0.0, %v1421
      %v1423 = vpop.f32.mrf.mxu0
      %1424 = vmatprep.mubr.f32.mxu0 0.0
      %1425 = vmatmul.mubr.f32.gmra.mxu0 %v1217
      %v1426 = vpop.f32.mrf.mxu0
      %v1427 = vadd.f32 0.0, %v1426
      %v1428 = vpop.f32.mrf.mxu0
      %1429 = vmatprep.mubr.f32.mxu0 0.0
      %1430 = vmatmul.mubr.f32.gmra.mxu0 %v1220
      %v1431 = vpop.f32.mrf.mxu0
      %v1432 = vadd.f32 0.0, %v1431
      %v1433 = vpop.f32.mrf.mxu0
      %1434 = vmatprep.mubr.f32.mxu0 0.0
      %1435 = vmatmul.mubr.f32.gmra.mxu0 %v1223
      %v1436 = vpop.f32.mrf.mxu0
      %v1437 = vadd.f32 0.0, %v1436
      %v1438 = vpop.f32.mrf.mxu0
      %1439 = vmatprep.mubr.f32.mxu0 0.0
      %1440 = vmatmul.mubr.f32.gmra.mxu0 %v1226
      %v1441 = vpop.f32.mrf.mxu0
      %v1442 = vadd.f32 0.0, %v1441
      %v1443 = vpop.f32.mrf.mxu0
      %1444 = vmatprep.mubr.f32.mxu0 0.0
      %1445 = vmatmul.mubr.f32.gmra.mxu0 %v1229
      %v1446 = vpop.f32.mrf.mxu0
      %v1447 = vadd.f32 0.0, %v1446
      %v1448 = vpop.f32.mrf.mxu0
      %1449 = vmatprep.mubr.f32.mxu0 0.0
      %1450 = vmatmul.mubr.f32.gmra.mxu0 %v1232
      %v1451 = vpop.f32.mrf.mxu0
      %v1452 = vadd.f32 0.0, %v1451
      %v1453 = vpop.f32.mrf.mxu0
      %1454 = vmatprep.mubr.f32.mxu0 0.0
      %1455 = vmatmul.mubr.f32.gmra.mxu0 %v1235
      %v1456 = vpop.f32.mrf.mxu0
      %v1457 = vadd.f32 0.0, %v1456
      %v1458 = vpop.f32.mrf.mxu0
      %1459 = vmatprep.mubr.f32.mxu0 0.0
      %1460 = vmatmul.mubr.f32.gmra.mxu0 %v1238
      %v1461 = vpop.f32.mrf.mxu0
      %v1462 = vadd.f32 0.0, %v1461
      %v1463 = vpop.f32.mrf.mxu0
      %1464 = vdwg.mxu0
      %v1465 = vadd.f32 %v953, %v1307
      %v1466 = vadd.f32 %v958, %v1312
      %v1467 = vadd.f32 %v963, %v1317
      %v1468 = vadd.f32 %v968, %v1322
      %v1469 = vadd.f32 %v973, %v1327
      %v1470 = vadd.f32 %v978, %v1332
      %v1471 = vadd.f32 %v983, %v1337
      %v1472 = vadd.f32 %v988, %v1342
      %v1473 = vadd.f32 %v993, %v1347
      %v1474 = vadd.f32 %v998, %v1352
      %v1475 = vadd.f32 %v1003, %v1357
      %v1476 = vadd.f32 %v1008, %v1362
      %v1477 = vadd.f32 %v1013, %v1367
      %v1478 = vadd.f32 %v1018, %v1372
      %v1479 = vadd.f32 %v1023, %v1377
      %v1480 = vadd.f32 %v1028, %v1382
      %v1481 = vadd.f32 %v1033, %v1387
      %v1482 = vadd.f32 %v1038, %v1392
      %v1483 = vadd.f32 %v1043, %v1397
      %v1484 = vadd.f32 %v1048, %v1402
      %v1485 = vadd.f32 %v1053, %v1407
      %v1486 = vadd.f32 %v1058, %v1412
      %v1487 = vadd.f32 %v1063, %v1417
      %v1488 = vadd.f32 %v1068, %v1422
      %v1489 = vadd.f32 %v1073, %v1427
      %v1490 = vadd.f32 %v1078, %v1432
      %v1491 = vadd.f32 %v1083, %v1437
      %v1492 = vadd.f32 %v1088, %v1442
      %v1493 = vadd.f32 %v1093, %v1447
      %v1494 = vadd.f32 %v1098, %v1452
      %v1495 = vadd.f32 %v1103, %v1457
      %v1496 = vadd.f32 %v1108, %v1462
      %v1497 = vld [vmem:[%s394] sm:$0xff]
      %v1498 = vld [vmem:[%s394 + $0x8] sm:$0xff]
      %v1499 = vld [vmem:[%s394 + $0x10] sm:$0xff]
      %v1500 = vld [vmem:[%s394 + $0x18] sm:$0xff]
      %v1501 = vld [vmem:[%s394 + $0x20] sm:$0xff]
      %v1502 = vld [vmem:[%s394 + $0x28] sm:$0xff]
      %v1503 = vld [vmem:[%s394 + $0x30] sm:$0xff]
      %v1504 = vld [vmem:[%s394 + $0x38] sm:$0xff]
      %v1505 = vld [vmem:[%s394 + $0x40] sm:$0xff]
      %v1506 = vld [vmem:[%s394 + $0x48] sm:$0xff]
      %v1507 = vld [vmem:[%s394 + $0x50] sm:$0xff]
      %v1508 = vld [vmem:[%s394 + $0x58] sm:$0xff]
      %v1509 = vld [vmem:[%s394 + $0x60] sm:$0xff]
      %v1510 = vld [vmem:[%s394 + $0x68] sm:$0xff]
      %v1511 = vld [vmem:[%s394 + $0x70] sm:$0xff]
      %v1512 = vld [vmem:[%s394 + $0x78] sm:$0xff]
      %v1513 = vld [vmem:[%s394 + $0x80] sm:$0xff]
      %v1514 = vld [vmem:[%s394 + $0x88] sm:$0xff]
      %v1515 = vld [vmem:[%s394 + $0x90] sm:$0xff]
      %v1516 = vld [vmem:[%s394 + $0x98] sm:$0xff]
      %v1517 = vld [vmem:[%s394 + $0xa0] sm:$0xff]
      %v1518 = vld [vmem:[%s394 + $0xa8] sm:$0xff]
      %v1519 = vld [vmem:[%s394 + $0xb0] sm:$0xff]
      %v1520 = vld [vmem:[%s394 + $0xb8] sm:$0xff]
      %v1521 = vld [vmem:[%s394 + $0xc0] sm:$0xff]
      %v1522 = vld [vmem:[%s394 + $0xc8] sm:$0xff]
      %v1523 = vld [vmem:[%s394 + $0xd0] sm:$0xff]
      %v1524 = vld [vmem:[%s394 + $0xd8] sm:$0xff]
      %v1525 = vld [vmem:[%s394 + $0xe0] sm:$0xff]
      %v1526 = vld [vmem:[%s394 + $0xe8] sm:$0xff]
      %v1527 = vld [vmem:[%s394 + $0xf0] sm:$0xff]
      %v1528 = vld [vmem:[%s394 + $0xf8] sm:$0xff]
      %v1529 = vld [vmem:[%s7] sm:$0xff]
      %v1531 = vsel %vm468, %v1497, 0
      %v1534 = vsel %vm468, %v1498, 0
      %v1537 = vsel %vm468, %v1499, 0
      %v1540 = vsel %vm468, %v1500, 0
      %v1543 = vsel %vm468, %v1501, 0
      %v1546 = vsel %vm468, %v1502, 0
      %v1549 = vsel %vm468, %v1503, 0
      %v1552 = vsel %vm468, %v1504, 0
      %v1555 = vsel %vm468, %v1505, 0
      %v1558 = vsel %vm468, %v1506, 0
      %v1561 = vsel %vm468, %v1507, 0
      %v1564 = vsel %vm468, %v1508, 0
      %v1567 = vsel %vm468, %v1509, 0
      %v1570 = vsel %vm468, %v1510, 0
      %v1573 = vsel %vm468, %v1511, 0
      %v1576 = vsel %vm468, %v1512, 0
      %v1579 = vsel %vm468, %v1513, 0
      %v1582 = vsel %vm468, %v1514, 0
      %v1585 = vsel %vm468, %v1515, 0
      %v1588 = vsel %vm468, %v1516, 0
      %v1591 = vsel %vm468, %v1517, 0
      %v1594 = vsel %vm468, %v1518, 0
      %v1597 = vsel %vm468, %v1519, 0
      %v1600 = vsel %vm468, %v1520, 0
      %v1603 = vsel %vm468, %v1521, 0
      %v1606 = vsel %vm468, %v1522, 0
      %v1609 = vsel %vm468, %v1523, 0
      %v1612 = vsel %vm468, %v1524, 0
      %v1615 = vsel %vm468, %v1525, 0
      %v1618 = vsel %vm468, %v1526, 0
      %v1621 = vsel %vm468, %v1527, 0
      %v1624 = vsel %vm468, %v1528, 0
      %1626 = vmatprep.subr.mxu0 0.0
      %1627 = vmatpush1.msra.mxu0 0.0
      %1628 = vmatprep.subr.mxu0 0.0
      %1629 = vmatpush1.msra.mxu0 0.0
      %1630 = vmatprep.subr.mxu0 0.0
      %1631 = vmatpush1.msra.mxu0 0.0
      %1632 = vmatprep.subr.mxu0 0.0
      %1633 = vmatpush1.msra.mxu0 0.0
      %1634 = vmatprep.subr.mxu0 0.0
      %1635 = vmatpush1.msra.mxu0 0.0
      %1636 = vmatprep.subr.mxu0 0.0
      %1637 = vmatpush1.msra.mxu0 0.0
      %1638 = vmatprep.subr.mxu0 0.0
      %1639 = vmatpush1.msra.mxu0 0.0
      %1640 = vmatprep.subr.mxu0 0.0
      %1641 = vmatpush1.msra.mxu0 0.0
      %1642 = vmatprep.subr.mxu0 0.0
      %1643 = vmatpush1.msra.mxu0 0.0
      %1644 = vmatprep.subr.mxu0 0.0
      %1645 = vmatpush1.msra.mxu0 0.0
      %1646 = vmatprep.subr.mxu0 0.0
      %1647 = vmatpush1.msra.mxu0 0.0
      %1648 = vmatprep.subr.mxu0 0.0
      %1649 = vmatpush1.msra.mxu0 0.0
      %1650 = vmatprep.subr.mxu0 0.0
      %1651 = vmatpush1.msra.mxu0 0.0
      %1652 = vmatprep.subr.mxu0 0.0
      %1653 = vmatpush1.msra.mxu0 0.0
      %1654 = vmatprep.subr.mxu0 0.0
      %1655 = vmatpush1.msra.mxu0 0.0
      %1656 = vmatprep.subr.mxu0 0.0
      %1657 = vmatpush1.msra.mxu0 %v1529
      %1658 = vmatprep.subr.mxu0 0.0
      %1659 = vmatpush2.msra.mxu0 0.0
      %1660 = vmatprep.subr.mxu0 0.0
      %1661 = vmatpush2.msra.mxu0 0.0
      %1662 = vmatprep.subr.mxu0 0.0
      %1663 = vmatpush2.msra.mxu0 0.0
      %1664 = vmatprep.subr.mxu0 0.0
      %1665 = vmatpush2.msra.mxu0 0.0
      %1666 = vmatprep.subr.mxu0 0.0
      %1667 = vmatpush2.msra.mxu0 0.0
      %1668 = vmatprep.subr.mxu0 0.0
      %1669 = vmatpush2.msra.mxu0 0.0
      %1670 = vmatprep.subr.mxu0 0.0
      %1671 = vmatpush2.msra.mxu0 0.0
      %1672 = vmatprep.subr.mxu0 0.0
      %1673 = vmatpush2.msra.mxu0 0.0
      %1674 = vmatprep.subr.mxu0 0.0
      %1675 = vmatpush2.msra.mxu0 0.0
      %1676 = vmatprep.subr.mxu0 0.0
      %1677 = vmatpush2.msra.mxu0 0.0
      %1678 = vmatprep.subr.mxu0 0.0
      %1679 = vmatpush2.msra.mxu0 0.0
      %1680 = vmatprep.subr.mxu0 0.0
      %1681 = vmatpush2.msra.mxu0 0.0
      %1682 = vmatprep.subr.mxu0 0.0
      %1683 = vmatpush2.msra.mxu0 0.0
      %1684 = vmatprep.subr.mxu0 0.0
      %1685 = vmatpush2.msra.mxu0 0.0
      %1686 = vmatprep.subr.mxu0 0.0
      %1687 = vmatpush2.msra.mxu0 0.0
      %1688 = vmatprep.subr.mxu0 0.0
      %1689 = vmatpush2.msra.mxu0 0.0
      %1690 = vmatprep.mubr.f32.mxu0 0.0
      %1691 = vmatmul.mubr.f32.gmra.mxu0 %v1531
      %v1692 = vpop.f32.mrf.mxu0
      %v1693 = vadd.f32 0.0, %v1692
      %v1694 = vpop.f32.mrf.mxu0
      %1695 = vmatprep.mubr.f32.mxu0 0.0
      %1696 = vmatmul.mubr.f32.gmra.mxu0 %v1534
      %v1697 = vpop.f32.mrf.mxu0
      %v1698 = vadd.f32 0.0, %v1697
      %v1699 = vpop.f32.mrf.mxu0
      %1700 = vmatprep.mubr.f32.mxu0 0.0
      %1701 = vmatmul.mubr.f32.gmra.mxu0 %v1537
      %v1702 = vpop.f32.mrf.mxu0
      %v1703 = vadd.f32 0.0, %v1702
      %v1704 = vpop.f32.mrf.mxu0
      %1705 = vmatprep.mubr.f32.mxu0 0.0
      %1706 = vmatmul.mubr.f32.gmra.mxu0 %v1540
      %v1707 = vpop.f32.mrf.mxu0
      %v1708 = vadd.f32 0.0, %v1707
      %v1709 = vpop.f32.mrf.mxu0
      %1710 = vmatprep.mubr.f32.mxu0 0.0
      %1711 = vmatmul.mubr.f32.gmra.mxu0 %v1543
      %v1712 = vpop.f32.mrf.mxu0
      %v1713 = vadd.f32 0.0, %v1712
      %v1714 = vpop.f32.mrf.mxu0
      %1715 = vmatprep.mubr.f32.mxu0 0.0
      %1716 = vmatmul.mubr.f32.gmra.mxu0 %v1546
      %v1717 = vpop.f32.mrf.mxu0
      %v1718 = vadd.f32 0.0, %v1717
      %v1719 = vpop.f32.mrf.mxu0
      %1720 = vmatprep.mubr.f32.mxu0 0.0
      %1721 = vmatmul.mubr.f32.gmra.mxu0 %v1549
      %v1722 = vpop.f32.mrf.mxu0
      %v1723 = vadd.f32 0.0, %v1722
      %v1724 = vpop.f32.mrf.mxu0
      %1725 = vmatprep.mubr.f32.mxu0 0.0
      %1726 = vmatmul.mubr.f32.gmra.mxu0 %v1552
      %v1727 = vpop.f32.mrf.mxu0
      %v1728 = vadd.f32 0.0, %v1727
      %v1729 = vpop.f32.mrf.mxu0
      %1730 = vmatprep.mubr.f32.mxu0 0.0
      %1731 = vmatmul.mubr.f32.gmra.mxu0 %v1555
      %v1732 = vpop.f32.mrf.mxu0
      %v1733 = vadd.f32 0.0, %v1732
      %v1734 = vpop.f32.mrf.mxu0
      %1735 = vmatprep.mubr.f32.mxu0 0.0
      %1736 = vmatmul.mubr.f32.gmra.mxu0 %v1558
      %v1737 = vpop.f32.mrf.mxu0
      %v1738 = vadd.f32 0.0, %v1737
      %v1739 = vpop.f32.mrf.mxu0
      %1740 = vmatprep.mubr.f32.mxu0 0.0
      %1741 = vmatmul.mubr.f32.gmra.mxu0 %v1561
      %v1742 = vpop.f32.mrf.mxu0
      %v1743 = vadd.f32 0.0, %v1742
      %v1744 = vpop.f32.mrf.mxu0
      %1745 = vmatprep.mubr.f32.mxu0 0.0
      %1746 = vmatmul.mubr.f32.gmra.mxu0 %v1564
      %v1747 = vpop.f32.mrf.mxu0
      %v1748 = vadd.f32 0.0, %v1747
      %v1749 = vpop.f32.mrf.mxu0
      %1750 = vmatprep.mubr.f32.mxu0 0.0
      %1751 = vmatmul.mubr.f32.gmra.mxu0 %v1567
      %v1752 = vpop.f32.mrf.mxu0
      %v1753 = vadd.f32 0.0, %v1752
      %v1754 = vpop.f32.mrf.mxu0
      %1755 = vmatprep.mubr.f32.mxu0 0.0
      %1756 = vmatmul.mubr.f32.gmra.mxu0 %v1570
      %v1757 = vpop.f32.mrf.mxu0
      %v1758 = vadd.f32 0.0, %v1757
      %v1759 = vpop.f32.mrf.mxu0
      %1760 = vmatprep.mubr.f32.mxu0 0.0
      %1761 = vmatmul.mubr.f32.gmra.mxu0 %v1573
      %v1762 = vpop.f32.mrf.mxu0
      %v1763 = vadd.f32 0.0, %v1762
      %v1764 = vpop.f32.mrf.mxu0
      %1765 = vmatprep.mubr.f32.mxu0 0.0
      %1766 = vmatmul.mubr.f32.gmra.mxu0 %v1576
      %v1767 = vpop.f32.mrf.mxu0
      %v1768 = vadd.f32 0.0, %v1767
      %v1769 = vpop.f32.mrf.mxu0
      %1770 = vmatprep.mubr.f32.mxu0 0.0
      %1771 = vmatmul.mubr.f32.gmra.mxu0 %v1579
      %v1772 = vpop.f32.mrf.mxu0
      %v1773 = vadd.f32 0.0, %v1772
      %v1774 = vpop.f32.mrf.mxu0
      %1775 = vmatprep.mubr.f32.mxu0 0.0
      %1776 = vmatmul.mubr.f32.gmra.mxu0 %v1582
      %v1777 = vpop.f32.mrf.mxu0
      %v1778 = vadd.f32 0.0, %v1777
      %v1779 = vpop.f32.mrf.mxu0
      %1780 = vmatprep.mubr.f32.mxu0 0.0
      %1781 = vmatmul.mubr.f32.gmra.mxu0 %v1585
      %v1782 = vpop.f32.mrf.mxu0
      %v1783 = vadd.f32 0.0, %v1782
      %v1784 = vpop.f32.mrf.mxu0
      %1785 = vmatprep.mubr.f32.mxu0 0.0
      %1786 = vmatmul.mubr.f32.gmra.mxu0 %v1588
      %v1787 = vpop.f32.mrf.mxu0
      %v1788 = vadd.f32 0.0, %v1787
      %v1789 = vpop.f32.mrf.mxu0
      %1790 = vmatprep.mubr.f32.mxu0 0.0
      %1791 = vmatmul.mubr.f32.gmra.mxu0 %v1591
      %v1792 = vpop.f32.mrf.mxu0
      %v1793 = vadd.f32 0.0, %v1792
      %v1794 = vpop.f32.mrf.mxu0
      %1795 = vmatprep.mubr.f32.mxu0 0.0
      %1796 = vmatmul.mubr.f32.gmra.mxu0 %v1594
      %v1797 = vpop.f32.mrf.mxu0
      %v1798 = vadd.f32 0.0, %v1797
      %v1799 = vpop.f32.mrf.mxu0
      %1800 = vmatprep.mubr.f32.mxu0 0.0
      %1801 = vmatmul.mubr.f32.gmra.mxu0 %v1597
      %v1802 = vpop.f32.mrf.mxu0
      %v1803 = vadd.f32 0.0, %v1802
      %v1804 = vpop.f32.mrf.mxu0
      %1805 = vmatprep.mubr.f32.mxu0 0.0
      %1806 = vmatmul.mubr.f32.gmra.mxu0 %v1600
      %v1807 = vpop.f32.mrf.mxu0
      %v1808 = vadd.f32 0.0, %v1807
      %v1809 = vpop.f32.mrf.mxu0
      %1810 = vmatprep.mubr.f32.mxu0 0.0
      %1811 = vmatmul.mubr.f32.gmra.mxu0 %v1603
      %v1812 = vpop.f32.mrf.mxu0
      %v1813 = vadd.f32 0.0, %v1812
      %v1814 = vpop.f32.mrf.mxu0
      %1815 = vmatprep.mubr.f32.mxu0 0.0
      %1816 = vmatmul.mubr.f32.gmra.mxu0 %v1606
      %v1817 = vpop.f32.mrf.mxu0
      %v1818 = vadd.f32 0.0, %v1817
      %v1819 = vpop.f32.mrf.mxu0
      %1820 = vmatprep.mubr.f32.mxu0 0.0
      %1821 = vmatmul.mubr.f32.gmra.mxu0 %v1609
      %v1822 = vpop.f32.mrf.mxu0
      %v1823 = vadd.f32 0.0, %v1822
      %v1824 = vpop.f32.mrf.mxu0
      %1825 = vmatprep.mubr.f32.mxu0 0.0
      %1826 = vmatmul.mubr.f32.gmra.mxu0 %v1612
      %v1827 = vpop.f32.mrf.mxu0
      %v1828 = vadd.f32 0.0, %v1827
      %v1829 = vpop.f32.mrf.mxu0
      %1830 = vmatprep.mubr.f32.mxu0 0.0
      %1831 = vmatmul.mubr.f32.gmra.mxu0 %v1615
      %v1832 = vpop.f32.mrf.mxu0
      %v1833 = vadd.f32 0.0, %v1832
      %v1834 = vpop.f32.mrf.mxu0
      %1835 = vmatprep.mubr.f32.mxu0 0.0
      %1836 = vmatmul.mubr.f32.gmra.mxu0 %v1618
      %v1837 = vpop.f32.mrf.mxu0
      %v1838 = vadd.f32 0.0, %v1837
      %v1839 = vpop.f32.mrf.mxu0
      %1840 = vmatprep.mubr.f32.mxu0 0.0
      %1841 = vmatmul.mubr.f32.gmra.mxu0 %v1621
      %v1842 = vpop.f32.mrf.mxu0
      %v1843 = vadd.f32 0.0, %v1842
      %v1844 = vpop.f32.mrf.mxu0
      %1845 = vmatprep.mubr.f32.mxu0 0.0
      %1846 = vmatmul.mubr.f32.gmra.mxu0 %v1624
      %v1847 = vpop.f32.mrf.mxu0
      %v1848 = vadd.f32 0.0, %v1847
      %v1849 = vpop.f32.mrf.mxu0
      %1850 = vdwg.mxu0
      %v1851 = vadd.f32 %v1465, %v1693
      %v1852 = vadd.f32 %v1466, %v1698
      %v1853 = vadd.f32 %v1467, %v1703
      %v1854 = vadd.f32 %v1468, %v1708
      %v1855 = vadd.f32 %v1469, %v1713
      %v1856 = vadd.f32 %v1470, %v1718
      %v1857 = vadd.f32 %v1471, %v1723
      %v1858 = vadd.f32 %v1472, %v1728
      %v1859 = vadd.f32 %v1473, %v1733
      %v1860 = vadd.f32 %v1474, %v1738
      %v1861 = vadd.f32 %v1475, %v1743
      %v1862 = vadd.f32 %v1476, %v1748
      %v1863 = vadd.f32 %v1477, %v1753
      %v1864 = vadd.f32 %v1478, %v1758
      %v1865 = vadd.f32 %v1479, %v1763
      %v1866 = vadd.f32 %v1480, %v1768
      %v1867 = vadd.f32 %v1481, %v1773
      %v1868 = vadd.f32 %v1482, %v1778
      %v1869 = vadd.f32 %v1483, %v1783
      %v1870 = vadd.f32 %v1484, %v1788
      %v1871 = vadd.f32 %v1485, %v1793
      %v1872 = vadd.f32 %v1486, %v1798
      %v1873 = vadd.f32 %v1487, %v1803
      %v1874 = vadd.f32 %v1488, %v1808
      %v1875 = vadd.f32 %v1489, %v1813
      %v1876 = vadd.f32 %v1490, %v1818
      %v1877 = vadd.f32 %v1491, %v1823
      %v1878 = vadd.f32 %v1492, %v1828
      %v1879 = vadd.f32 %v1493, %v1833
      %v1880 = vadd.f32 %v1494, %v1838
      %v1881 = vadd.f32 %v1495, %v1843
      %v1882 = vadd.f32 %v1496, %v1848
      %v1883 = vld [vmem:[%s8] sm:$0x1]
      %v1885 = vlaneseq
      %v1886 = vshrl.u32 %v1885, 7
      %v1887 = vsub.s32 0, %v1886
      %v1888 = vrot.slane %v1883, %v1887
      %v1890 = vadd.f32 %v1851, %v1888
      %v1891 = vadd.f32 %v1852, %v1888
      %v1892 = vadd.f32 %v1853, %v1888
      %v1893 = vadd.f32 %v1854, %v1888
      %v1894 = vadd.f32 %v1855, %v1888
      %v1895 = vadd.f32 %v1856, %v1888
      %v1896 = vadd.f32 %v1857, %v1888
      %v1897 = vadd.f32 %v1858, %v1888
      %v1898 = vadd.f32 %v1859, %v1888
      %v1899 = vadd.f32 %v1860, %v1888
      %v1900 = vadd.f32 %v1861, %v1888
      %v1901 = vadd.f32 %v1862, %v1888
      %v1902 = vadd.f32 %v1863, %v1888
      %v1903 = vadd.f32 %v1864, %v1888
      %v1904 = vadd.f32 %v1865, %v1888
      %v1905 = vadd.f32 %v1866, %v1888
      %v1906 = vadd.f32 %v1867, %v1888
      %v1907 = vadd.f32 %v1868, %v1888
      %v1908 = vadd.f32 %v1869, %v1888
      %v1909 = vadd.f32 %v1870, %v1888
      %v1910 = vadd.f32 %v1871, %v1888
      %v1911 = vadd.f32 %v1872, %v1888
      %v1912 = vadd.f32 %v1873, %v1888
      %v1913 = vadd.f32 %v1874, %v1888
      %v1914 = vadd.f32 %v1875, %v1888
      %v1915 = vadd.f32 %v1876, %v1888
      %v1916 = vadd.f32 %v1877, %v1888
      %v1917 = vadd.f32 %v1878, %v1888
      %v1918 = vadd.f32 %v1879, %v1888
      %v1919 = vadd.f32 %v1880, %v1888
      %v1920 = vadd.f32 %v1881, %v1888
      %v1921 = vadd.f32 %v1882, %v1888
      %v1922 = vxor.u32 %v1890, 2147483648
      %v1923 = vxor.u32 %v1891, 2147483648
      %v1924 = vxor.u32 %v1892, 2147483648
      %v1925 = vxor.u32 %v1893, 2147483648
      %v1926 = vxor.u32 %v1894, 2147483648
      %v1927 = vxor.u32 %v1895, 2147483648
      %v1928 = vxor.u32 %v1896, 2147483648
      %v1929 = vxor.u32 %v1897, 2147483648
      %v1930 = vxor.u32 %v1898, 2147483648
      %v1931 = vxor.u32 %v1899, 2147483648
      %v1932 = vxor.u32 %v1900, 2147483648
      %v1933 = vxor.u32 %v1901, 2147483648
      %v1934 = vxor.u32 %v1902, 2147483648
      %v1935 = vxor.u32 %v1903, 2147483648
      %v1936 = vxor.u32 %v1904, 2147483648
      %v1937 = vxor.u32 %v1905, 2147483648
      %v1938 = vxor.u32 %v1906, 2147483648
      %v1939 = vxor.u32 %v1907, 2147483648
      %v1940 = vxor.u32 %v1908, 2147483648
      %v1941 = vxor.u32 %v1909, 2147483648
      %v1942 = vxor.u32 %v1910, 2147483648
      %v1943 = vxor.u32 %v1911, 2147483648
      %v1944 = vxor.u32 %v1912, 2147483648
      %v1945 = vxor.u32 %v1913, 2147483648
      %v1946 = vxor.u32 %v1914, 2147483648
      %v1947 = vxor.u32 %v1915, 2147483648
      %v1948 = vxor.u32 %v1916, 2147483648
      %v1949 = vxor.u32 %v1917, 2147483648
      %v1950 = vxor.u32 %v1918, 2147483648
      %v1951 = vxor.u32 %v1919, 2147483648
      %v1952 = vxor.u32 %v1920, 2147483648
      %v1953 = vxor.u32 %v1921, 2147483648
      %v1954 = vmul.f32 %v1922, 1.442695
      %v1955 = vpow.pop %v1954
      %v1956 = vmul.f32 %v1923, 1.442695
      %v1957 = vpow.pop %v1956
      %v1958 = vmul.f32 %v1924, 1.442695
      %v1959 = vpow.pop %v1958
      %v1960 = vmul.f32 %v1925, 1.442695
      %v1961 = vpow.pop %v1960
      %v1962 = vmul.f32 %v1926, 1.442695
      %v1963 = vpow.pop %v1962
      %v1964 = vmul.f32 %v1927, 1.442695
      %v1965 = vpow.pop %v1964
      %v1966 = vmul.f32 %v1928, 1.442695
      %v1967 = vpow.pop %v1966
      %v1968 = vmul.f32 %v1929, 1.442695
      %v1969 = vpow.pop %v1968
      %v1970 = vmul.f32 %v1930, 1.442695
      %v1971 = vpow.pop %v1970
      %v1972 = vmul.f32 %v1931, 1.442695
      %v1973 = vpow.pop %v1972
      %v1974 = vmul.f32 %v1932, 1.442695
      %v1975 = vpow.pop %v1974
      %v1976 = vmul.f32 %v1933, 1.442695
      %v1977 = vpow.pop %v1976
      %v1978 = vmul.f32 %v1934, 1.442695
      %v1979 = vpow.pop %v1978
      %v1980 = vmul.f32 %v1935, 1.442695
      %v1981 = vpow.pop %v1980
      %v1982 = vmul.f32 %v1936, 1.442695
      %v1983 = vpow.pop %v1982
      %v1984 = vmul.f32 %v1937, 1.442695
      %v1985 = vpow.pop %v1984
      %v1986 = vmul.f32 %v1938, 1.442695
      %v1987 = vpow.pop %v1986
      %v1988 = vmul.f32 %v1939, 1.442695
      %v1989 = vpow.pop %v1988
      %v1990 = vmul.f32 %v1940, 1.442695
      %v1991 = vpow.pop %v1990
      %v1992 = vmul.f32 %v1941, 1.442695
      %v1993 = vpow.pop %v1992
      %v1994 = vmul.f32 %v1942, 1.442695
      %v1995 = vpow.pop %v1994
      %v1996 = vmul.f32 %v1943, 1.442695
      %v1997 = vpow.pop %v1996
      %v1998 = vmul.f32 %v1944, 1.442695
      %v1999 = vpow.pop %v1998
      %v2000 = vmul.f32 %v1945, 1.442695
      %v2001 = vpow.pop %v2000
      %v2002 = vmul.f32 %v1946, 1.442695
      %v2003 = vpow.pop %v2002
      %v2004 = vmul.f32 %v1947, 1.442695
      %v2005 = vpow.pop %v2004
      %v2006 = vmul.f32 %v1948, 1.442695
      %v2007 = vpow.pop %v2006
      %v2008 = vmul.f32 %v1949, 1.442695
      %v2009 = vpow.pop %v2008
      %v2010 = vmul.f32 %v1950, 1.442695
      %v2011 = vpow.pop %v2010
      %v2012 = vmul.f32 %v1951, 1.442695
      %v2013 = vpow.pop %v2012
      %v2014 = vmul.f32 %v1952, 1.442695
      %v2015 = vpow.pop %v2014
      %v2016 = vmul.f32 %v1953, 1.442695
      %v2017 = vpow.pop %v2016
      %v2018 = vadd.f32 %v1955, 1.0
      %v2019 = vadd.f32 %v1957, 1.0
      %v2020 = vadd.f32 %v1959, 1.0
      %v2021 = vadd.f32 %v1961, 1.0
      %v2022 = vadd.f32 %v1963, 1.0
      %v2023 = vadd.f32 %v1965, 1.0
      %v2024 = vadd.f32 %v1967, 1.0
      %v2025 = vadd.f32 %v1969, 1.0
      %v2026 = vadd.f32 %v1971, 1.0
      %v2027 = vadd.f32 %v1973, 1.0
      %v2028 = vadd.f32 %v1975, 1.0
      %v2029 = vadd.f32 %v1977, 1.0
      %v2030 = vadd.f32 %v1979, 1.0
      %v2031 = vadd.f32 %v1981, 1.0
      %v2032 = vadd.f32 %v1983, 1.0
      %v2033 = vadd.f32 %v1985, 1.0
      %v2034 = vadd.f32 %v1987, 1.0
      %v2035 = vadd.f32 %v1989, 1.0
      %v2036 = vadd.f32 %v1991, 1.0
      %v2037 = vadd.f32 %v1993, 1.0
      %v2038 = vadd.f32 %v1995, 1.0
      %v2039 = vadd.f32 %v1997, 1.0
      %v2040 = vadd.f32 %v1999, 1.0
      %v2041 = vadd.f32 %v2001, 1.0
      %v2042 = vadd.f32 %v2003, 1.0
      %v2043 = vadd.f32 %v2005, 1.0
      %v2044 = vadd.f32 %v2007, 1.0
      %v2045 = vadd.f32 %v2009, 1.0
      %v2046 = vadd.f32 %v2011, 1.0
      %v2047 = vadd.f32 %v2013, 1.0
      %v2048 = vadd.f32 %v2015, 1.0
      %v2049 = vadd.f32 %v2017, 1.0
      %v2050 = vrcp.pop %v2018
      %v2051 = vmul.f32 1.0, %v2050
      %v2052 = vrcp.pop %v2019
      %v2053 = vmul.f32 1.0, %v2052
      %v2054 = vrcp.pop %v2020
      %v2055 = vmul.f32 1.0, %v2054
      %v2056 = vrcp.pop %v2021
      %v2057 = vmul.f32 1.0, %v2056
      %v2058 = vrcp.pop %v2022
      %v2059 = vmul.f32 1.0, %v2058
      %v2060 = vrcp.pop %v2023
      %v2061 = vmul.f32 1.0, %v2060
      %v2062 = vrcp.pop %v2024
      %v2063 = vmul.f32 1.0, %v2062
      %v2064 = vrcp.pop %v2025
      %v2065 = vmul.f32 1.0, %v2064
      %v2066 = vrcp.pop %v2026
      %v2067 = vmul.f32 1.0, %v2066
      %v2068 = vrcp.pop %v2027
      %v2069 = vmul.f32 1.0, %v2068
      %v2070 = vrcp.pop %v2028
      %v2071 = vmul.f32 1.0, %v2070
      %v2072 = vrcp.pop %v2029
      %v2073 = vmul.f32 1.0, %v2072
      %v2074 = vrcp.pop %v2030
      %v2075 = vmul.f32 1.0, %v2074
      %v2076 = vrcp.pop %v2031
      %v2077 = vmul.f32 1.0, %v2076
      %v2078 = vrcp.pop %v2032
      %v2079 = vmul.f32 1.0, %v2078
      %v2080 = vrcp.pop %v2033
      %v2081 = vmul.f32 1.0, %v2080
      %v2082 = vrcp.pop %v2034
      %v2083 = vmul.f32 1.0, %v2082
      %v2084 = vrcp.pop %v2035
      %v2085 = vmul.f32 1.0, %v2084
      %v2086 = vrcp.pop %v2036
      %v2087 = vmul.f32 1.0, %v2086
      %v2088 = vrcp.pop %v2037
      %v2089 = vmul.f32 1.0, %v2088
      %v2090 = vrcp.pop %v2038
      %v2091 = vmul.f32 1.0, %v2090
      %v2092 = vrcp.pop %v2039
      %v2093 = vmul.f32 1.0, %v2092
      %v2094 = vrcp.pop %v2040
      %v2095 = vmul.f32 1.0, %v2094
      %v2096 = vrcp.pop %v2041
      %v2097 = vmul.f32 1.0, %v2096
      %v2098 = vrcp.pop %v2042
      %v2099 = vmul.f32 1.0, %v2098
      %v2100 = vrcp.pop %v2043
      %v2101 = vmul.f32 1.0, %v2100
      %v2102 = vrcp.pop %v2044
      %v2103 = vmul.f32 1.0, %v2102
      %v2104 = vrcp.pop %v2045
      %v2105 = vmul.f32 1.0, %v2104
      %v2106 = vrcp.pop %v2046
      %v2107 = vmul.f32 1.0, %v2106
      %v2108 = vrcp.pop %v2047
      %v2109 = vmul.f32 1.0, %v2108
      %v2110 = vrcp.pop %v2048
      %v2111 = vmul.f32 1.0, %v2110
      %v2112 = vrcp.pop %v2049
      %v2113 = vmul.f32 1.0, %v2112
      %v2114 = vmul.f32 %v1890, %v2051
      %v2115 = vmul.f32 %v1891, %v2053
      %v2116 = vmul.f32 %v1892, %v2055
      %v2117 = vmul.f32 %v1893, %v2057
      %v2118 = vmul.f32 %v1894, %v2059
      %v2119 = vmul.f32 %v1895, %v2061
      %v2120 = vmul.f32 %v1896, %v2063
      %v2121 = vmul.f32 %v1897, %v2065
      %v2122 = vmul.f32 %v1898, %v2067
      %v2123 = vmul.f32 %v1899, %v2069
      %v2124 = vmul.f32 %v1900, %v2071
      %v2125 = vmul.f32 %v1901, %v2073
      %v2126 = vmul.f32 %v1902, %v2075
      %v2127 = vmul.f32 %v1903, %v2077
      %v2128 = vmul.f32 %v1904, %v2079
      %v2129 = vmul.f32 %v1905, %v2081
      %v2130 = vmul.f32 %v1906, %v2083
      %v2131 = vmul.f32 %v1907, %v2085
      %v2132 = vmul.f32 %v1908, %v2087
      %v2133 = vmul.f32 %v1909, %v2089
      %v2134 = vmul.f32 %v1910, %v2091
      %v2135 = vmul.f32 %v1911, %v2093
      %v2136 = vmul.f32 %v1912, %v2095
      %v2137 = vmul.f32 %v1913, %v2097
      %v2138 = vmul.f32 %v1914, %v2099
      %v2139 = vmul.f32 %v1915, %v2101
      %v2140 = vmul.f32 %v1916, %v2103
      %v2141 = vmul.f32 %v1917, %v2105
      %v2142 = vmul.f32 %v1918, %v2107
      %v2143 = vmul.f32 %v1919, %v2109
      %v2144 = vmul.f32 %v1920, %v2111
      %v2145 = vmul.f32 %v1921, %v2113
      %vm2146 = vcmask 130048
      %2147 = vst.msk [vmem:[%s400] sm:$0xff] %vm2146, %v2114
      %2148 = vst.msk [vmem:[%s400 + $0x8] sm:$0xff] %vm2146, %v2115
      %2149 = vst.msk [vmem:[%s400 + $0x10] sm:$0xff] %vm2146, %v2116
      %2150 = vst.msk [vmem:[%s400 + $0x18] sm:$0xff] %vm2146, %v2117
      %2151 = vst.msk [vmem:[%s400 + $0x20] sm:$0xff] %vm2146, %v2118
      %2152 = vst.msk [vmem:[%s400 + $0x28] sm:$0xff] %vm2146, %v2119
      %2153 = vst.msk [vmem:[%s400 + $0x30] sm:$0xff] %vm2146, %v2120
      %2154 = vst.msk [vmem:[%s400 + $0x38] sm:$0xff] %vm2146, %v2121
      %2155 = vst.msk [vmem:[%s400 + $0x40] sm:$0xff] %vm2146, %v2122
      %2156 = vst.msk [vmem:[%s400 + $0x48] sm:$0xff] %vm2146, %v2123
      %2157 = vst.msk [vmem:[%s400 + $0x50] sm:$0xff] %vm2146, %v2124
      %2158 = vst.msk [vmem:[%s400 + $0x58] sm:$0xff] %vm2146, %v2125
      %2159 = vst.msk [vmem:[%s400 + $0x60] sm:$0xff] %vm2146, %v2126
      %2160 = vst.msk [vmem:[%s400 + $0x68] sm:$0xff] %vm2146, %v2127
      %2161 = vst.msk [vmem:[%s400 + $0x70] sm:$0xff] %vm2146, %v2128
      %2162 = vst.msk [vmem:[%s400 + $0x78] sm:$0xff] %vm2146, %v2129
      %2163 = vst.msk [vmem:[%s400 + $0x80] sm:$0xff] %vm2146, %v2130
      %2164 = vst.msk [vmem:[%s400 + $0x88] sm:$0xff] %vm2146, %v2131
      %2165 = vst.msk [vmem:[%s400 + $0x90] sm:$0xff] %vm2146, %v2132
      %2166 = vst.msk [vmem:[%s400 + $0x98] sm:$0xff] %vm2146, %v2133
      %2167 = vst.msk [vmem:[%s400 + $0xa0] sm:$0xff] %vm2146, %v2134
      %2168 = vst.msk [vmem:[%s400 + $0xa8] sm:$0xff] %vm2146, %v2135
      %2169 = vst.msk [vmem:[%s400 + $0xb0] sm:$0xff] %vm2146, %v2136
      %2170 = vst.msk [vmem:[%s400 + $0xb8] sm:$0xff] %vm2146, %v2137
      %2171 = vst.msk [vmem:[%s400 + $0xc0] sm:$0xff] %vm2146, %v2138
      %2172 = vst.msk [vmem:[%s400 + $0xc8] sm:$0xff] %vm2146, %v2139
      %2173 = vst.msk [vmem:[%s400 + $0xd0] sm:$0xff] %vm2146, %v2140
      %2174 = vst.msk [vmem:[%s400 + $0xd8] sm:$0xff] %vm2146, %v2141
      %2175 = vst.msk [vmem:[%s400 + $0xe0] sm:$0xff] %vm2146, %v2142
      %2176 = vst.msk [vmem:[%s400 + $0xe8] sm:$0xff] %vm2146, %v2143
      %2177 = vst.msk [vmem:[%s400 + $0xf0] sm:$0xff] %vm2146, %v2144
      %2178 = vst.msk [vmem:[%s400 + $0xf8] sm:$0xff] %vm2146, %v2145
      %s2179 = smul.u32 32, %s20
      %p2180 = scmp.lt.s32.totalorder %s2179, 63
      %s2181 = scalar_select %p2180, %s2179, 63
      %s2182 = smul.addr %s2181, 8
      %s2183 = scalar_lea.vmem %s9, %s2182
      // Predicated region
      $region57: #{_lambda_.11} parent=55 // pred_check
        %p2184 = pneg %p247
      $region58: #{_lambda_.11} parent=55 // pred_check_branch
        %2186 = sbr.rel (%p2184) target = $region60
      $region59: #{_lambda_.11} parent=55 // pred_region
        %s2187 = smul.u32 32, %s20
      $region60: #{_lambda_.11} parent=55 // pred_fallthru
        _
    $region56: #{_lambda_.11} parent=5 // pred_fallthru
      _
    %p2188 = scmp.le.s32.totalorder 2, %s15
    // Predicated region
    $region61: #{_lambda_.11} parent=5 // pred_check
      %p2189 = pneg %p2188
    $region62: #{_lambda_.11} parent=5 // pred_check_branch
      %2191 = sbr.rel (%p2189) target = $region64
    $region63: #{_lambda_.11} parent=5 // pred_region
      %s2192 = ssub.s32 %s15, 2
      // Predicated region
      $region65: #{_lambda_.11} parent=63 // pred_check
        %p2193 = pneg %p253
      $region66: #{_lambda_.11} parent=63 // pred_check_branch
        %2195 = sbr.rel (%p2193) target = $region68
      $region67: #{_lambda_.11} parent=63 // pred_region
        %s2196 = smul.u32 32, %s21
        %p2197 = scmp.lt.s32.totalorder %s2196, 63
        %s2198 = scalar_select %p2197, %s2196, 63
        %s2199 = smul.addr %s2198, 8
        %s2200 = scalar_lea.vmem %s9, %s2199
      $region68: #{_lambda_.11} parent=63 // pred_fallthru
        _
    $region64: #{_lambda_.11} parent=5 // pred_fallthru
      _
  $region6: #{_lambda_.11} parent=0 // loop_footer
    %s19 = sadd.s32 1, %s15
  $region7: #{_lambda_.11} parent=0 // loop_footer_branch
    %14 = sbr.rel target = $region3
  $region8: #{_lambda_.11} parent=0 // loop_exit
    _

// kernel: _lambda_.7
$region0: #{_lambda_.7}
  #allocation0 [shape = 'u32[]', space=smem, size = 0x4, offset = 0x4, fixed_abs, tag = 'smem constant byte address 0x4 - core index']
  #allocation1 [shape = 'u32[144,128]{1,0:T(1,128)}', space=vmem, size = 0x12000, scoped, tag = 'internal scratch']
  #allocation2 [shape = 'f32[18,32,8]{2,1,0:T(8,128)}', space=vmem, size = 0x48000, scoped, tag = 'scratch operand']
  %s0 = inlined_call_operand.vmem [shape: f32[2,16,16,8], index: 0, kind: input, shape index: {}]
  %s1 = inlined_call_operand.vmem [shape: f32[9,8,8], index: 1, kind: input, shape index: {}]
  %s2 = inlined_call_operand.vmem [shape: f32[1,8], index: 2, kind: input, shape index: {}]
  %s3 = inlined_call_operand.vmem [shape: f32[2,256,8], index: 3, kind: output, shape index: {}]
  %s4 = sld [smem:[#allocation0]]
  $region45: #{_lambda_.7} parent=0
    _
  %s6 = ssub.s32 1, %s4
  %s7 = scalar_select 0, %s6, %s4
  loop: start=0, step=1, limit=4
  $region2: #{_lambda_.7} parent=0 // loop_pre_header
    _
  $region3: #{_lambda_.7} parent=0 // loop_header
    %s9 = sphi 0, %s13
    %p10 = scmp.ge.s32.totalorder %s9, 4
    %s19 = sphi 0, %s21
    %s22 = sphi 0, %s19
    %s23 = sphi 0, %s22
    %s39 = sphi 0, %s23
    %s43 = sphi 0, %s43
    %s45 = sphi 0, %s43
    %s46 = sphi 0, %s45
    %s60 = sphi 0, %s46
    %s64 = sphi 0, %s64
    %s66 = sphi 0, %s64
    %s67 = sphi 0, %s66
    %s81 = sphi 0, %s67
    %s87 = sphi 0, %s89
    %s90 = sphi 0, %s87
    %s91 = sphi 0, %s90
    %s107 = sphi 0, %s91
  $region4: #{_lambda_.7} parent=0 // loop_header_branch
    %12 = sbr.rel (%p10) target = $region8
  $region5: #{_lambda_.7} parent=0 // loop_body
    %s14 = ssub.s32 %s9, 1
    %s15 = ssub.s32 %s9, 2
    %s16 = sadd.s32 %s9, 1
    %s17 = ssub.s32 %s9, %s16
    %p18 = scmp.eq.s32.totalorder %s17, 0
    %s20 = sadd.s32 %s19, 1
    %s21 = scalar_select %p18, %s19, %s20
    %p24 = pneg %p18
    %p25 = scmp.eq.s32.totalorder %s9, 1
    %p26 = por %p24, %p25
    %p27 = scmp.ne.s32.totalorder %s19, %s22
    %p28 = scmp.eq.s32.totalorder %s9, 0
    %p29 = por %p27, %p28
    %p30 = scmp.ne.s32.totalorder %s19, %s22
    %p31 = scmp.eq.s32.totalorder %s14, 1
    %p32 = por %p30, %p31
    %p33 = scmp.ne.s32.totalorder %s22, %s23
    %p34 = scmp.eq.s32.totalorder %s14, 0
    %p35 = por %p33, %p34
    %p36 = scmp.ne.s32.totalorder %s22, %s23
    %p37 = scmp.eq.s32.totalorder %s15, 1
    %p38 = por %p36, %p37
    %p40 = scmp.ne.s32.totalorder %s23, %s39
    %p41 = scmp.eq.s32.totalorder %s15, 0
    %p42 = por %p40, %p41
    %s44 = sadd.s32 %s43, 1
    %p47 = scmp.eq.s32.totalorder %s9, 1
    %p48 = scmp.ne.s32.totalorder %s43, %s45
    %p49 = scmp.eq.s32.totalorder %s9, 0
    %p50 = por %p48, %p49
    %p51 = scmp.ne.s32.totalorder %s43, %s45
    %p52 = scmp.eq.s32.totalorder %s14, 1
    %p53 = por %p51, %p52
    %p54 = scmp.ne.s32.totalorder %s45, %s46
    %p55 = scmp.eq.s32.totalorder %s14, 0
    %p56 = por %p54, %p55
    %p57 = scmp.ne.s32.totalorder %s45, %s46
    %p58 = scmp.eq.s32.totalorder %s15, 1
    %p59 = por %p57, %p58
    %p61 = scmp.ne.s32.totalorder %s46, %s60
    %p62 = scmp.eq.s32.totalorder %s15, 0
    %p63 = por %p61, %p62
    %s65 = sadd.s32 %s64, 1
    %p68 = scmp.eq.s32.totalorder %s9, 1
    %p69 = scmp.ne.s32.totalorder %s64, %s66
    %p70 = scmp.eq.s32.totalorder %s9, 0
    %p71 = por %p69, %p70
    %p72 = scmp.ne.s32.totalorder %s64, %s66
    %p73 = scmp.eq.s32.totalorder %s14, 1
    %p74 = por %p72, %p73
    %p75 = scmp.ne.s32.totalorder %s66, %s67
    %p76 = scmp.eq.s32.totalorder %s14, 0
    %p77 = por %p75, %p76
    %p78 = scmp.ne.s32.totalorder %s66, %s67
    %p79 = scmp.eq.s32.totalorder %s15, 1
    %p80 = por %p78, %p79
    %p82 = scmp.ne.s32.totalorder %s67, %s81
    %p83 = scmp.eq.s32.totalorder %s15, 0
    %p84 = por %p82, %p83
    %s85 = ssub.s32 %s9, %s16
    %p86 = scmp.eq.s32.totalorder %s85, 0
    %s88 = sadd.s32 %s87, 1
    %s89 = scalar_select %p86, %s87, %s88
    %p92 = pneg %p86
    %p93 = scmp.eq.s32.totalorder %s9, 1
    %p94 = por %p92, %p93
    %p95 = scmp.ne.s32.totalorder %s87, %s90
    %p96 = scmp.eq.s32.totalorder %s9, 0
    %p97 = por %p95, %p96
    %p98 = scmp.ne.s32.totalorder %s87, %s90
    %p99 = scmp.eq.s32.totalorder %s14, 1
    %p100 = por %p98, %p99
    %p101 = scmp.ne.s32.totalorder %s90, %s91
    %p102 = scmp.eq.s32.totalorder %s14, 0
    %p103 = por %p101, %p102
    %p104 = scmp.ne.s32.totalorder %s90, %s91
    %p105 = scmp.eq.s32.totalorder %s15, 1
    %p106 = por %p104, %p105
    %p108 = scmp.ne.s32.totalorder %s91, %s107
    %p109 = scmp.eq.s32.totalorder %s15, 0
    %p110 = por %p108, %p109
    %p111 = scmp.le.s32.totalorder 1, %s9
    %p112 = scmp.lt.s32.totalorder %s9, 3
    %p113 = pnand %p111, %p112
    %p114 = pneg %p113
    // Predicated region
    $region9: #{_lambda_.7} parent=5 // pred_check
      _
    $region10: #{_lambda_.7} parent=5 // pred_check_branch
      %116 = sbr.rel (%p113) target = $region12
    $region11: #{_lambda_.7} parent=5 // pred_region
      %s117 = ssub.s32 %s9, 1
      // Predicated region
      $region13: #{_lambda_.7} parent=11 // pred_check
        %p118 = pneg %p56
      $region14: #{_lambda_.7} parent=11 // pred_check_branch
        %120 = sbr.rel (%p118) target = $region16
      $region15: #{_lambda_.7} parent=11 // pred_region
        _
      $region16: #{_lambda_.7} parent=11 // pred_fallthru
        _
      // Predicated region
      $region17: #{_lambda_.7} parent=11 // pred_check
        %p121 = pneg %p77
      $region18: #{_lambda_.7} parent=11 // pred_check_branch
        %123 = sbr.rel (%p121) target = $region20
      $region19: #{_lambda_.7} parent=11 // pred_region
        _
      $region20: #{_lambda_.7} parent=11 // pred_fallthru
        _
    $region12: #{_lambda_.7} parent=5 // pred_fallthru
      _
    %p124 = scmp.lt.s32.totalorder %s9, 2
    // Predicated region
    $region21: #{_lambda_.7} parent=5 // pred_check
      %p125 = pneg %p124
    $region22: #{_lambda_.7} parent=5 // pred_check_branch
      %127 = sbr.rel (%p125) target = $region24
    $region23: #{_lambda_.7} parent=5 // pred_region
      // Predicated region
      $region25: #{_lambda_.7} parent=23 // pred_check
        %p128 = pneg %p29
      $region26: #{_lambda_.7} parent=23 // pred_check_branch
        %130 = sbr.rel (%p128) target = $region28
      $region27: #{_lambda_.7} parent=23 // pred_region
        %p131 = scmp.lt.s32.totalorder %s9, 1
        %s132 = scalar_select %p131, %s9, 1
        %s133 = smul.addr %s132, 32
        %s134 = smul.addr %s133, 8
        %s135 = scalar_lea.vmem %s0, %s134
      $region28: #{_lambda_.7} parent=23 // pred_fallthru
        _
    $region24: #{_lambda_.7} parent=5 // pred_fallthru
      _
    %p136 = scmp.le.s32.totalorder 1, %s9
    %p137 = scmp.lt.s32.totalorder %s9, 3
    %p138 = pnand %p136, %p137
    %p139 = pneg %p138
    // Predicated region
    $region29: #{_lambda_.7} parent=5 // pred_check
      _
    $region30: #{_lambda_.7} parent=5 // pred_check_branch
      %141 = sbr.rel (%p138) target = $region32
    $region31: #{_lambda_.7} parent=5 // pred_region
      %s142 = ssub.s32 %s9, 1
      %p143 = scmp.lt.s32.totalorder %s14, 1
      %s144 = scalar_select %p143, %s14, 1
      %s145 = smul.addr %s144, 32
      %s146 = smul.addr %s145, 8
      %s147 = scalar_lea.vmem %s0, %s146
      %p148 = pneg %p35
      %p149 = pneg %p32
      %p150 = pneg %p56
      %p151 = pneg %p53
      %p152 = pneg %p77
      %p153 = pneg %p74
      %p154 = pneg %p103
      %p155 = pneg %p100
      %p156 = scmp.lt.s32.totalorder %s14, 1
      %s157 = scalar_select %p156, %s14, 1
      %s158 = smul.addr %s157, 32
      %s159 = smul.addr %s158, 8
      %s160 = scalar_lea.vmem %s3, %s159
      %p161 = scmp.lt.s32.totalorder %s14, 1
      %s162 = scalar_select %p161, %s14, 1
      %s163 = smul.addr %s162, 32
      %s164 = smul.addr %s163, 8
      %s165 = scalar_lea.vmem %s0, %s164
      %p166 = scmp.lt.s32.totalorder %s14, 1
      %s167 = scalar_select %p166, %s14, 1
      %s168 = smul.addr %s167, 32
      %s169 = smul.addr %s168, 8
      %s170 = scalar_lea.vmem %s3, %s169
      %vm171 = vcmask 64512
      %172 = vst.msk [vmem:[#allocation2] sm:$0xff] %vm171, 0.0
      %173 = vst.msk [vmem:[#allocation2 + $0x8] sm:$0xff] %vm171, 0.0
      %174 = vst.msk [vmem:[#allocation2 + $0x10] sm:$0xff] %vm171, 0.0
      %175 = vst.msk [vmem:[#allocation2 + $0x18] sm:$0xff] %vm171, 0.0
      %176 = vst.msk [vmem:[#allocation2 + $0x20] sm:$0xff] %vm171, 0.0
      %177 = vst.msk [vmem:[#allocation2 + $0x28] sm:$0xff] %vm171, 0.0
      %178 = vst.msk [vmem:[#allocation2 + $0x30] sm:$0xff] %vm171, 0.0
      %179 = vst.msk [vmem:[#allocation2 + $0x38] sm:$0xff] %vm171, 0.0
      %180 = vst.msk [vmem:[#allocation2 + $0x40] sm:$0xff] %vm171, 0.0
      %181 = vst.msk [vmem:[#allocation2 + $0x48] sm:$0xff] %vm171, 0.0
      %182 = vst.msk [vmem:[#allocation2 + $0x50] sm:$0xff] %vm171, 0.0
      %183 = vst.msk [vmem:[#allocation2 + $0x58] sm:$0xff] %vm171, 0.0
      %184 = vst.msk [vmem:[#allocation2 + $0x60] sm:$0xff] %vm171, 0.0
      %185 = vst.msk [vmem:[#allocation2 + $0x68] sm:$0xff] %vm171, 0.0
      %186 = vst.msk [vmem:[#allocation2 + $0x70] sm:$0xff] %vm171, 0.0
      %187 = vst.msk [vmem:[#allocation2 + $0x78] sm:$0xff] %vm171, 0.0
      %188 = vst.msk [vmem:[#allocation2 + $0x80] sm:$0xff] %vm171, 0.0
      %189 = vst.msk [vmem:[#allocation2 + $0x88] sm:$0xff] %vm171, 0.0
      %190 = vst.msk [vmem:[#allocation2 + $0x90] sm:$0xff] %vm171, 0.0
      %191 = vst.msk [vmem:[#allocation2 + $0x98] sm:$0xff] %vm171, 0.0
      %192 = vst.msk [vmem:[#allocation2 + $0xa0] sm:$0xff] %vm171, 0.0
      %193 = vst.msk [vmem:[#allocation2 + $0xa8] sm:$0xff] %vm171, 0.0
      %194 = vst.msk [vmem:[#allocation2 + $0xb0] sm:$0xff] %vm171, 0.0
      %195 = vst.msk [vmem:[#allocation2 + $0xb8] sm:$0xff] %vm171, 0.0
      %196 = vst.msk [vmem:[#allocation2 + $0xc0] sm:$0xff] %vm171, 0.0
      %197 = vst.msk [vmem:[#allocation2 + $0xc8] sm:$0xff] %vm171, 0.0
      %198 = vst.msk [vmem:[#allocation2 + $0xd0] sm:$0xff] %vm171, 0.0
      %199 = vst.msk [vmem:[#allocation2 + $0xd8] sm:$0xff] %vm171, 0.0
      %200 = vst.msk [vmem:[#allocation2 + $0xe0] sm:$0xff] %vm171, 0.0
      %201 = vst.msk [vmem:[#allocation2 + $0xe8] sm:$0xff] %vm171, 0.0
      %202 = vst.msk [vmem:[#allocation2 + $0xf0] sm:$0xff] %vm171, 0.0
      %203 = vst.msk [vmem:[#allocation2 + $0xf8] sm:$0xff] %vm171, 0.0
      %204 = vst.msk [vmem:[#allocation2 + $0x100] sm:$0xff] %vm171, 0.0
      %205 = vst.msk [vmem:[#allocation2 + $0x108] sm:$0xff] %vm171, 0.0
      %206 = vst.msk [vmem:[#allocation2 + $0x110] sm:$0xff] %vm171, 0.0
      %207 = vst.msk [vmem:[#allocation2 + $0x118] sm:$0xff] %vm171, 0.0
      %208 = vst.msk [vmem:[#allocation2 + $0x120] sm:$0xff] %vm171, 0.0
      %209 = vst.msk [vmem:[#allocation2 + $0x128] sm:$0xff] %vm171, 0.0
      %210 = vst.msk [vmem:[#allocation2 + $0x130] sm:$0xff] %vm171, 0.0
      %211 = vst.msk [vmem:[#allocation2 + $0x138] sm:$0xff] %vm171, 0.0
      %212 = vst.msk [vmem:[#allocation2 + $0x140] sm:$0xff] %vm171, 0.0
      %213 = vst.msk [vmem:[#allocation2 + $0x148] sm:$0xff] %vm171, 0.0
      %214 = vst.msk [vmem:[#allocation2 + $0x150] sm:$0xff] %vm171, 0.0
      %215 = vst.msk [vmem:[#allocation2 + $0x158] sm:$0xff] %vm171, 0.0
      %216 = vst.msk [vmem:[#allocation2 + $0x160] sm:$0xff] %vm171, 0.0
      %217 = vst.msk [vmem:[#allocation2 + $0x168] sm:$0xff] %vm171, 0.0
      %218 = vst.msk [vmem:[#allocation2 + $0x170] sm:$0xff] %vm171, 0.0
      %219 = vst.msk [vmem:[#allocation2 + $0x178] sm:$0xff] %vm171, 0.0
      %220 = vst.msk [vmem:[#allocation2 + $0x180] sm:$0xff] %vm171, 0.0
      %221 = vst.msk [vmem:[#allocation2 + $0x188] sm:$0xff] %vm171, 0.0
      %222 = vst.msk [vmem:[#allocation2 + $0x190] sm:$0xff] %vm171, 0.0
      %223 = vst.msk [vmem:[#allocation2 + $0x198] sm:$0xff] %vm171, 0.0
      %224 = vst.msk [vmem:[#allocation2 + $0x1a0] sm:$0xff] %vm171, 0.0
      %225 = vst.msk [vmem:[#allocation2 + $0x1a8] sm:$0xff] %vm171, 0.0
      %226 = vst.msk [vmem:[#allocation2 + $0x1b0] sm:$0xff] %vm171, 0.0
      %227 = vst.msk [vmem:[#allocation2 + $0x1b8] sm:$0xff] %vm171, 0.0
      %228 = vst.msk [vmem:[#allocation2 + $0x1c0] sm:$0xff] %vm171, 0.0
      %229 = vst.msk [vmem:[#allocation2 + $0x1c8] sm:$0xff] %vm171, 0.0
      %230 = vst.msk [vmem:[#allocation2 + $0x1d0] sm:$0xff] %vm171, 0.0
      %231 = vst.msk [vmem:[#allocation2 + $0x1d8] sm:$0xff] %vm171, 0.0
      %232 = vst.msk [vmem:[#allocation2 + $0x1e0] sm:$0xff] %vm171, 0.0
      %233 = vst.msk [vmem:[#allocation2 + $0x1e8] sm:$0xff] %vm171, 0.0
      %234 = vst.msk [vmem:[#allocation2 + $0x1f0] sm:$0xff] %vm171, 0.0
      %235 = vst.msk [vmem:[#allocation2 + $0x1f8] sm:$0xff] %vm171, 0.0
      %236 = vst.msk [vmem:[#allocation2 + $0x200] sm:$0xff] %vm171, 0.0
      %237 = vst.msk [vmem:[#allocation2 + $0x208] sm:$0xff] %vm171, 0.0
      %238 = vst.msk [vmem:[#allocation2 + $0x210] sm:$0xff] %vm171, 0.0
      %239 = vst.msk [vmem:[#allocation2 + $0x218] sm:$0xff] %vm171, 0.0
      %240 = vst.msk [vmem:[#allocation2 + $0x220] sm:$0xff] %vm171, 0.0
      %241 = vst.msk [vmem:[#allocation2 + $0x228] sm:$0xff] %vm171, 0.0
      %242 = vst.msk [vmem:[#allocation2 + $0x230] sm:$0xff] %vm171, 0.0
      %243 = vst.msk [vmem:[#allocation2 + $0x238] sm:$0xff] %vm171, 0.0
      %v244 = vld [vmem:[%s165] sm:$0xff]
      %v245 = vld [vmem:[%s165 + $0x8] sm:$0xff]
      %v246 = vld [vmem:[%s165 + $0x10] sm:$0xff]
      %v247 = vld [vmem:[%s165 + $0x18] sm:$0xff]
      %v248 = vld [vmem:[%s165 + $0x20] sm:$0xff]
      %v249 = vld [vmem:[%s165 + $0x28] sm:$0xff]
      %v250 = vld [vmem:[%s165 + $0x30] sm:$0xff]
      %v251 = vld [vmem:[%s165 + $0x38] sm:$0xff]
      %v252 = vld [vmem:[%s165 + $0x40] sm:$0xff]
      %v253 = vld [vmem:[%s165 + $0x48] sm:$0xff]
      %v254 = vld [vmem:[%s165 + $0x50] sm:$0xff]
      %v255 = vld [vmem:[%s165 + $0x58] sm:$0xff]
      %v256 = vld [vmem:[%s165 + $0x60] sm:$0xff]
      %v257 = vld [vmem:[%s165 + $0x68] sm:$0xff]
      %v258 = vld [vmem:[%s165 + $0x70] sm:$0xff]
      %v259 = vld [vmem:[%s165 + $0x78] sm:$0xff]
      %v260 = vld [vmem:[%s165 + $0x80] sm:$0xff]
      %v261 = vld [vmem:[%s165 + $0x88] sm:$0xff]
      %v262 = vld [vmem:[%s165 + $0x90] sm:$0xff]
      %v263 = vld [vmem:[%s165 + $0x98] sm:$0xff]
      %v264 = vld [vmem:[%s165 + $0xa0] sm:$0xff]
      %v265 = vld [vmem:[%s165 + $0xa8] sm:$0xff]
      %v266 = vld [vmem:[%s165 + $0xb0] sm:$0xff]
      %v267 = vld [vmem:[%s165 + $0xb8] sm:$0xff]
      %v268 = vld [vmem:[%s165 + $0xc0] sm:$0xff]
      %v269 = vld [vmem:[%s165 + $0xc8] sm:$0xff]
      %v270 = vld [vmem:[%s165 + $0xd0] sm:$0xff]
      %v271 = vld [vmem:[%s165 + $0xd8] sm:$0xff]
      %v272 = vld [vmem:[%s165 + $0xe0] sm:$0xff]
      %v273 = vld [vmem:[%s165 + $0xe8] sm:$0xff]
      %v274 = vld [vmem:[%s165 + $0xf0] sm:$0xff]
      %v275 = vld [vmem:[%s165 + $0xf8] sm:$0xff]
      %s276 = scalar_lea.vmem [#allocation2], 32
      %277 = vst.msk [vmem:[%s276 + $0x8] sm:$0xff] %vm171, %v244
      %278 = vst.msk [vmem:[%s276 + $0x10] sm:$0xff] %vm171, %v245
      %279 = vst.msk [vmem:[%s276 + $0x28] sm:$0xff] %vm171, %v246
      %280 = vst.msk [vmem:[%s276 + $0x30] sm:$0xff] %vm171, %v247
      %281 = vst.msk [vmem:[%s276 + $0x48] sm:$0xff] %vm171, %v248
      %282 = vst.msk [vmem:[%s276 + $0x50] sm:$0xff] %vm171, %v249
      %283 = vst.msk [vmem:[%s276 + $0x68] sm:$0xff] %vm171, %v250
      %284 = vst.msk [vmem:[%s276 + $0x70] sm:$0xff] %vm171, %v251
      %285 = vst.msk [vmem:[%s276 + $0x88] sm:$0xff] %vm171, %v252
      %286 = vst.msk [vmem:[%s276 + $0x90] sm:$0xff] %vm171, %v253
      %287 = vst.msk [vmem:[%s276 + $0xa8] sm:$0xff] %vm171, %v254
      %288 = vst.msk [vmem:[%s276 + $0xb0] sm:$0xff] %vm171, %v255
      %289 = vst.msk [vmem:[%s276 + $0xc8] sm:$0xff] %vm171, %v256
      %290 = vst.msk [vmem:[%s276 + $0xd0] sm:$0xff] %vm171, %v257
      %291 = vst.msk [vmem:[%s276 + $0xe8] sm:$0xff] %vm171, %v258
      %292 = vst.msk [vmem:[%s276 + $0xf0] sm:$0xff] %vm171, %v259
      %293 = vst.msk [vmem:[%s276 + $0x108] sm:$0xff] %vm171, %v260
      %294 = vst.msk [vmem:[%s276 + $0x110] sm:$0xff] %vm171, %v261
      %295 = vst.msk [vmem:[%s276 + $0x128] sm:$0xff] %vm171, %v262
      %296 = vst.msk [vmem:[%s276 + $0x130] sm:$0xff] %vm171, %v263
      %297 = vst.msk [vmem:[%s276 + $0x148] sm:$0xff] %vm171, %v264
      %298 = vst.msk [vmem:[%s276 + $0x150] sm:$0xff] %vm171, %v265
      %299 = vst.msk [vmem:[%s276 + $0x168] sm:$0xff] %vm171, %v266
      %300 = vst.msk [vmem:[%s276 + $0x170] sm:$0xff] %vm171, %v267
      %301 = vst.msk [vmem:[%s276 + $0x188] sm:$0xff] %vm171, %v268
      %302 = vst.msk [vmem:[%s276 + $0x190] sm:$0xff] %vm171, %v269
      %303 = vst.msk [vmem:[%s276 + $0x1a8] sm:$0xff] %vm171, %v270
      %304 = vst.msk [vmem:[%s276 + $0x1b0] sm:$0xff] %vm171, %v271
      %305 = vst.msk [vmem:[%s276 + $0x1c8] sm:$0xff] %vm171, %v272
      %306 = vst.msk [vmem:[%s276 + $0x1d0] sm:$0xff] %vm171, %v273
      %307 = vst.msk [vmem:[%s276 + $0x1e8] sm:$0xff] %vm171, %v274
      %308 = vst.msk [vmem:[%s276 + $0x1f0] sm:$0xff] %vm171, %v275
      %v309 = vld [vmem:[#allocation2 + $0x7] sm:$0xff]
      %v310 = vld [vmem:[#allocation2 + $0xf] sm:$0xff]
      %v311 = vld [vmem:[#allocation2 + $0x27] sm:$0xff]
      %v312 = vld [vmem:[#allocation2 + $0x2f] sm:$0xff]
      %v313 = vld [vmem:[#allocation2 + $0x47] sm:$0xff]
      %v314 = vld [vmem:[#allocation2 + $0x4f] sm:$0xff]
      %v315 = vld [vmem:[#allocation2 + $0x67] sm:$0xff]
      %v316 = vld [vmem:[#allocation2 + $0x6f] sm:$0xff]
      %v317 = vld [vmem:[#allocation2 + $0x87] sm:$0xff]
      %v318 = vld [vmem:[#allocation2 + $0x8f] sm:$0xff]
      %v319 = vld [vmem:[#allocation2 + $0xa7] sm:$0xff]
      %v320 = vld [vmem:[#allocation2 + $0xaf] sm:$0xff]
      %v321 = vld [vmem:[#allocation2 + $0xc7] sm:$0xff]
      %v322 = vld [vmem:[#allocation2 + $0xcf] sm:$0xff]
      %v323 = vld [vmem:[#allocation2 + $0xe7] sm:$0xff]
      %v324 = vld [vmem:[#allocation2 + $0xef] sm:$0xff]
      %v325 = vld [vmem:[#allocation2 + $0x107] sm:$0xff]
      %v326 = vld [vmem:[#allocation2 + $0x10f] sm:$0xff]
      %v327 = vld [vmem:[#allocation2 + $0x127] sm:$0xff]
      %v328 = vld [vmem:[#allocation2 + $0x12f] sm:$0xff]
      %v329 = vld [vmem:[#allocation2 + $0x147] sm:$0xff]
      %v330 = vld [vmem:[#allocation2 + $0x14f] sm:$0xff]
      %v331 = vld [vmem:[#allocation2 + $0x167] sm:$0xff]
      %v332 = vld [vmem:[#allocation2 + $0x16f] sm:$0xff]
      %v333 = vld [vmem:[#allocation2 + $0x187] sm:$0xff]
      %v334 = vld [vmem:[#allocation2 + $0x18f] sm:$0xff]
      %v335 = vld [vmem:[#allocation2 + $0x1a7] sm:$0xff]
      %v336 = vld [vmem:[#allocation2 + $0x1af] sm:$0xff]
      %v337 = vld [vmem:[#allocation2 + $0x1c7] sm:$0xff]
      %v338 = vld [vmem:[#allocation2 + $0x1cf] sm:$0xff]
      %v339 = vld [vmem:[#allocation2 + $0x1e7] sm:$0xff]
      %v340 = vld [vmem:[#allocation2 + $0x1ef] sm:$0xff]
      %v341 = vld [vmem:[%s1] sm:$0xff]
      %v342 = vld [vmem:[#allocation2 + $0x8] sm:$0xff]
      %v343 = vld [vmem:[#allocation2 + $0x10] sm:$0xff]
      %v344 = vld [vmem:[#allocation2 + $0x28] sm:$0xff]
      %v345 = vld [vmem:[#allocation2 + $0x30] sm:$0xff]
      %v346 = vld [vmem:[#allocation2 + $0x48] sm:$0xff]
      %v347 = vld [vmem:[#allocation2 + $0x50] sm:$0xff]
      %v348 = vld [vmem:[#allocation2 + $0x68] sm:$0xff]
      %v349 = vld [vmem:[#allocation2 + $0x70] sm:$0xff]
      %v350 = vld [vmem:[#allocation2 + $0x88] sm:$0xff]
      %v351 = vld [vmem:[#allocation2 + $0x90] sm:$0xff]
      %v352 = vld [vmem:[#allocation2 + $0xa8] sm:$0xff]
      %v353 = vld [vmem:[#allocation2 + $0xb0] sm:$0xff]
      %v354 = vld [vmem:[#allocation2 + $0xc8] sm:$0xff]
      %v355 = vld [vmem:[#allocation2 + $0xd0] sm:$0xff]
      %v356 = vld [vmem:[#allocation2 + $0xe8] sm:$0xff]
      %v357 = vld [vmem:[#allocation2 + $0xf0] sm:$0xff]
      %v358 = vld [vmem:[#allocation2 + $0x108] sm:$0xff]
      %v359 = vld [vmem:[#allocation2 + $0x110] sm:$0xff]
      %v360 = vld [vmem:[#allocation2 + $0x128] sm:$0xff]
      %v361 = vld [vmem:[#allocation2 + $0x130] sm:$0xff]
      %v362 = vld [vmem:[#allocation2 + $0x148] sm:$0xff]
      %v363 = vld [vmem:[#allocation2 + $0x150] sm:$0xff]
      %v364 = vld [vmem:[#allocation2 + $0x168] sm:$0xff]
      %v365 = vld [vmem:[#allocation2 + $0x170] sm:$0xff]
      %v366 = vld [vmem:[#allocation2 + $0x188] sm:$0xff]
      %v367 = vld [vmem:[#allocation2 + $0x190] sm:$0xff]
      %v368 = vld [vmem:[#allocation2 + $0x1a8] sm:$0xff]
      %v369 = vld [vmem:[#allocation2 + $0x1b0] sm:$0xff]
      %v370 = vld [vmem:[#allocation2 + $0x1c8] sm:$0xff]
      %v371 = vld [vmem:[#allocation2 + $0x1d0] sm:$0xff]
      %v372 = vld [vmem:[#allocation2 + $0x1e8] sm:$0xff]
      %v373 = vld [vmem:[#allocation2 + $0x1f0] sm:$0xff]
      %s374 = scalar_lea.vmem %s1, 8
      %v375 = vld [vmem:[%s374] sm:$0xff]
      %v377 = vsel %vm171, %v342, 0
      %v380 = vsel %vm171, %v343, 0
      %v383 = vsel %vm171, %v344, 0
      %v386 = vsel %vm171, %v345, 0
      %v389 = vsel %vm171, %v346, 0
      %v392 = vsel %vm171, %v347, 0
      %v395 = vsel %vm171, %v348, 0
      %v398 = vsel %vm171, %v349, 0
      %v401 = vsel %vm171, %v350, 0
      %v404 = vsel %vm171, %v351, 0
      %v407 = vsel %vm171, %v352, 0
      %v410 = vsel %vm171, %v353, 0
      %v413 = vsel %vm171, %v354, 0
      %v416 = vsel %vm171, %v355, 0
      %v419 = vsel %vm171, %v356, 0
      %v422 = vsel %vm171, %v357, 0
      %v425 = vsel %vm171, %v358, 0
      %v428 = vsel %vm171, %v359, 0
      %v431 = vsel %vm171, %v360, 0
      %v434 = vsel %vm171, %v361, 0
      %v437 = vsel %vm171, %v362, 0
      %v440 = vsel %vm171, %v363, 0
      %v443 = vsel %vm171, %v364, 0
      %v446 = vsel %vm171, %v365, 0
      %v449 = vsel %vm171, %v366, 0
      %v452 = vsel %vm171, %v367, 0
      %v455 = vsel %vm171, %v368, 0
      %v458 = vsel %vm171, %v369, 0
      %v461 = vsel %vm171, %v370, 0
      %v464 = vsel %vm171, %v371, 0
      %v467 = vsel %vm171, %v372, 0
      %v470 = vsel %vm171, %v373, 0
      %472 = vmatprep.subr.mxu0 0.0
      %473 = vmatpush1.msra.mxu0 0.0
      %474 = vmatprep.subr.mxu0 0.0
      %475 = vmatpush1.msra.mxu0 0.0
      %476 = vmatprep.subr.mxu0 0.0
      %477 = vmatpush1.msra.mxu0 0.0
      %478 = vmatprep.subr.mxu0 0.0
      %479 = vmatpush1.msra.mxu0 0.0
      %480 = vmatprep.subr.mxu0 0.0
      %481 = vmatpush1.msra.mxu0 0.0
      %482 = vmatprep.subr.mxu0 0.0
      %483 = vmatpush1.msra.mxu0 0.0
      %484 = vmatprep.subr.mxu0 0.0
      %485 = vmatpush1.msra.mxu0 0.0
      %486 = vmatprep.subr.mxu0 0.0
      %487 = vmatpush1.msra.mxu0 0.0
      %488 = vmatprep.subr.mxu0 0.0
      %489 = vmatpush1.msra.mxu0 0.0
      %490 = vmatprep.subr.mxu0 0.0
      %491 = vmatpush1.msra.mxu0 0.0
      %492 = vmatprep.subr.mxu0 0.0
      %493 = vmatpush1.msra.mxu0 0.0
      %494 = vmatprep.subr.mxu0 0.0
      %495 = vmatpush1.msra.mxu0 0.0
      %496 = vmatprep.subr.mxu0 0.0
      %497 = vmatpush1.msra.mxu0 0.0
      %498 = vmatprep.subr.mxu0 0.0
      %499 = vmatpush1.msra.mxu0 0.0
      %500 = vmatprep.subr.mxu0 0.0
      %501 = vmatpush1.msra.mxu0 0.0
      %502 = vmatprep.subr.mxu0 0.0
      %503 = vmatpush1.msra.mxu0 %v375
      %504 = vmatprep.subr.mxu0 0.0
      %505 = vmatpush2.msra.mxu0 0.0
      %506 = vmatprep.subr.mxu0 0.0
      %507 = vmatpush2.msra.mxu0 0.0
      %508 = vmatprep.subr.mxu0 0.0
      %509 = vmatpush2.msra.mxu0 0.0
      %510 = vmatprep.subr.mxu0 0.0
      %511 = vmatpush2.msra.mxu0 0.0
      %512 = vmatprep.subr.mxu0 0.0
      %513 = vmatpush2.msra.mxu0 0.0
      %514 = vmatprep.subr.mxu0 0.0
      %515 = vmatpush2.msra.mxu0 0.0
      %516 = vmatprep.subr.mxu0 0.0
      %517 = vmatpush2.msra.mxu0 0.0
      %518 = vmatprep.subr.mxu0 0.0
      %519 = vmatpush2.msra.mxu0 0.0
      %520 = vmatprep.subr.mxu0 0.0
      %521 = vmatpush2.msra.mxu0 0.0
      %522 = vmatprep.subr.mxu0 0.0
      %523 = vmatpush2.msra.mxu0 0.0
      %524 = vmatprep.subr.mxu0 0.0
      %525 = vmatpush2.msra.mxu0 0.0
      %526 = vmatprep.subr.mxu0 0.0
      %527 = vmatpush2.msra.mxu0 0.0
      %528 = vmatprep.subr.mxu0 0.0
      %529 = vmatpush2.msra.mxu0 0.0
      %530 = vmatprep.subr.mxu0 0.0
      %531 = vmatpush2.msra.mxu0 0.0
      %532 = vmatprep.subr.mxu0 0.0
      %533 = vmatpush2.msra.mxu0 0.0
      %534 = vmatprep.subr.mxu0 0.0
      %535 = vmatpush2.msra.mxu0 0.0
      %536 = vmatprep.mubr.f32.mxu0 0.0
      %537 = vmatmul.mubr.f32.gmra.mxu0 %v377
      %v538 = vpop.f32.mrf.mxu0
      %v539 = vadd.f32 0.0, %v538
      %v540 = vpop.f32.mrf.mxu0
      %541 = vmatprep.mubr.f32.mxu0 0.0
      %542 = vmatmul.mubr.f32.gmra.mxu0 %v380
      %v543 = vpop.f32.mrf.mxu0
      %v544 = vadd.f32 0.0, %v543
      %v545 = vpop.f32.mrf.mxu0
      %546 = vmatprep.mubr.f32.mxu0 0.0
      %547 = vmatmul.mubr.f32.gmra.mxu0 %v383
      %v548 = vpop.f32.mrf.mxu0
      %v549 = vadd.f32 0.0, %v548
      %v550 = vpop.f32.mrf.mxu0
      %551 = vmatprep.mubr.f32.mxu0 0.0
      %552 = vmatmul.mubr.f32.gmra.mxu0 %v386
      %v553 = vpop.f32.mrf.mxu0
      %v554 = vadd.f32 0.0, %v553
      %v555 = vpop.f32.mrf.mxu0
      %556 = vmatprep.mubr.f32.mxu0 0.0
      %557 = vmatmul.mubr.f32.gmra.mxu0 %v389
      %v558 = vpop.f32.mrf.mxu0
      %v559 = vadd.f32 0.0, %v558
      %v560 = vpop.f32.mrf.mxu0
      %561 = vmatprep.mubr.f32.mxu0 0.0
      %562 = vmatmul.mubr.f32.gmra.mxu0 %v392
      %v563 = vpop.f32.mrf.mxu0
      %v564 = vadd.f32 0.0, %v563
      %v565 = vpop.f32.mrf.mxu0
      %566 = vmatprep.mubr.f32.mxu0 0.0
      %567 = vmatmul.mubr.f32.gmra.mxu0 %v395
      %v568 = vpop.f32.mrf.mxu0
      %v569 = vadd.f32 0.0, %v568
      %v570 = vpop.f32.mrf.mxu0
      %571 = vmatprep.mubr.f32.mxu0 0.0
      %572 = vmatmul.mubr.f32.gmra.mxu0 %v398
      %v573 = vpop.f32.mrf.mxu0
      %v574 = vadd.f32 0.0, %v573
      %v575 = vpop.f32.mrf.mxu0
      %576 = vmatprep.mubr.f32.mxu0 0.0
      %577 = vmatmul.mubr.f32.gmra.mxu0 %v401
      %v578 = vpop.f32.mrf.mxu0
      %v579 = vadd.f32 0.0, %v578
      %v580 = vpop.f32.mrf.mxu0
      %581 = vmatprep.mubr.f32.mxu0 0.0
      %582 = vmatmul.mubr.f32.gmra.mxu0 %v404
      %v583 = vpop.f32.mrf.mxu0
      %v584 = vadd.f32 0.0, %v583
      %v585 = vpop.f32.mrf.mxu0
      %586 = vmatprep.mubr.f32.mxu0 0.0
      %587 = vmatmul.mubr.f32.gmra.mxu0 %v407
      %v588 = vpop.f32.mrf.mxu0
      %v589 = vadd.f32 0.0, %v588
      %v590 = vpop.f32.mrf.mxu0
      %591 = vmatprep.mubr.f32.mxu0 0.0
      %592 = vmatmul.mubr.f32.gmra.mxu0 %v410
      %v593 = vpop.f32.mrf.mxu0
      %v594 = vadd.f32 0.0, %v593
      %v595 = vpop.f32.mrf.mxu0
      %596 = vmatprep.mubr.f32.mxu0 0.0
      %597 = vmatmul.mubr.f32.gmra.mxu0 %v413
      %v598 = vpop.f32.mrf.mxu0
      %v599 = vadd.f32 0.0, %v598
      %v600 = vpop.f32.mrf.mxu0
      %601 = vmatprep.mubr.f32.mxu0 0.0
      %602 = vmatmul.mubr.f32.gmra.mxu0 %v416
      %v603 = vpop.f32.mrf.mxu0
      %v604 = vadd.f32 0.0, %v603
      %v605 = vpop.f32.mrf.mxu0
      %606 = vmatprep.mubr.f32.mxu0 0.0
      %607 = vmatmul.mubr.f32.gmra.mxu0 %v419
      %v608 = vpop.f32.mrf.mxu0
      %v609 = vadd.f32 0.0, %v608
      %v610 = vpop.f32.mrf.mxu0
      %611 = vmatprep.mubr.f32.mxu0 0.0
      %612 = vmatmul.mubr.f32.gmra.mxu0 %v422
      %v613 = vpop.f32.mrf.mxu0
      %v614 = vadd.f32 0.0, %v613
      %v615 = vpop.f32.mrf.mxu0
      %616 = vmatprep.mubr.f32.mxu0 0.0
      %617 = vmatmul.mubr.f32.gmra.mxu0 %v425
      %v618 = vpop.f32.mrf.mxu0
      %v619 = vadd.f32 0.0, %v618
      %v620 = vpop.f32.mrf.mxu0
      %621 = vmatprep.mubr.f32.mxu0 0.0
      %622 = vmatmul.mubr.f32.gmra.mxu0 %v428
      %v623 = vpop.f32.mrf.mxu0
      %v624 = vadd.f32 0.0, %v623
      %v625 = vpop.f32.mrf.mxu0
      %626 = vmatprep.mubr.f32.mxu0 0.0
      %627 = vmatmul.mubr.f32.gmra.mxu0 %v431
      %v628 = vpop.f32.mrf.mxu0
      %v629 = vadd.f32 0.0, %v628
      %v630 = vpop.f32.mrf.mxu0
      %631 = vmatprep.mubr.f32.mxu0 0.0
      %632 = vmatmul.mubr.f32.gmra.mxu0 %v434
      %v633 = vpop.f32.mrf.mxu0
      %v634 = vadd.f32 0.0, %v633
      %v635 = vpop.f32.mrf.mxu0
      %636 = vmatprep.mubr.f32.mxu0 0.0
      %637 = vmatmul.mubr.f32.gmra.mxu0 %v437
      %v638 = vpop.f32.mrf.mxu0
      %v639 = vadd.f32 0.0, %v638
      %v640 = vpop.f32.mrf.mxu0
      %641 = vmatprep.mubr.f32.mxu0 0.0
      %642 = vmatmul.mubr.f32.gmra.mxu0 %v440
      %v643 = vpop.f32.mrf.mxu0
      %v644 = vadd.f32 0.0, %v643
      %v645 = vpop.f32.mrf.mxu0
      %646 = vmatprep.mubr.f32.mxu0 0.0
      %647 = vmatmul.mubr.f32.gmra.mxu0 %v443
      %v648 = vpop.f32.mrf.mxu0
      %v649 = vadd.f32 0.0, %v648
      %v650 = vpop.f32.mrf.mxu0
      %651 = vmatprep.mubr.f32.mxu0 0.0
      %652 = vmatmul.mubr.f32.gmra.mxu0 %v446
      %v653 = vpop.f32.mrf.mxu0
      %v654 = vadd.f32 0.0, %v653
      %v655 = vpop.f32.mrf.mxu0
      %656 = vmatprep.mubr.f32.mxu0 0.0
      %657 = vmatmul.mubr.f32.gmra.mxu0 %v449
      %v658 = vpop.f32.mrf.mxu0
      %v659 = vadd.f32 0.0, %v658
      %v660 = vpop.f32.mrf.mxu0
      %661 = vmatprep.mubr.f32.mxu0 0.0
      %662 = vmatmul.mubr.f32.gmra.mxu0 %v452
      %v663 = vpop.f32.mrf.mxu0
      %v664 = vadd.f32 0.0, %v663
      %v665 = vpop.f32.mrf.mxu0
      %666 = vmatprep.mubr.f32.mxu0 0.0
      %667 = vmatmul.mubr.f32.gmra.mxu0 %v455
      %v668 = vpop.f32.mrf.mxu0
      %v669 = vadd.f32 0.0, %v668
      %v670 = vpop.f32.mrf.mxu0
      %671 = vmatprep.mubr.f32.mxu0 0.0
      %672 = vmatmul.mubr.f32.gmra.mxu0 %v458
      %v673 = vpop.f32.mrf.mxu0
      %v674 = vadd.f32 0.0, %v673
      %v675 = vpop.f32.mrf.mxu0
      %676 = vmatprep.mubr.f32.mxu0 0.0
      %677 = vmatmul.mubr.f32.gmra.mxu0 %v461
      %v678 = vpop.f32.mrf.mxu0
      %v679 = vadd.f32 0.0, %v678
      %v680 = vpop.f32.mrf.mxu0
      %681 = vmatprep.mubr.f32.mxu0 0.0
      %682 = vmatmul.mubr.f32.gmra.mxu0 %v464
      %v683 = vpop.f32.mrf.mxu0
      %v684 = vadd.f32 0.0, %v683
      %v685 = vpop.f32.mrf.mxu0
      %686 = vmatprep.mubr.f32.mxu0 0.0
      %687 = vmatmul.mubr.f32.gmra.mxu0 %v467
      %v688 = vpop.f32.mrf.mxu0
      %v689 = vadd.f32 0.0, %v688
      %v690 = vpop.f32.mrf.mxu0
      %691 = vmatprep.mubr.f32.mxu0 0.0
      %692 = vmatmul.mubr.f32.gmra.mxu0 %v470
      %v693 = vpop.f32.mrf.mxu0
      %v694 = vadd.f32 0.0, %v693
      %v695 = vpop.f32.mrf.mxu0
      %696 = vdwg.mxu0
      %v698 = vsel %vm171, %v309, 0
      %v701 = vsel %vm171, %v310, 0
      %v704 = vsel %vm171, %v311, 0
      %v707 = vsel %vm171, %v312, 0
      %v710 = vsel %vm171, %v313, 0
      %v713 = vsel %vm171, %v314, 0
      %v716 = vsel %vm171, %v315, 0
      %v719 = vsel %vm171, %v316, 0
      %v722 = vsel %vm171, %v317, 0
      %v725 = vsel %vm171, %v318, 0
      %v728 = vsel %vm171, %v319, 0
      %v731 = vsel %vm171, %v320, 0
      %v734 = vsel %vm171, %v321, 0
      %v737 = vsel %vm171, %v322, 0
      %v740 = vsel %vm171, %v323, 0
      %v743 = vsel %vm171, %v324, 0
      %v746 = vsel %vm171, %v325, 0
      %v749 = vsel %vm171, %v326, 0
      %v752 = vsel %vm171, %v327, 0
      %v755 = vsel %vm171, %v328, 0
      %v758 = vsel %vm171, %v329, 0
      %v761 = vsel %vm171, %v330, 0
      %v764 = vsel %vm171, %v331, 0
      %v767 = vsel %vm171, %v332, 0
      %v770 = vsel %vm171, %v333, 0
      %v773 = vsel %vm171, %v334, 0
      %v776 = vsel %vm171, %v335, 0
      %v779 = vsel %vm171, %v336, 0
      %v782 = vsel %vm171, %v337, 0
      %v785 = vsel %vm171, %v338, 0
      %v788 = vsel %vm171, %v339, 0
      %v791 = vsel %vm171, %v340, 0
      %793 = vmatprep.subr.mxu0 0.0
      %794 = vmatpush1.msra.mxu0 0.0
      %795 = vmatprep.subr.mxu0 0.0
      %796 = vmatpush1.msra.mxu0 0.0
      %797 = vmatprep.subr.mxu0 0.0
      %798 = vmatpush1.msra.mxu0 0.0
      %799 = vmatprep.subr.mxu0 0.0
      %800 = vmatpush1.msra.mxu0 0.0
      %801 = vmatprep.subr.mxu0 0.0
      %802 = vmatpush1.msra.mxu0 0.0
      %803 = vmatprep.subr.mxu0 0.0
      %804 = vmatpush1.msra.mxu0 0.0
      %805 = vmatprep.subr.mxu0 0.0
      %806 = vmatpush1.msra.mxu0 0.0
      %807 = vmatprep.subr.mxu0 0.0
      %808 = vmatpush1.msra.mxu0 0.0
      %809 = vmatprep.subr.mxu0 0.0
      %810 = vmatpush1.msra.mxu0 0.0
      %811 = vmatprep.subr.mxu0 0.0
      %812 = vmatpush1.msra.mxu0 0.0
      %813 = vmatprep.subr.mxu0 0.0
      %814 = vmatpush1.msra.mxu0 0.0
      %815 = vmatprep.subr.mxu0 0.0
      %816 = vmatpush1.msra.mxu0 0.0
      %817 = vmatprep.subr.mxu0 0.0
      %818 = vmatpush1.msra.mxu0 0.0
      %819 = vmatprep.subr.mxu0 0.0
      %820 = vmatpush1.msra.mxu0 0.0
      %821 = vmatprep.subr.mxu0 0.0
      %822 = vmatpush1.msra.mxu0 0.0
      %823 = vmatprep.subr.mxu0 0.0
      %824 = vmatpush1.msra.mxu0 %v341
      %825 = vmatprep.subr.mxu0 0.0
      %826 = vmatpush2.msra.mxu0 0.0
      %827 = vmatprep.subr.mxu0 0.0
      %828 = vmatpush2.msra.mxu0 0.0
      %829 = vmatprep.subr.mxu0 0.0
      %830 = vmatpush2.msra.mxu0 0.0
      %831 = vmatprep.subr.mxu0 0.0
      %832 = vmatpush2.msra.mxu0 0.0
      %833 = vmatprep.subr.mxu0 0.0
      %834 = vmatpush2.msra.mxu0 0.0
      %835 = vmatprep.subr.mxu0 0.0
      %836 = vmatpush2.msra.mxu0 0.0
      %837 = vmatprep.subr.mxu0 0.0
      %838 = vmatpush2.msra.mxu0 0.0
      %839 = vmatprep.subr.mxu0 0.0
      %840 = vmatpush2.msra.mxu0 0.0
      %841 = vmatprep.subr.mxu0 0.0
      %842 = vmatpush2.msra.mxu0 0.0
      %843 = vmatprep.subr.mxu0 0.0
      %844 = vmatpush2.msra.mxu0 0.0
      %845 = vmatprep.subr.mxu0 0.0
      %846 = vmatpush2.msra.mxu0 0.0
      %847 = vmatprep.subr.mxu0 0.0
      %848 = vmatpush2.msra.mxu0 0.0
      %849 = vmatprep.subr.mxu0 0.0
      %850 = vmatpush2.msra.mxu0 0.0
      %851 = vmatprep.subr.mxu0 0.0
      %852 = vmatpush2.msra.mxu0 0.0
      %853 = vmatprep.subr.mxu0 0.0
      %854 = vmatpush2.msra.mxu0 0.0
      %855 = vmatprep.subr.mxu0 0.0
      %856 = vmatpush2.msra.mxu0 0.0
      %857 = vmatprep.mubr.f32.mxu0 0.0
      %858 = vmatmul.mubr.f32.gmra.mxu0 %v698
      %v859 = vpop.f32.mrf.mxu0
      %v860 = vadd.f32 %v539, %v859
      %v861 = vpop.f32.mrf.mxu0
      %862 = vmatprep.mubr.f32.mxu0 0.0
      %863 = vmatmul.mubr.f32.gmra.mxu0 %v701
      %v864 = vpop.f32.mrf.mxu0
      %v865 = vadd.f32 %v544, %v864
      %v866 = vpop.f32.mrf.mxu0
      %867 = vmatprep.mubr.f32.mxu0 0.0
      %868 = vmatmul.mubr.f32.gmra.mxu0 %v704
      %v869 = vpop.f32.mrf.mxu0
      %v870 = vadd.f32 %v549, %v869
      %v871 = vpop.f32.mrf.mxu0
      %872 = vmatprep.mubr.f32.mxu0 0.0
      %873 = vmatmul.mubr.f32.gmra.mxu0 %v707
      %v874 = vpop.f32.mrf.mxu0
      %v875 = vadd.f32 %v554, %v874
      %v876 = vpop.f32.mrf.mxu0
      %877 = vmatprep.mubr.f32.mxu0 0.0
      %878 = vmatmul.mubr.f32.gmra.mxu0 %v710
      %v879 = vpop.f32.mrf.mxu0
      %v880 = vadd.f32 %v559, %v879
      %v881 = vpop.f32.mrf.mxu0
      %882 = vmatprep.mubr.f32.mxu0 0.0
      %883 = vmatmul.mubr.f32.gmra.mxu0 %v713
      %v884 = vpop.f32.mrf.mxu0
      %v885 = vadd.f32 %v564, %v884
      %v886 = vpop.f32.mrf.mxu0
      %887 = vmatprep.mubr.f32.mxu0 0.0
      %888 = vmatmul.mubr.f32.gmra.mxu0 %v716
      %v889 = vpop.f32.mrf.mxu0
      %v890 = vadd.f32 %v569, %v889
      %v891 = vpop.f32.mrf.mxu0
      %892 = vmatprep.mubr.f32.mxu0 0.0
      %893 = vmatmul.mubr.f32.gmra.mxu0 %v719
      %v894 = vpop.f32.mrf.mxu0
      %v895 = vadd.f32 %v574, %v894
      %v896 = vpop.f32.mrf.mxu0
      %897 = vmatprep.mubr.f32.mxu0 0.0
      %898 = vmatmul.mubr.f32.gmra.mxu0 %v722
      %v899 = vpop.f32.mrf.mxu0
      %v900 = vadd.f32 %v579, %v899
      %v901 = vpop.f32.mrf.mxu0
      %902 = vmatprep.mubr.f32.mxu0 0.0
      %903 = vmatmul.mubr.f32.gmra.mxu0 %v725
      %v904 = vpop.f32.mrf.mxu0
      %v905 = vadd.f32 %v584, %v904
      %v906 = vpop.f32.mrf.mxu0
      %907 = vmatprep.mubr.f32.mxu0 0.0
      %908 = vmatmul.mubr.f32.gmra.mxu0 %v728
      %v909 = vpop.f32.mrf.mxu0
      %v910 = vadd.f32 %v589, %v909
      %v911 = vpop.f32.mrf.mxu0
      %912 = vmatprep.mubr.f32.mxu0 0.0
      %913 = vmatmul.mubr.f32.gmra.mxu0 %v731
      %v914 = vpop.f32.mrf.mxu0
      %v915 = vadd.f32 %v594, %v914
      %v916 = vpop.f32.mrf.mxu0
      %917 = vmatprep.mubr.f32.mxu0 0.0
      %918 = vmatmul.mubr.f32.gmra.mxu0 %v734
      %v919 = vpop.f32.mrf.mxu0
      %v920 = vadd.f32 %v599, %v919
      %v921 = vpop.f32.mrf.mxu0
      %922 = vmatprep.mubr.f32.mxu0 0.0
      %923 = vmatmul.mubr.f32.gmra.mxu0 %v737
      %v924 = vpop.f32.mrf.mxu0
      %v925 = vadd.f32 %v604, %v924
      %v926 = vpop.f32.mrf.mxu0
      %927 = vmatprep.mubr.f32.mxu0 0.0
      %928 = vmatmul.mubr.f32.gmra.mxu0 %v740
      %v929 = vpop.f32.mrf.mxu0
      %v930 = vadd.f32 %v609, %v929
      %v931 = vpop.f32.mrf.mxu0
      %932 = vmatprep.mubr.f32.mxu0 0.0
      %933 = vmatmul.mubr.f32.gmra.mxu0 %v743
      %v934 = vpop.f32.mrf.mxu0
      %v935 = vadd.f32 %v614, %v934
      %v936 = vpop.f32.mrf.mxu0
      %937 = vmatprep.mubr.f32.mxu0 0.0
      %938 = vmatmul.mubr.f32.gmra.mxu0 %v746
      %v939 = vpop.f32.mrf.mxu0
      %v940 = vadd.f32 %v619, %v939
      %v941 = vpop.f32.mrf.mxu0
      %942 = vmatprep.mubr.f32.mxu0 0.0
      %943 = vmatmul.mubr.f32.gmra.mxu0 %v749
      %v944 = vpop.f32.mrf.mxu0
      %v945 = vadd.f32 %v624, %v944
      %v946 = vpop.f32.mrf.mxu0
      %947 = vmatprep.mubr.f32.mxu0 0.0
      %948 = vmatmul.mubr.f32.gmra.mxu0 %v752
      %v949 = vpop.f32.mrf.mxu0
      %v950 = vadd.f32 %v629, %v949
      %v951 = vpop.f32.mrf.mxu0
      %952 = vmatprep.mubr.f32.mxu0 0.0
      %953 = vmatmul.mubr.f32.gmra.mxu0 %v755
      %v954 = vpop.f32.mrf.mxu0
      %v955 = vadd.f32 %v634, %v954
      %v956 = vpop.f32.mrf.mxu0
      %957 = vmatprep.mubr.f32.mxu0 0.0
      %958 = vmatmul.mubr.f32.gmra.mxu0 %v758
      %v959 = vpop.f32.mrf.mxu0
      %v960 = vadd.f32 %v639, %v959
      %v961 = vpop.f32.mrf.mxu0
      %962 = vmatprep.mubr.f32.mxu0 0.0
      %963 = vmatmul.mubr.f32.gmra.mxu0 %v761
      %v964 = vpop.f32.mrf.mxu0
      %v965 = vadd.f32 %v644, %v964
      %v966 = vpop.f32.mrf.mxu0
      %967 = vmatprep.mubr.f32.mxu0 0.0
      %968 = vmatmul.mubr.f32.gmra.mxu0 %v764
      %v969 = vpop.f32.mrf.mxu0
      %v970 = vadd.f32 %v649, %v969
      %v971 = vpop.f32.mrf.mxu0
      %972 = vmatprep.mubr.f32.mxu0 0.0
      %973 = vmatmul.mubr.f32.gmra.mxu0 %v767
      %v974 = vpop.f32.mrf.mxu0
      %v975 = vadd.f32 %v654, %v974
      %v976 = vpop.f32.mrf.mxu0
      %977 = vmatprep.mubr.f32.mxu0 0.0
      %978 = vmatmul.mubr.f32.gmra.mxu0 %v770
      %v979 = vpop.f32.mrf.mxu0
      %v980 = vadd.f32 %v659, %v979
      %v981 = vpop.f32.mrf.mxu0
      %982 = vmatprep.mubr.f32.mxu0 0.0
      %983 = vmatmul.mubr.f32.gmra.mxu0 %v773
      %v984 = vpop.f32.mrf.mxu0
      %v985 = vadd.f32 %v664, %v984
      %v986 = vpop.f32.mrf.mxu0
      %987 = vmatprep.mubr.f32.mxu0 0.0
      %988 = vmatmul.mubr.f32.gmra.mxu0 %v776
      %v989 = vpop.f32.mrf.mxu0
      %v990 = vadd.f32 %v669, %v989
      %v991 = vpop.f32.mrf.mxu0
      %992 = vmatprep.mubr.f32.mxu0 0.0
      %993 = vmatmul.mubr.f32.gmra.mxu0 %v779
      %v994 = vpop.f32.mrf.mxu0
      %v995 = vadd.f32 %v674, %v994
      %v996 = vpop.f32.mrf.mxu0
      %997 = vmatprep.mubr.f32.mxu0 0.0
      %998 = vmatmul.mubr.f32.gmra.mxu0 %v782
      %v999 = vpop.f32.mrf.mxu0
      %v1000 = vadd.f32 %v679, %v999
      %v1001 = vpop.f32.mrf.mxu0
      %1002 = vmatprep.mubr.f32.mxu0 0.0
      %1003 = vmatmul.mubr.f32.gmra.mxu0 %v785
      %v1004 = vpop.f32.mrf.mxu0
      %v1005 = vadd.f32 %v684, %v1004
      %v1006 = vpop.f32.mrf.mxu0
      %1007 = vmatprep.mubr.f32.mxu0 0.0
      %1008 = vmatmul.mubr.f32.gmra.mxu0 %v788
      %v1009 = vpop.f32.mrf.mxu0
      %v1010 = vadd.f32 %v689, %v1009
      %v1011 = vpop.f32.mrf.mxu0
      %1012 = vmatprep.mubr.f32.mxu0 0.0
      %1013 = vmatmul.mubr.f32.gmra.mxu0 %v791
      %v1014 = vpop.f32.mrf.mxu0
      %v1015 = vadd.f32 %v694, %v1014
      %v1016 = vpop.f32.mrf.mxu0
      %1017 = vdwg.mxu0
      %v1018 = vld [vmem:[#allocation2 + $0x9] sm:$0xff]
      %v1019 = vld [vmem:[#allocation2 + $0x11] sm:$0xff]
      %v1020 = vld [vmem:[#allocation2 + $0x29] sm:$0xff]
      %v1021 = vld [vmem:[#allocation2 + $0x31] sm:$0xff]
      %v1022 = vld [vmem:[#allocation2 + $0x49] sm:$0xff]
      %v1023 = vld [vmem:[#allocation2 + $0x51] sm:$0xff]
      %v1024 = vld [vmem:[#allocation2 + $0x69] sm:$0xff]
      %v1025 = vld [vmem:[#allocation2 + $0x71] sm:$0xff]
      %v1026 = vld [vmem:[#allocation2 + $0x89] sm:$0xff]
      %v1027 = vld [vmem:[#allocation2 + $0x91] sm:$0xff]
      %v1028 = vld [vmem:[#allocation2 + $0xa9] sm:$0xff]
      %v1029 = vld [vmem:[#allocation2 + $0xb1] sm:$0xff]
      %v1030 = vld [vmem:[#allocation2 + $0xc9] sm:$0xff]
      %v1031 = vld [vmem:[#allocation2 + $0xd1] sm:$0xff]
      %v1032 = vld [vmem:[#allocation2 + $0xe9] sm:$0xff]
      %v1033 = vld [vmem:[#allocation2 + $0xf1] sm:$0xff]
      %v1034 = vld [vmem:[#allocation2 + $0x109] sm:$0xff]
      %v1035 = vld [vmem:[#allocation2 + $0x111] sm:$0xff]
      %v1036 = vld [vmem:[#allocation2 + $0x129] sm:$0xff]
      %v1037 = vld [vmem:[#allocation2 + $0x131] sm:$0xff]
      %v1038 = vld [vmem:[#allocation2 + $0x149] sm:$0xff]
      %v1039 = vld [vmem:[#allocation2 + $0x151] sm:$0xff]
      %v1040 = vld [vmem:[#allocation2 + $0x169] sm:$0xff]
      %v1041 = vld [vmem:[#allocation2 + $0x171] sm:$0xff]
      %v1042 = vld [vmem:[#allocation2 + $0x189] sm:$0xff]
      %v1043 = vld [vmem:[#allocation2 + $0x191] sm:$0xff]
      %v1044 = vld [vmem:[#allocation2 + $0x1a9] sm:$0xff]
      %v1045 = vld [vmem:[#allocation2 + $0x1b1] sm:$0xff]
      %v1046 = vld [vmem:[#allocation2 + $0x1c9] sm:$0xff]
      %v1047 = vld [vmem:[#allocation2 + $0x1d1] sm:$0xff]
      %v1048 = vld [vmem:[#allocation2 + $0x1e9] sm:$0xff]
      %v1049 = vld [vmem:[#allocation2 + $0x1f1] sm:$0xff]
      %s1050 = scalar_lea.vmem %s1, 16
      %v1051 = vld [vmem:[%s1050] sm:$0xff]
      %v1053 = vsel %vm171, %v1018, 0
      %v1056 = vsel %vm171, %v1019, 0
      %v1059 = vsel %vm171, %v1020, 0
      %v1062 = vsel %vm171, %v1021, 0
      %v1065 = vsel %vm171, %v1022, 0
      %v1068 = vsel %vm171, %v1023, 0
      %v1071 = vsel %vm171, %v1024, 0
      %v1074 = vsel %vm171, %v1025, 0
      %v1077 = vsel %vm171, %v1026, 0
      %v1080 = vsel %vm171, %v1027, 0
      %v1083 = vsel %vm171, %v1028, 0
      %v1086 = vsel %vm171, %v1029, 0
      %v1089 = vsel %vm171, %v1030, 0
      %v1092 = vsel %vm171, %v1031, 0
      %v1095 = vsel %vm171, %v1032, 0
      %v1098 = vsel %vm171, %v1033, 0
      %v1101 = vsel %vm171, %v1034, 0
      %v1104 = vsel %vm171, %v1035, 0
      %v1107 = vsel %vm171, %v1036, 0
      %v1110 = vsel %vm171, %v1037, 0
      %v1113 = vsel %vm171, %v1038, 0
      %v1116 = vsel %vm171, %v1039, 0
      %v1119 = vsel %vm171, %v1040, 0
      %v1122 = vsel %vm171, %v1041, 0
      %v1125 = vsel %vm171, %v1042, 0
      %v1128 = vsel %vm171, %v1043, 0
      %v1131 = vsel %vm171, %v1044, 0
      %v1134 = vsel %vm171, %v1045, 0
      %v1137 = vsel %vm171, %v1046, 0
      %v1140 = vsel %vm171, %v1047, 0
      %v1143 = vsel %vm171, %v1048, 0
      %v1146 = vsel %vm171, %v1049, 0
      %1148 = vmatprep.subr.mxu0 0.0
      %1149 = vmatpush1.msra.mxu0 0.0
      %1150 = vmatprep.subr.mxu0 0.0
      %1151 = vmatpush1.msra.mxu0 0.0
      %1152 = vmatprep.subr.mxu0 0.0
      %1153 = vmatpush1.msra.mxu0 0.0
      %1154 = vmatprep.subr.mxu0 0.0
      %1155 = vmatpush1.msra.mxu0 0.0
      %1156 = vmatprep.subr.mxu0 0.0
      %1157 = vmatpush1.msra.mxu0 0.0
      %1158 = vmatprep.subr.mxu0 0.0
      %1159 = vmatpush1.msra.mxu0 0.0
      %1160 = vmatprep.subr.mxu0 0.0
      %1161 = vmatpush1.msra.mxu0 0.0
      %1162 = vmatprep.subr.mxu0 0.0
      %1163 = vmatpush1.msra.mxu0 0.0
      %1164 = vmatprep.subr.mxu0 0.0
      %1165 = vmatpush1.msra.mxu0 0.0
      %1166 = vmatprep.subr.mxu0 0.0
      %1167 = vmatpush1.msra.mxu0 0.0
      %1168 = vmatprep.subr.mxu0 0.0
      %1169 = vmatpush1.msra.mxu0 0.0
      %1170 = vmatprep.subr.mxu0 0.0
      %1171 = vmatpush1.msra.mxu0 0.0
      %1172 = vmatprep.subr.mxu0 0.0
      %1173 = vmatpush1.msra.mxu0 0.0
      %1174 = vmatprep.subr.mxu0 0.0
      %1175 = vmatpush1.msra.mxu0 0.0
      %1176 = vmatprep.subr.mxu0 0.0
      %1177 = vmatpush1.msra.mxu0 0.0
      %1178 = vmatprep.subr.mxu0 0.0
      %1179 = vmatpush1.msra.mxu0 %v1051
      %1180 = vmatprep.subr.mxu0 0.0
      %1181 = vmatpush2.msra.mxu0 0.0
      %1182 = vmatprep.subr.mxu0 0.0
      %1183 = vmatpush2.msra.mxu0 0.0
      %1184 = vmatprep.subr.mxu0 0.0
      %1185 = vmatpush2.msra.mxu0 0.0
      %1186 = vmatprep.subr.mxu0 0.0
      %1187 = vmatpush2.msra.mxu0 0.0
      %1188 = vmatprep.subr.mxu0 0.0
      %1189 = vmatpush2.msra.mxu0 0.0
      %1190 = vmatprep.subr.mxu0 0.0
      %1191 = vmatpush2.msra.mxu0 0.0
      %1192 = vmatprep.subr.mxu0 0.0
      %1193 = vmatpush2.msra.mxu0 0.0
      %1194 = vmatprep.subr.mxu0 0.0
      %1195 = vmatpush2.msra.mxu0 0.0
      %1196 = vmatprep.subr.mxu0 0.0
      %1197 = vmatpush2.msra.mxu0 0.0
      %1198 = vmatprep.subr.mxu0 0.0
      %1199 = vmatpush2.msra.mxu0 0.0
      %1200 = vmatprep.subr.mxu0 0.0
      %1201 = vmatpush2.msra.mxu0 0.0
      %1202 = vmatprep.subr.mxu0 0.0
      %1203 = vmatpush2.msra.mxu0 0.0
      %1204 = vmatprep.subr.mxu0 0.0
      %1205 = vmatpush2.msra.mxu0 0.0
      %1206 = vmatprep.subr.mxu0 0.0
      %1207 = vmatpush2.msra.mxu0 0.0
      %1208 = vmatprep.subr.mxu0 0.0
      %1209 = vmatpush2.msra.mxu0 0.0
      %1210 = vmatprep.subr.mxu0 0.0
      %1211 = vmatpush2.msra.mxu0 0.0
      %1212 = vmatprep.mubr.f32.mxu0 0.0
      %1213 = vmatmul.mubr.f32.gmra.mxu0 %v1053
      %v1214 = vpop.f32.mrf.mxu0
      %v1215 = vadd.f32 0.0, %v1214
      %v1216 = vpop.f32.mrf.mxu0
      %1217 = vmatprep.mubr.f32.mxu0 0.0
      %1218 = vmatmul.mubr.f32.gmra.mxu0 %v1056
      %v1219 = vpop.f32.mrf.mxu0
      %v1220 = vadd.f32 0.0, %v1219
      %v1221 = vpop.f32.mrf.mxu0
      %1222 = vmatprep.mubr.f32.mxu0 0.0
      %1223 = vmatmul.mubr.f32.gmra.mxu0 %v1059
      %v1224 = vpop.f32.mrf.mxu0
      %v1225 = vadd.f32 0.0, %v1224
      %v1226 = vpop.f32.mrf.mxu0
      %1227 = vmatprep.mubr.f32.mxu0 0.0
      %1228 = vmatmul.mubr.f32.gmra.mxu0 %v1062
      %v1229 = vpop.f32.mrf.mxu0
      %v1230 = vadd.f32 0.0, %v1229
      %v1231 = vpop.f32.mrf.mxu0
      %1232 = vmatprep.mubr.f32.mxu0 0.0
      %1233 = vmatmul.mubr.f32.gmra.mxu0 %v1065
      %v1234 = vpop.f32.mrf.mxu0
      %v1235 = vadd.f32 0.0, %v1234
      %v1236 = vpop.f32.mrf.mxu0
      %1237 = vmatprep.mubr.f32.mxu0 0.0
      %1238 = vmatmul.mubr.f32.gmra.mxu0 %v1068
      %v1239 = vpop.f32.mrf.mxu0
      %v1240 = vadd.f32 0.0, %v1239
      %v1241 = vpop.f32.mrf.mxu0
      %1242 = vmatprep.mubr.f32.mxu0 0.0
      %1243 = vmatmul.mubr.f32.gmra.mxu0 %v1071
      %v1244 = vpop.f32.mrf.mxu0
      %v1245 = vadd.f32 0.0, %v1244
      %v1246 = vpop.f32.mrf.mxu0
      %1247 = vmatprep.mubr.f32.mxu0 0.0
      %1248 = vmatmul.mubr.f32.gmra.mxu0 %v1074
      %v1249 = vpop.f32.mrf.mxu0
      %v1250 = vadd.f32 0.0, %v1249
      %v1251 = vpop.f32.mrf.mxu0
      %1252 = vmatprep.mubr.f32.mxu0 0.0
      %1253 = vmatmul.mubr.f32.gmra.mxu0 %v1077
      %v1254 = vpop.f32.mrf.mxu0
      %v1255 = vadd.f32 0.0, %v1254
      %v1256 = vpop.f32.mrf.mxu0
      %1257 = vmatprep.mubr.f32.mxu0 0.0
      %1258 = vmatmul.mubr.f32.gmra.mxu0 %v1080
      %v1259 = vpop.f32.mrf.mxu0
      %v1260 = vadd.f32 0.0, %v1259
      %v1261 = vpop.f32.mrf.mxu0
      %1262 = vmatprep.mubr.f32.mxu0 0.0
      %1263 = vmatmul.mubr.f32.gmra.mxu0 %v1083
      %v1264 = vpop.f32.mrf.mxu0
      %v1265 = vadd.f32 0.0, %v1264
      %v1266 = vpop.f32.mrf.mxu0
      %1267 = vmatprep.mubr.f32.mxu0 0.0
      %1268 = vmatmul.mubr.f32.gmra.mxu0 %v1086
      %v1269 = vpop.f32.mrf.mxu0
      %v1270 = vadd.f32 0.0, %v1269
      %v1271 = vpop.f32.mrf.mxu0
      %1272 = vmatprep.mubr.f32.mxu0 0.0
      %1273 = vmatmul.mubr.f32.gmra.mxu0 %v1089
      %v1274 = vpop.f32.mrf.mxu0
      %v1275 = vadd.f32 0.0, %v1274
      %v1276 = vpop.f32.mrf.mxu0
      %1277 = vmatprep.mubr.f32.mxu0 0.0
      %1278 = vmatmul.mubr.f32.gmra.mxu0 %v1092
      %v1279 = vpop.f32.mrf.mxu0
      %v1280 = vadd.f32 0.0, %v1279
      %v1281 = vpop.f32.mrf.mxu0
      %1282 = vmatprep.mubr.f32.mxu0 0.0
      %1283 = vmatmul.mubr.f32.gmra.mxu0 %v1095
      %v1284 = vpop.f32.mrf.mxu0
      %v1285 = vadd.f32 0.0, %v1284
      %v1286 = vpop.f32.mrf.mxu0
      %1287 = vmatprep.mubr.f32.mxu0 0.0
      %1288 = vmatmul.mubr.f32.gmra.mxu0 %v1098
      %v1289 = vpop.f32.mrf.mxu0
      %v1290 = vadd.f32 0.0, %v1289
      %v1291 = vpop.f32.mrf.mxu0
      %1292 = vmatprep.mubr.f32.mxu0 0.0
      %1293 = vmatmul.mubr.f32.gmra.mxu0 %v1101
      %v1294 = vpop.f32.mrf.mxu0
      %v1295 = vadd.f32 0.0, %v1294
      %v1296 = vpop.f32.mrf.mxu0
      %1297 = vmatprep.mubr.f32.mxu0 0.0
      %1298 = vmatmul.mubr.f32.gmra.mxu0 %v1104
      %v1299 = vpop.f32.mrf.mxu0
      %v1300 = vadd.f32 0.0, %v1299
      %v1301 = vpop.f32.mrf.mxu0
      %1302 = vmatprep.mubr.f32.mxu0 0.0
      %1303 = vmatmul.mubr.f32.gmra.mxu0 %v1107
      %v1304 = vpop.f32.mrf.mxu0
      %v1305 = vadd.f32 0.0, %v1304
      %v1306 = vpop.f32.mrf.mxu0
      %1307 = vmatprep.mubr.f32.mxu0 0.0
      %1308 = vmatmul.mubr.f32.gmra.mxu0 %v1110
      %v1309 = vpop.f32.mrf.mxu0
      %v1310 = vadd.f32 0.0, %v1309
      %v1311 = vpop.f32.mrf.mxu0
      %1312 = vmatprep.mubr.f32.mxu0 0.0
      %1313 = vmatmul.mubr.f32.gmra.mxu0 %v1113
      %v1314 = vpop.f32.mrf.mxu0
      %v1315 = vadd.f32 0.0, %v1314
      %v1316 = vpop.f32.mrf.mxu0
      %1317 = vmatprep.mubr.f32.mxu0 0.0
      %1318 = vmatmul.mubr.f32.gmra.mxu0 %v1116
      %v1319 = vpop.f32.mrf.mxu0
      %v1320 = vadd.f32 0.0, %v1319
      %v1321 = vpop.f32.mrf.mxu0
      %1322 = vmatprep.mubr.f32.mxu0 0.0
      %1323 = vmatmul.mubr.f32.gmra.mxu0 %v1119
      %v1324 = vpop.f32.mrf.mxu0
      %v1325 = vadd.f32 0.0, %v1324
      %v1326 = vpop.f32.mrf.mxu0
      %1327 = vmatprep.mubr.f32.mxu0 0.0
      %1328 = vmatmul.mubr.f32.gmra.mxu0 %v1122
      %v1329 = vpop.f32.mrf.mxu0
      %v1330 = vadd.f32 0.0, %v1329
      %v1331 = vpop.f32.mrf.mxu0
      %1332 = vmatprep.mubr.f32.mxu0 0.0
      %1333 = vmatmul.mubr.f32.gmra.mxu0 %v1125
      %v1334 = vpop.f32.mrf.mxu0
      %v1335 = vadd.f32 0.0, %v1334
      %v1336 = vpop.f32.mrf.mxu0
      %1337 = vmatprep.mubr.f32.mxu0 0.0
      %1338 = vmatmul.mubr.f32.gmra.mxu0 %v1128
      %v1339 = vpop.f32.mrf.mxu0
      %v1340 = vadd.f32 0.0, %v1339
      %v1341 = vpop.f32.mrf.mxu0
      %1342 = vmatprep.mubr.f32.mxu0 0.0
      %1343 = vmatmul.mubr.f32.gmra.mxu0 %v1131
      %v1344 = vpop.f32.mrf.mxu0
      %v1345 = vadd.f32 0.0, %v1344
      %v1346 = vpop.f32.mrf.mxu0
      %1347 = vmatprep.mubr.f32.mxu0 0.0
      %1348 = vmatmul.mubr.f32.gmra.mxu0 %v1134
      %v1349 = vpop.f32.mrf.mxu0
      %v1350 = vadd.f32 0.0, %v1349
      %v1351 = vpop.f32.mrf.mxu0
      %1352 = vmatprep.mubr.f32.mxu0 0.0
      %1353 = vmatmul.mubr.f32.gmra.mxu0 %v1137
      %v1354 = vpop.f32.mrf.mxu0
      %v1355 = vadd.f32 0.0, %v1354
      %v1356 = vpop.f32.mrf.mxu0
      %1357 = vmatprep.mubr.f32.mxu0 0.0
      %1358 = vmatmul.mubr.f32.gmra.mxu0 %v1140
      %v1359 = vpop.f32.mrf.mxu0
      %v1360 = vadd.f32 0.0, %v1359
      %v1361 = vpop.f32.mrf.mxu0
      %1362 = vmatprep.mubr.f32.mxu0 0.0
      %1363 = vmatmul.mubr.f32.gmra.mxu0 %v1143
      %v1364 = vpop.f32.mrf.mxu0
      %v1365 = vadd.f32 0.0, %v1364
      %v1366 = vpop.f32.mrf.mxu0
      %1367 = vmatprep.mubr.f32.mxu0 0.0
      %1368 = vmatmul.mubr.f32.gmra.mxu0 %v1146
      %v1369 = vpop.f32.mrf.mxu0
      %v1370 = vadd.f32 0.0, %v1369
      %v1371 = vpop.f32.mrf.mxu0
      %1372 = vdwg.mxu0
      %v1373 = vadd.f32 %v860, %v1215
      %v1374 = vadd.f32 %v865, %v1220
      %v1375 = vadd.f32 %v870, %v1225
      %v1376 = vadd.f32 %v875, %v1230
      %v1377 = vadd.f32 %v880, %v1235
      %v1378 = vadd.f32 %v885, %v1240
      %v1379 = vadd.f32 %v890, %v1245
      %v1380 = vadd.f32 %v895, %v1250
      %v1381 = vadd.f32 %v900, %v1255
      %v1382 = vadd.f32 %v905, %v1260
      %v1383 = vadd.f32 %v910, %v1265
      %v1384 = vadd.f32 %v915, %v1270
      %v1385 = vadd.f32 %v920, %v1275
      %v1386 = vadd.f32 %v925, %v1280
      %v1387 = vadd.f32 %v930, %v1285
      %v1388 = vadd.f32 %v935, %v1290
      %v1389 = vadd.f32 %v940, %v1295
      %v1390 = vadd.f32 %v945, %v1300
      %v1391 = vadd.f32 %v950, %v1305
      %v1392 = vadd.f32 %v955, %v1310
      %v1393 = vadd.f32 %v960, %v1315
      %v1394 = vadd.f32 %v965, %v1320
      %v1395 = vadd.f32 %v970, %v1325
      %v1396 = vadd.f32 %v975, %v1330
      %v1397 = vadd.f32 %v980, %v1335
      %v1398 = vadd.f32 %v985, %v1340
      %v1399 = vadd.f32 %v990, %v1345
      %v1400 = vadd.f32 %v995, %v1350
      %v1401 = vadd.f32 %v1000, %v1355
      %v1402 = vadd.f32 %v1005, %v1360
      %v1403 = vadd.f32 %v1010, %v1365
      %v1404 = vadd.f32 %v1015, %v1370
      %v1405 = vld [vmem:[%s276 + $0x7] sm:$0xff]
      %v1406 = vld [vmem:[%s276 + $0xf] sm:$0xff]
      %v1407 = vld [vmem:[%s276 + $0x27] sm:$0xff]
      %v1408 = vld [vmem:[%s276 + $0x2f] sm:$0xff]
      %v1409 = vld [vmem:[%s276 + $0x47] sm:$0xff]
      %v1410 = vld [vmem:[%s276 + $0x4f] sm:$0xff]
      %v1411 = vld [vmem:[%s276 + $0x67] sm:$0xff]
      %v1412 = vld [vmem:[%s276 + $0x6f] sm:$0xff]
      %v1413 = vld [vmem:[%s276 + $0x87] sm:$0xff]
      %v1414 = vld [vmem:[%s276 + $0x8f] sm:$0xff]
      %v1415 = vld [vmem:[%s276 + $0xa7] sm:$0xff]
      %v1416 = vld [vmem:[%s276 + $0xaf] sm:$0xff]
      %v1417 = vld [vmem:[%s276 + $0xc7] sm:$0xff]
      %v1418 = vld [vmem:[%s276 + $0xcf] sm:$0xff]
      %v1419 = vld [vmem:[%s276 + $0xe7] sm:$0xff]
      %v1420 = vld [vmem:[%s276 + $0xef] sm:$0xff]
      %v1421 = vld [vmem:[%s276 + $0x107] sm:$0xff]
      %v1422 = vld [vmem:[%s276 + $0x10f] sm:$0xff]
      %v1423 = vld [vmem:[%s276 + $0x127] sm:$0xff]
      %v1424 = vld [vmem:[%s276 + $0x12f] sm:$0xff]
      %v1425 = vld [vmem:[%s276 + $0x147] sm:$0xff]
      %v1426 = vld [vmem:[%s276 + $0x14f] sm:$0xff]
      %v1427 = vld [vmem:[%s276 + $0x167] sm:$0xff]
      %v1428 = vld [vmem:[%s276 + $0x16f] sm:$0xff]
      %v1429 = vld [vmem:[%s276 + $0x187] sm:$0xff]
      %v1430 = vld [vmem:[%s276 + $0x18f] sm:$0xff]
      %v1431 = vld [vmem:[%s276 + $0x1a7] sm:$0xff]
      %v1432 = vld [vmem:[%s276 + $0x1af] sm:$0xff]
      %v1433 = vld [vmem:[%s276 + $0x1c7] sm:$0xff]
      %v1434 = vld [vmem:[%s276 + $0x1cf] sm:$0xff]
      %v1435 = vld [vmem:[%s276 + $0x1e7] sm:$0xff]
      %v1436 = vld [vmem:[%s276 + $0x1ef] sm:$0xff]
      %s1437 = scalar_lea.vmem %s1, 24
      %v1438 = vld [vmem:[%s1437] sm:$0xff]
      %v1440 = vsel %vm171, %v1405, 0
      %v1443 = vsel %vm171, %v1406, 0
      %v1446 = vsel %vm171, %v1407, 0
      %v1449 = vsel %vm171, %v1408, 0
      %v1452 = vsel %vm171, %v1409, 0
      %v1455 = vsel %vm171, %v1410, 0
      %v1458 = vsel %vm171, %v1411, 0
      %v1461 = vsel %vm171, %v1412, 0
      %v1464 = vsel %vm171, %v1413, 0
      %v1467 = vsel %vm171, %v1414, 0
      %v1470 = vsel %vm171, %v1415, 0
      %v1473 = vsel %vm171, %v1416, 0
      %v1476 = vsel %vm171, %v1417, 0
      %v1479 = vsel %vm171, %v1418, 0
      %v1482 = vsel %vm171, %v1419, 0
      %v1485 = vsel %vm171, %v1420, 0
      %v1488 = vsel %vm171, %v1421, 0
      %v1491 = vsel %vm171, %v1422, 0
      %v1494 = vsel %vm171, %v1423, 0
      %v1497 = vsel %vm171, %v1424, 0
      %v1500 = vsel %vm171, %v1425, 0
      %v1503 = vsel %vm171, %v1426, 0
      %v1506 = vsel %vm171, %v1427, 0
      %v1509 = vsel %vm171, %v1428, 0
      %v1512 = vsel %vm171, %v1429, 0
      %v1515 = vsel %vm171, %v1430, 0
      %v1518 = vsel %vm171, %v1431, 0
      %v1521 = vsel %vm171, %v1432, 0
      %v1524 = vsel %vm171, %v1433, 0
      %v1527 = vsel %vm171, %v1434, 0
      %v1530 = vsel %vm171, %v1435, 0
      %v1533 = vsel %vm171, %v1436, 0
      %1535 = vmatprep.subr.mxu0 0.0
      %1536 = vmatpush1.msra.mxu0 0.0
      %1537 = vmatprep.subr.mxu0 0.0
      %1538 = vmatpush1.msra.mxu0 0.0
      %1539 = vmatprep.subr.mxu0 0.0
      %1540 = vmatpush1.msra.mxu0 0.0
      %1541 = vmatprep.subr.mxu0 0.0
      %1542 = vmatpush1.msra.mxu0 0.0
      %1543 = vmatprep.subr.mxu0 0.0
      %1544 = vmatpush1.msra.mxu0 0.0
      %1545 = vmatprep.subr.mxu0 0.0
      %1546 = vmatpush1.msra.mxu0 0.0
      %1547 = vmatprep.subr.mxu0 0.0
      %1548 = vmatpush1.msra.mxu0 0.0
      %1549 = vmatprep.subr.mxu0 0.0
      %1550 = vmatpush1.msra.mxu0 0.0
      %1551 = vmatprep.subr.mxu0 0.0
      %1552 = vmatpush1.msra.mxu0 0.0
      %1553 = vmatprep.subr.mxu0 0.0
      %1554 = vmatpush1.msra.mxu0 0.0
      %1555 = vmatprep.subr.mxu0 0.0
      %1556 = vmatpush1.msra.mxu0 0.0
      %1557 = vmatprep.subr.mxu0 0.0
      %1558 = vmatpush1.msra.mxu0 0.0
      %1559 = vmatprep.subr.mxu0 0.0
      %1560 = vmatpush1.msra.mxu0 0.0
      %1561 = vmatprep.subr.mxu0 0.0
      %1562 = vmatpush1.msra.mxu0 0.0
      %1563 = vmatprep.subr.mxu0 0.0
      %1564 = vmatpush1.msra.mxu0 0.0
      %1565 = vmatprep.subr.mxu0 0.0
      %1566 = vmatpush1.msra.mxu0 %v1438
      %1567 = vmatprep.subr.mxu0 0.0
      %1568 = vmatpush2.msra.mxu0 0.0
      %1569 = vmatprep.subr.mxu0 0.0
      %1570 = vmatpush2.msra.mxu0 0.0
      %1571 = vmatprep.subr.mxu0 0.0
      %1572 = vmatpush2.msra.mxu0 0.0
      %1573 = vmatprep.subr.mxu0 0.0
      %1574 = vmatpush2.msra.mxu0 0.0
      %1575 = vmatprep.subr.mxu0 0.0
      %1576 = vmatpush2.msra.mxu0 0.0
      %1577 = vmatprep.subr.mxu0 0.0
      %1578 = vmatpush2.msra.mxu0 0.0
      %1579 = vmatprep.subr.mxu0 0.0
      %1580 = vmatpush2.msra.mxu0 0.0
      %1581 = vmatprep.subr.mxu0 0.0
      %1582 = vmatpush2.msra.mxu0 0.0
      %1583 = vmatprep.subr.mxu0 0.0
      %1584 = vmatpush2.msra.mxu0 0.0
      %1585 = vmatprep.subr.mxu0 0.0
      %1586 = vmatpush2.msra.mxu0 0.0
      %1587 = vmatprep.subr.mxu0 0.0
      %1588 = vmatpush2.msra.mxu0 0.0
      %1589 = vmatprep.subr.mxu0 0.0
      %1590 = vmatpush2.msra.mxu0 0.0
      %1591 = vmatprep.subr.mxu0 0.0
      %1592 = vmatpush2.msra.mxu0 0.0
      %1593 = vmatprep.subr.mxu0 0.0
      %1594 = vmatpush2.msra.mxu0 0.0
      %1595 = vmatprep.subr.mxu0 0.0
      %1596 = vmatpush2.msra.mxu0 0.0
      %1597 = vmatprep.subr.mxu0 0.0
      %1598 = vmatpush2.msra.mxu0 0.0
      %1599 = vmatprep.mubr.f32.mxu0 0.0
      %1600 = vmatmul.mubr.f32.gmra.mxu0 %v1440
      %v1601 = vpop.f32.mrf.mxu0
      %v1602 = vadd.f32 0.0, %v1601
      %v1603 = vpop.f32.mrf.mxu0
      %1604 = vmatprep.mubr.f32.mxu0 0.0
      %1605 = vmatmul.mubr.f32.gmra.mxu0 %v1443
      %v1606 = vpop.f32.mrf.mxu0
      %v1607 = vadd.f32 0.0, %v1606
      %v1608 = vpop.f32.mrf.mxu0
      %1609 = vmatprep.mubr.f32.mxu0 0.0
      %1610 = vmatmul.mubr.f32.gmra.mxu0 %v1446
      %v1611 = vpop.f32.mrf.mxu0
      %v1612 = vadd.f32 0.0, %v1611
      %v1613 = vpop.f32.mrf.mxu0
      %1614 = vmatprep.mubr.f32.mxu0 0.0
      %1615 = vmatmul.mubr.f32.gmra.mxu0 %v1449
      %v1616 = vpop.f32.mrf.mxu0
      %v1617 = vadd.f32 0.0, %v1616
      %v1618 = vpop.f32.mrf.mxu0
      %1619 = vmatprep.mubr.f32.mxu0 0.0
      %1620 = vmatmul.mubr.f32.gmra.mxu0 %v1452
      %v1621 = vpop.f32.mrf.mxu0
      %v1622 = vadd.f32 0.0, %v1621
      %v1623 = vpop.f32.mrf.mxu0
      %1624 = vmatprep.mubr.f32.mxu0 0.0
      %1625 = vmatmul.mubr.f32.gmra.mxu0 %v1455
      %v1626 = vpop.f32.mrf.mxu0
      %v1627 = vadd.f32 0.0, %v1626
      %v1628 = vpop.f32.mrf.mxu0
      %1629 = vmatprep.mubr.f32.mxu0 0.0
      %1630 = vmatmul.mubr.f32.gmra.mxu0 %v1458
      %v1631 = vpop.f32.mrf.mxu0
      %v1632 = vadd.f32 0.0, %v1631
      %v1633 = vpop.f32.mrf.mxu0
      %1634 = vmatprep.mubr.f32.mxu0 0.0
      %1635 = vmatmul.mubr.f32.gmra.mxu0 %v1461
      %v1636 = vpop.f32.mrf.mxu0
      %v1637 = vadd.f32 0.0, %v1636
      %v1638 = vpop.f32.mrf.mxu0
      %1639 = vmatprep.mubr.f32.mxu0 0.0
      %1640 = vmatmul.mubr.f32.gmra.mxu0 %v1464
      %v1641 = vpop.f32.mrf.mxu0
      %v1642 = vadd.f32 0.0, %v1641
      %v1643 = vpop.f32.mrf.mxu0
      %1644 = vmatprep.mubr.f32.mxu0 0.0
      %1645 = vmatmul.mubr.f32.gmra.mxu0 %v1467
      %v1646 = vpop.f32.mrf.mxu0
      %v1647 = vadd.f32 0.0, %v1646
      %v1648 = vpop.f32.mrf.mxu0
      %1649 = vmatprep.mubr.f32.mxu0 0.0
      %1650 = vmatmul.mubr.f32.gmra.mxu0 %v1470
      %v1651 = vpop.f32.mrf.mxu0
      %v1652 = vadd.f32 0.0, %v1651
      %v1653 = vpop.f32.mrf.mxu0
      %1654 = vmatprep.mubr.f32.mxu0 0.0
      %1655 = vmatmul.mubr.f32.gmra.mxu0 %v1473
      %v1656 = vpop.f32.mrf.mxu0
      %v1657 = vadd.f32 0.0, %v1656
      %v1658 = vpop.f32.mrf.mxu0
      %1659 = vmatprep.mubr.f32.mxu0 0.0
      %1660 = vmatmul.mubr.f32.gmra.mxu0 %v1476
      %v1661 = vpop.f32.mrf.mxu0
      %v1662 = vadd.f32 0.0, %v1661
      %v1663 = vpop.f32.mrf.mxu0
      %1664 = vmatprep.mubr.f32.mxu0 0.0
      %1665 = vmatmul.mubr.f32.gmra.mxu0 %v1479
      %v1666 = vpop.f32.mrf.mxu0
      %v1667 = vadd.f32 0.0, %v1666
      %v1668 = vpop.f32.mrf.mxu0
      %1669 = vmatprep.mubr.f32.mxu0 0.0
      %1670 = vmatmul.mubr.f32.gmra.mxu0 %v1482
      %v1671 = vpop.f32.mrf.mxu0
      %v1672 = vadd.f32 0.0, %v1671
      %v1673 = vpop.f32.mrf.mxu0
      %1674 = vmatprep.mubr.f32.mxu0 0.0
      %1675 = vmatmul.mubr.f32.gmra.mxu0 %v1485
      %v1676 = vpop.f32.mrf.mxu0
      %v1677 = vadd.f32 0.0, %v1676
      %v1678 = vpop.f32.mrf.mxu0
      %1679 = vmatprep.mubr.f32.mxu0 0.0
      %1680 = vmatmul.mubr.f32.gmra.mxu0 %v1488
      %v1681 = vpop.f32.mrf.mxu0
      %v1682 = vadd.f32 0.0, %v1681
      %v1683 = vpop.f32.mrf.mxu0
      %1684 = vmatprep.mubr.f32.mxu0 0.0
      %1685 = vmatmul.mubr.f32.gmra.mxu0 %v1491
      %v1686 = vpop.f32.mrf.mxu0
      %v1687 = vadd.f32 0.0, %v1686
      %v1688 = vpop.f32.mrf.mxu0
      %1689 = vmatprep.mubr.f32.mxu0 0.0
      %1690 = vmatmul.mubr.f32.gmra.mxu0 %v1494
      %v1691 = vpop.f32.mrf.mxu0
      %v1692 = vadd.f32 0.0, %v1691
      %v1693 = vpop.f32.mrf.mxu0
      %1694 = vmatprep.mubr.f32.mxu0 0.0
      %1695 = vmatmul.mubr.f32.gmra.mxu0 %v1497
      %v1696 = vpop.f32.mrf.mxu0
      %v1697 = vadd.f32 0.0, %v1696
      %v1698 = vpop.f32.mrf.mxu0
      %1699 = vmatprep.mubr.f32.mxu0 0.0
      %1700 = vmatmul.mubr.f32.gmra.mxu0 %v1500
      %v1701 = vpop.f32.mrf.mxu0
      %v1702 = vadd.f32 0.0, %v1701
      %v1703 = vpop.f32.mrf.mxu0
      %1704 = vmatprep.mubr.f32.mxu0 0.0
      %1705 = vmatmul.mubr.f32.gmra.mxu0 %v1503
      %v1706 = vpop.f32.mrf.mxu0
      %v1707 = vadd.f32 0.0, %v1706
      %v1708 = vpop.f32.mrf.mxu0
      %1709 = vmatprep.mubr.f32.mxu0 0.0
      %1710 = vmatmul.mubr.f32.gmra.mxu0 %v1506
      %v1711 = vpop.f32.mrf.mxu0
      %v1712 = vadd.f32 0.0, %v1711
      %v1713 = vpop.f32.mrf.mxu0
      %1714 = vmatprep.mubr.f32.mxu0 0.0
      %1715 = vmatmul.mubr.f32.gmra.mxu0 %v1509
      %v1716 = vpop.f32.mrf.mxu0
      %v1717 = vadd.f32 0.0, %v1716
      %v1718 = vpop.f32.mrf.mxu0
      %1719 = vmatprep.mubr.f32.mxu0 0.0
      %1720 = vmatmul.mubr.f32.gmra.mxu0 %v1512
      %v1721 = vpop.f32.mrf.mxu0
      %v1722 = vadd.f32 0.0, %v1721
      %v1723 = vpop.f32.mrf.mxu0
      %1724 = vmatprep.mubr.f32.mxu0 0.0
      %1725 = vmatmul.mubr.f32.gmra.mxu0 %v1515
      %v1726 = vpop.f32.mrf.mxu0
      %v1727 = vadd.f32 0.0, %v1726
      %v1728 = vpop.f32.mrf.mxu0
      %1729 = vmatprep.mubr.f32.mxu0 0.0
      %1730 = vmatmul.mubr.f32.gmra.mxu0 %v1518
      %v1731 = vpop.f32.mrf.mxu0
      %v1732 = vadd.f32 0.0, %v1731
      %v1733 = vpop.f32.mrf.mxu0
      %1734 = vmatprep.mubr.f32.mxu0 0.0
      %1735 = vmatmul.mubr.f32.gmra.mxu0 %v1521
      %v1736 = vpop.f32.mrf.mxu0
      %v1737 = vadd.f32 0.0, %v1736
      %v1738 = vpop.f32.mrf.mxu0
      %1739 = vmatprep.mubr.f32.mxu0 0.0
      %1740 = vmatmul.mubr.f32.gmra.mxu0 %v1524
      %v1741 = vpop.f32.mrf.mxu0
      %v1742 = vadd.f32 0.0, %v1741
      %v1743 = vpop.f32.mrf.mxu0
      %1744 = vmatprep.mubr.f32.mxu0 0.0
      %1745 = vmatmul.mubr.f32.gmra.mxu0 %v1527
      %v1746 = vpop.f32.mrf.mxu0
      %v1747 = vadd.f32 0.0, %v1746
      %v1748 = vpop.f32.mrf.mxu0
      %1749 = vmatprep.mubr.f32.mxu0 0.0
      %1750 = vmatmul.mubr.f32.gmra.mxu0 %v1530
      %v1751 = vpop.f32.mrf.mxu0
      %v1752 = vadd.f32 0.0, %v1751
      %v1753 = vpop.f32.mrf.mxu0
      %1754 = vmatprep.mubr.f32.mxu0 0.0
      %1755 = vmatmul.mubr.f32.gmra.mxu0 %v1533
      %v1756 = vpop.f32.mrf.mxu0
      %v1757 = vadd.f32 0.0, %v1756
      %v1758 = vpop.f32.mrf.mxu0
      %1759 = vdwg.mxu0
      %v1760 = vadd.f32 %v1373, %v1602
      %v1761 = vadd.f32 %v1374, %v1607
      %v1762 = vadd.f32 %v1375, %v1612
      %v1763 = vadd.f32 %v1376, %v1617
      %v1764 = vadd.f32 %v1377, %v1622
      %v1765 = vadd.f32 %v1378, %v1627
      %v1766 = vadd.f32 %v1379, %v1632
      %v1767 = vadd.f32 %v1380, %v1637
      %v1768 = vadd.f32 %v1381, %v1642
      %v1769 = vadd.f32 %v1382, %v1647
      %v1770 = vadd.f32 %v1383, %v1652
      %v1771 = vadd.f32 %v1384, %v1657
      %v1772 = vadd.f32 %v1385, %v1662
      %v1773 = vadd.f32 %v1386, %v1667
      %v1774 = vadd.f32 %v1387, %v1672
      %v1775 = vadd.f32 %v1388, %v1677
      %v1776 = vadd.f32 %v1389, %v1682
      %v1777 = vadd.f32 %v1390, %v1687
      %v1778 = vadd.f32 %v1391, %v1692
      %v1779 = vadd.f32 %v1392, %v1697
      %v1780 = vadd.f32 %v1393, %v1702
      %v1781 = vadd.f32 %v1394, %v1707
      %v1782 = vadd.f32 %v1395, %v1712
      %v1783 = vadd.f32 %v1396, %v1717
      %v1784 = vadd.f32 %v1397, %v1722
      %v1785 = vadd.f32 %v1398, %v1727
      %v1786 = vadd.f32 %v1399, %v1732
      %v1787 = vadd.f32 %v1400, %v1737
      %v1788 = vadd.f32 %v1401, %v1742
      %v1789 = vadd.f32 %v1402, %v1747
      %v1790 = vadd.f32 %v1403, %v1752
      %v1791 = vadd.f32 %v1404, %v1757
      %v1792 = vld [vmem:[%s276 + $0x8] sm:$0xff]
      %v1793 = vld [vmem:[%s276 + $0x10] sm:$0xff]
      %v1794 = vld [vmem:[%s276 + $0x28] sm:$0xff]
      %v1795 = vld [vmem:[%s276 + $0x30] sm:$0xff]
      %v1796 = vld [vmem:[%s276 + $0x48] sm:$0xff]
      %v1797 = vld [vmem:[%s276 + $0x50] sm:$0xff]
      %v1798 = vld [vmem:[%s276 + $0x68] sm:$0xff]
      %v1799 = vld [vmem:[%s276 + $0x70] sm:$0xff]
      %v1800 = vld [vmem:[%s276 + $0x88] sm:$0xff]
      %v1801 = vld [vmem:[%s276 + $0x90] sm:$0xff]
      %v1802 = vld [vmem:[%s276 + $0xa8] sm:$0xff]
      %v1803 = vld [vmem:[%s276 + $0xb0] sm:$0xff]
      %v1804 = vld [vmem:[%s276 + $0xc8] sm:$0xff]
      %v1805 = vld [vmem:[%s276 + $0xd0] sm:$0xff]
      %v1806 = vld [vmem:[%s276 + $0xe8] sm:$0xff]
      %v1807 = vld [vmem:[%s276 + $0xf0] sm:$0xff]
      %v1808 = vld [vmem:[%s276 + $0x108] sm:$0xff]
      %v1809 = vld [vmem:[%s276 + $0x110] sm:$0xff]
      %v1810 = vld [vmem:[%s276 + $0x128] sm:$0xff]
      %v1811 = vld [vmem:[%s276 + $0x130] sm:$0xff]
      %v1812 = vld [vmem:[%s276 + $0x148] sm:$0xff]
      %v1813 = vld [vmem:[%s276 + $0x150] sm:$0xff]
      %v1814 = vld [vmem:[%s276 + $0x168] sm:$0xff]
      %v1815 = vld [vmem:[%s276 + $0x170] sm:$0xff]
      %v1816 = vld [vmem:[%s276 + $0x188] sm:$0xff]
      %v1817 = vld [vmem:[%s276 + $0x190] sm:$0xff]
      %v1818 = vld [vmem:[%s276 + $0x1a8] sm:$0xff]
      %v1819 = vld [vmem:[%s276 + $0x1b0] sm:$0xff]
      %v1820 = vld [vmem:[%s276 + $0x1c8] sm:$0xff]
      %v1821 = vld [vmem:[%s276 + $0x1d0] sm:$0xff]
      %v1822 = vld [vmem:[%s276 + $0x1e8] sm:$0xff]
      %v1823 = vld [vmem:[%s276 + $0x1f0] sm:$0xff]
      %s1824 = scalar_lea.vmem %s1, 32
      %v1825 = vld [vmem:[%s1824] sm:$0xff]
      %v1827 = vsel %vm171, %v1792, 0
      %v1830 = vsel %vm171, %v1793, 0
      %v1833 = vsel %vm171, %v1794, 0
      %v1836 = vsel %vm171, %v1795, 0
      %v1839 = vsel %vm171, %v1796, 0
      %v1842 = vsel %vm171, %v1797, 0
      %v1845 = vsel %vm171, %v1798, 0
      %v1848 = vsel %vm171, %v1799, 0
      %v1851 = vsel %vm171, %v1800, 0
      %v1854 = vsel %vm171, %v1801, 0
      %v1857 = vsel %vm171, %v1802, 0
      %v1860 = vsel %vm171, %v1803, 0
      %v1863 = vsel %vm171, %v1804, 0
      %v1866 = vsel %vm171, %v1805, 0
      %v1869 = vsel %vm171, %v1806, 0
      %v1872 = vsel %vm171, %v1807, 0
      %v1875 = vsel %vm171, %v1808, 0
      %v1878 = vsel %vm171, %v1809, 0
      %v1881 = vsel %vm171, %v1810, 0
      %v1884 = vsel %vm171, %v1811, 0
      %v1887 = vsel %vm171, %v1812, 0
      %v1890 = vsel %vm171, %v1813, 0
      %v1893 = vsel %vm171, %v1814, 0
      %v1896 = vsel %vm171, %v1815, 0
      %v1899 = vsel %vm171, %v1816, 0
      %v1902 = vsel %vm171, %v1817, 0
      %v1905 = vsel %vm171, %v1818, 0
      %v1908 = vsel %vm171, %v1819, 0
      %v1911 = vsel %vm171, %v1820, 0
      %v1914 = vsel %vm171, %v1821, 0
      %v1917 = vsel %vm171, %v1822, 0
      %v1920 = vsel %vm171, %v1823, 0
      %1922 = vmatprep.subr.mxu0 0.0
      %1923 = vmatpush1.msra.mxu0 0.0
      %1924 = vmatprep.subr.mxu0 0.0
      %1925 = vmatpush1.msra.mxu0 0.0
      %1926 = vmatprep.subr.mxu0 0.0
      %1927 = vmatpush1.msra.mxu0 0.0
      %1928 = vmatprep.subr.mxu0 0.0
      %1929 = vmatpush1.msra.mxu0 0.0
      %1930 = vmatprep.subr.mxu0 0.0
      %1931 = vmatpush1.msra.mxu0 0.0
      %1932 = vmatprep.subr.mxu0 0.0
      %1933 = vmatpush1.msra.mxu0 0.0
      %1934 = vmatprep.subr.mxu0 0.0
      %1935 = vmatpush1.msra.mxu0 0.0
      %1936 = vmatprep.subr.mxu0 0.0
      %1937 = vmatpush1.msra.mxu0 0.0
      %1938 = vmatprep.subr.mxu0 0.0
      %1939 = vmatpush1.msra.mxu0 0.0
      %1940 = vmatprep.subr.mxu0 0.0
      %1941 = vmatpush1.msra.mxu0 0.0
      %1942 = vmatprep.subr.mxu0 0.0
      %1943 = vmatpush1.msra.mxu0 0.0
      %1944 = vmatprep.subr.mxu0 0.0
      %1945 = vmatpush1.msra.mxu0 0.0
      %1946 = vmatprep.subr.mxu0 0.0
      %1947 = vmatpush1.msra.mxu0 0.0
      %1948 = vmatprep.subr.mxu0 0.0
      %1949 = vmatpush1.msra.mxu0 0.0
      %1950 = vmatprep.subr.mxu0 0.0
      %1951 = vmatpush1.msra.mxu0 0.0
      %1952 = vmatprep.subr.mxu0 0.0
      %1953 = vmatpush1.msra.mxu0 %v1825
      %1954 = vmatprep.subr.mxu0 0.0
      %1955 = vmatpush2.msra.mxu0 0.0
      %1956 = vmatprep.subr.mxu0 0.0
      %1957 = vmatpush2.msra.mxu0 0.0
      %1958 = vmatprep.subr.mxu0 0.0
      %1959 = vmatpush2.msra.mxu0 0.0
      %1960 = vmatprep.subr.mxu0 0.0
      %1961 = vmatpush2.msra.mxu0 0.0
      %1962 = vmatprep.subr.mxu0 0.0
      %1963 = vmatpush2.msra.mxu0 0.0
      %1964 = vmatprep.subr.mxu0 0.0
      %1965 = vmatpush2.msra.mxu0 0.0
      %1966 = vmatprep.subr.mxu0 0.0
      %1967 = vmatpush2.msra.mxu0 0.0
      %1968 = vmatprep.subr.mxu0 0.0
      %1969 = vmatpush2.msra.mxu0 0.0
      %1970 = vmatprep.subr.mxu0 0.0
      %1971 = vmatpush2.msra.mxu0 0.0
      %1972 = vmatprep.subr.mxu0 0.0
      %1973 = vmatpush2.msra.mxu0 0.0
      %1974 = vmatprep.subr.mxu0 0.0
      %1975 = vmatpush2.msra.mxu0 0.0
      %1976 = vmatprep.subr.mxu0 0.0
      %1977 = vmatpush2.msra.mxu0 0.0
      %1978 = vmatprep.subr.mxu0 0.0
      %1979 = vmatpush2.msra.mxu0 0.0
      %1980 = vmatprep.subr.mxu0 0.0
      %1981 = vmatpush2.msra.mxu0 0.0
      %1982 = vmatprep.subr.mxu0 0.0
      %1983 = vmatpush2.msra.mxu0 0.0
      %1984 = vmatprep.subr.mxu0 0.0
      %1985 = vmatpush2.msra.mxu0 0.0
      %1986 = vmatprep.mubr.f32.mxu0 0.0
      %1987 = vmatmul.mubr.f32.gmra.mxu0 %v1827
      %v1988 = vpop.f32.mrf.mxu0
      %v1989 = vadd.f32 0.0, %v1988
      %v1990 = vpop.f32.mrf.mxu0
      %1991 = vmatprep.mubr.f32.mxu0 0.0
      %1992 = vmatmul.mubr.f32.gmra.mxu0 %v1830
      %v1993 = vpop.f32.mrf.mxu0
      %v1994 = vadd.f32 0.0, %v1993
      %v1995 = vpop.f32.mrf.mxu0
      %1996 = vmatprep.mubr.f32.mxu0 0.0
      %1997 = vmatmul.mubr.f32.gmra.mxu0 %v1833
      %v1998 = vpop.f32.mrf.mxu0
      %v1999 = vadd.f32 0.0, %v1998
      %v2000 = vpop.f32.mrf.mxu0
      %2001 = vmatprep.mubr.f32.mxu0 0.0
      %2002 = vmatmul.mubr.f32.gmra.mxu0 %v1836
      %v2003 = vpop.f32.mrf.mxu0
      %v2004 = vadd.f32 0.0, %v2003
      %v2005 = vpop.f32.mrf.mxu0
      %2006 = vmatprep.mubr.f32.mxu0 0.0
      %2007 = vmatmul.mubr.f32.gmra.mxu0 %v1839
      %v2008 = vpop.f32.mrf.mxu0
      %v2009 = vadd.f32 0.0, %v2008
      %v2010 = vpop.f32.mrf.mxu0
      %2011 = vmatprep.mubr.f32.mxu0 0.0
      %2012 = vmatmul.mubr.f32.gmra.mxu0 %v1842
      %v2013 = vpop.f32.mrf.mxu0
      %v2014 = vadd.f32 0.0, %v2013
      %v2015 = vpop.f32.mrf.mxu0
      %2016 = vmatprep.mubr.f32.mxu0 0.0
      %2017 = vmatmul.mubr.f32.gmra.mxu0 %v1845
      %v2018 = vpop.f32.mrf.mxu0
      %v2019 = vadd.f32 0.0, %v2018
      %v2020 = vpop.f32.mrf.mxu0
      %2021 = vmatprep.mubr.f32.mxu0 0.0
      %2022 = vmatmul.mubr.f32.gmra.mxu0 %v1848
      %v2023 = vpop.f32.mrf.mxu0
      %v2024 = vadd.f32 0.0, %v2023
      %v2025 = vpop.f32.mrf.mxu0
      %2026 = vmatprep.mubr.f32.mxu0 0.0
      %2027 = vmatmul.mubr.f32.gmra.mxu0 %v1851
      %v2028 = vpop.f32.mrf.mxu0
      %v2029 = vadd.f32 0.0, %v2028
      %v2030 = vpop.f32.mrf.mxu0
      %2031 = vmatprep.mubr.f32.mxu0 0.0
      %2032 = vmatmul.mubr.f32.gmra.mxu0 %v1854
      %v2033 = vpop.f32.mrf.mxu0
      %v2034 = vadd.f32 0.0, %v2033
      %v2035 = vpop.f32.mrf.mxu0
      %2036 = vmatprep.mubr.f32.mxu0 0.0
      %2037 = vmatmul.mubr.f32.gmra.mxu0 %v1857
      %v2038 = vpop.f32.mrf.mxu0
      %v2039 = vadd.f32 0.0, %v2038
      %v2040 = vpop.f32.mrf.mxu0
      %2041 = vmatprep.mubr.f32.mxu0 0.0
      %2042 = vmatmul.mubr.f32.gmra.mxu0 %v1860
      %v2043 = vpop.f32.mrf.mxu0
      %v2044 = vadd.f32 0.0, %v2043
      %v2045 = vpop.f32.mrf.mxu0
      %2046 = vmatprep.mubr.f32.mxu0 0.0
      %2047 = vmatmul.mubr.f32.gmra.mxu0 %v1863
      %v2048 = vpop.f32.mrf.mxu0
      %v2049 = vadd.f32 0.0, %v2048
      %v2050 = vpop.f32.mrf.mxu0
      %2051 = vmatprep.mubr.f32.mxu0 0.0
      %2052 = vmatmul.mubr.f32.gmra.mxu0 %v1866
      %v2053 = vpop.f32.mrf.mxu0
      %v2054 = vadd.f32 0.0, %v2053
      %v2055 = vpop.f32.mrf.mxu0
      %2056 = vmatprep.mubr.f32.mxu0 0.0
      %2057 = vmatmul.mubr.f32.gmra.mxu0 %v1869
      %v2058 = vpop.f32.mrf.mxu0
      %v2059 = vadd.f32 0.0, %v2058
      %v2060 = vpop.f32.mrf.mxu0
      %2061 = vmatprep.mubr.f32.mxu0 0.0
      %2062 = vmatmul.mubr.f32.gmra.mxu0 %v1872
      %v2063 = vpop.f32.mrf.mxu0
      %v2064 = vadd.f32 0.0, %v2063
      %v2065 = vpop.f32.mrf.mxu0
      %2066 = vmatprep.mubr.f32.mxu0 0.0
      %2067 = vmatmul.mubr.f32.gmra.mxu0 %v1875
      %v2068 = vpop.f32.mrf.mxu0
      %v2069 = vadd.f32 0.0, %v2068
      %v2070 = vpop.f32.mrf.mxu0
      %2071 = vmatprep.mubr.f32.mxu0 0.0
      %2072 = vmatmul.mubr.f32.gmra.mxu0 %v1878
      %v2073 = vpop.f32.mrf.mxu0
      %v2074 = vadd.f32 0.0, %v2073
      %v2075 = vpop.f32.mrf.mxu0
      %2076 = vmatprep.mubr.f32.mxu0 0.0
      %2077 = vmatmul.mubr.f32.gmra.mxu0 %v1881
      %v2078 = vpop.f32.mrf.mxu0
      %v2079 = vadd.f32 0.0, %v2078
      %v2080 = vpop.f32.mrf.mxu0
      %2081 = vmatprep.mubr.f32.mxu0 0.0
      %2082 = vmatmul.mubr.f32.gmra.mxu0 %v1884
      %v2083 = vpop.f32.mrf.mxu0
      %v2084 = vadd.f32 0.0, %v2083
      %v2085 = vpop.f32.mrf.mxu0
      %2086 = vmatprep.mubr.f32.mxu0 0.0
      %2087 = vmatmul.mubr.f32.gmra.mxu0 %v1887
      %v2088 = vpop.f32.mrf.mxu0
      %v2089 = vadd.f32 0.0, %v2088
      %v2090 = vpop.f32.mrf.mxu0
      %2091 = vmatprep.mubr.f32.mxu0 0.0
      %2092 = vmatmul.mubr.f32.gmra.mxu0 %v1890
      %v2093 = vpop.f32.mrf.mxu0
      %v2094 = vadd.f32 0.0, %v2093
      %v2095 = vpop.f32.mrf.mxu0
      %2096 = vmatprep.mubr.f32.mxu0 0.0
      %2097 = vmatmul.mubr.f32.gmra.mxu0 %v1893
      %v2098 = vpop.f32.mrf.mxu0
      %v2099 = vadd.f32 0.0, %v2098
      %v2100 = vpop.f32.mrf.mxu0
      %2101 = vmatprep.mubr.f32.mxu0 0.0
      %2102 = vmatmul.mubr.f32.gmra.mxu0 %v1896
      %v2103 = vpop.f32.mrf.mxu0
      %v2104 = vadd.f32 0.0, %v2103
      %v2105 = vpop.f32.mrf.mxu0
      %2106 = vmatprep.mubr.f32.mxu0 0.0
      %2107 = vmatmul.mubr.f32.gmra.mxu0 %v1899
      %v2108 = vpop.f32.mrf.mxu0
      %v2109 = vadd.f32 0.0, %v2108
      %v2110 = vpop.f32.mrf.mxu0
      %2111 = vmatprep.mubr.f32.mxu0 0.0
      %2112 = vmatmul.mubr.f32.gmra.mxu0 %v1902
      %v2113 = vpop.f32.mrf.mxu0
      %v2114 = vadd.f32 0.0, %v2113
      %v2115 = vpop.f32.mrf.mxu0
      %2116 = vmatprep.mubr.f32.mxu0 0.0
      %2117 = vmatmul.mubr.f32.gmra.mxu0 %v1905
      %v2118 = vpop.f32.mrf.mxu0
      %v2119 = vadd.f32 0.0, %v2118
      %v2120 = vpop.f32.mrf.mxu0
      %2121 = vmatprep.mubr.f32.mxu0 0.0
      %2122 = vmatmul.mubr.f32.gmra.mxu0 %v1908
      %v2123 = vpop.f32.mrf.mxu0
      %v2124 = vadd.f32 0.0, %v2123
      %v2125 = vpop.f32.mrf.mxu0
      %2126 = vmatprep.mubr.f32.mxu0 0.0
      %2127 = vmatmul.mubr.f32.gmra.mxu0 %v1911
      %v2128 = vpop.f32.mrf.mxu0
      %v2129 = vadd.f32 0.0, %v2128
      %v2130 = vpop.f32.mrf.mxu0
      %2131 = vmatprep.mubr.f32.mxu0 0.0
      %2132 = vmatmul.mubr.f32.gmra.mxu0 %v1914
      %v2133 = vpop.f32.mrf.mxu0
      %v2134 = vadd.f32 0.0, %v2133
      %v2135 = vpop.f32.mrf.mxu0
      %2136 = vmatprep.mubr.f32.mxu0 0.0
      %2137 = vmatmul.mubr.f32.gmra.mxu0 %v1917
      %v2138 = vpop.f32.mrf.mxu0
      %v2139 = vadd.f32 0.0, %v2138
      %v2140 = vpop.f32.mrf.mxu0
      %2141 = vmatprep.mubr.f32.mxu0 0.0
      %2142 = vmatmul.mubr.f32.gmra.mxu0 %v1920
      %v2143 = vpop.f32.mrf.mxu0
      %v2144 = vadd.f32 0.0, %v2143
      %v2145 = vpop.f32.mrf.mxu0
      %2146 = vdwg.mxu0
      %v2147 = vadd.f32 %v1760, %v1989
      %v2148 = vadd.f32 %v1761, %v1994
      %v2149 = vadd.f32 %v1762, %v1999
      %v2150 = vadd.f32 %v1763, %v2004
      %v2151 = vadd.f32 %v1764, %v2009
      %v2152 = vadd.f32 %v1765, %v2014
      %v2153 = vadd.f32 %v1766, %v2019
      %v2154 = vadd.f32 %v1767, %v2024
      %v2155 = vadd.f32 %v1768, %v2029
      %v2156 = vadd.f32 %v1769, %v2034
      %v2157 = vadd.f32 %v1770, %v2039
      %v2158 = vadd.f32 %v1771, %v2044
      %v2159 = vadd.f32 %v1772, %v2049
      %v2160 = vadd.f32 %v1773, %v2054
      %v2161 = vadd.f32 %v1774, %v2059
      %v2162 = vadd.f32 %v1775, %v2064
      %v2163 = vadd.f32 %v1776, %v2069
      %v2164 = vadd.f32 %v1777, %v2074
      %v2165 = vadd.f32 %v1778, %v2079
      %v2166 = vadd.f32 %v1779, %v2084
      %v2167 = vadd.f32 %v1780, %v2089
      %v2168 = vadd.f32 %v1781, %v2094
      %v2169 = vadd.f32 %v1782, %v2099
      %v2170 = vadd.f32 %v1783, %v2104
      %v2171 = vadd.f32 %v1784, %v2109
      %v2172 = vadd.f32 %v1785, %v2114
      %v2173 = vadd.f32 %v1786, %v2119
      %v2174 = vadd.f32 %v1787, %v2124
      %v2175 = vadd.f32 %v1788, %v2129
      %v2176 = vadd.f32 %v1789, %v2134
      %v2177 = vadd.f32 %v1790, %v2139
      %v2178 = vadd.f32 %v1791, %v2144
      %v2179 = vld [vmem:[%s276 + $0x9] sm:$0xff]
      %v2180 = vld [vmem:[%s276 + $0x11] sm:$0xff]
      %v2181 = vld [vmem:[%s276 + $0x29] sm:$0xff]
      %v2182 = vld [vmem:[%s276 + $0x31] sm:$0xff]
      %v2183 = vld [vmem:[%s276 + $0x49] sm:$0xff]
      %v2184 = vld [vmem:[%s276 + $0x51] sm:$0xff]
      %v2185 = vld [vmem:[%s276 + $0x69] sm:$0xff]
      %v2186 = vld [vmem:[%s276 + $0x71] sm:$0xff]
      %v2187 = vld [vmem:[%s276 + $0x89] sm:$0xff]
      %v2188 = vld [vmem:[%s276 + $0x91] sm:$0xff]
      %v2189 = vld [vmem:[%s276 + $0xa9] sm:$0xff]
      %v2190 = vld [vmem:[%s276 + $0xb1] sm:$0xff]
      %v2191 = vld [vmem:[%s276 + $0xc9] sm:$0xff]
      %v2192 = vld [vmem:[%s276 + $0xd1] sm:$0xff]
      %v2193 = vld [vmem:[%s276 + $0xe9] sm:$0xff]
      %v2194 = vld [vmem:[%s276 + $0xf1] sm:$0xff]
      %v2195 = vld [vmem:[%s276 + $0x109] sm:$0xff]
      %v2196 = vld [vmem:[%s276 + $0x111] sm:$0xff]
      %v2197 = vld [vmem:[%s276 + $0x129] sm:$0xff]
      %v2198 = vld [vmem:[%s276 + $0x131] sm:$0xff]
      %v2199 = vld [vmem:[%s276 + $0x149] sm:$0xff]
      %v2200 = vld [vmem:[%s276 + $0x151] sm:$0xff]
      %v2201 = vld [vmem:[%s276 + $0x169] sm:$0xff]
      %v2202 = vld [vmem:[%s276 + $0x171] sm:$0xff]
      %v2203 = vld [vmem:[%s276 + $0x189] sm:$0xff]
      %v2204 = vld [vmem:[%s276 + $0x191] sm:$0xff]
      %v2205 = vld [vmem:[%s276 + $0x1a9] sm:$0xff]
      %v2206 = vld [vmem:[%s276 + $0x1b1] sm:$0xff]
      %v2207 = vld [vmem:[%s276 + $0x1c9] sm:$0xff]
      %v2208 = vld [vmem:[%s276 + $0x1d1] sm:$0xff]
      %v2209 = vld [vmem:[%s276 + $0x1e9] sm:$0xff]
      %v2210 = vld [vmem:[%s276 + $0x1f1] sm:$0xff]
      %s2211 = scalar_lea.vmem %s1, 40
      %v2212 = vld [vmem:[%s2211] sm:$0xff]
      %v2214 = vsel %vm171, %v2179, 0
      %v2217 = vsel %vm171, %v2180, 0
      %v2220 = vsel %vm171, %v2181, 0
      %v2223 = vsel %vm171, %v2182, 0
      %v2226 = vsel %vm171, %v2183, 0
      %v2229 = vsel %vm171, %v2184, 0
      %v2232 = vsel %vm171, %v2185, 0
      %v2235 = vsel %vm171, %v2186, 0
      %v2238 = vsel %vm171, %v2187, 0
      %v2241 = vsel %vm171, %v2188, 0
      %v2244 = vsel %vm171, %v2189, 0
      %v2247 = vsel %vm171, %v2190, 0
      %v2250 = vsel %vm171, %v2191, 0
      %v2253 = vsel %vm171, %v2192, 0
      %v2256 = vsel %vm171, %v2193, 0
      %v2259 = vsel %vm171, %v2194, 0
      %v2262 = vsel %vm171, %v2195, 0
      %v2265 = vsel %vm171, %v2196, 0
      %v2268 = vsel %vm171, %v2197, 0
      %v2271 = vsel %vm171, %v2198, 0
      %v2274 = vsel %vm171, %v2199, 0
      %v2277 = vsel %vm171, %v2200, 0
      %v2280 = vsel %vm171, %v2201, 0
      %v2283 = vsel %vm171, %v2202, 0
      %v2286 = vsel %vm171, %v2203, 0
      %v2289 = vsel %vm171, %v2204, 0
      %v2292 = vsel %vm171, %v2205, 0
      %v2295 = vsel %vm171, %v2206, 0
      %v2298 = vsel %vm171, %v2207, 0
      %v2301 = vsel %vm171, %v2208, 0
      %v2304 = vsel %vm171, %v2209, 0
      %v2307 = vsel %vm171, %v2210, 0
      %2309 = vmatprep.subr.mxu0 0.0
      %2310 = vmatpush1.msra.mxu0 0.0
      %2311 = vmatprep.subr.mxu0 0.0
      %2312 = vmatpush1.msra.mxu0 0.0
      %2313 = vmatprep.subr.mxu0 0.0
      %2314 = vmatpush1.msra.mxu0 0.0
      %2315 = vmatprep.subr.mxu0 0.0
      %2316 = vmatpush1.msra.mxu0 0.0
      %2317 = vmatprep.subr.mxu0 0.0
      %2318 = vmatpush1.msra.mxu0 0.0
      %2319 = vmatprep.subr.mxu0 0.0
      %2320 = vmatpush1.msra.mxu0 0.0
      %2321 = vmatprep.subr.mxu0 0.0
      %2322 = vmatpush1.msra.mxu0 0.0
      %2323 = vmatprep.subr.mxu0 0.0
      %2324 = vmatpush1.msra.mxu0 0.0
      %2325 = vmatprep.subr.mxu0 0.0
      %2326 = vmatpush1.msra.mxu0 0.0
      %2327 = vmatprep.subr.mxu0 0.0
      %2328 = vmatpush1.msra.mxu0 0.0
      %2329 = vmatprep.subr.mxu0 0.0
      %2330 = vmatpush1.msra.mxu0 0.0
      %2331 = vmatprep.subr.mxu0 0.0
      %2332 = vmatpush1.msra.mxu0 0.0
      %2333 = vmatprep.subr.mxu0 0.0
      %2334 = vmatpush1.msra.mxu0 0.0
      %2335 = vmatprep.subr.mxu0 0.0
      %2336 = vmatpush1.msra.mxu0 0.0
      %2337 = vmatprep.subr.mxu0 0.0
      %2338 = vmatpush1.msra.mxu0 0.0
      %2339 = vmatprep.subr.mxu0 0.0
      %2340 = vmatpush1.msra.mxu0 %v2212
      %2341 = vmatprep.subr.mxu0 0.0
      %2342 = vmatpush2.msra.mxu0 0.0
      %2343 = vmatprep.subr.mxu0 0.0
      %2344 = vmatpush2.msra.mxu0 0.0
      %2345 = vmatprep.subr.mxu0 0.0
      %2346 = vmatpush2.msra.mxu0 0.0
      %2347 = vmatprep.subr.mxu0 0.0
      %2348 = vmatpush2.msra.mxu0 0.0
      %2349 = vmatprep.subr.mxu0 0.0
      %2350 = vmatpush2.msra.mxu0 0.0
      %2351 = vmatprep.subr.mxu0 0.0
      %2352 = vmatpush2.msra.mxu0 0.0
      %2353 = vmatprep.subr.mxu0 0.0
      %2354 = vmatpush2.msra.mxu0 0.0
      %2355 = vmatprep.subr.mxu0 0.0
      %2356 = vmatpush2.msra.mxu0 0.0
      %2357 = vmatprep.subr.mxu0 0.0
      %2358 = vmatpush2.msra.mxu0 0.0
      %2359 = vmatprep.subr.mxu0 0.0
      %2360 = vmatpush2.msra.mxu0 0.0
      %2361 = vmatprep.subr.mxu0 0.0
      %2362 = vmatpush2.msra.mxu0 0.0
      %2363 = vmatprep.subr.mxu0 0.0
      %2364 = vmatpush2.msra.mxu0 0.0
      %2365 = vmatprep.subr.mxu0 0.0
      %2366 = vmatpush2.msra.mxu0 0.0
      %2367 = vmatprep.subr.mxu0 0.0
      %2368 = vmatpush2.msra.mxu0 0.0
      %2369 = vmatprep.subr.mxu0 0.0
      %2370 = vmatpush2.msra.mxu0 0.0
      %2371 = vmatprep.subr.mxu0 0.0
      %2372 = vmatpush2.msra.mxu0 0.0
      %2373 = vmatprep.mubr.f32.mxu0 0.0
      %2374 = vmatmul.mubr.f32.gmra.mxu0 %v2214
      %v2375 = vpop.f32.mrf.mxu0
      %v2376 = vadd.f32 0.0, %v2375
      %v2377 = vpop.f32.mrf.mxu0
      %2378 = vmatprep.mubr.f32.mxu0 0.0
      %2379 = vmatmul.mubr.f32.gmra.mxu0 %v2217
      %v2380 = vpop.f32.mrf.mxu0
      %v2381 = vadd.f32 0.0, %v2380
      %v2382 = vpop.f32.mrf.mxu0
      %2383 = vmatprep.mubr.f32.mxu0 0.0
      %2384 = vmatmul.mubr.f32.gmra.mxu0 %v2220
      %v2385 = vpop.f32.mrf.mxu0
      %v2386 = vadd.f32 0.0, %v2385
      %v2387 = vpop.f32.mrf.mxu0
      %2388 = vmatprep.mubr.f32.mxu0 0.0
      %2389 = vmatmul.mubr.f32.gmra.mxu0 %v2223
      %v2390 = vpop.f32.mrf.mxu0
      %v2391 = vadd.f32 0.0, %v2390
      %v2392 = vpop.f32.mrf.mxu0
      %2393 = vmatprep.mubr.f32.mxu0 0.0
      %2394 = vmatmul.mubr.f32.gmra.mxu0 %v2226
      %v2395 = vpop.f32.mrf.mxu0
      %v2396 = vadd.f32 0.0, %v2395
      %v2397 = vpop.f32.mrf.mxu0
      %2398 = vmatprep.mubr.f32.mxu0 0.0
      %2399 = vmatmul.mubr.f32.gmra.mxu0 %v2229
      %v2400 = vpop.f32.mrf.mxu0
      %v2401 = vadd.f32 0.0, %v2400
      %v2402 = vpop.f32.mrf.mxu0
      %2403 = vmatprep.mubr.f32.mxu0 0.0
      %2404 = vmatmul.mubr.f32.gmra.mxu0 %v2232
      %v2405 = vpop.f32.mrf.mxu0
      %v2406 = vadd.f32 0.0, %v2405
      %v2407 = vpop.f32.mrf.mxu0
      %2408 = vmatprep.mubr.f32.mxu0 0.0
      %2409 = vmatmul.mubr.f32.gmra.mxu0 %v2235
      %v2410 = vpop.f32.mrf.mxu0
      %v2411 = vadd.f32 0.0, %v2410
      %v2412 = vpop.f32.mrf.mxu0
      %2413 = vmatprep.mubr.f32.mxu0 0.0
      %2414 = vmatmul.mubr.f32.gmra.mxu0 %v2238
      %v2415 = vpop.f32.mrf.mxu0
      %v2416 = vadd.f32 0.0, %v2415
      %v2417 = vpop.f32.mrf.mxu0
      %2418 = vmatprep.mubr.f32.mxu0 0.0
      %2419 = vmatmul.mubr.f32.gmra.mxu0 %v2241
      %v2420 = vpop.f32.mrf.mxu0
      %v2421 = vadd.f32 0.0, %v2420
      %v2422 = vpop.f32.mrf.mxu0
      %2423 = vmatprep.mubr.f32.mxu0 0.0
      %2424 = vmatmul.mubr.f32.gmra.mxu0 %v2244
      %v2425 = vpop.f32.mrf.mxu0
      %v2426 = vadd.f32 0.0, %v2425
      %v2427 = vpop.f32.mrf.mxu0
      %2428 = vmatprep.mubr.f32.mxu0 0.0
      %2429 = vmatmul.mubr.f32.gmra.mxu0 %v2247
      %v2430 = vpop.f32.mrf.mxu0
      %v2431 = vadd.f32 0.0, %v2430
      %v2432 = vpop.f32.mrf.mxu0
      %2433 = vmatprep.mubr.f32.mxu0 0.0
      %2434 = vmatmul.mubr.f32.gmra.mxu0 %v2250
      %v2435 = vpop.f32.mrf.mxu0
      %v2436 = vadd.f32 0.0, %v2435
      %v2437 = vpop.f32.mrf.mxu0
      %2438 = vmatprep.mubr.f32.mxu0 0.0
      %2439 = vmatmul.mubr.f32.gmra.mxu0 %v2253
      %v2440 = vpop.f32.mrf.mxu0
      %v2441 = vadd.f32 0.0, %v2440
      %v2442 = vpop.f32.mrf.mxu0
      %2443 = vmatprep.mubr.f32.mxu0 0.0
      %2444 = vmatmul.mubr.f32.gmra.mxu0 %v2256
      %v2445 = vpop.f32.mrf.mxu0
      %v2446 = vadd.f32 0.0, %v2445
      %v2447 = vpop.f32.mrf.mxu0
      %2448 = vmatprep.mubr.f32.mxu0 0.0
      %2449 = vmatmul.mubr.f32.gmra.mxu0 %v2259
      %v2450 = vpop.f32.mrf.mxu0
      %v2451 = vadd.f32 0.0, %v2450
      %v2452 = vpop.f32.mrf.mxu0
      %2453 = vmatprep.mubr.f32.mxu0 0.0
      %2454 = vmatmul.mubr.f32.gmra.mxu0 %v2262
      %v2455 = vpop.f32.mrf.mxu0
      %v2456 = vadd.f32 0.0, %v2455
      %v2457 = vpop.f32.mrf.mxu0
      %2458 = vmatprep.mubr.f32.mxu0 0.0
      %2459 = vmatmul.mubr.f32.gmra.mxu0 %v2265
      %v2460 = vpop.f32.mrf.mxu0
      %v2461 = vadd.f32 0.0, %v2460
      %v2462 = vpop.f32.mrf.mxu0
      %2463 = vmatprep.mubr.f32.mxu0 0.0
      %2464 = vmatmul.mubr.f32.gmra.mxu0 %v2268
      %v2465 = vpop.f32.mrf.mxu0
      %v2466 = vadd.f32 0.0, %v2465
      %v2467 = vpop.f32.mrf.mxu0
      %2468 = vmatprep.mubr.f32.mxu0 0.0
      %2469 = vmatmul.mubr.f32.gmra.mxu0 %v2271
      %v2470 = vpop.f32.mrf.mxu0
      %v2471 = vadd.f32 0.0, %v2470
      %v2472 = vpop.f32.mrf.mxu0
      %2473 = vmatprep.mubr.f32.mxu0 0.0
      %2474 = vmatmul.mubr.f32.gmra.mxu0 %v2274
      %v2475 = vpop.f32.mrf.mxu0
      %v2476 = vadd.f32 0.0, %v2475
      %v2477 = vpop.f32.mrf.mxu0
      %2478 = vmatprep.mubr.f32.mxu0 0.0
      %2479 = vmatmul.mubr.f32.gmra.mxu0 %v2277
      %v2480 = vpop.f32.mrf.mxu0
      %v2481 = vadd.f32 0.0, %v2480
      %v2482 = vpop.f32.mrf.mxu0
      %2483 = vmatprep.mubr.f32.mxu0 0.0
      %2484 = vmatmul.mubr.f32.gmra.mxu0 %v2280
      %v2485 = vpop.f32.mrf.mxu0
      %v2486 = vadd.f32 0.0, %v2485
      %v2487 = vpop.f32.mrf.mxu0
      %2488 = vmatprep.mubr.f32.mxu0 0.0
      %2489 = vmatmul.mubr.f32.gmra.mxu0 %v2283
      %v2490 = vpop.f32.mrf.mxu0
      %v2491 = vadd.f32 0.0, %v2490
      %v2492 = vpop.f32.mrf.mxu0
      %2493 = vmatprep.mubr.f32.mxu0 0.0
      %2494 = vmatmul.mubr.f32.gmra.mxu0 %v2286
      %v2495 = vpop.f32.mrf.mxu0
      %v2496 = vadd.f32 0.0, %v2495
      %v2497 = vpop.f32.mrf.mxu0
      %2498 = vmatprep.mubr.f32.mxu0 0.0
      %2499 = vmatmul.mubr.f32.gmra.mxu0 %v2289
      %v2500 = vpop.f32.mrf.mxu0
      %v2501 = vadd.f32 0.0, %v2500
      %v2502 = vpop.f32.mrf.mxu0
      %2503 = vmatprep.mubr.f32.mxu0 0.0
      %2504 = vmatmul.mubr.f32.gmra.mxu0 %v2292
      %v2505 = vpop.f32.mrf.mxu0
      %v2506 = vadd.f32 0.0, %v2505
      %v2507 = vpop.f32.mrf.mxu0
      %2508 = vmatprep.mubr.f32.mxu0 0.0
      %2509 = vmatmul.mubr.f32.gmra.mxu0 %v2295
      %v2510 = vpop.f32.mrf.mxu0
      %v2511 = vadd.f32 0.0, %v2510
      %v2512 = vpop.f32.mrf.mxu0
      %2513 = vmatprep.mubr.f32.mxu0 0.0
      %2514 = vmatmul.mubr.f32.gmra.mxu0 %v2298
      %v2515 = vpop.f32.mrf.mxu0
      %v2516 = vadd.f32 0.0, %v2515
      %v2517 = vpop.f32.mrf.mxu0
      %2518 = vmatprep.mubr.f32.mxu0 0.0
      %2519 = vmatmul.mubr.f32.gmra.mxu0 %v2301
      %v2520 = vpop.f32.mrf.mxu0
      %v2521 = vadd.f32 0.0, %v2520
      %v2522 = vpop.f32.mrf.mxu0
      %2523 = vmatprep.mubr.f32.mxu0 0.0
      %2524 = vmatmul.mubr.f32.gmra.mxu0 %v2304
      %v2525 = vpop.f32.mrf.mxu0
      %v2526 = vadd.f32 0.0, %v2525
      %v2527 = vpop.f32.mrf.mxu0
      %2528 = vmatprep.mubr.f32.mxu0 0.0
      %2529 = vmatmul.mubr.f32.gmra.mxu0 %v2307
      %v2530 = vpop.f32.mrf.mxu0
      %v2531 = vadd.f32 0.0, %v2530
      %v2532 = vpop.f32.mrf.mxu0
      %2533 = vdwg.mxu0
      %v2534 = vadd.f32 %v2147, %v2376
      %v2535 = vadd.f32 %v2148, %v2381
      %v2536 = vadd.f32 %v2149, %v2386
      %v2537 = vadd.f32 %v2150, %v2391
      %v2538 = vadd.f32 %v2151, %v2396
      %v2539 = vadd.f32 %v2152, %v2401
      %v2540 = vadd.f32 %v2153, %v2406
      %v2541 = vadd.f32 %v2154, %v2411
      %v2542 = vadd.f32 %v2155, %v2416
      %v2543 = vadd.f32 %v2156, %v2421
      %v2544 = vadd.f32 %v2157, %v2426
      %v2545 = vadd.f32 %v2158, %v2431
      %v2546 = vadd.f32 %v2159, %v2436
      %v2547 = vadd.f32 %v2160, %v2441
      %v2548 = vadd.f32 %v2161, %v2446
      %v2549 = vadd.f32 %v2162, %v2451
      %v2550 = vadd.f32 %v2163, %v2456
      %v2551 = vadd.f32 %v2164, %v2461
      %v2552 = vadd.f32 %v2165, %v2466
      %v2553 = vadd.f32 %v2166, %v2471
      %v2554 = vadd.f32 %v2167, %v2476
      %v2555 = vadd.f32 %v2168, %v2481
      %v2556 = vadd.f32 %v2169, %v2486
      %v2557 = vadd.f32 %v2170, %v2491
      %v2558 = vadd.f32 %v2171, %v2496
      %v2559 = vadd.f32 %v2172, %v2501
      %v2560 = vadd.f32 %v2173, %v2506
      %v2561 = vadd.f32 %v2174, %v2511
      %v2562 = vadd.f32 %v2175, %v2516
      %v2563 = vadd.f32 %v2176, %v2521
      %v2564 = vadd.f32 %v2177, %v2526
      %v2565 = vadd.f32 %v2178, %v2531
      %s2566 = scalar_lea.vmem [#allocation2], 64
      %v2567 = vld [vmem:[%s2566 + $0x7] sm:$0xff]
      %v2568 = vld [vmem:[%s2566 + $0xf] sm:$0xff]
      %v2569 = vld [vmem:[%s2566 + $0x27] sm:$0xff]
      %v2570 = vld [vmem:[%s2566 + $0x2f] sm:$0xff]
      %v2571 = vld [vmem:[%s2566 + $0x47] sm:$0xff]
      %v2572 = vld [vmem:[%s2566 + $0x4f] sm:$0xff]
      %v2573 = vld [vmem:[%s2566 + $0x67] sm:$0xff]
      %v2574 = vld [vmem:[%s2566 + $0x6f] sm:$0xff]
      %v2575 = vld [vmem:[%s2566 + $0x87] sm:$0xff]
      %v2576 = vld [vmem:[%s2566 + $0x8f] sm:$0xff]
      %v2577 = vld [vmem:[%s2566 + $0xa7] sm:$0xff]
      %v2578 = vld [vmem:[%s2566 + $0xaf] sm:$0xff]
      %v2579 = vld [vmem:[%s2566 + $0xc7] sm:$0xff]
      %v2580 = vld [vmem:[%s2566 + $0xcf] sm:$0xff]
      %v2581 = vld [vmem:[%s2566 + $0xe7] sm:$0xff]
      %v2582 = vld [vmem:[%s2566 + $0xef] sm:$0xff]
      %v2583 = vld [vmem:[%s2566 + $0x107] sm:$0xff]
      %v2584 = vld [vmem:[%s2566 + $0x10f] sm:$0xff]
      %v2585 = vld [vmem:[%s2566 + $0x127] sm:$0xff]
      %v2586 = vld [vmem:[%s2566 + $0x12f] sm:$0xff]
      %v2587 = vld [vmem:[%s2566 + $0x147] sm:$0xff]
      %v2588 = vld [vmem:[%s2566 + $0x14f] sm:$0xff]
      %v2589 = vld [vmem:[%s2566 + $0x167] sm:$0xff]
      %v2590 = vld [vmem:[%s2566 + $0x16f] sm:$0xff]
      %v2591 = vld [vmem:[%s2566 + $0x187] sm:$0xff]
      %v2592 = vld [vmem:[%s2566 + $0x18f] sm:$0xff]
      %v2593 = vld [vmem:[%s2566 + $0x1a7] sm:$0xff]
      %v2594 = vld [vmem:[%s2566 + $0x1af] sm:$0xff]
      %v2595 = vld [vmem:[%s2566 + $0x1c7] sm:$0xff]
      %v2596 = vld [vmem:[%s2566 + $0x1cf] sm:$0xff]
      %v2597 = vld [vmem:[%s2566 + $0x1e7] sm:$0xff]
      %v2598 = vld [vmem:[%s2566 + $0x1ef] sm:$0xff]
      %s2599 = scalar_lea.vmem %s1, 48
      %v2600 = vld [vmem:[%s2599] sm:$0xff]
      %v2602 = vsel %vm171, %v2567, 0
      %v2605 = vsel %vm171, %v2568, 0
      %v2608 = vsel %vm171, %v2569, 0
      %v2611 = vsel %vm171, %v2570, 0
      %v2614 = vsel %vm171, %v2571, 0
      %v2617 = vsel %vm171, %v2572, 0
      %v2620 = vsel %vm171, %v2573, 0
      %v2623 = vsel %vm171, %v2574, 0
      %v2626 = vsel %vm171, %v2575, 0
      %v2629 = vsel %vm171, %v2576, 0
      %v2632 = vsel %vm171, %v2577, 0
      %v2635 = vsel %vm171, %v2578, 0
      %v2638 = vsel %vm171, %v2579, 0
      %v2641 = vsel %vm171, %v2580, 0
      %v2644 = vsel %vm171, %v2581, 0
      %v2647 = vsel %vm171, %v2582, 0
      %v2650 = vsel %vm171, %v2583, 0
      %v2653 = vsel %vm171, %v2584, 0
      %v2656 = vsel %vm171, %v2585, 0
      %v2659 = vsel %vm171, %v2586, 0
      %v2662 = vsel %vm171, %v2587, 0
      %v2665 = vsel %vm171, %v2588, 0
      %v2668 = vsel %vm171, %v2589, 0
      %v2671 = vsel %vm171, %v2590, 0
      %v2674 = vsel %vm171, %v2591, 0
      %v2677 = vsel %vm171, %v2592, 0
      %v2680 = vsel %vm171, %v2593, 0
      %v2683 = vsel %vm171, %v2594, 0
      %v2686 = vsel %vm171, %v2595, 0
      %v2689 = vsel %vm171, %v2596, 0
      %v2692 = vsel %vm171, %v2597, 0
      %v2695 = vsel %vm171, %v2598, 0
      %2697 = vmatprep.subr.mxu0 0.0
      %2698 = vmatpush1.msra.mxu0 0.0
      %2699 = vmatprep.subr.mxu0 0.0
      %2700 = vmatpush1.msra.mxu0 0.0
      %2701 = vmatprep.subr.mxu0 0.0
      %2702 = vmatpush1.msra.mxu0 0.0
      %2703 = vmatprep.subr.mxu0 0.0
      %2704 = vmatpush1.msra.mxu0 0.0
      %2705 = vmatprep.subr.mxu0 0.0
      %2706 = vmatpush1.msra.mxu0 0.0
      %2707 = vmatprep.subr.mxu0 0.0
      %2708 = vmatpush1.msra.mxu0 0.0
      %2709 = vmatprep.subr.mxu0 0.0
      %2710 = vmatpush1.msra.mxu0 0.0
      %2711 = vmatprep.subr.mxu0 0.0
      %2712 = vmatpush1.msra.mxu0 0.0
      %2713 = vmatprep.subr.mxu0 0.0
      %2714 = vmatpush1.msra.mxu0 0.0
      %2715 = vmatprep.subr.mxu0 0.0
      %2716 = vmatpush1.msra.mxu0 0.0
      %2717 = vmatprep.subr.mxu0 0.0
      %2718 = vmatpush1.msra.mxu0 0.0
      %2719 = vmatprep.subr.mxu0 0.0
      %2720 = vmatpush1.msra.mxu0 0.0
      %2721 = vmatprep.subr.mxu0 0.0
      %2722 = vmatpush1.msra.mxu0 0.0
      %2723 = vmatprep.subr.mxu0 0.0
      %2724 = vmatpush1.msra.mxu0 0.0
      %2725 = vmatprep.subr.mxu0 0.0
      %2726 = vmatpush1.msra.mxu0 0.0
      %2727 = vmatprep.subr.mxu0 0.0
      %2728 = vmatpush1.msra.mxu0 %v2600
      %2729 = vmatprep.subr.mxu0 0.0
      %2730 = vmatpush2.msra.mxu0 0.0
      %2731 = vmatprep.subr.mxu0 0.0
      %2732 = vmatpush2.msra.mxu0 0.0
      %2733 = vmatprep.subr.mxu0 0.0
      %2734 = vmatpush2.msra.mxu0 0.0
      %2735 = vmatprep.subr.mxu0 0.0
      %2736 = vmatpush2.msra.mxu0 0.0
      %2737 = vmatprep.subr.mxu0 0.0
      %2738 = vmatpush2.msra.mxu0 0.0
      %2739 = vmatprep.subr.mxu0 0.0
      %2740 = vmatpush2.msra.mxu0 0.0
      %2741 = vmatprep.subr.mxu0 0.0
      %2742 = vmatpush2.msra.mxu0 0.0
      %2743 = vmatprep.subr.mxu0 0.0
      %2744 = vmatpush2.msra.mxu0 0.0
      %2745 = vmatprep.subr.mxu0 0.0
      %2746 = vmatpush2.msra.mxu0 0.0
      %2747 = vmatprep.subr.mxu0 0.0
      %2748 = vmatpush2.msra.mxu0 0.0
      %2749 = vmatprep.subr.mxu0 0.0
      %2750 = vmatpush2.msra.mxu0 0.0
      %2751 = vmatprep.subr.mxu0 0.0
      %2752 = vmatpush2.msra.mxu0 0.0
      %2753 = vmatprep.subr.mxu0 0.0
      %2754 = vmatpush2.msra.mxu0 0.0
      %2755 = vmatprep.subr.mxu0 0.0
      %2756 = vmatpush2.msra.mxu0 0.0
      %2757 = vmatprep.subr.mxu0 0.0
      %2758 = vmatpush2.msra.mxu0 0.0
      %2759 = vmatprep.subr.mxu0 0.0
      %2760 = vmatpush2.msra.mxu0 0.0
      %2761 = vmatprep.mubr.f32.mxu0 0.0
      %2762 = vmatmul.mubr.f32.gmra.mxu0 %v2602
      %v2763 = vpop.f32.mrf.mxu0
      %v2764 = vadd.f32 0.0, %v2763
      %v2765 = vpop.f32.mrf.mxu0
      %2766 = vmatprep.mubr.f32.mxu0 0.0
      %2767 = vmatmul.mubr.f32.gmra.mxu0 %v2605
      %v2768 = vpop.f32.mrf.mxu0
      %v2769 = vadd.f32 0.0, %v2768
      %v2770 = vpop.f32.mrf.mxu0
      %2771 = vmatprep.mubr.f32.mxu0 0.0
      %2772 = vmatmul.mubr.f32.gmra.mxu0 %v2608
      %v2773 = vpop.f32.mrf.mxu0
      %v2774 = vadd.f32 0.0, %v2773
      %v2775 = vpop.f32.mrf.mxu0
      %2776 = vmatprep.mubr.f32.mxu0 0.0
      %2777 = vmatmul.mubr.f32.gmra.mxu0 %v2611
      %v2778 = vpop.f32.mrf.mxu0
      %v2779 = vadd.f32 0.0, %v2778
      %v2780 = vpop.f32.mrf.mxu0
      %2781 = vmatprep.mubr.f32.mxu0 0.0
      %2782 = vmatmul.mubr.f32.gmra.mxu0 %v2614
      %v2783 = vpop.f32.mrf.mxu0
      %v2784 = vadd.f32 0.0, %v2783
      %v2785 = vpop.f32.mrf.mxu0
      %2786 = vmatprep.mubr.f32.mxu0 0.0
      %2787 = vmatmul.mubr.f32.gmra.mxu0 %v2617
      %v2788 = vpop.f32.mrf.mxu0
      %v2789 = vadd.f32 0.0, %v2788
      %v2790 = vpop.f32.mrf.mxu0
      %2791 = vmatprep.mubr.f32.mxu0 0.0
      %2792 = vmatmul.mubr.f32.gmra.mxu0 %v2620
      %v2793 = vpop.f32.mrf.mxu0
      %v2794 = vadd.f32 0.0, %v2793
      %v2795 = vpop.f32.mrf.mxu0
      %2796 = vmatprep.mubr.f32.mxu0 0.0
      %2797 = vmatmul.mubr.f32.gmra.mxu0 %v2623
      %v2798 = vpop.f32.mrf.mxu0
      %v2799 = vadd.f32 0.0, %v2798
      %v2800 = vpop.f32.mrf.mxu0
      %2801 = vmatprep.mubr.f32.mxu0 0.0
      %2802 = vmatmul.mubr.f32.gmra.mxu0 %v2626
      %v2803 = vpop.f32.mrf.mxu0
      %v2804 = vadd.f32 0.0, %v2803
      %v2805 = vpop.f32.mrf.mxu0
      %2806 = vmatprep.mubr.f32.mxu0 0.0
      %2807 = vmatmul.mubr.f32.gmra.mxu0 %v2629
      %v2808 = vpop.f32.mrf.mxu0
      %v2809 = vadd.f32 0.0, %v2808
      %v2810 = vpop.f32.mrf.mxu0
      %2811 = vmatprep.mubr.f32.mxu0 0.0
      %2812 = vmatmul.mubr.f32.gmra.mxu0 %v2632
      %v2813 = vpop.f32.mrf.mxu0
      %v2814 = vadd.f32 0.0, %v2813
      %v2815 = vpop.f32.mrf.mxu0
      %2816 = vmatprep.mubr.f32.mxu0 0.0
      %2817 = vmatmul.mubr.f32.gmra.mxu0 %v2635
      %v2818 = vpop.f32.mrf.mxu0
      %v2819 = vadd.f32 0.0, %v2818
      %v2820 = vpop.f32.mrf.mxu0
      %2821 = vmatprep.mubr.f32.mxu0 0.0
      %2822 = vmatmul.mubr.f32.gmra.mxu0 %v2638
      %v2823 = vpop.f32.mrf.mxu0
      %v2824 = vadd.f32 0.0, %v2823
      %v2825 = vpop.f32.mrf.mxu0
      %2826 = vmatprep.mubr.f32.mxu0 0.0
      %2827 = vmatmul.mubr.f32.gmra.mxu0 %v2641
      %v2828 = vpop.f32.mrf.mxu0
      %v2829 = vadd.f32 0.0, %v2828
      %v2830 = vpop.f32.mrf.mxu0
      %2831 = vmatprep.mubr.f32.mxu0 0.0
      %2832 = vmatmul.mubr.f32.gmra.mxu0 %v2644
      %v2833 = vpop.f32.mrf.mxu0
      %v2834 = vadd.f32 0.0, %v2833
      %v2835 = vpop.f32.mrf.mxu0
      %2836 = vmatprep.mubr.f32.mxu0 0.0
      %2837 = vmatmul.mubr.f32.gmra.mxu0 %v2647
      %v2838 = vpop.f32.mrf.mxu0
      %v2839 = vadd.f32 0.0, %v2838
      %v2840 = vpop.f32.mrf.mxu0
      %2841 = vmatprep.mubr.f32.mxu0 0.0
      %2842 = vmatmul.mubr.f32.gmra.mxu0 %v2650
      %v2843 = vpop.f32.mrf.mxu0
      %v2844 = vadd.f32 0.0, %v2843
      %v2845 = vpop.f32.mrf.mxu0
      %2846 = vmatprep.mubr.f32.mxu0 0.0
      %2847 = vmatmul.mubr.f32.gmra.mxu0 %v2653
      %v2848 = vpop.f32.mrf.mxu0
      %v2849 = vadd.f32 0.0, %v2848
      %v2850 = vpop.f32.mrf.mxu0
      %2851 = vmatprep.mubr.f32.mxu0 0.0
      %2852 = vmatmul.mubr.f32.gmra.mxu0 %v2656
      %v2853 = vpop.f32.mrf.mxu0
      %v2854 = vadd.f32 0.0, %v2853
      %v2855 = vpop.f32.mrf.mxu0
      %2856 = vmatprep.mubr.f32.mxu0 0.0
      %2857 = vmatmul.mubr.f32.gmra.mxu0 %v2659
      %v2858 = vpop.f32.mrf.mxu0
      %v2859 = vadd.f32 0.0, %v2858
      %v2860 = vpop.f32.mrf.mxu0
      %2861 = vmatprep.mubr.f32.mxu0 0.0
      %2862 = vmatmul.mubr.f32.gmra.mxu0 %v2662
      %v2863 = vpop.f32.mrf.mxu0
      %v2864 = vadd.f32 0.0, %v2863
      %v2865 = vpop.f32.mrf.mxu0
      %2866 = vmatprep.mubr.f32.mxu0 0.0
      %2867 = vmatmul.mubr.f32.gmra.mxu0 %v2665
      %v2868 = vpop.f32.mrf.mxu0
      %v2869 = vadd.f32 0.0, %v2868
      %v2870 = vpop.f32.mrf.mxu0
      %2871 = vmatprep.mubr.f32.mxu0 0.0
      %2872 = vmatmul.mubr.f32.gmra.mxu0 %v2668
      %v2873 = vpop.f32.mrf.mxu0
      %v2874 = vadd.f32 0.0, %v2873
      %v2875 = vpop.f32.mrf.mxu0
      %2876 = vmatprep.mubr.f32.mxu0 0.0
      %2877 = vmatmul.mubr.f32.gmra.mxu0 %v2671
      %v2878 = vpop.f32.mrf.mxu0
      %v2879 = vadd.f32 0.0, %v2878
      %v2880 = vpop.f32.mrf.mxu0
      %2881 = vmatprep.mubr.f32.mxu0 0.0
      %2882 = vmatmul.mubr.f32.gmra.mxu0 %v2674
      %v2883 = vpop.f32.mrf.mxu0
      %v2884 = vadd.f32 0.0, %v2883
      %v2885 = vpop.f32.mrf.mxu0
      %2886 = vmatprep.mubr.f32.mxu0 0.0
      %2887 = vmatmul.mubr.f32.gmra.mxu0 %v2677
      %v2888 = vpop.f32.mrf.mxu0
      %v2889 = vadd.f32 0.0, %v2888
      %v2890 = vpop.f32.mrf.mxu0
      %2891 = vmatprep.mubr.f32.mxu0 0.0
      %2892 = vmatmul.mubr.f32.gmra.mxu0 %v2680
      %v2893 = vpop.f32.mrf.mxu0
      %v2894 = vadd.f32 0.0, %v2893
      %v2895 = vpop.f32.mrf.mxu0
      %2896 = vmatprep.mubr.f32.mxu0 0.0
      %2897 = vmatmul.mubr.f32.gmra.mxu0 %v2683
      %v2898 = vpop.f32.mrf.mxu0
      %v2899 = vadd.f32 0.0, %v2898
      %v2900 = vpop.f32.mrf.mxu0
      %2901 = vmatprep.mubr.f32.mxu0 0.0
      %2902 = vmatmul.mubr.f32.gmra.mxu0 %v2686
      %v2903 = vpop.f32.mrf.mxu0
      %v2904 = vadd.f32 0.0, %v2903
      %v2905 = vpop.f32.mrf.mxu0
      %2906 = vmatprep.mubr.f32.mxu0 0.0
      %2907 = vmatmul.mubr.f32.gmra.mxu0 %v2689
      %v2908 = vpop.f32.mrf.mxu0
      %v2909 = vadd.f32 0.0, %v2908
      %v2910 = vpop.f32.mrf.mxu0
      %2911 = vmatprep.mubr.f32.mxu0 0.0
      %2912 = vmatmul.mubr.f32.gmra.mxu0 %v2692
      %v2913 = vpop.f32.mrf.mxu0
      %v2914 = vadd.f32 0.0, %v2913
      %v2915 = vpop.f32.mrf.mxu0
      %2916 = vmatprep.mubr.f32.mxu0 0.0
      %2917 = vmatmul.mubr.f32.gmra.mxu0 %v2695
      %v2918 = vpop.f32.mrf.mxu0
      %v2919 = vadd.f32 0.0, %v2918
      %v2920 = vpop.f32.mrf.mxu0
      %2921 = vdwg.mxu0
      %v2922 = vadd.f32 %v2534, %v2764
      %v2923 = vadd.f32 %v2535, %v2769
      %v2924 = vadd.f32 %v2536, %v2774
      %v2925 = vadd.f32 %v2537, %v2779
      %v2926 = vadd.f32 %v2538, %v2784
      %v2927 = vadd.f32 %v2539, %v2789
      %v2928 = vadd.f32 %v2540, %v2794
      %v2929 = vadd.f32 %v2541, %v2799
      %v2930 = vadd.f32 %v2542, %v2804
      %v2931 = vadd.f32 %v2543, %v2809
      %v2932 = vadd.f32 %v2544, %v2814
      %v2933 = vadd.f32 %v2545, %v2819
      %v2934 = vadd.f32 %v2546, %v2824
      %v2935 = vadd.f32 %v2547, %v2829
      %v2936 = vadd.f32 %v2548, %v2834
      %v2937 = vadd.f32 %v2549, %v2839
      %v2938 = vadd.f32 %v2550, %v2844
      %v2939 = vadd.f32 %v2551, %v2849
      %v2940 = vadd.f32 %v2552, %v2854
      %v2941 = vadd.f32 %v2553, %v2859
      %v2942 = vadd.f32 %v2554, %v2864
      %v2943 = vadd.f32 %v2555, %v2869
      %v2944 = vadd.f32 %v2556, %v2874
      %v2945 = vadd.f32 %v2557, %v2879
      %v2946 = vadd.f32 %v2558, %v2884
      %v2947 = vadd.f32 %v2559, %v2889
      %v2948 = vadd.f32 %v2560, %v2894
      %v2949 = vadd.f32 %v2561, %v2899
      %v2950 = vadd.f32 %v2562, %v2904
      %v2951 = vadd.f32 %v2563, %v2909
      %v2952 = vadd.f32 %v2564, %v2914
      %v2953 = vadd.f32 %v2565, %v2919
      %v2954 = vld [vmem:[%s2566 + $0x8] sm:$0xff]
      %v2955 = vld [vmem:[%s2566 + $0x10] sm:$0xff]
      %v2956 = vld [vmem:[%s2566 + $0x28] sm:$0xff]
      %v2957 = vld [vmem:[%s2566 + $0x30] sm:$0xff]
      %v2958 = vld [vmem:[%s2566 + $0x48] sm:$0xff]
      %v2959 = vld [vmem:[%s2566 + $0x50] sm:$0xff]
      %v2960 = vld [vmem:[%s2566 + $0x68] sm:$0xff]
      %v2961 = vld [vmem:[%s2566 + $0x70] sm:$0xff]
      %v2962 = vld [vmem:[%s2566 + $0x88] sm:$0xff]
      %v2963 = vld [vmem:[%s2566 + $0x90] sm:$0xff]
      %v2964 = vld [vmem:[%s2566 + $0xa8] sm:$0xff]
      %v2965 = vld [vmem:[%s2566 + $0xb0] sm:$0xff]
      %v2966 = vld [vmem:[%s2566 + $0xc8] sm:$0xff]
      %v2967 = vld [vmem:[%s2566 + $0xd0] sm:$0xff]
      %v2968 = vld [vmem:[%s2566 + $0xe8] sm:$0xff]
      %v2969 = vld [vmem:[%s2566 + $0xf0] sm:$0xff]
      %v2970 = vld [vmem:[%s2566 + $0x108] sm:$0xff]
      %v2971 = vld [vmem:[%s2566 + $0x110] sm:$0xff]
      %v2972 = vld [vmem:[%s2566 + $0x128] sm:$0xff]
      %v2973 = vld [vmem:[%s2566 + $0x130] sm:$0xff]
      %v2974 = vld [vmem:[%s2566 + $0x148] sm:$0xff]
      %v2975 = vld [vmem:[%s2566 + $0x150] sm:$0xff]
      %v2976 = vld [vmem:[%s2566 + $0x168] sm:$0xff]
      %v2977 = vld [vmem:[%s2566 + $0x170] sm:$0xff]
      %v2978 = vld [vmem:[%s2566 + $0x188] sm:$0xff]
      %v2979 = vld [vmem:[%s2566 + $0x190] sm:$0xff]
      %v2980 = vld [vmem:[%s2566 + $0x1a8] sm:$0xff]
      %v2981 = vld [vmem:[%s2566 + $0x1b0] sm:$0xff]
      %v2982 = vld [vmem:[%s2566 + $0x1c8] sm:$0xff]
      %v2983 = vld [vmem:[%s2566 + $0x1d0] sm:$0xff]
      %v2984 = vld [vmem:[%s2566 + $0x1e8] sm:$0xff]
      %v2985 = vld [vmem:[%s2566 + $0x1f0] sm:$0xff]
      %s2986 = scalar_lea.vmem %s1, 56
      %v2987 = vld [vmem:[%s2986] sm:$0xff]
      %v2989 = vsel %vm171, %v2954, 0
      %v2992 = vsel %vm171, %v2955, 0
      %v2995 = vsel %vm171, %v2956, 0
      %v2998 = vsel %vm171, %v2957, 0
      %v3001 = vsel %vm171, %v2958, 0
      %v3004 = vsel %vm171, %v2959, 0
      %v3007 = vsel %vm171, %v2960, 0
      %v3010 = vsel %vm171, %v2961, 0
      %v3013 = vsel %vm171, %v2962, 0
      %v3016 = vsel %vm171, %v2963, 0
      %v3019 = vsel %vm171, %v2964, 0
      %v3022 = vsel %vm171, %v2965, 0
      %v3025 = vsel %vm171, %v2966, 0
      %v3028 = vsel %vm171, %v2967, 0
      %v3031 = vsel %vm171, %v2968, 0
      %v3034 = vsel %vm171, %v2969, 0
      %v3037 = vsel %vm171, %v2970, 0
      %v3040 = vsel %vm171, %v2971, 0
      %v3043 = vsel %vm171, %v2972, 0
      %v3046 = vsel %vm171, %v2973, 0
      %v3049 = vsel %vm171, %v2974, 0
      %v3052 = vsel %vm171, %v2975, 0
      %v3055 = vsel %vm171, %v2976, 0
      %v3058 = vsel %vm171, %v2977, 0
      %v3061 = vsel %vm171, %v2978, 0
      %v3064 = vsel %vm171, %v2979, 0
      %v3067 = vsel %vm171, %v2980, 0
      %v3070 = vsel %vm171, %v2981, 0
      %v3073 = vsel %vm171, %v2982, 0
      %v3076 = vsel %vm171, %v2983, 0
      %v3079 = vsel %vm171, %v2984, 0
      %v3082 = vsel %vm171, %v2985, 0
      %3084 = vmatprep.subr.mxu0 0.0
      %3085 = vmatpush1.msra.mxu0 0.0
      %3086 = vmatprep.subr.mxu0 0.0
      %3087 = vmatpush1.msra.mxu0 0.0
      %3088 = vmatprep.subr.mxu0 0.0
      %3089 = vmatpush1.msra.mxu0 0.0
      %3090 = vmatprep.subr.mxu0 0.0
      %3091 = vmatpush1.msra.mxu0 0.0
      %3092 = vmatprep.subr.mxu0 0.0
      %3093 = vmatpush1.msra.mxu0 0.0
      %3094 = vmatprep.subr.mxu0 0.0
      %3095 = vmatpush1.msra.mxu0 0.0
      %3096 = vmatprep.subr.mxu0 0.0
      %3097 = vmatpush1.msra.mxu0 0.0
      %3098 = vmatprep.subr.mxu0 0.0
      %3099 = vmatpush1.msra.mxu0 0.0
      %3100 = vmatprep.subr.mxu0 0.0
      %3101 = vmatpush1.msra.mxu0 0.0
      %3102 = vmatprep.subr.mxu0 0.0
      %3103 = vmatpush1.msra.mxu0 0.0
      %3104 = vmatprep.subr.mxu0 0.0
      %3105 = vmatpush1.msra.mxu0 0.0
      %3106 = vmatprep.subr.mxu0 0.0
      %3107 = vmatpush1.msra.mxu0 0.0
      %3108 = vmatprep.subr.mxu0 0.0
      %3109 = vmatpush1.msra.mxu0 0.0
      %3110 = vmatprep.subr.mxu0 0.0
      %3111 = vmatpush1.msra.mxu0 0.0
      %3112 = vmatprep.subr.mxu0 0.0
      %3113 = vmatpush1.msra.mxu0 0.0
      %3114 = vmatprep.subr.mxu0 0.0
      %3115 = vmatpush1.msra.mxu0 %v2987
      %3116 = vmatprep.subr.mxu0 0.0
      %3117 = vmatpush2.msra.mxu0 0.0
      %3118 = vmatprep.subr.mxu0 0.0
      %3119 = vmatpush2.msra.mxu0 0.0
      %3120 = vmatprep.subr.mxu0 0.0
      %3121 = vmatpush2.msra.mxu0 0.0
      %3122 = vmatprep.subr.mxu0 0.0
      %3123 = vmatpush2.msra.mxu0 0.0
      %3124 = vmatprep.subr.mxu0 0.0
      %3125 = vmatpush2.msra.mxu0 0.0
      %3126 = vmatprep.subr.mxu0 0.0
      %3127 = vmatpush2.msra.mxu0 0.0
      %3128 = vmatprep.subr.mxu0 0.0
      %3129 = vmatpush2.msra.mxu0 0.0
      %3130 = vmatprep.subr.mxu0 0.0
      %3131 = vmatpush2.msra.mxu0 0.0
      %3132 = vmatprep.subr.mxu0 0.0
      %3133 = vmatpush2.msra.mxu0 0.0
      %3134 = vmatprep.subr.mxu0 0.0
      %3135 = vmatpush2.msra.mxu0 0.0
      %3136 = vmatprep.subr.mxu0 0.0
      %3137 = vmatpush2.msra.mxu0 0.0
      %3138 = vmatprep.subr.mxu0 0.0
      %3139 = vmatpush2.msra.mxu0 0.0
      %3140 = vmatprep.subr.mxu0 0.0
      %3141 = vmatpush2.msra.mxu0 0.0
      %3142 = vmatprep.subr.mxu0 0.0
      %3143 = vmatpush2.msra.mxu0 0.0
      %3144 = vmatprep.subr.mxu0 0.0
      %3145 = vmatpush2.msra.mxu0 0.0
      %3146 = vmatprep.subr.mxu0 0.0
      %3147 = vmatpush2.msra.mxu0 0.0
      %3148 = vmatprep.mubr.f32.mxu0 0.0
      %3149 = vmatmul.mubr.f32.gmra.mxu0 %v2989
      %v3150 = vpop.f32.mrf.mxu0
      %v3151 = vadd.f32 0.0, %v3150
      %v3152 = vpop.f32.mrf.mxu0
      %3153 = vmatprep.mubr.f32.mxu0 0.0
      %3154 = vmatmul.mubr.f32.gmra.mxu0 %v2992
      %v3155 = vpop.f32.mrf.mxu0
      %v3156 = vadd.f32 0.0, %v3155
      %v3157 = vpop.f32.mrf.mxu0
      %3158 = vmatprep.mubr.f32.mxu0 0.0
      %3159 = vmatmul.mubr.f32.gmra.mxu0 %v2995
      %v3160 = vpop.f32.mrf.mxu0
      %v3161 = vadd.f32 0.0, %v3160
      %v3162 = vpop.f32.mrf.mxu0
      %3163 = vmatprep.mubr.f32.mxu0 0.0
      %3164 = vmatmul.mubr.f32.gmra.mxu0 %v2998
      %v3165 = vpop.f32.mrf.mxu0
      %v3166 = vadd.f32 0.0, %v3165
      %v3167 = vpop.f32.mrf.mxu0
      %3168 = vmatprep.mubr.f32.mxu0 0.0
      %3169 = vmatmul.mubr.f32.gmra.mxu0 %v3001
      %v3170 = vpop.f32.mrf.mxu0
      %v3171 = vadd.f32 0.0, %v3170
      %v3172 = vpop.f32.mrf.mxu0
      %3173 = vmatprep.mubr.f32.mxu0 0.0
      %3174 = vmatmul.mubr.f32.gmra.mxu0 %v3004
      %v3175 = vpop.f32.mrf.mxu0
      %v3176 = vadd.f32 0.0, %v3175
      %v3177 = vpop.f32.mrf.mxu0
      %3178 = vmatprep.mubr.f32.mxu0 0.0
      %3179 = vmatmul.mubr.f32.gmra.mxu0 %v3007
      %v3180 = vpop.f32.mrf.mxu0
      %v3181 = vadd.f32 0.0, %v3180
      %v3182 = vpop.f32.mrf.mxu0
      %3183 = vmatprep.mubr.f32.mxu0 0.0
      %3184 = vmatmul.mubr.f32.gmra.mxu0 %v3010
      %v3185 = vpop.f32.mrf.mxu0
      %v3186 = vadd.f32 0.0, %v3185
      %v3187 = vpop.f32.mrf.mxu0
      %3188 = vmatprep.mubr.f32.mxu0 0.0
      %3189 = vmatmul.mubr.f32.gmra.mxu0 %v3013
      %v3190 = vpop.f32.mrf.mxu0
      %v3191 = vadd.f32 0.0, %v3190
      %v3192 = vpop.f32.mrf.mxu0
      %3193 = vmatprep.mubr.f32.mxu0 0.0
      %3194 = vmatmul.mubr.f32.gmra.mxu0 %v3016
      %v3195 = vpop.f32.mrf.mxu0
      %v3196 = vadd.f32 0.0, %v3195
      %v3197 = vpop.f32.mrf.mxu0
      %3198 = vmatprep.mubr.f32.mxu0 0.0
      %3199 = vmatmul.mubr.f32.gmra.mxu0 %v3019
      %v3200 = vpop.f32.mrf.mxu0
      %v3201 = vadd.f32 0.0, %v3200
      %v3202 = vpop.f32.mrf.mxu0
      %3203 = vmatprep.mubr.f32.mxu0 0.0
      %3204 = vmatmul.mubr.f32.gmra.mxu0 %v3022
      %v3205 = vpop.f32.mrf.mxu0
      %v3206 = vadd.f32 0.0, %v3205
      %v3207 = vpop.f32.mrf.mxu0
      %3208 = vmatprep.mubr.f32.mxu0 0.0
      %3209 = vmatmul.mubr.f32.gmra.mxu0 %v3025
      %v3210 = vpop.f32.mrf.mxu0
      %v3211 = vadd.f32 0.0, %v3210
      %v3212 = vpop.f32.mrf.mxu0
      %3213 = vmatprep.mubr.f32.mxu0 0.0
      %3214 = vmatmul.mubr.f32.gmra.mxu0 %v3028
      %v3215 = vpop.f32.mrf.mxu0
      %v3216 = vadd.f32 0.0, %v3215
      %v3217 = vpop.f32.mrf.mxu0
      %3218 = vmatprep.mubr.f32.mxu0 0.0
      %3219 = vmatmul.mubr.f32.gmra.mxu0 %v3031
      %v3220 = vpop.f32.mrf.mxu0
      %v3221 = vadd.f32 0.0, %v3220
      %v3222 = vpop.f32.mrf.mxu0
      %3223 = vmatprep.mubr.f32.mxu0 0.0
      %3224 = vmatmul.mubr.f32.gmra.mxu0 %v3034
      %v3225 = vpop.f32.mrf.mxu0
      %v3226 = vadd.f32 0.0, %v3225
      %v3227 = vpop.f32.mrf.mxu0
      %3228 = vmatprep.mubr.f32.mxu0 0.0
      %3229 = vmatmul.mubr.f32.gmra.mxu0 %v3037
      %v3230 = vpop.f32.mrf.mxu0
      %v3231 = vadd.f32 0.0, %v3230
      %v3232 = vpop.f32.mrf.mxu0
      %3233 = vmatprep.mubr.f32.mxu0 0.0
      %3234 = vmatmul.mubr.f32.gmra.mxu0 %v3040
      %v3235 = vpop.f32.mrf.mxu0
      %v3236 = vadd.f32 0.0, %v3235
      %v3237 = vpop.f32.mrf.mxu0
      %3238 = vmatprep.mubr.f32.mxu0 0.0
      %3239 = vmatmul.mubr.f32.gmra.mxu0 %v3043
      %v3240 = vpop.f32.mrf.mxu0
      %v3241 = vadd.f32 0.0, %v3240
      %v3242 = vpop.f32.mrf.mxu0
      %3243 = vmatprep.mubr.f32.mxu0 0.0
      %3244 = vmatmul.mubr.f32.gmra.mxu0 %v3046
      %v3245 = vpop.f32.mrf.mxu0
      %v3246 = vadd.f32 0.0, %v3245
      %v3247 = vpop.f32.mrf.mxu0
      %3248 = vmatprep.mubr.f32.mxu0 0.0
      %3249 = vmatmul.mubr.f32.gmra.mxu0 %v3049
      %v3250 = vpop.f32.mrf.mxu0
      %v3251 = vadd.f32 0.0, %v3250
      %v3252 = vpop.f32.mrf.mxu0
      %3253 = vmatprep.mubr.f32.mxu0 0.0
      %3254 = vmatmul.mubr.f32.gmra.mxu0 %v3052
      %v3255 = vpop.f32.mrf.mxu0
      %v3256 = vadd.f32 0.0, %v3255
      %v3257 = vpop.f32.mrf.mxu0
      %3258 = vmatprep.mubr.f32.mxu0 0.0
      %3259 = vmatmul.mubr.f32.gmra.mxu0 %v3055
      %v3260 = vpop.f32.mrf.mxu0
      %v3261 = vadd.f32 0.0, %v3260
      %v3262 = vpop.f32.mrf.mxu0
      %3263 = vmatprep.mubr.f32.mxu0 0.0
      %3264 = vmatmul.mubr.f32.gmra.mxu0 %v3058
      %v3265 = vpop.f32.mrf.mxu0
      %v3266 = vadd.f32 0.0, %v3265
      %v3267 = vpop.f32.mrf.mxu0
      %3268 = vmatprep.mubr.f32.mxu0 0.0
      %3269 = vmatmul.mubr.f32.gmra.mxu0 %v3061
      %v3270 = vpop.f32.mrf.mxu0
      %v3271 = vadd.f32 0.0, %v3270
      %v3272 = vpop.f32.mrf.mxu0
      %3273 = vmatprep.mubr.f32.mxu0 0.0
      %3274 = vmatmul.mubr.f32.gmra.mxu0 %v3064
      %v3275 = vpop.f32.mrf.mxu0
      %v3276 = vadd.f32 0.0, %v3275
      %v3277 = vpop.f32.mrf.mxu0
      %3278 = vmatprep.mubr.f32.mxu0 0.0
      %3279 = vmatmul.mubr.f32.gmra.mxu0 %v3067
      %v3280 = vpop.f32.mrf.mxu0
      %v3281 = vadd.f32 0.0, %v3280
      %v3282 = vpop.f32.mrf.mxu0
      %3283 = vmatprep.mubr.f32.mxu0 0.0
      %3284 = vmatmul.mubr.f32.gmra.mxu0 %v3070
      %v3285 = vpop.f32.mrf.mxu0
      %v3286 = vadd.f32 0.0, %v3285
      %v3287 = vpop.f32.mrf.mxu0
      %3288 = vmatprep.mubr.f32.mxu0 0.0
      %3289 = vmatmul.mubr.f32.gmra.mxu0 %v3073
      %v3290 = vpop.f32.mrf.mxu0
      %v3291 = vadd.f32 0.0, %v3290
      %v3292 = vpop.f32.mrf.mxu0
      %3293 = vmatprep.mubr.f32.mxu0 0.0
      %3294 = vmatmul.mubr.f32.gmra.mxu0 %v3076
      %v3295 = vpop.f32.mrf.mxu0
      %v3296 = vadd.f32 0.0, %v3295
      %v3297 = vpop.f32.mrf.mxu0
      %3298 = vmatprep.mubr.f32.mxu0 0.0
      %3299 = vmatmul.mubr.f32.gmra.mxu0 %v3079
      %v3300 = vpop.f32.mrf.mxu0
      %v3301 = vadd.f32 0.0, %v3300
      %v3302 = vpop.f32.mrf.mxu0
      %3303 = vmatprep.mubr.f32.mxu0 0.0
      %3304 = vmatmul.mubr.f32.gmra.mxu0 %v3082
      %v3305 = vpop.f32.mrf.mxu0
      %v3306 = vadd.f32 0.0, %v3305
      %v3307 = vpop.f32.mrf.mxu0
      %3308 = vdwg.mxu0
      %v3309 = vadd.f32 %v2922, %v3151
      %v3310 = vadd.f32 %v2923, %v3156
      %v3311 = vadd.f32 %v2924, %v3161
      %v3312 = vadd.f32 %v2925, %v3166
      %v3313 = vadd.f32 %v2926, %v3171
      %v3314 = vadd.f32 %v2927, %v3176
      %v3315 = vadd.f32 %v2928, %v3181
      %v3316 = vadd.f32 %v2929, %v3186
      %v3317 = vadd.f32 %v2930, %v3191
      %v3318 = vadd.f32 %v2931, %v3196
      %v3319 = vadd.f32 %v2932, %v3201
      %v3320 = vadd.f32 %v2933, %v3206
      %v3321 = vadd.f32 %v2934, %v3211
      %v3322 = vadd.f32 %v2935, %v3216
      %v3323 = vadd.f32 %v2936, %v3221
      %v3324 = vadd.f32 %v2937, %v3226
      %v3325 = vadd.f32 %v2938, %v3231
      %v3326 = vadd.f32 %v2939, %v3236
      %v3327 = vadd.f32 %v2940, %v3241
      %v3328 = vadd.f32 %v2941, %v3246
      %v3329 = vadd.f32 %v2942, %v3251
      %v3330 = vadd.f32 %v2943, %v3256
      %v3331 = vadd.f32 %v2944, %v3261
      %v3332 = vadd.f32 %v2945, %v3266
      %v3333 = vadd.f32 %v2946, %v3271
      %v3334 = vadd.f32 %v2947, %v3276
      %v3335 = vadd.f32 %v2948, %v3281
      %v3336 = vadd.f32 %v2949, %v3286
      %v3337 = vadd.f32 %v2950, %v3291
      %v3338 = vadd.f32 %v2951, %v3296
      %v3339 = vadd.f32 %v2952, %v3301
      %v3340 = vadd.f32 %v2953, %v3306
      %v3341 = vld [vmem:[%s2566 + $0x9] sm:$0xff]
      %v3342 = vld [vmem:[%s2566 + $0x11] sm:$0xff]
      %v3343 = vld [vmem:[%s2566 + $0x29] sm:$0xff]
      %v3344 = vld [vmem:[%s2566 + $0x31] sm:$0xff]
      %v3345 = vld [vmem:[%s2566 + $0x49] sm:$0xff]
      %v3346 = vld [vmem:[%s2566 + $0x51] sm:$0xff]
      %v3347 = vld [vmem:[%s2566 + $0x69] sm:$0xff]
      %v3348 = vld [vmem:[%s2566 + $0x71] sm:$0xff]
      %v3349 = vld [vmem:[%s2566 + $0x89] sm:$0xff]
      %v3350 = vld [vmem:[%s2566 + $0x91] sm:$0xff]
      %v3351 = vld [vmem:[%s2566 + $0xa9] sm:$0xff]
      %v3352 = vld [vmem:[%s2566 + $0xb1] sm:$0xff]
      %v3353 = vld [vmem:[%s2566 + $0xc9] sm:$0xff]
      %v3354 = vld [vmem:[%s2566 + $0xd1] sm:$0xff]
      %v3355 = vld [vmem:[%s2566 + $0xe9] sm:$0xff]
      %v3356 = vld [vmem:[%s2566 + $0xf1] sm:$0xff]
      %v3357 = vld [vmem:[%s2566 + $0x109] sm:$0xff]
      %v3358 = vld [vmem:[%s2566 + $0x111] sm:$0xff]
      %v3359 = vld [vmem:[%s2566 + $0x129] sm:$0xff]
      %v3360 = vld [vmem:[%s2566 + $0x131] sm:$0xff]
      %v3361 = vld [vmem:[%s2566 + $0x149] sm:$0xff]
      %v3362 = vld [vmem:[%s2566 + $0x151] sm:$0xff]
      %v3363 = vld [vmem:[%s2566 + $0x169] sm:$0xff]
      %v3364 = vld [vmem:[%s2566 + $0x171] sm:$0xff]
      %v3365 = vld [vmem:[%s2566 + $0x189] sm:$0xff]
      %v3366 = vld [vmem:[%s2566 + $0x191] sm:$0xff]
      %v3367 = vld [vmem:[%s2566 + $0x1a9] sm:$0xff]
      %v3368 = vld [vmem:[%s2566 + $0x1b1] sm:$0xff]
      %v3369 = vld [vmem:[%s2566 + $0x1c9] sm:$0xff]
      %v3370 = vld [vmem:[%s2566 + $0x1d1] sm:$0xff]
      %v3371 = vld [vmem:[%s2566 + $0x1e9] sm:$0xff]
      %v3372 = vld [vmem:[%s2566 + $0x1f1] sm:$0xff]
      %s3373 = scalar_lea.vmem %s1, 64
      %v3374 = vld [vmem:[%s3373] sm:$0xff]
      %v3376 = vsel %vm171, %v3341, 0
      %v3379 = vsel %vm171, %v3342, 0
      %v3382 = vsel %vm171, %v3343, 0
      %v3385 = vsel %vm171, %v3344, 0
      %v3388 = vsel %vm171, %v3345, 0
      %v3391 = vsel %vm171, %v3346, 0
      %v3394 = vsel %vm171, %v3347, 0
      %v3397 = vsel %vm171, %v3348, 0
      %v3400 = vsel %vm171, %v3349, 0
      %v3403 = vsel %vm171, %v3350, 0
      %v3406 = vsel %vm171, %v3351, 0
      %v3409 = vsel %vm171, %v3352, 0
      %v3412 = vsel %vm171, %v3353, 0
      %v3415 = vsel %vm171, %v3354, 0
      %v3418 = vsel %vm171, %v3355, 0
      %v3421 = vsel %vm171, %v3356, 0
      %v3424 = vsel %vm171, %v3357, 0
      %v3427 = vsel %vm171, %v3358, 0
      %v3430 = vsel %vm171, %v3359, 0
      %v3433 = vsel %vm171, %v3360, 0
      %v3436 = vsel %vm171, %v3361, 0
      %v3439 = vsel %vm171, %v3362, 0
      %v3442 = vsel %vm171, %v3363, 0
      %v3445 = vsel %vm171, %v3364, 0
      %v3448 = vsel %vm171, %v3365, 0
      %v3451 = vsel %vm171, %v3366, 0
      %v3454 = vsel %vm171, %v3367, 0
      %v3457 = vsel %vm171, %v3368, 0
      %v3460 = vsel %vm171, %v3369, 0
      %v3463 = vsel %vm171, %v3370, 0
      %v3466 = vsel %vm171, %v3371, 0
      %v3469 = vsel %vm171, %v3372, 0
      %3471 = vmatprep.subr.mxu0 0.0
      %3472 = vmatpush1.msra.mxu0 0.0
      %3473 = vmatprep.subr.mxu0 0.0
      %3474 = vmatpush1.msra.mxu0 0.0
      %3475 = vmatprep.subr.mxu0 0.0
      %3476 = vmatpush1.msra.mxu0 0.0
      %3477 = vmatprep.subr.mxu0 0.0
      %3478 = vmatpush1.msra.mxu0 0.0
      %3479 = vmatprep.subr.mxu0 0.0
      %3480 = vmatpush1.msra.mxu0 0.0
      %3481 = vmatprep.subr.mxu0 0.0
      %3482 = vmatpush1.msra.mxu0 0.0
      %3483 = vmatprep.subr.mxu0 0.0
      %3484 = vmatpush1.msra.mxu0 0.0
      %3485 = vmatprep.subr.mxu0 0.0
      %3486 = vmatpush1.msra.mxu0 0.0
      %3487 = vmatprep.subr.mxu0 0.0
      %3488 = vmatpush1.msra.mxu0 0.0
      %3489 = vmatprep.subr.mxu0 0.0
      %3490 = vmatpush1.msra.mxu0 0.0
      %3491 = vmatprep.subr.mxu0 0.0
      %3492 = vmatpush1.msra.mxu0 0.0
      %3493 = vmatprep.subr.mxu0 0.0
      %3494 = vmatpush1.msra.mxu0 0.0
      %3495 = vmatprep.subr.mxu0 0.0
      %3496 = vmatpush1.msra.mxu0 0.0
      %3497 = vmatprep.subr.mxu0 0.0
      %3498 = vmatpush1.msra.mxu0 0.0
      %3499 = vmatprep.subr.mxu0 0.0
      %3500 = vmatpush1.msra.mxu0 0.0
      %3501 = vmatprep.subr.mxu0 0.0
      %3502 = vmatpush1.msra.mxu0 %v3374
      %3503 = vmatprep.subr.mxu0 0.0
      %3504 = vmatpush2.msra.mxu0 0.0
      %3505 = vmatprep.subr.mxu0 0.0
      %3506 = vmatpush2.msra.mxu0 0.0
      %3507 = vmatprep.subr.mxu0 0.0
      %3508 = vmatpush2.msra.mxu0 0.0
      %3509 = vmatprep.subr.mxu0 0.0
      %3510 = vmatpush2.msra.mxu0 0.0
      %3511 = vmatprep.subr.mxu0 0.0
      %3512 = vmatpush2.msra.mxu0 0.0
      %3513 = vmatprep.subr.mxu0 0.0
      %3514 = vmatpush2.msra.mxu0 0.0
      %3515 = vmatprep.subr.mxu0 0.0
      %3516 = vmatpush2.msra.mxu0 0.0
      %3517 = vmatprep.subr.mxu0 0.0
      %3518 = vmatpush2.msra.mxu0 0.0
      %3519 = vmatprep.subr.mxu0 0.0
      %3520 = vmatpush2.msra.mxu0 0.0
      %3521 = vmatprep.subr.mxu0 0.0
      %3522 = vmatpush2.msra.mxu0 0.0
      %3523 = vmatprep.subr.mxu0 0.0
      %3524 = vmatpush2.msra.mxu0 0.0
      %3525 = vmatprep.subr.mxu0 0.0
      %3526 = vmatpush2.msra.mxu0 0.0
      %3527 = vmatprep.subr.mxu0 0.0
      %3528 = vmatpush2.msra.mxu0 0.0
      %3529 = vmatprep.subr.mxu0 0.0
      %3530 = vmatpush2.msra.mxu0 0.0
      %3531 = vmatprep.subr.mxu0 0.0
      %3532 = vmatpush2.msra.mxu0 0.0
      %3533 = vmatprep.subr.mxu0 0.0
      %3534 = vmatpush2.msra.mxu0 0.0
      %3535 = vmatprep.mubr.f32.mxu0 0.0
      %3536 = vmatmul.mubr.f32.gmra.mxu0 %v3376
      %v3537 = vpop.f32.mrf.mxu0
      %v3538 = vadd.f32 0.0, %v3537
      %v3539 = vpop.f32.mrf.mxu0
      %3540 = vmatprep.mubr.f32.mxu0 0.0
      %3541 = vmatmul.mubr.f32.gmra.mxu0 %v3379
      %v3542 = vpop.f32.mrf.mxu0
      %v3543 = vadd.f32 0.0, %v3542
      %v3544 = vpop.f32.mrf.mxu0
      %3545 = vmatprep.mubr.f32.mxu0 0.0
      %3546 = vmatmul.mubr.f32.gmra.mxu0 %v3382
      %v3547 = vpop.f32.mrf.mxu0
      %v3548 = vadd.f32 0.0, %v3547
      %v3549 = vpop.f32.mrf.mxu0
      %3550 = vmatprep.mubr.f32.mxu0 0.0
      %3551 = vmatmul.mubr.f32.gmra.mxu0 %v3385
      %v3552 = vpop.f32.mrf.mxu0
      %v3553 = vadd.f32 0.0, %v3552
      %v3554 = vpop.f32.mrf.mxu0
      %3555 = vmatprep.mubr.f32.mxu0 0.0
      %3556 = vmatmul.mubr.f32.gmra.mxu0 %v3388
      %v3557 = vpop.f32.mrf.mxu0
      %v3558 = vadd.f32 0.0, %v3557
      %v3559 = vpop.f32.mrf.mxu0
      %3560 = vmatprep.mubr.f32.mxu0 0.0
      %3561 = vmatmul.mubr.f32.gmra.mxu0 %v3391
      %v3562 = vpop.f32.mrf.mxu0
      %v3563 = vadd.f32 0.0, %v3562
      %v3564 = vpop.f32.mrf.mxu0
      %3565 = vmatprep.mubr.f32.mxu0 0.0
      %3566 = vmatmul.mubr.f32.gmra.mxu0 %v3394
      %v3567 = vpop.f32.mrf.mxu0
      %v3568 = vadd.f32 0.0, %v3567
      %v3569 = vpop.f32.mrf.mxu0
      %3570 = vmatprep.mubr.f32.mxu0 0.0
      %3571 = vmatmul.mubr.f32.gmra.mxu0 %v3397
      %v3572 = vpop.f32.mrf.mxu0
      %v3573 = vadd.f32 0.0, %v3572
      %v3574 = vpop.f32.mrf.mxu0
      %3575 = vmatprep.mubr.f32.mxu0 0.0
      %3576 = vmatmul.mubr.f32.gmra.mxu0 %v3400
      %v3577 = vpop.f32.mrf.mxu0
      %v3578 = vadd.f32 0.0, %v3577
      %v3579 = vpop.f32.mrf.mxu0
      %3580 = vmatprep.mubr.f32.mxu0 0.0
      %3581 = vmatmul.mubr.f32.gmra.mxu0 %v3403
      %v3582 = vpop.f32.mrf.mxu0
      %v3583 = vadd.f32 0.0, %v3582
      %v3584 = vpop.f32.mrf.mxu0
      %3585 = vmatprep.mubr.f32.mxu0 0.0
      %3586 = vmatmul.mubr.f32.gmra.mxu0 %v3406
      %v3587 = vpop.f32.mrf.mxu0
      %v3588 = vadd.f32 0.0, %v3587
      %v3589 = vpop.f32.mrf.mxu0
      %3590 = vmatprep.mubr.f32.mxu0 0.0
      %3591 = vmatmul.mubr.f32.gmra.mxu0 %v3409
      %v3592 = vpop.f32.mrf.mxu0
      %v3593 = vadd.f32 0.0, %v3592
      %v3594 = vpop.f32.mrf.mxu0
      %3595 = vmatprep.mubr.f32.mxu0 0.0
      %3596 = vmatmul.mubr.f32.gmra.mxu0 %v3412
      %v3597 = vpop.f32.mrf.mxu0
      %v3598 = vadd.f32 0.0, %v3597
      %v3599 = vpop.f32.mrf.mxu0
      %3600 = vmatprep.mubr.f32.mxu0 0.0
      %3601 = vmatmul.mubr.f32.gmra.mxu0 %v3415
      %v3602 = vpop.f32.mrf.mxu0
      %v3603 = vadd.f32 0.0, %v3602
      %v3604 = vpop.f32.mrf.mxu0
      %3605 = vmatprep.mubr.f32.mxu0 0.0
      %3606 = vmatmul.mubr.f32.gmra.mxu0 %v3418
      %v3607 = vpop.f32.mrf.mxu0
      %v3608 = vadd.f32 0.0, %v3607
      %v3609 = vpop.f32.mrf.mxu0
      %3610 = vmatprep.mubr.f32.mxu0 0.0
      %3611 = vmatmul.mubr.f32.gmra.mxu0 %v3421
      %v3612 = vpop.f32.mrf.mxu0
      %v3613 = vadd.f32 0.0, %v3612
      %v3614 = vpop.f32.mrf.mxu0
      %3615 = vmatprep.mubr.f32.mxu0 0.0
      %3616 = vmatmul.mubr.f32.gmra.mxu0 %v3424
      %v3617 = vpop.f32.mrf.mxu0
      %v3618 = vadd.f32 0.0, %v3617
      %v3619 = vpop.f32.mrf.mxu0
      %3620 = vmatprep.mubr.f32.mxu0 0.0
      %3621 = vmatmul.mubr.f32.gmra.mxu0 %v3427
      %v3622 = vpop.f32.mrf.mxu0
      %v3623 = vadd.f32 0.0, %v3622
      %v3624 = vpop.f32.mrf.mxu0
      %3625 = vmatprep.mubr.f32.mxu0 0.0
      %3626 = vmatmul.mubr.f32.gmra.mxu0 %v3430
      %v3627 = vpop.f32.mrf.mxu0
      %v3628 = vadd.f32 0.0, %v3627
      %v3629 = vpop.f32.mrf.mxu0
      %3630 = vmatprep.mubr.f32.mxu0 0.0
      %3631 = vmatmul.mubr.f32.gmra.mxu0 %v3433
      %v3632 = vpop.f32.mrf.mxu0
      %v3633 = vadd.f32 0.0, %v3632
      %v3634 = vpop.f32.mrf.mxu0
      %3635 = vmatprep.mubr.f32.mxu0 0.0
      %3636 = vmatmul.mubr.f32.gmra.mxu0 %v3436
      %v3637 = vpop.f32.mrf.mxu0
      %v3638 = vadd.f32 0.0, %v3637
      %v3639 = vpop.f32.mrf.mxu0
      %3640 = vmatprep.mubr.f32.mxu0 0.0
      %3641 = vmatmul.mubr.f32.gmra.mxu0 %v3439
      %v3642 = vpop.f32.mrf.mxu0
      %v3643 = vadd.f32 0.0, %v3642
      %v3644 = vpop.f32.mrf.mxu0
      %3645 = vmatprep.mubr.f32.mxu0 0.0
      %3646 = vmatmul.mubr.f32.gmra.mxu0 %v3442
      %v3647 = vpop.f32.mrf.mxu0
      %v3648 = vadd.f32 0.0, %v3647
      %v3649 = vpop.f32.mrf.mxu0
      %3650 = vmatprep.mubr.f32.mxu0 0.0
      %3651 = vmatmul.mubr.f32.gmra.mxu0 %v3445
      %v3652 = vpop.f32.mrf.mxu0
      %v3653 = vadd.f32 0.0, %v3652
      %v3654 = vpop.f32.mrf.mxu0
      %3655 = vmatprep.mubr.f32.mxu0 0.0
      %3656 = vmatmul.mubr.f32.gmra.mxu0 %v3448
      %v3657 = vpop.f32.mrf.mxu0
      %v3658 = vadd.f32 0.0, %v3657
      %v3659 = vpop.f32.mrf.mxu0
      %3660 = vmatprep.mubr.f32.mxu0 0.0
      %3661 = vmatmul.mubr.f32.gmra.mxu0 %v3451
      %v3662 = vpop.f32.mrf.mxu0
      %v3663 = vadd.f32 0.0, %v3662
      %v3664 = vpop.f32.mrf.mxu0
      %3665 = vmatprep.mubr.f32.mxu0 0.0
      %3666 = vmatmul.mubr.f32.gmra.mxu0 %v3454
      %v3667 = vpop.f32.mrf.mxu0
      %v3668 = vadd.f32 0.0, %v3667
      %v3669 = vpop.f32.mrf.mxu0
      %3670 = vmatprep.mubr.f32.mxu0 0.0
      %3671 = vmatmul.mubr.f32.gmra.mxu0 %v3457
      %v3672 = vpop.f32.mrf.mxu0
      %v3673 = vadd.f32 0.0, %v3672
      %v3674 = vpop.f32.mrf.mxu0
      %3675 = vmatprep.mubr.f32.mxu0 0.0
      %3676 = vmatmul.mubr.f32.gmra.mxu0 %v3460
      %v3677 = vpop.f32.mrf.mxu0
      %v3678 = vadd.f32 0.0, %v3677
      %v3679 = vpop.f32.mrf.mxu0
      %3680 = vmatprep.mubr.f32.mxu0 0.0
      %3681 = vmatmul.mubr.f32.gmra.mxu0 %v3463
      %v3682 = vpop.f32.mrf.mxu0
      %v3683 = vadd.f32 0.0, %v3682
      %v3684 = vpop.f32.mrf.mxu0
      %3685 = vmatprep.mubr.f32.mxu0 0.0
      %3686 = vmatmul.mubr.f32.gmra.mxu0 %v3466
      %v3687 = vpop.f32.mrf.mxu0
      %v3688 = vadd.f32 0.0, %v3687
      %v3689 = vpop.f32.mrf.mxu0
      %3690 = vmatprep.mubr.f32.mxu0 0.0
      %3691 = vmatmul.mubr.f32.gmra.mxu0 %v3469
      %v3692 = vpop.f32.mrf.mxu0
      %v3693 = vadd.f32 0.0, %v3692
      %v3694 = vpop.f32.mrf.mxu0
      %3695 = vdwg.mxu0
      %v3696 = vadd.f32 %v3309, %v3538
      %v3697 = vadd.f32 %v3310, %v3543
      %v3698 = vadd.f32 %v3311, %v3548
      %v3699 = vadd.f32 %v3312, %v3553
      %v3700 = vadd.f32 %v3313, %v3558
      %v3701 = vadd.f32 %v3314, %v3563
      %v3702 = vadd.f32 %v3315, %v3568
      %v3703 = vadd.f32 %v3316, %v3573
      %v3704 = vadd.f32 %v3317, %v3578
      %v3705 = vadd.f32 %v3318, %v3583
      %v3706 = vadd.f32 %v3319, %v3588
      %v3707 = vadd.f32 %v3320, %v3593
      %v3708 = vadd.f32 %v3321, %v3598
      %v3709 = vadd.f32 %v3322, %v3603
      %v3710 = vadd.f32 %v3323, %v3608
      %v3711 = vadd.f32 %v3324, %v3613
      %v3712 = vadd.f32 %v3325, %v3618
      %v3713 = vadd.f32 %v3326, %v3623
      %v3714 = vadd.f32 %v3327, %v3628
      %v3715 = vadd.f32 %v3328, %v3633
      %v3716 = vadd.f32 %v3329, %v3638
      %v3717 = vadd.f32 %v3330, %v3643
      %v3718 = vadd.f32 %v3331, %v3648
      %v3719 = vadd.f32 %v3332, %v3653
      %v3720 = vadd.f32 %v3333, %v3658
      %v3721 = vadd.f32 %v3334, %v3663
      %v3722 = vadd.f32 %v3335, %v3668
      %v3723 = vadd.f32 %v3336, %v3673
      %v3724 = vadd.f32 %v3337, %v3678
      %v3725 = vadd.f32 %v3338, %v3683
      %v3726 = vadd.f32 %v3339, %v3688
      %v3727 = vadd.f32 %v3340, %v3693
      %v3728 = vld [vmem:[%s2] sm:$0x1]
      %v3730 = vlaneseq
      %v3731 = vshrl.u32 %v3730, 7
      %v3732 = vsub.s32 0, %v3731
      %v3733 = vrot.slane %v3728, %v3732
      %v3735 = vadd.f32 %v3696, %v3733
      %v3736 = vadd.f32 %v3697, %v3733
      %v3737 = vadd.f32 %v3698, %v3733
      %v3738 = vadd.f32 %v3699, %v3733
      %v3739 = vadd.f32 %v3700, %v3733
      %v3740 = vadd.f32 %v3701, %v3733
      %v3741 = vadd.f32 %v3702, %v3733
      %v3742 = vadd.f32 %v3703, %v3733
      %v3743 = vadd.f32 %v3704, %v3733
      %v3744 = vadd.f32 %v3705, %v3733
      %v3745 = vadd.f32 %v3706, %v3733
      %v3746 = vadd.f32 %v3707, %v3733
      %v3747 = vadd.f32 %v3708, %v3733
      %v3748 = vadd.f32 %v3709, %v3733
      %v3749 = vadd.f32 %v3710, %v3733
      %v3750 = vadd.f32 %v3711, %v3733
      %v3751 = vadd.f32 %v3712, %v3733
      %v3752 = vadd.f32 %v3713, %v3733
      %v3753 = vadd.f32 %v3714, %v3733
      %v3754 = vadd.f32 %v3715, %v3733
      %v3755 = vadd.f32 %v3716, %v3733
      %v3756 = vadd.f32 %v3717, %v3733
      %v3757 = vadd.f32 %v3718, %v3733
      %v3758 = vadd.f32 %v3719, %v3733
      %v3759 = vadd.f32 %v3720, %v3733
      %v3760 = vadd.f32 %v3721, %v3733
      %v3761 = vadd.f32 %v3722, %v3733
      %v3762 = vadd.f32 %v3723, %v3733
      %v3763 = vadd.f32 %v3724, %v3733
      %v3764 = vadd.f32 %v3725, %v3733
      %v3765 = vadd.f32 %v3726, %v3733
      %v3766 = vadd.f32 %v3727, %v3733
      %v3767 = vxor.u32 %v3735, 2147483648
      %v3768 = vxor.u32 %v3736, 2147483648
      %v3769 = vxor.u32 %v3737, 2147483648
      %v3770 = vxor.u32 %v3738, 2147483648
      %v3771 = vxor.u32 %v3739, 2147483648
      %v3772 = vxor.u32 %v3740, 2147483648
      %v3773 = vxor.u32 %v3741, 2147483648
      %v3774 = vxor.u32 %v3742, 2147483648
      %v3775 = vxor.u32 %v3743, 2147483648
      %v3776 = vxor.u32 %v3744, 2147483648
      %v3777 = vxor.u32 %v3745, 2147483648
      %v3778 = vxor.u32 %v3746, 2147483648
      %v3779 = vxor.u32 %v3747, 2147483648
      %v3780 = vxor.u32 %v3748, 2147483648
      %v3781 = vxor.u32 %v3749, 2147483648
      %v3782 = vxor.u32 %v3750, 2147483648
      %v3783 = vxor.u32 %v3751, 2147483648
      %v3784 = vxor.u32 %v3752, 2147483648
      %v3785 = vxor.u32 %v3753, 2147483648
      %v3786 = vxor.u32 %v3754, 2147483648
      %v3787 = vxor.u32 %v3755, 2147483648
      %v3788 = vxor.u32 %v3756, 2147483648
      %v3789 = vxor.u32 %v3757, 2147483648
      %v3790 = vxor.u32 %v3758, 2147483648
      %v3791 = vxor.u32 %v3759, 2147483648
      %v3792 = vxor.u32 %v3760, 2147483648
      %v3793 = vxor.u32 %v3761, 2147483648
      %v3794 = vxor.u32 %v3762, 2147483648
      %v3795 = vxor.u32 %v3763, 2147483648
      %v3796 = vxor.u32 %v3764, 2147483648
      %v3797 = vxor.u32 %v3765, 2147483648
      %v3798 = vxor.u32 %v3766, 2147483648
      %v3799 = vmul.f32 %v3767, 1.442695
      %v3800 = vpow.pop %v3799
      %v3801 = vmul.f32 %v3768, 1.442695
      %v3802 = vpow.pop %v3801
      %v3803 = vmul.f32 %v3769, 1.442695
      %v3804 = vpow.pop %v3803
      %v3805 = vmul.f32 %v3770, 1.442695
      %v3806 = vpow.pop %v3805
      %v3807 = vmul.f32 %v3771, 1.442695
      %v3808 = vpow.pop %v3807
      %v3809 = vmul.f32 %v3772, 1.442695
      %v3810 = vpow.pop %v3809
      %v3811 = vmul.f32 %v3773, 1.442695
      %v3812 = vpow.pop %v3811
      %v3813 = vmul.f32 %v3774, 1.442695
      %v3814 = vpow.pop %v3813
      %v3815 = vmul.f32 %v3775, 1.442695
      %v3816 = vpow.pop %v3815
      %v3817 = vmul.f32 %v3776, 1.442695
      %v3818 = vpow.pop %v3817
      %v3819 = vmul.f32 %v3777, 1.442695
      %v3820 = vpow.pop %v3819
      %v3821 = vmul.f32 %v3778, 1.442695
      %v3822 = vpow.pop %v3821
      %v3823 = vmul.f32 %v3779, 1.442695
      %v3824 = vpow.pop %v3823
      %v3825 = vmul.f32 %v3780, 1.442695
      %v3826 = vpow.pop %v3825
      %v3827 = vmul.f32 %v3781, 1.442695
      %v3828 = vpow.pop %v3827
      %v3829 = vmul.f32 %v3782, 1.442695
      %v3830 = vpow.pop %v3829
      %v3831 = vmul.f32 %v3783, 1.442695
      %v3832 = vpow.pop %v3831
      %v3833 = vmul.f32 %v3784, 1.442695
      %v3834 = vpow.pop %v3833
      %v3835 = vmul.f32 %v3785, 1.442695
      %v3836 = vpow.pop %v3835
      %v3837 = vmul.f32 %v3786, 1.442695
      %v3838 = vpow.pop %v3837
      %v3839 = vmul.f32 %v3787, 1.442695
      %v3840 = vpow.pop %v3839
      %v3841 = vmul.f32 %v3788, 1.442695
      %v3842 = vpow.pop %v3841
      %v3843 = vmul.f32 %v3789, 1.442695
      %v3844 = vpow.pop %v3843
      %v3845 = vmul.f32 %v3790, 1.442695
      %v3846 = vpow.pop %v3845
      %v3847 = vmul.f32 %v3791, 1.442695
      %v3848 = vpow.pop %v3847
      %v3849 = vmul.f32 %v3792, 1.442695
      %v3850 = vpow.pop %v3849
      %v3851 = vmul.f32 %v3793, 1.442695
      %v3852 = vpow.pop %v3851
      %v3853 = vmul.f32 %v3794, 1.442695
      %v3854 = vpow.pop %v3853
      %v3855 = vmul.f32 %v3795, 1.442695
      %v3856 = vpow.pop %v3855
      %v3857 = vmul.f32 %v3796, 1.442695
      %v3858 = vpow.pop %v3857
      %v3859 = vmul.f32 %v3797, 1.442695
      %v3860 = vpow.pop %v3859
      %v3861 = vmul.f32 %v3798, 1.442695
      %v3862 = vpow.pop %v3861
      %v3863 = vadd.f32 %v3800, 1.0
      %v3864 = vadd.f32 %v3802, 1.0
      %v3865 = vadd.f32 %v3804, 1.0
      %v3866 = vadd.f32 %v3806, 1.0
      %v3867 = vadd.f32 %v3808, 1.0
      %v3868 = vadd.f32 %v3810, 1.0
      %v3869 = vadd.f32 %v3812, 1.0
      %v3870 = vadd.f32 %v3814, 1.0
      %v3871 = vadd.f32 %v3816, 1.0
      %v3872 = vadd.f32 %v3818, 1.0
      %v3873 = vadd.f32 %v3820, 1.0
      %v3874 = vadd.f32 %v3822, 1.0
      %v3875 = vadd.f32 %v3824, 1.0
      %v3876 = vadd.f32 %v3826, 1.0
      %v3877 = vadd.f32 %v3828, 1.0
      %v3878 = vadd.f32 %v3830, 1.0
      %v3879 = vadd.f32 %v3832, 1.0
      %v3880 = vadd.f32 %v3834, 1.0
      %v3881 = vadd.f32 %v3836, 1.0
      %v3882 = vadd.f32 %v3838, 1.0
      %v3883 = vadd.f32 %v3840, 1.0
      %v3884 = vadd.f32 %v3842, 1.0
      %v3885 = vadd.f32 %v3844, 1.0
      %v3886 = vadd.f32 %v3846, 1.0
      %v3887 = vadd.f32 %v3848, 1.0
      %v3888 = vadd.f32 %v3850, 1.0
      %v3889 = vadd.f32 %v3852, 1.0
      %v3890 = vadd.f32 %v3854, 1.0
      %v3891 = vadd.f32 %v3856, 1.0
      %v3892 = vadd.f32 %v3858, 1.0
      %v3893 = vadd.f32 %v3860, 1.0
      %v3894 = vadd.f32 %v3862, 1.0
      %v3895 = vrcp.pop %v3863
      %v3896 = vmul.f32 1.0, %v3895
      %v3897 = vrcp.pop %v3864
      %v3898 = vmul.f32 1.0, %v3897
      %v3899 = vrcp.pop %v3865
      %v3900 = vmul.f32 1.0, %v3899
      %v3901 = vrcp.pop %v3866
      %v3902 = vmul.f32 1.0, %v3901
      %v3903 = vrcp.pop %v3867
      %v3904 = vmul.f32 1.0, %v3903
      %v3905 = vrcp.pop %v3868
      %v3906 = vmul.f32 1.0, %v3905
      %v3907 = vrcp.pop %v3869
      %v3908 = vmul.f32 1.0, %v3907
      %v3909 = vrcp.pop %v3870
      %v3910 = vmul.f32 1.0, %v3909
      %v3911 = vrcp.pop %v3871
      %v3912 = vmul.f32 1.0, %v3911
      %v3913 = vrcp.pop %v3872
      %v3914 = vmul.f32 1.0, %v3913
      %v3915 = vrcp.pop %v3873
      %v3916 = vmul.f32 1.0, %v3915
      %v3917 = vrcp.pop %v3874
      %v3918 = vmul.f32 1.0, %v3917
      %v3919 = vrcp.pop %v3875
      %v3920 = vmul.f32 1.0, %v3919
      %v3921 = vrcp.pop %v3876
      %v3922 = vmul.f32 1.0, %v3921
      %v3923 = vrcp.pop %v3877
      %v3924 = vmul.f32 1.0, %v3923
      %v3925 = vrcp.pop %v3878
      %v3926 = vmul.f32 1.0, %v3925
      %v3927 = vrcp.pop %v3879
      %v3928 = vmul.f32 1.0, %v3927
      %v3929 = vrcp.pop %v3880
      %v3930 = vmul.f32 1.0, %v3929
      %v3931 = vrcp.pop %v3881
      %v3932 = vmul.f32 1.0, %v3931
      %v3933 = vrcp.pop %v3882
      %v3934 = vmul.f32 1.0, %v3933
      %v3935 = vrcp.pop %v3883
      %v3936 = vmul.f32 1.0, %v3935
      %v3937 = vrcp.pop %v3884
      %v3938 = vmul.f32 1.0, %v3937
      %v3939 = vrcp.pop %v3885
      %v3940 = vmul.f32 1.0, %v3939
      %v3941 = vrcp.pop %v3886
      %v3942 = vmul.f32 1.0, %v3941
      %v3943 = vrcp.pop %v3887
      %v3944 = vmul.f32 1.0, %v3943
      %v3945 = vrcp.pop %v3888
      %v3946 = vmul.f32 1.0, %v3945
      %v3947 = vrcp.pop %v3889
      %v3948 = vmul.f32 1.0, %v3947
      %v3949 = vrcp.pop %v3890
      %v3950 = vmul.f32 1.0, %v3949
      %v3951 = vrcp.pop %v3891
      %v3952 = vmul.f32 1.0, %v3951
      %v3953 = vrcp.pop %v3892
      %v3954 = vmul.f32 1.0, %v3953
      %v3955 = vrcp.pop %v3893
      %v3956 = vmul.f32 1.0, %v3955
      %v3957 = vrcp.pop %v3894
      %v3958 = vmul.f32 1.0, %v3957
      %v3959 = vmul.f32 %v3735, %v3896
      %v3960 = vmul.f32 %v3736, %v3898
      %v3961 = vmul.f32 %v3737, %v3900
      %v3962 = vmul.f32 %v3738, %v3902
      %v3963 = vmul.f32 %v3739, %v3904
      %v3964 = vmul.f32 %v3740, %v3906
      %v3965 = vmul.f32 %v3741, %v3908
      %v3966 = vmul.f32 %v3742, %v3910
      %v3967 = vmul.f32 %v3743, %v3912
      %v3968 = vmul.f32 %v3744, %v3914
      %v3969 = vmul.f32 %v3745, %v3916
      %v3970 = vmul.f32 %v3746, %v3918
      %v3971 = vmul.f32 %v3747, %v3920
      %v3972 = vmul.f32 %v3748, %v3922
      %v3973 = vmul.f32 %v3749, %v3924
      %v3974 = vmul.f32 %v3750, %v3926
      %v3975 = vmul.f32 %v3751, %v3928
      %v3976 = vmul.f32 %v3752, %v3930
      %v3977 = vmul.f32 %v3753, %v3932
      %v3978 = vmul.f32 %v3754, %v3934
      %v3979 = vmul.f32 %v3755, %v3936
      %v3980 = vmul.f32 %v3756, %v3938
      %v3981 = vmul.f32 %v3757, %v3940
      %v3982 = vmul.f32 %v3758, %v3942
      %v3983 = vmul.f32 %v3759, %v3944
      %v3984 = vmul.f32 %v3760, %v3946
      %v3985 = vmul.f32 %v3761, %v3948
      %v3986 = vmul.f32 %v3762, %v3950
      %v3987 = vmul.f32 %v3763, %v3952
      %v3988 = vmul.f32 %v3764, %v3954
      %v3989 = vmul.f32 %v3765, %v3956
      %v3990 = vmul.f32 %v3766, %v3958
      %3991 = vst.msk [vmem:[%s170] sm:$0xff] %vm171, %v3959
      %3992 = vst.msk [vmem:[%s170 + $0x8] sm:$0xff] %vm171, %v3960
      %3993 = vst.msk [vmem:[%s170 + $0x10] sm:$0xff] %vm171, %v3961
      %3994 = vst.msk [vmem:[%s170 + $0x18] sm:$0xff] %vm171, %v3962
      %3995 = vst.msk [vmem:[%s170 + $0x20] sm:$0xff] %vm171, %v3963
      %3996 = vst.msk [vmem:[%s170 + $0x28] sm:$0xff] %vm171, %v3964
      %3997 = vst.msk [vmem:[%s170 + $0x30] sm:$0xff] %vm171, %v3965
      %3998 = vst.msk [vmem:[%s170 + $0x38] sm:$0xff] %vm171, %v3966
      %3999 = vst.msk [vmem:[%s170 + $0x40] sm:$0xff] %vm171, %v3967
      %4000 = vst.msk [vmem:[%s170 + $0x48] sm:$0xff] %vm171, %v3968
      %4001 = vst.msk [vmem:[%s170 + $0x50] sm:$0xff] %vm171, %v3969
      %4002 = vst.msk [vmem:[%s170 + $0x58] sm:$0xff] %vm171, %v3970
      %4003 = vst.msk [vmem:[%s170 + $0x60] sm:$0xff] %vm171, %v3971
      %4004 = vst.msk [vmem:[%s170 + $0x68] sm:$0xff] %vm171, %v3972
      %4005 = vst.msk [vmem:[%s170 + $0x70] sm:$0xff] %vm171, %v3973
      %4006 = vst.msk [vmem:[%s170 + $0x78] sm:$0xff] %vm171, %v3974
      %4007 = vst.msk [vmem:[%s170 + $0x80] sm:$0xff] %vm171, %v3975
      %4008 = vst.msk [vmem:[%s170 + $0x88] sm:$0xff] %vm171, %v3976
      %4009 = vst.msk [vmem:[%s170 + $0x90] sm:$0xff] %vm171, %v3977
      %4010 = vst.msk [vmem:[%s170 + $0x98] sm:$0xff] %vm171, %v3978
      %4011 = vst.msk [vmem:[%s170 + $0xa0] sm:$0xff] %vm171, %v3979
      %4012 = vst.msk [vmem:[%s170 + $0xa8] sm:$0xff] %vm171, %v3980
      %4013 = vst.msk [vmem:[%s170 + $0xb0] sm:$0xff] %vm171, %v3981
      %4014 = vst.msk [vmem:[%s170 + $0xb8] sm:$0xff] %vm171, %v3982
      %4015 = vst.msk [vmem:[%s170 + $0xc0] sm:$0xff] %vm171, %v3983
      %4016 = vst.msk [vmem:[%s170 + $0xc8] sm:$0xff] %vm171, %v3984
      %4017 = vst.msk [vmem:[%s170 + $0xd0] sm:$0xff] %vm171, %v3985
      %4018 = vst.msk [vmem:[%s170 + $0xd8] sm:$0xff] %vm171, %v3986
      %4019 = vst.msk [vmem:[%s170 + $0xe0] sm:$0xff] %vm171, %v3987
      %4020 = vst.msk [vmem:[%s170 + $0xe8] sm:$0xff] %vm171, %v3988
      %4021 = vst.msk [vmem:[%s170 + $0xf0] sm:$0xff] %vm171, %v3989
      %4022 = vst.msk [vmem:[%s170 + $0xf8] sm:$0xff] %vm171, %v3990
      %p4023 = scmp.lt.s32.totalorder %s14, 1
      %s4024 = scalar_select %p4023, %s14, 1
      %s4025 = smul.addr %s4024, 32
      %s4026 = smul.addr %s4025, 8
      %s4027 = scalar_lea.vmem %s3, %s4026
      // Predicated region
      $region33: #{_lambda_.7} parent=31 // pred_check
        %p4028 = pneg %p100
      $region34: #{_lambda_.7} parent=31 // pred_check_branch
        %4030 = sbr.rel (%p4028) target = $region36
      $region35: #{_lambda_.7} parent=31 // pred_region
        _
      $region36: #{_lambda_.7} parent=31 // pred_fallthru
        _
    $region32: #{_lambda_.7} parent=5 // pred_fallthru
      _
    %p4031 = scmp.le.s32.totalorder 2, %s9
    // Predicated region
    $region37: #{_lambda_.7} parent=5 // pred_check
      %p4032 = pneg %p4031
    $region38: #{_lambda_.7} parent=5 // pred_check_branch
      %4034 = sbr.rel (%p4032) target = $region40
    $region39: #{_lambda_.7} parent=5 // pred_region
      %s4035 = ssub.s32 %s9, 2
      // Predicated region
      $region41: #{_lambda_.7} parent=39 // pred_check
        %p4036 = pneg %p106
      $region42: #{_lambda_.7} parent=39 // pred_check_branch
        %4038 = sbr.rel (%p4036) target = $region44
      $region43: #{_lambda_.7} parent=39 // pred_region
        %p4039 = scmp.lt.s32.totalorder %s15, 1
        %s4040 = scalar_select %p4039, %s15, 1
        %s4041 = smul.addr %s4040, 32
        %s4042 = smul.addr %s4041, 8
        %s4043 = scalar_lea.vmem %s3, %s4042
      $region44: #{_lambda_.7} parent=39 // pred_fallthru
        _
    $region40: #{_lambda_.7} parent=5 // pred_fallthru
      _
  $region6: #{_lambda_.7} parent=0 // loop_footer
    %s13 = sadd.s32 1, %s9
  $region7: #{_lambda_.7} parent=0 // loop_footer_branch
    %8 = sbr.rel target = $region3
  $region8: #{_lambda_.7} parent=0 // loop_exit
    _

</llo_original>
